<compile_context>
chip_gen: v5e
topology: v5e:2x2
jax: 0.10.0
libtpu: 0.0.40
codegen_flags: <defaults>
</compile_context>

<pallas_src>
import jax
import jax.numpy as jnp
from jax.experimental import pallas as pl
from jax.experimental.pallas import tpu as pltpu


_K5 = 5            # conv kernel size
_TILE_B = 16       # images per stage-kernel grid step (safe on v5e/v6e/v7x;
                   # can be raised to 32 on v6e's 128 MiB VMEM)
_VMEM_LIMIT = 32 * 1024 * 1024   # <= physical VMEM on every TPU generation


# ----------------------------------------------------------------------------
# Pallas kernels
# ----------------------------------------------------------------------------
def conv_relu_pool_kernel(p_ref, w_ref, b_ref, o_ref):
    """Fused conv(as matmul) + bias + ReLU + 2x2/2 max-pool for TILE_B images.

    p_ref: (4, R, K) bf16   corner-decomposed im2col patches, R = TILE_B*PH*PW
    w_ref: (K, Cout) bf16   conv weight, rows ordered (kh, kw, cin)
    b_ref: (1, Cout) f32
    o_ref: (R, Cout) bf16   pooled activations, rows ordered (b, ph, pw)

    max_pool(relu(conv + b)) == relu(max_corners(conv) + b): the bias is
    corner-invariant and ReLU is monotone, so the pool becomes an elementwise
    max of four wide matmuls (each >= TILE_B*25 rows -> good MXU fill).
    """
    w = w_ref[...]
    y = jnp.dot(p_ref[0], w, preferred_element_type=jnp.float32)
    y = jnp.maximum(y, jnp.dot(p_ref[1], w, preferred_element_type=jnp.float32))
    y = jnp.maximum(y, jnp.dot(p_ref[2], w, preferred_element_type=jnp.float32))
    y = jnp.maximum(y, jnp.dot(p_ref[3], w, preferred_element_type=jnp.float32))
    y = jnp.maximum(y + b_ref[...], 0.0)
    o_ref[...] = y.astype(o_ref.dtype)


def tail_kernel(x_ref, w3_ref, b3_ref, w4_ref, b4_ref, w5_ref, b5_ref, o_ref):
    """conv3 (5x5 over the 5x5 map -> matmul) + ReLU + fc1 + ReLU + fc2 + log_softmax."""
    h = jnp.dot(x_ref[...], w3_ref[...], preferred_element_type=jnp.float32)
    h = jnp.maximum(h + b3_ref[...], 0.0)                          # (T, 128)
    h = jnp.dot(h.astype(jnp.bfloat16), w4_ref[...],
                preferred_element_type=jnp.float32)
    h = jnp.maximum(h + b4_ref[...], 0.0)                          # (T, 128)
    h = jnp.dot(h.astype(jnp.bfloat16), w5_ref[...],
                preferred_element_type=jnp.float32)
    h = h + b5_ref[...]                                            # (T, 10)
    m = jnp.max(h, axis=-1, keepdims=True)
    s = h - m
    lse = jnp.log(jnp.sum(jnp.exp(s), axis=-1, keepdims=True))
    o_ref[...] = (s - lse).astype(o_ref.dtype)


# ----------------------------------------------------------------------------
# XLA glue + Pallas wrappers
# ----------------------------------------------------------------------------
def _pool_corner_patches(x):
    """x: (N, H, W, C) -> (4, N*PH*PW, 25*C) bf16 corner-decomposed im2col.

    Slab (pi, pj), row (b, ph, pw) holds the 5x5xC input patch feeding the conv
    output at (2*ph+pi, 2*pw+pj), flattened in (kh, kw, cin) order to match the
    weight layout.  Built directly from x, with no intermediate full im2col.
    """
    N, H, W, C = x.shape
    PH, PW = (H - _K5 + 1) // 2, (W - _K5 + 1) // 2
    M, K = PH * PW, _K5 * _K5 * C
    slabs = []
    for pi in (0, 1):
        for pj in (0, 1):
            cols = [x[:, pi + kh::2, pj + kw::2, :][:, :PH, :PW, :]
                    for kh in range(_K5) for kw in range(_K5)]
            slabs.append(jnp.stack(cols, axis=3).reshape(N * M, K))
    return jnp.stack(slabs, axis=0).astype(jnp.bfloat16)


def conv_relu_pool(x, w2d, b2d, tile_b):
    """x: (N, H, W, C) with N % tile_b == 0 -> (N, PH, PW, Cout) bf16."""
    N, H, W, C = x.shape
    K, Cout = w2d.shape
    PH, PW = (H - _K5 + 1) // 2, (W - _K5 + 1) // 2
    M = PH * PW
    R = tile_b * M
    pc = _pool_corner_patches(x)                        # (4, N*M, K) bf16

    out = pl.pallas_call(
        conv_relu_pool_kernel,
        out_shape=jax.ShapeDtypeStruct((N * M, Cout), jnp.bfloat16),
        grid=(N // tile_b,),
        in_specs=[
            pl.BlockSpec((4, R, K), lambda b: (0, b, 0)),
            pl.BlockSpec((K, Cout), lambda b: (0, 0)),
            pl.BlockSpec((1, Cout), lambda b: (0, 0)),
        ],
        out_specs=pl.BlockSpec((R, Cout), lambda b: (b, 0)),
        compiler_params=pltpu.CompilerParams(
            dimension_semantics=("parallel",),
            vmem_limit_bytes=_VMEM_LIMIT),
    )(pc, w2d, b2d)
    return out.reshape(N, PH, PW, Cout)


def _row_tile(n):
    for t in (512, 256, 128, 64, 32, 16, 8):
        if n % t == 0:
            return t
    return n


def tail_fused(x, w3, b3, w4, b4, w5, b5):
    """x: (N, 400) bf16 with N % 8 == 0 -> (N, 10) f32 log-probs."""
    N, D = x.shape
    H1, H2, C = w3.shape[1], w4.shape[1], w5.shape[1]
    tile_n = _row_tile(N)
    return pl.pallas_call(
        tail_kernel,
        out_shape=jax.ShapeDtypeStruct((N, C), jnp.float32),
        grid=(N // tile_n,),
        in_specs=[
            pl.BlockSpec((tile_n, D), lambda i: (i, 0)),
            pl.BlockSpec((D, H1), lambda i: (0, 0)),
            pl.BlockSpec((1, H1), lambda i: (0, 0)),
            pl.BlockSpec((H1, H2), lambda i: (0, 0)),
            pl.BlockSpec((1, H2), lambda i: (0, 0)),
            pl.BlockSpec((H2, C), lambda i: (0, 0)),
            pl.BlockSpec((1, C), lambda i: (0, 0)),
        ],
        out_specs=pl.BlockSpec((tile_n, C), lambda i: (i, 0)),
        compiler_params=pltpu.CompilerParams(
            dimension_semantics=("parallel",),
            vmem_limit_bytes=_VMEM_LIMIT),
    )(x, w3, b3, w4, b4, w5, b5)


# ----------------------------------------------------------------------------
# Parameters (deterministic, PyTorch-default-style uniform init)
# ----------------------------------------------------------------------------
def _uniform(key, shape, fan_in):
    bound = 1.0 / jnp.sqrt(jnp.float32(fan_in))
    return jax.random.uniform(key, shape, jnp.float32, -bound, bound)


def init_params(key):
    """PyTorch-layout parameters."""
    keys = jax.random.split(key, 10)
    return {
        "conv1_w": _uniform(keys[0], (6, 3, 5, 5), 3 * 5 * 5),
        "conv1_b": _uniform(keys[1], (6,), 3 * 5 * 5),
        "conv2_w": _uniform(keys[2], (16, 6, 5, 5), 6 * 5 * 5),
        "conv2_b": _uniform(keys[3], (16,), 6 * 5 * 5),
        "conv3_w": _uniform(keys[4], (120, 16, 5, 5), 16 * 5 * 5),
        "conv3_b": _uniform(keys[5], (120,), 16 * 5 * 5),
        "fc1_w": _uniform(keys[6], (84, 120), 120),
        "fc1_b": _uniform(keys[7], (84,), 120),
        "fc2_w": _uniform(keys[8], (10, 84), 84),
        "fc2_b": _uniform(keys[9], (10,), 84),
    }


def prepare_params(p):
    """One-time (outside jit) conversion to the kernels' matmul layouts:
    conv weights -> (kh*kw*cin, cout) bf16; tail inner dims zero-padded to 128
    lanes (120->128, 84->128), which is mathematically inert."""
    def conv_w2d(w):  # (Cout, Cin, KH, KW) -> (KH*KW*Cin, Cout)
        co, ci, kh, kw = w.shape
        return w.transpose(2, 3, 1, 0).reshape(kh * kw * ci, co)

    bf16 = jnp.bfloat16
    w3 = jnp.pad(conv_w2d(p["conv3_w"]), ((0, 0), (0, 8)))        # (400, 128)
    b3 = jnp.pad(p["conv3_b"], (0, 8)).reshape(1, 128)
    w4 = jnp.pad(p["fc1_w"].T, ((0, 8), (0, 44)))                 # (128, 128)
    b4 = jnp.pad(p["fc1_b"], (0, 44)).reshape(1, 128)
    w5 = jnp.pad(p["fc2_w"].T, ((0, 44), (0, 0)))                 # (128, 10)
    b5 = p["fc2_b"].reshape(1, 10)
    return {
        "w1": conv_w2d(p["conv1_w"]).astype(bf16), "b1": p["conv1_b"].reshape(1, 6),
        "w2": conv_w2d(p["conv2_w"]).astype(bf16), "b2": p["conv2_b"].reshape(1, 16),
        "w3": w3.astype(bf16), "b3": b3,
        "w4": w4.astype(bf16), "b4": b4,
        "w5": w5.astype(bf16), "b5": b5,
    }


# ----------------------------------------------------------------------------
# Forward pass (mirrors LeNet_5_CIFAR.forward)
# ----------------------------------------------------------------------------
def lenet5_cifar_forward(kp, x):
    # x: (N, 3, 32, 32) NCHW float32 (PyTorch layout)
    N = x.shape[0]
    tile_b = min(_TILE_B, 8 * ((N + 7) // 8))
    n_pad = tile_b * ((N + tile_b - 1) // tile_b)
    x = x.transpose(0, 2, 3, 1)                                    # NHWC
    if n_pad != N:
        x = jnp.pad(x, ((0, n_pad - N), (0, 0), (0, 0), (0, 0)))
    h = conv_relu_pool(x, kp["w1"], kp["b1"], tile_b)              # (n_pad,14,14,6)
    h = conv_relu_pool(h, kp["w2"], kp["b2"], tile_b)              # (n_pad,5,5,16)
    h = h.reshape(n_pad, 400)                                      # (ph,pw,c) order
    out = tail_fused(h, kp["w3"], kp["b3"], kp["w4"], kp["b4"],
                     kp["w5"], kp["b5"])                           # (n_pad, 10)
    return out[:N]


# ----------------------------------------------------------------------------
# Pure-XLA f32 reference (for correctness check)
# ----------------------------------------------------------------------------
def _reference_forward(p, x):
    def conv(x, w, b):
        y = jax.lax.conv_general_dilated(
            x, w, (1, 1), "VALID",
            dimension_numbers=("NCHW", "OIHW", "NCHW"))
        return y + b.reshape(1, -1, 1, 1)

    def pool(x):
        n, c, h, w = x.shape
        return x.reshape(n, c, h // 2, 2, w // 2, 2).max(axis=(3, 5))

    h = pool(jax.nn.relu(conv(x, p["conv1_w"], p["conv1_b"])))
    h = pool(jax.nn.relu(conv(h, p["conv2_w"], p["conv2_b"])))
    h = jax.nn.relu(conv(h, p["conv3_w"], p["conv3_b"])).reshape(-1, 120)
    h = jax.nn.relu(h @ p["fc1_w"].T + p["fc1_b"])
    h = h @ p["fc2_w"].T + p["fc2_b"]
    return jax.nn.log_softmax(h, axis=1)


if __name__ == "__main__":
    key = jax.random.PRNGKey(0)
    pkey, xkey = jax.random.split(key)
    torch_params = init_params(pkey)
    kp = prepare_params(torch_params)

    # CIFAR-shaped input (the conv stack requires 3x32x32).
    x = jax.random.normal(xkey, (2, 3, 32, 32), dtype=jnp.float32)

    fwd = jax.jit(lenet5_cifar_forward)
    out = jax.block_until_ready(fwd(kp, x))

    assert out.shape == (2, 10)
    # log_softmax rows should sum to 1 in prob space.
    assert bool(jnp.allclose(jnp.exp(out).sum(axis=1), 1.0, atol=1e-3))
    # bf16 matmul inputs with f32 accumulation vs. the pure-f32 reference.
    ref = _reference_forward(torch_params, x)
    assert bool(jnp.allclose(out, ref, atol=1e-1)), float(jnp.max(jnp.abs(out - ref)))
    print("KERNEL_OK")
</pallas_src>

<mosaic_0001>
module attributes {stable_mosaic.version = 11 : i64} {
  func.func @conv_relu_pool_kernel(%arg0: i32, %arg1: memref<4x1568x75xbf16, #tpu.memory_space<vmem>>, %arg2: memref<75x6xbf16, #tpu.memory_space<vmem>>, %arg3: memref<1x6xf32, #tpu.memory_space<vmem>>, %arg4: memref<1568x6xbf16, #tpu.memory_space<vmem>>) attributes {dimension_semantics = [#tpu.dimension_semantics<parallel>], iteration_bounds = array<i64: 1>, scalar_prefetch = 0 : i64, scratch_operands = 0 : i64, tpu.core_type = #tpu.core_type<tc>, window_params = [{transform_indices = @transform_0, window_bounds = array<i64: 4, 1568, 75>}, {pipeline_mode = #tpu.pipeline_mode<synchronous>, transform_indices = @transform_1, window_bounds = array<i64: 75, 6>}, {pipeline_mode = #tpu.pipeline_mode<synchronous>, transform_indices = @transform_2, window_bounds = array<i64: 1, 6>}, {transform_indices = @transform_3, window_bounds = array<i64: 1568, 6>}]} {
    %c0 = arith.constant 0 : index
    %c0_0 = arith.constant 0 : index
    %0 = vector.load %arg2[%c0, %c0_0] : memref<75x6xbf16, #tpu.memory_space<vmem>>, vector<75x6xbf16>
    %c0_1 = arith.constant 0 : index
    %c0_2 = arith.constant 0 : index
    %c0_3 = arith.constant 0 : index
    %1 = vector.load %arg1[%c0_1, %c0_2, %c0_3] : memref<4x1568x75xbf16, #tpu.memory_space<vmem>>, vector<1x1568x75xbf16>
    %2 = vector.shape_cast %1 : vector<1x1568x75xbf16> to vector<1568x75xbf16>
    %cst = arith.constant dense<0.000000e+00> : vector<1568x6xf32>
    %3 = tpu.matmul %2, %0, %cst {dimension_numbers = #tpu.dot_dimension_numbers<[1], [0], [0], [1], [0, 0, 1, 1], [], []>} : vector<1568x75xbf16>, vector<75x6xbf16>, vector<1568x6xf32> -> vector<1568x6xf32>
    %c1 = arith.constant 1 : index
    %c0_4 = arith.constant 0 : index
    %c0_5 = arith.constant 0 : index
    %4 = vector.load %arg1[%c1, %c0_4, %c0_5] : memref<4x1568x75xbf16, #tpu.memory_space<vmem>>, vector<1x1568x75xbf16>
    %5 = vector.shape_cast %4 : vector<1x1568x75xbf16> to vector<1568x75xbf16>
    %cst_6 = arith.constant dense<0.000000e+00> : vector<1568x6xf32>
    %6 = tpu.matmul %5, %0, %cst_6 {dimension_numbers = #tpu.dot_dimension_numbers<[1], [0], [0], [1], [0, 0, 1, 1], [], []>} : vector<1568x75xbf16>, vector<75x6xbf16>, vector<1568x6xf32> -> vector<1568x6xf32>
    %7 = arith.maximumf %3, %6 : vector<1568x6xf32>
    %c2 = arith.constant 2 : index
    %c0_7 = arith.constant 0 : index
    %c0_8 = arith.constant 0 : index
    %8 = vector.load %arg1[%c2, %c0_7, %c0_8] : memref<4x1568x75xbf16, #tpu.memory_space<vmem>>, vector<1x1568x75xbf16>
    %9 = vector.shape_cast %8 : vector<1x1568x75xbf16> to vector<1568x75xbf16>
    %cst_9 = arith.constant dense<0.000000e+00> : vector<1568x6xf32>
    %10 = tpu.matmul %9, %0, %cst_9 {dimension_numbers = #tpu.dot_dimension_numbers<[1], [0], [0], [1], [0, 0, 1, 1], [], []>} : vector<1568x75xbf16>, vector<75x6xbf16>, vector<1568x6xf32> -> vector<1568x6xf32>
    %11 = arith.maximumf %7, %10 : vector<1568x6xf32>
    %c3 = arith.constant 3 : index
    %c0_10 = arith.constant 0 : index
    %c0_11 = arith.constant 0 : index
    %12 = vector.load %arg1[%c3, %c0_10, %c0_11] : memref<4x1568x75xbf16, #tpu.memory_space<vmem>>, vector<1x1568x75xbf16>
    %13 = vector.shape_cast %12 : vector<1x1568x75xbf16> to vector<1568x75xbf16>
    %cst_12 = arith.constant dense<0.000000e+00> : vector<1568x6xf32>
    %14 = tpu.matmul %13, %0, %cst_12 {dimension_numbers = #tpu.dot_dimension_numbers<[1], [0], [0], [1], [0, 0, 1, 1], [], []>} : vector<1568x75xbf16>, vector<75x6xbf16>, vector<1568x6xf32> -> vector<1568x6xf32>
    %15 = arith.maximumf %11, %14 : vector<1568x6xf32>
    %c0_13 = arith.constant 0 : index
    %c0_14 = arith.constant 0 : index
    %16 = vector.load %arg3[%c0_13, %c0_14] : memref<1x6xf32, #tpu.memory_space<vmem>>, vector<1x6xf32>
    %17 = vector.broadcast %16 : vector<1x6xf32> to vector<1568x6xf32>
    %18 = arith.addf %15, %17 : vector<1568x6xf32>
    %cst_15 = arith.constant 0.000000e+00 : f32
    %19 = vector.broadcast %cst_15 : f32 to vector<1568x6xf32>
    %20 = arith.maximumf %18, %19 : vector<1568x6xf32>
    %21 = arith.truncf %20 : vector<1568x6xf32> to vector<1568x6xbf16>
    %c0_16 = arith.constant 0 : index
    %c0_17 = arith.constant 0 : index
    %22 = vector.load %arg4[%c0_16, %c0_17] : memref<1568x6xbf16, #tpu.memory_space<vmem>>, vector<1568x6xbf16>
    tpu.vector_store %arg4[%c0_16, %c0_17], %21 {strides = array<i32>} : memref<1568x6xbf16, #tpu.memory_space<vmem>>, vector<1568x6xbf16>,
    return
  }
  func.func @transform_0(%arg0: i32) -> (i32, i32, i32) {
    %c0_i32 = arith.constant 0 : i32
    %c0_i32_0 = arith.constant 0 : i32
    %c0_i32_1 = arith.constant 0 : i32
    return %c0_i32, %arg0, %c0_i32_0 : i32, i32, i32
  }
  func.func @transform_1(%arg0: i32) -> (i32, i32) {
    %c0_i32 = arith.constant 0 : i32
    %c0_i32_0 = arith.constant 0 : i32
    %c0_i32_1 = arith.constant 0 : i32
    return %c0_i32, %c0_i32_0 : i32, i32
  }
  func.func @transform_2(%arg0: i32) -> (i32, i32) {
    %c0_i32 = arith.constant 0 : i32
    %c0_i32_0 = arith.constant 0 : i32
    %c0_i32_1 = arith.constant 0 : i32
    return %c0_i32, %c0_i32_0 : i32, i32
  }
  func.func @transform_3(%arg0: i32) -> (i32, i32) {
    %c0_i32 = arith.constant 0 : i32
    %c0_i32_0 = arith.constant 0 : i32
    return %arg0, %c0_i32 : i32, i32
  }
}

module attributes {stable_mosaic.version = 11 : i64} {
  func.func @conv_relu_pool_kernel(%arg0: i32, %arg1: memref<4x200x150xbf16, #tpu.memory_space<vmem>>, %arg2: memref<150x16xbf16, #tpu.memory_space<vmem>>, %arg3: memref<1x16xf32, #tpu.memory_space<vmem>>, %arg4: memref<200x16xbf16, #tpu.memory_space<vmem>>) attributes {dimension_semantics = [#tpu.dimension_semantics<parallel>], iteration_bounds = array<i64: 1>, scalar_prefetch = 0 : i64, scratch_operands = 0 : i64, tpu.core_type = #tpu.core_type<tc>, window_params = [{transform_indices = @transform_0, window_bounds = array<i64: 4, 200, 150>}, {pipeline_mode = #tpu.pipeline_mode<synchronous>, transform_indices = @transform_1, window_bounds = array<i64: 150, 16>}, {pipeline_mode = #tpu.pipeline_mode<synchronous>, transform_indices = @transform_2, window_bounds = array<i64: 1, 16>}, {transform_indices = @transform_3, window_bounds = array<i64: 200, 16>}]} {
    %c0 = arith.constant 0 : index
    %c0_0 = arith.constant 0 : index
    %0 = vector.load %arg2[%c0, %c0_0] : memref<150x16xbf16, #tpu.memory_space<vmem>>, vector<150x16xbf16>
    %c0_1 = arith.constant 0 : index
    %c0_2 = arith.constant 0 : index
    %c0_3 = arith.constant 0 : index
    %1 = vector.load %arg1[%c0_1, %c0_2, %c0_3] : memref<4x200x150xbf16, #tpu.memory_space<vmem>>, vector<1x200x150xbf16>
    %2 = vector.shape_cast %1 : vector<1x200x150xbf16> to vector<200x150xbf16>
    %cst = arith.constant dense<0.000000e+00> : vector<200x16xf32>
    %3 = tpu.matmul %2, %0, %cst {dimension_numbers = #tpu.dot_dimension_numbers<[1], [0], [0], [1], [0, 0, 1, 1], [], []>} : vector<200x150xbf16>, vector<150x16xbf16>, vector<200x16xf32> -> vector<200x16xf32>
    %c1 = arith.constant 1 : index
    %c0_4 = arith.constant 0 : index
    %c0_5 = arith.constant 0 : index
    %4 = vector.load %arg1[%c1, %c0_4, %c0_5] : memref<4x200x150xbf16, #tpu.memory_space<vmem>>, vector<1x200x150xbf16>
    %5 = vector.shape_cast %4 : vector<1x200x150xbf16> to vector<200x150xbf16>
    %cst_6 = arith.constant dense<0.000000e+00> : vector<200x16xf32>
    %6 = tpu.matmul %5, %0, %cst_6 {dimension_numbers = #tpu.dot_dimension_numbers<[1], [0], [0], [1], [0, 0, 1, 1], [], []>} : vector<200x150xbf16>, vector<150x16xbf16>, vector<200x16xf32> -> vector<200x16xf32>
    %7 = arith.maximumf %3, %6 : vector<200x16xf32>
    %c2 = arith.constant 2 : index
    %c0_7 = arith.constant 0 : index
    %c0_8 = arith.constant 0 : index
    %8 = vector.load %arg1[%c2, %c0_7, %c0_8] : memref<4x200x150xbf16, #tpu.memory_space<vmem>>, vector<1x200x150xbf16>
    %9 = vector.shape_cast %8 : vector<1x200x150xbf16> to vector<200x150xbf16>
    %cst_9 = arith.constant dense<0.000000e+00> : vector<200x16xf32>
    %10 = tpu.matmul %9, %0, %cst_9 {dimension_numbers = #tpu.dot_dimension_numbers<[1], [0], [0], [1], [0, 0, 1, 1], [], []>} : vector<200x150xbf16>, vector<150x16xbf16>, vector<200x16xf32> -> vector<200x16xf32>
    %11 = arith.maximumf %7, %10 : vector<200x16xf32>
    %c3 = arith.constant 3 : index
    %c0_10 = arith.constant 0 : index
    %c0_11 = arith.constant 0 : index
    %12 = vector.load %arg1[%c3, %c0_10, %c0_11] : memref<4x200x150xbf16, #tpu.memory_space<vmem>>, vector<1x200x150xbf16>
    %13 = vector.shape_cast %12 : vector<1x200x150xbf16> to vector<200x150xbf16>
    %cst_12 = arith.constant dense<0.000000e+00> : vector<200x16xf32>
    %14 = tpu.matmul %13, %0, %cst_12 {dimension_numbers = #tpu.dot_dimension_numbers<[1], [0], [0], [1], [0, 0, 1, 1], [], []>} : vector<200x150xbf16>, vector<150x16xbf16>, vector<200x16xf32> -> vector<200x16xf32>
    %15 = arith.maximumf %11, %14 : vector<200x16xf32>
    %c0_13 = arith.constant 0 : index
    %c0_14 = arith.constant 0 : index
    %16 = vector.load %arg3[%c0_13, %c0_14] : memref<1x16xf32, #tpu.memory_space<vmem>>, vector<1x16xf32>
    %17 = vector.broadcast %16 : vector<1x16xf32> to vector<200x16xf32>
    %18 = arith.addf %15, %17 : vector<200x16xf32>
    %cst_15 = arith.constant 0.000000e+00 : f32
    %19 = vector.broadcast %cst_15 : f32 to vector<200x16xf32>
    %20 = arith.maximumf %18, %19 : vector<200x16xf32>
    %21 = arith.truncf %20 : vector<200x16xf32> to vector<200x16xbf16>
    %c0_16 = arith.constant 0 : index
    %c0_17 = arith.constant 0 : index
    %22 = vector.load %arg4[%c0_16, %c0_17] : memref<200x16xbf16, #tpu.memory_space<vmem>>, vector<200x16xbf16>
    tpu.vector_store %arg4[%c0_16, %c0_17], %21 {strides = array<i32>} : memref<200x16xbf16, #tpu.memory_space<vmem>>, vector<200x16xbf16>,
    return
  }
  func.func @transform_0(%arg0: i32) -> (i32, i32, i32) {
    %c0_i32 = arith.constant 0 : i32
    %c0_i32_0 = arith.constant 0 : i32
    %c0_i32_1 = arith.constant 0 : i32
    return %c0_i32, %arg0, %c0_i32_0 : i32, i32, i32
  }
  func.func @transform_1(%arg0: i32) -> (i32, i32) {
    %c0_i32 = arith.constant 0 : i32
    %c0_i32_0 = arith.constant 0 : i32
    %c0_i32_1 = arith.constant 0 : i32
    return %c0_i32, %c0_i32_0 : i32, i32
  }
  func.func @transform_2(%arg0: i32) -> (i32, i32) {
    %c0_i32 = arith.constant 0 : i32
    %c0_i32_0 = arith.constant 0 : i32
    %c0_i32_1 = arith.constant 0 : i32
    return %c0_i32, %c0_i32_0 : i32, i32
  }
  func.func @transform_3(%arg0: i32) -> (i32, i32) {
    %c0_i32 = arith.constant 0 : i32
    %c0_i32_0 = arith.constant 0 : i32
    return %arg0, %c0_i32 : i32, i32
  }
}

module attributes {stable_mosaic.version = 11 : i64} {
  func.func @tail_kernel(%arg0: i32, %arg1: memref<8x400xbf16, #tpu.memory_space<vmem>>, %arg2: memref<400x128xbf16, #tpu.memory_space<vmem>>, %arg3: memref<1x128xf32, #tpu.memory_space<vmem>>, %arg4: memref<128x128xbf16, #tpu.memory_space<vmem>>, %arg5: memref<1x128xf32, #tpu.memory_space<vmem>>, %arg6: memref<128x10xbf16, #tpu.memory_space<vmem>>, %arg7: memref<1x10xf32, #tpu.memory_space<vmem>>, %arg8: memref<8x10xf32, #tpu.memory_space<vmem>>) attributes {dimension_semantics = [#tpu.dimension_semantics<parallel>], iteration_bounds = array<i64: 1>, scalar_prefetch = 0 : i64, scratch_operands = 0 : i64, tpu.core_type = #tpu.core_type<tc>, window_params = [{transform_indices = @transform_0, window_bounds = array<i64: 8, 400>}, {pipeline_mode = #tpu.pipeline_mode<synchronous>, transform_indices = @transform_1, window_bounds = array<i64: 400, 128>}, {pipeline_mode = #tpu.pipeline_mode<synchronous>, transform_indices = @transform_2, window_bounds = array<i64: 1, 128>}, {pipeline_mode = #tpu.pipeline_mode<synchronous>, transform_indices = @transform_3, window_bounds = array<i64: 128, 128>}, {pipeline_mode = #tpu.pipeline_mode<synchronous>, transform_indices = @transform_4, window_bounds = array<i64: 1, 128>}, {pipeline_mode = #tpu.pipeline_mode<synchronous>, transform_indices = @transform_5, window_bounds = array<i64: 128, 10>}, {pipeline_mode = #tpu.pipeline_mode<synchronous>, transform_indices = @transform_6, window_bounds = array<i64: 1, 10>}, {transform_indices = @transform_7, window_bounds = array<i64: 8, 10>}]} {
    %c0 = arith.constant 0 : index
    %c0_0 = arith.constant 0 : index
    %0 = vector.load %arg1[%c0, %c0_0] : memref<8x400xbf16, #tpu.memory_space<vmem>>, vector<8x400xbf16>
    %c0_1 = arith.constant 0 : index
    %c0_2 = arith.constant 0 : index
    %1 = vector.load %arg2[%c0_1, %c0_2] : memref<400x128xbf16, #tpu.memory_space<vmem>>, vector<400x128xbf16>
    %cst = arith.constant dense<0.000000e+00> : vector<8x128xf32>
    %2 = tpu.matmul %0, %1, %cst {dimension_numbers = #tpu.dot_dimension_numbers<[1], [0], [0], [1], [0, 0, 1, 1], [], []>} : vector<8x400xbf16>, vector<400x128xbf16>, vector<8x128xf32> -> vector<8x128xf32>
    %c0_3 = arith.constant 0 : index
    %c0_4 = arith.constant 0 : index
    %3 = vector.load %arg3[%c0_3, %c0_4] : memref<1x128xf32, #tpu.memory_space<vmem>>, vector<1x128xf32>
    %4 = vector.broadcast %3 : vector<1x128xf32> to vector<8x128xf32>
    %5 = arith.addf %2, %4 : vector<8x128xf32>
    %cst_5 = arith.constant 0.000000e+00 : f32
    %6 = vector.broadcast %cst_5 : f32 to vector<8x128xf32>
    %7 = arith.maximumf %5, %6 : vector<8x128xf32>
    %8 = arith.truncf %7 : vector<8x128xf32> to vector<8x128xbf16>
    %c0_6 = arith.constant 0 : index
    %c0_7 = arith.constant 0 : index
    %9 = vector.load %arg4[%c0_6, %c0_7] : memref<128x128xbf16, #tpu.memory_space<vmem>>, vector<128x128xbf16>
    %cst_8 = arith.constant dense<0.000000e+00> : vector<8x128xf32>
    %10 = tpu.matmul %8, %9, %cst_8 {dimension_numbers = #tpu.dot_dimension_numbers<[1], [0], [0], [1], [0, 0, 1, 1], [], []>} : vector<8x128xbf16>, vector<128x128xbf16>, vector<8x128xf32> -> vector<8x128xf32>
    %c0_9 = arith.constant 0 : index
    %c0_10 = arith.constant 0 : index
    %11 = vector.load %arg5[%c0_9, %c0_10] : memref<1x128xf32, #tpu.memory_space<vmem>>, vector<1x128xf32>
    %12 = vector.broadcast %11 : vector<1x128xf32> to vector<8x128xf32>
    %13 = arith.addf %10, %12 : vector<8x128xf32>
    %cst_11 = arith.constant 0.000000e+00 : f32
    %14 = vector.broadcast %cst_11 : f32 to vector<8x128xf32>
    %15 = arith.maximumf %13, %14 : vector<8x128xf32>
    %16 = arith.truncf %15 : vector<8x128xf32> to vector<8x128xbf16>
    %c0_12 = arith.constant 0 : index
    %c0_13 = arith.constant 0 : index
    %17 = vector.load %arg6[%c0_12, %c0_13] : memref<128x10xbf16, #tpu.memory_space<vmem>>, vector<128x10xbf16>
    %cst_14 = arith.constant dense<0.000000e+00> : vector<8x10xf32>
    %18 = tpu.matmul %16, %17, %cst_14 {dimension_numbers = #tpu.dot_dimension_numbers<[1], [0], [0], [1], [0, 0, 1, 1], [], []>} : vector<8x128xbf16>, vector<128x10xbf16>, vector<8x10xf32> -> vector<8x10xf32>
    %c0_15 = arith.constant 0 : index
    %c0_16 = arith.constant 0 : index
    %19 = vector.load %arg7[%c0_15, %c0_16] : memref<1x10xf32, #tpu.memory_space<vmem>>, vector<1x10xf32>
    %20 = vector.broadcast %19 : vector<1x10xf32> to vector<8x10xf32>
    %21 = arith.addf %18, %20 : vector<8x10xf32>
    %cst_17 = arith.constant dense<0xFF800000> : vector<8xf32>
    %22 = vector.multi_reduction <maximumf>, %21, %cst_17 [1] : vector<8x10xf32> to vector<8xf32>
    %23 = vector.shape_cast %22 : vector<8xf32> to vector<8x1xf32>
    %24 = vector.broadcast %23 : vector<8x1xf32> to vector<8x10xf32>
    %25 = arith.subf %21, %24 : vector<8x10xf32>
    %26 = math.exp %25 : vector<8x10xf32>
    %cst_18 = arith.constant dense<0.000000e+00> : vector<8xf32>
    %27 = vector.multi_reduction <add>, %26, %cst_18 [1] : vector<8x10xf32> to vector<8xf32>
    %28 = vector.shape_cast %27 : vector<8xf32> to vector<8x1xf32>
    %29 = math.log %28 : vector<8x1xf32>
    %30 = vector.broadcast %29 : vector<8x1xf32> to vector<8x10xf32>
    %31 = arith.subf %25, %30 : vector<8x10xf32>
    %c0_19 = arith.constant 0 : index
    %c0_20 = arith.constant 0 : index
    %32 = vector.load %arg8[%c0_19, %c0_20] : memref<8x10xf32, #tpu.memory_space<vmem>>, vector<8x10xf32>
    tpu.vector_store %arg8[%c0_19, %c0_20], %31 {strides = array<i32>} : memref<8x10xf32, #tpu.memory_space<vmem>>, vector<8x10xf32>,
    return
  }
  func.func @transform_0(%arg0: i32) -> (i32, i32) {
    %c0_i32 = arith.constant 0 : i32
    %c0_i32_0 = arith.constant 0 : i32
    return %arg0, %c0_i32 : i32, i32
  }
  func.func @transform_1(%arg0: i32) -> (i32, i32) {
    %c0_i32 = arith.constant 0 : i32
    %c0_i32_0 = arith.constant 0 : i32
    %c0_i32_1 = arith.constant 0 : i32
    return %c0_i32, %c0_i32_0 : i32, i32
  }
  func.func @transform_2(%arg0: i32) -> (i32, i32) {
    %c0_i32 = arith.constant 0 : i32
    %c0_i32_0 = arith.constant 0 : i32
    %c0_i32_1 = arith.constant 0 : i32
    return %c0_i32, %c0_i32_0 : i32, i32
  }
  func.func @transform_3(%arg0: i32) -> (i32, i32) {
    %c0_i32 = arith.constant 0 : i32
    %c0_i32_0 = arith.constant 0 : i32
    %c0_i32_1 = arith.constant 0 : i32
    return %c0_i32, %c0_i32_0 : i32, i32
  }
  func.func @transform_4(%arg0: i32) -> (i32, i32) {
    %c0_i32 = arith.constant 0 : i32
    %c0_i32_0 = arith.constant 0 : i32
    %c0_i32_1 = arith.constant 0 : i32
    return %c0_i32, %c0_i32_0 : i32, i32
  }
  func.func @transform_5(%arg0: i32) -> (i32, i32) {
    %c0_i32 = arith.constant 0 : i32
    %c0_i32_0 = arith.constant 0 : i32
    %c0_i32_1 = arith.constant 0 : i32
    return %c0_i32, %c0_i32_0 : i32, i32
  }
  func.func @transform_6(%arg0: i32) -> (i32, i32) {
    %c0_i32 = arith.constant 0 : i32
    %c0_i32_0 = arith.constant 0 : i32
    %c0_i32_1 = arith.constant 0 : i32
    return %c0_i32, %c0_i32_0 : i32, i32
  }
  func.func @transform_7(%arg0: i32) -> (i32, i32) {
    %c0_i32 = arith.constant 0 : i32
    %c0_i32_0 = arith.constant 0 : i32
    return %arg0, %c0_i32 : i32, i32
  }
}

</mosaic_0001>

<llo_original>
// kernel: lenet5_cifar_forward.3
$region0: #{lenet5_cifar_forward.3}
  #allocation0 [shape = 'u32[]', space=smem, size = 0x4, offset = 0x4, fixed_abs, tag = 'smem constant byte address 0x4 - core index']
  #allocation1 [shape = 'u32[72,128]{1,0:T(1,128)}', space=vmem, size = 0x9000, scoped, tag = 'internal scratch']
  %s0 = inlined_call_operand.vmem [shape: bf16[4,1568,75], index: 0, kind: input, shape index: {}]
  %s1 = inlined_call_operand.vmem [shape: bf16[75,6], index: 1, kind: input, shape index: {}]
  %s2 = inlined_call_operand.vmem [shape: f32[1,6], index: 2, kind: input, shape index: {}]
  %s3 = inlined_call_operand.vmem [shape: bf16[1568,6], index: 3, kind: output, shape index: {}]
  %s4 = sld [smem:[#allocation0]]
  $region22: #{lenet5_cifar_forward.3} parent=0
    _
  %s6 = ssub.s32 1, %s4
  %s7 = scalar_select 0, %s6, %s4
  // Predicated region
  $region2: #{lenet5_cifar_forward.3} parent=0 // pred_check
    _
  $region3: #{lenet5_cifar_forward.3} parent=0 // pred_check_branch
    %9 = sbr.rel (0) target = $region5
  $region4: #{lenet5_cifar_forward.3} parent=0 // pred_region
    _
  $region5: #{lenet5_cifar_forward.3} parent=0 // pred_fallthru
    _
  // Predicated region
  $region6: #{lenet5_cifar_forward.3} parent=0 // pred_check
    _
  $region7: #{lenet5_cifar_forward.3} parent=0 // pred_check_branch
    %11 = sbr.rel (0) target = $region9
  $region8: #{lenet5_cifar_forward.3} parent=0 // pred_region
    _
  $region9: #{lenet5_cifar_forward.3} parent=0 // pred_fallthru
    _
  // Predicated region
  $region10: #{lenet5_cifar_forward.3} parent=0 // pred_check
    _
  $region11: #{lenet5_cifar_forward.3} parent=0 // pred_check_branch
    %13 = sbr.rel (0) target = $region13
  $region12: #{lenet5_cifar_forward.3} parent=0 // pred_region
    _
  $region13: #{lenet5_cifar_forward.3} parent=0 // pred_fallthru
    _
  %v15 = vld [vmem:[%s1] sm:$0xf]
  %v16 = vld [vmem:[%s1 + $0x4] sm:$0xf]
  %v17 = vld [vmem:[%s1 + $0x8] sm:$0xf]
  %v18 = vld [vmem:[%s1 + $0xc] sm:$0xf]
  %v19 = vld [vmem:[%s1 + $0x10] sm:$0xf]
  %v20 = vld [vmem:[%s1 + $0x14] sm:$0xf]
  %v21 = vld [vmem:[%s1 + $0x18] sm:$0xf]
  %v22 = vld [vmem:[%s1 + $0x1c] sm:$0xf]
  %v23 = vld [vmem:[%s1 + $0x20] sm:$0xf]
  %v24 = vld [vmem:[%s1 + $0x24] sm:$0x3]
  %v25 = vld [vmem:[%s0] sm:$0xf]
  %v26 = vld [vmem:[%s0 + $0x4] sm:$0xf]
  %v27 = vld [vmem:[%s0 + $0x8] sm:$0xf]
  %v28 = vld [vmem:[%s0 + $0xc] sm:$0xf]
  %v29 = vld [vmem:[%s0 + $0x10] sm:$0xf]
  %v30 = vld [vmem:[%s0 + $0x14] sm:$0xf]
  %v31 = vld [vmem:[%s0 + $0x18] sm:$0xf]
  %v32 = vld [vmem:[%s0 + $0x1c] sm:$0xf]
  %v33 = vld [vmem:[%s0 + $0x20] sm:$0xf]
  %v34 = vld [vmem:[%s0 + $0x24] sm:$0xf]
  %v35 = vld [vmem:[%s0 + $0x28] sm:$0xf]
  %v36 = vld [vmem:[%s0 + $0x2c] sm:$0xf]
  %v37 = vld [vmem:[%s0 + $0x30] sm:$0xf]
  %v38 = vld [vmem:[%s0 + $0x34] sm:$0xf]
  %v39 = vld [vmem:[%s0 + $0x38] sm:$0xf]
  %v40 = vld [vmem:[%s0 + $0x3c] sm:$0xf]
  %v41 = vld [vmem:[%s0 + $0x40] sm:$0xf]
  %v42 = vld [vmem:[%s0 + $0x44] sm:$0xf]
  %v43 = vld [vmem:[%s0 + $0x48] sm:$0xf]
  %v44 = vld [vmem:[%s0 + $0x4c] sm:$0xf]
  %v45 = vld [vmem:[%s0 + $0x50] sm:$0xf]
  %v46 = vld [vmem:[%s0 + $0x54] sm:$0xf]
  %v47 = vld [vmem:[%s0 + $0x58] sm:$0xf]
  %v48 = vld [vmem:[%s0 + $0x5c] sm:$0xf]
  %v49 = vld [vmem:[%s0 + $0x60] sm:$0xf]
  %v50 = vld [vmem:[%s0 + $0x64] sm:$0xf]
  %v51 = vld [vmem:[%s0 + $0x68] sm:$0xf]
  %v52 = vld [vmem:[%s0 + $0x6c] sm:$0xf]
  %v53 = vld [vmem:[%s0 + $0x70] sm:$0xf]
  %v54 = vld [vmem:[%s0 + $0x74] sm:$0xf]
  %v55 = vld [vmem:[%s0 + $0x78] sm:$0xf]
  %v56 = vld [vmem:[%s0 + $0x7c] sm:$0xf]
  %v57 = vld [vmem:[%s0 + $0x80] sm:$0xf]
  %v58 = vld [vmem:[%s0 + $0x84] sm:$0xf]
  %v59 = vld [vmem:[%s0 + $0x88] sm:$0xf]
  %v60 = vld [vmem:[%s0 + $0x8c] sm:$0xf]
  %v61 = vld [vmem:[%s0 + $0x90] sm:$0xf]
  %v62 = vld [vmem:[%s0 + $0x94] sm:$0xf]
  %v63 = vld [vmem:[%s0 + $0x98] sm:$0xf]
  %v64 = vld [vmem:[%s0 + $0x9c] sm:$0xf]
  %v65 = vld [vmem:[%s0 + $0xa0] sm:$0xf]
  %v66 = vld [vmem:[%s0 + $0xa4] sm:$0xf]
  %v67 = vld [vmem:[%s0 + $0xa8] sm:$0xf]
  %v68 = vld [vmem:[%s0 + $0xac] sm:$0xf]
  %v69 = vld [vmem:[%s0 + $0xb0] sm:$0xf]
  %v70 = vld [vmem:[%s0 + $0xb4] sm:$0xf]
  %v71 = vld [vmem:[%s0 + $0xb8] sm:$0xf]
  %v72 = vld [vmem:[%s0 + $0xbc] sm:$0xf]
  %v73 = vld [vmem:[%s0 + $0xc0] sm:$0xf]
  %v74 = vld [vmem:[%s0 + $0xc4] sm:$0xf]
  %v75 = vld [vmem:[%s0 + $0xc8] sm:$0xf]
  %v76 = vld [vmem:[%s0 + $0xcc] sm:$0xf]
  %v77 = vld [vmem:[%s0 + $0xd0] sm:$0xf]
  %v78 = vld [vmem:[%s0 + $0xd4] sm:$0xf]
  %v79 = vld [vmem:[%s0 + $0xd8] sm:$0xf]
  %v80 = vld [vmem:[%s0 + $0xdc] sm:$0xf]
  %v81 = vld [vmem:[%s0 + $0xe0] sm:$0xf]
  %v82 = vld [vmem:[%s0 + $0xe4] sm:$0xf]
  %v83 = vld [vmem:[%s0 + $0xe8] sm:$0xf]
  %v84 = vld [vmem:[%s0 + $0xec] sm:$0xf]
  %v85 = vld [vmem:[%s0 + $0xf0] sm:$0xf]
  %v86 = vld [vmem:[%s0 + $0xf4] sm:$0xf]
  %v87 = vld [vmem:[%s0 + $0xf8] sm:$0xf]
  %v88 = vld [vmem:[%s0 + $0xfc] sm:$0xf]
  %v89 = vld [vmem:[%s0 + $0x100] sm:$0xf]
  %v90 = vld [vmem:[%s0 + $0x104] sm:$0xf]
  %v91 = vld [vmem:[%s0 + $0x108] sm:$0xf]
  %v92 = vld [vmem:[%s0 + $0x10c] sm:$0xf]
  %v93 = vld [vmem:[%s0 + $0x110] sm:$0xf]
  %v94 = vld [vmem:[%s0 + $0x114] sm:$0xf]
  %v95 = vld [vmem:[%s0 + $0x118] sm:$0xf]
  %v96 = vld [vmem:[%s0 + $0x11c] sm:$0xf]
  %v97 = vld [vmem:[%s0 + $0x120] sm:$0xf]
  %v98 = vld [vmem:[%s0 + $0x124] sm:$0xf]
  %v99 = vld [vmem:[%s0 + $0x128] sm:$0xf]
  %v100 = vld [vmem:[%s0 + $0x12c] sm:$0xf]
  %v101 = vld [vmem:[%s0 + $0x130] sm:$0xf]
  %v102 = vld [vmem:[%s0 + $0x134] sm:$0xf]
  %v103 = vld [vmem:[%s0 + $0x138] sm:$0xf]
  %v104 = vld [vmem:[%s0 + $0x13c] sm:$0xf]
  %v105 = vld [vmem:[%s0 + $0x140] sm:$0xf]
  %v106 = vld [vmem:[%s0 + $0x144] sm:$0xf]
  %v107 = vld [vmem:[%s0 + $0x148] sm:$0xf]
  %v108 = vld [vmem:[%s0 + $0x14c] sm:$0xf]
  %v109 = vld [vmem:[%s0 + $0x150] sm:$0xf]
  %v110 = vld [vmem:[%s0 + $0x154] sm:$0xf]
  %v111 = vld [vmem:[%s0 + $0x158] sm:$0xf]
  %v112 = vld [vmem:[%s0 + $0x15c] sm:$0xf]
  %v113 = vld [vmem:[%s0 + $0x160] sm:$0xf]
  %v114 = vld [vmem:[%s0 + $0x164] sm:$0xf]
  %v115 = vld [vmem:[%s0 + $0x168] sm:$0xf]
  %v116 = vld [vmem:[%s0 + $0x16c] sm:$0xf]
  %v117 = vld [vmem:[%s0 + $0x170] sm:$0xf]
  %v118 = vld [vmem:[%s0 + $0x174] sm:$0xf]
  %v119 = vld [vmem:[%s0 + $0x178] sm:$0xf]
  %v120 = vld [vmem:[%s0 + $0x17c] sm:$0xf]
  %v121 = vld [vmem:[%s0 + $0x180] sm:$0xf]
  %v122 = vld [vmem:[%s0 + $0x184] sm:$0xf]
  %v123 = vld [vmem:[%s0 + $0x188] sm:$0xf]
  %v124 = vld [vmem:[%s0 + $0x18c] sm:$0xf]
  %v125 = vld [vmem:[%s0 + $0x190] sm:$0xf]
  %v126 = vld [vmem:[%s0 + $0x194] sm:$0xf]
  %v127 = vld [vmem:[%s0 + $0x198] sm:$0xf]
  %v128 = vld [vmem:[%s0 + $0x19c] sm:$0xf]
  %v129 = vld [vmem:[%s0 + $0x1a0] sm:$0xf]
  %v130 = vld [vmem:[%s0 + $0x1a4] sm:$0xf]
  %v131 = vld [vmem:[%s0 + $0x1a8] sm:$0xf]
  %v132 = vld [vmem:[%s0 + $0x1ac] sm:$0xf]
  %v133 = vld [vmem:[%s0 + $0x1b0] sm:$0xf]
  %v134 = vld [vmem:[%s0 + $0x1b4] sm:$0xf]
  %v135 = vld [vmem:[%s0 + $0x1b8] sm:$0xf]
  %v136 = vld [vmem:[%s0 + $0x1bc] sm:$0xf]
  %v137 = vld [vmem:[%s0 + $0x1c0] sm:$0xf]
  %v138 = vld [vmem:[%s0 + $0x1c4] sm:$0xf]
  %v139 = vld [vmem:[%s0 + $0x1c8] sm:$0xf]
  %v140 = vld [vmem:[%s0 + $0x1cc] sm:$0xf]
  %v141 = vld [vmem:[%s0 + $0x1d0] sm:$0xf]
  %v142 = vld [vmem:[%s0 + $0x1d4] sm:$0xf]
  %v143 = vld [vmem:[%s0 + $0x1d8] sm:$0xf]
  %v144 = vld [vmem:[%s0 + $0x1dc] sm:$0xf]
  %v145 = vld [vmem:[%s0 + $0x1e0] sm:$0xf]
  %v146 = vld [vmem:[%s0 + $0x1e4] sm:$0xf]
  %v147 = vld [vmem:[%s0 + $0x1e8] sm:$0xf]
  %v148 = vld [vmem:[%s0 + $0x1ec] sm:$0xf]
  %v149 = vld [vmem:[%s0 + $0x1f0] sm:$0xf]
  %v150 = vld [vmem:[%s0 + $0x1f4] sm:$0xf]
  %v151 = vld [vmem:[%s0 + $0x1f8] sm:$0xf]
  %v152 = vld [vmem:[%s0 + $0x1fc] sm:$0xf]
  %v153 = vld [vmem:[%s0 + $0x200] sm:$0xf]
  %v154 = vld [vmem:[%s0 + $0x204] sm:$0xf]
  %v155 = vld [vmem:[%s0 + $0x208] sm:$0xf]
  %v156 = vld [vmem:[%s0 + $0x20c] sm:$0xf]
  %v157 = vld [vmem:[%s0 + $0x210] sm:$0xf]
  %v158 = vld [vmem:[%s0 + $0x214] sm:$0xf]
  %v159 = vld [vmem:[%s0 + $0x218] sm:$0xf]
  %v160 = vld [vmem:[%s0 + $0x21c] sm:$0xf]
  %v161 = vld [vmem:[%s0 + $0x220] sm:$0xf]
  %v162 = vld [vmem:[%s0 + $0x224] sm:$0xf]
  %v163 = vld [vmem:[%s0 + $0x228] sm:$0xf]
  %v164 = vld [vmem:[%s0 + $0x22c] sm:$0xf]
  %v165 = vld [vmem:[%s0 + $0x230] sm:$0xf]
  %v166 = vld [vmem:[%s0 + $0x234] sm:$0xf]
  %v167 = vld [vmem:[%s0 + $0x238] sm:$0xf]
  %v168 = vld [vmem:[%s0 + $0x23c] sm:$0xf]
  %v169 = vld [vmem:[%s0 + $0x240] sm:$0xf]
  %v170 = vld [vmem:[%s0 + $0x244] sm:$0xf]
  %v171 = vld [vmem:[%s0 + $0x248] sm:$0xf]
  %v172 = vld [vmem:[%s0 + $0x24c] sm:$0xf]
  %v173 = vld [vmem:[%s0 + $0x250] sm:$0xf]
  %v174 = vld [vmem:[%s0 + $0x254] sm:$0xf]
  %v175 = vld [vmem:[%s0 + $0x258] sm:$0xf]
  %v176 = vld [vmem:[%s0 + $0x25c] sm:$0xf]
  %v177 = vld [vmem:[%s0 + $0x260] sm:$0xf]
  %v178 = vld [vmem:[%s0 + $0x264] sm:$0xf]
  %v179 = vld [vmem:[%s0 + $0x268] sm:$0xf]
  %v180 = vld [vmem:[%s0 + $0x26c] sm:$0xf]
  %v181 = vld [vmem:[%s0 + $0x270] sm:$0xf]
  %v182 = vld [vmem:[%s0 + $0x274] sm:$0xf]
  %v183 = vld [vmem:[%s0 + $0x278] sm:$0xf]
  %v184 = vld [vmem:[%s0 + $0x27c] sm:$0xf]
  %v185 = vld [vmem:[%s0 + $0x280] sm:$0xf]
  %v186 = vld [vmem:[%s0 + $0x284] sm:$0xf]
  %v187 = vld [vmem:[%s0 + $0x288] sm:$0xf]
  %v188 = vld [vmem:[%s0 + $0x28c] sm:$0xf]
  %v189 = vld [vmem:[%s0 + $0x290] sm:$0xf]
  %v190 = vld [vmem:[%s0 + $0x294] sm:$0xf]
  %v191 = vld [vmem:[%s0 + $0x298] sm:$0xf]
  %v192 = vld [vmem:[%s0 + $0x29c] sm:$0xf]
  %v193 = vld [vmem:[%s0 + $0x2a0] sm:$0xf]
  %v194 = vld [vmem:[%s0 + $0x2a4] sm:$0xf]
  %v195 = vld [vmem:[%s0 + $0x2a8] sm:$0xf]
  %v196 = vld [vmem:[%s0 + $0x2ac] sm:$0xf]
  %v197 = vld [vmem:[%s0 + $0x2b0] sm:$0xf]
  %v198 = vld [vmem:[%s0 + $0x2b4] sm:$0xf]
  %v199 = vld [vmem:[%s0 + $0x2b8] sm:$0xf]
  %v200 = vld [vmem:[%s0 + $0x2bc] sm:$0xf]
  %v201 = vld [vmem:[%s0 + $0x2c0] sm:$0xf]
  %v202 = vld [vmem:[%s0 + $0x2c4] sm:$0xf]
  %v203 = vld [vmem:[%s0 + $0x2c8] sm:$0xf]
  %v204 = vld [vmem:[%s0 + $0x2cc] sm:$0xf]
  %v205 = vld [vmem:[%s0 + $0x2d0] sm:$0xf]
  %v206 = vld [vmem:[%s0 + $0x2d4] sm:$0xf]
  %v207 = vld [vmem:[%s0 + $0x2d8] sm:$0xf]
  %v208 = vld [vmem:[%s0 + $0x2dc] sm:$0xf]
  %v209 = vld [vmem:[%s0 + $0x2e0] sm:$0xf]
  %v210 = vld [vmem:[%s0 + $0x2e4] sm:$0xf]
  %v211 = vld [vmem:[%s0 + $0x2e8] sm:$0xf]
  %v212 = vld [vmem:[%s0 + $0x2ec] sm:$0xf]
  %v213 = vld [vmem:[%s0 + $0x2f0] sm:$0xf]
  %v214 = vld [vmem:[%s0 + $0x2f4] sm:$0xf]
  %v215 = vld [vmem:[%s0 + $0x2f8] sm:$0xf]
  %v216 = vld [vmem:[%s0 + $0x2fc] sm:$0xf]
  %v217 = vld [vmem:[%s0 + $0x300] sm:$0xf]
  %v218 = vld [vmem:[%s0 + $0x304] sm:$0xf]
  %v219 = vld [vmem:[%s0 + $0x308] sm:$0xf]
  %v220 = vld [vmem:[%s0 + $0x30c] sm:$0xf]
  %v417 = vunpack.c.l.b16 %v25
  %v418 = vunpack.c.l.b16 %v26
  %v419 = vunpack.c.l.b16 %v27
  %v420 = vunpack.c.l.b16 %v28
  %v421 = vunpack.c.l.b16 %v29
  %v422 = vunpack.c.l.b16 %v30
  %v423 = vunpack.c.l.b16 %v31
  %v424 = vunpack.c.l.b16 %v32
  %v425 = vunpack.c.l.b16 %v33
  %v426 = vunpack.c.l.b16 %v34
  %v427 = vunpack.c.l.b16 %v35
  %v428 = vunpack.c.l.b16 %v36
  %v429 = vunpack.c.l.b16 %v37
  %v430 = vunpack.c.l.b16 %v38
  %v431 = vunpack.c.l.b16 %v39
  %v432 = vunpack.c.l.b16 %v40
  %v433 = vunpack.c.l.b16 %v41
  %v434 = vunpack.c.l.b16 %v42
  %v435 = vunpack.c.l.b16 %v43
  %v436 = vunpack.c.l.b16 %v44
  %v437 = vunpack.c.l.b16 %v45
  %v438 = vunpack.c.l.b16 %v46
  %v439 = vunpack.c.l.b16 %v47
  %v440 = vunpack.c.l.b16 %v48
  %v441 = vunpack.c.l.b16 %v49
  %v442 = vunpack.c.l.b16 %v50
  %v443 = vunpack.c.l.b16 %v51
  %v444 = vunpack.c.l.b16 %v52
  %v445 = vunpack.c.l.b16 %v53
  %v446 = vunpack.c.l.b16 %v54
  %v447 = vunpack.c.l.b16 %v55
  %v448 = vunpack.c.l.b16 %v56
  %v449 = vunpack.c.l.b16 %v57
  %v450 = vunpack.c.l.b16 %v58
  %v451 = vunpack.c.l.b16 %v59
  %v452 = vunpack.c.l.b16 %v60
  %v453 = vunpack.c.l.b16 %v61
  %v454 = vunpack.c.l.b16 %v62
  %v455 = vunpack.c.l.b16 %v63
  %v456 = vunpack.c.l.b16 %v64
  %v457 = vunpack.c.l.b16 %v65
  %v458 = vunpack.c.l.b16 %v66
  %v459 = vunpack.c.l.b16 %v67
  %v460 = vunpack.c.l.b16 %v68
  %v461 = vunpack.c.l.b16 %v69
  %v462 = vunpack.c.l.b16 %v70
  %v463 = vunpack.c.l.b16 %v71
  %v464 = vunpack.c.l.b16 %v72
  %v465 = vunpack.c.l.b16 %v73
  %v466 = vunpack.c.l.b16 %v74
  %v467 = vunpack.c.l.b16 %v75
  %v468 = vunpack.c.l.b16 %v76
  %v469 = vunpack.c.l.b16 %v77
  %v470 = vunpack.c.l.b16 %v78
  %v471 = vunpack.c.l.b16 %v79
  %v472 = vunpack.c.l.b16 %v80
  %v473 = vunpack.c.l.b16 %v81
  %v474 = vunpack.c.l.b16 %v82
  %v475 = vunpack.c.l.b16 %v83
  %v476 = vunpack.c.l.b16 %v84
  %v477 = vunpack.c.l.b16 %v85
  %v478 = vunpack.c.l.b16 %v86
  %v479 = vunpack.c.l.b16 %v87
  %v480 = vunpack.c.l.b16 %v88
  %v481 = vunpack.c.l.b16 %v89
  %v482 = vunpack.c.l.b16 %v90
  %v483 = vunpack.c.l.b16 %v91
  %v484 = vunpack.c.l.b16 %v92
  %v485 = vunpack.c.l.b16 %v93
  %v486 = vunpack.c.l.b16 %v94
  %v487 = vunpack.c.l.b16 %v95
  %v488 = vunpack.c.l.b16 %v96
  %v489 = vunpack.c.l.b16 %v97
  %v490 = vunpack.c.l.b16 %v98
  %v491 = vunpack.c.l.b16 %v99
  %v492 = vunpack.c.l.b16 %v100
  %v493 = vunpack.c.l.b16 %v101
  %v494 = vunpack.c.l.b16 %v102
  %v495 = vunpack.c.l.b16 %v103
  %v496 = vunpack.c.l.b16 %v104
  %v497 = vunpack.c.l.b16 %v105
  %v498 = vunpack.c.l.b16 %v106
  %v499 = vunpack.c.l.b16 %v107
  %v500 = vunpack.c.l.b16 %v108
  %v501 = vunpack.c.l.b16 %v109
  %v502 = vunpack.c.l.b16 %v110
  %v503 = vunpack.c.l.b16 %v111
  %v504 = vunpack.c.l.b16 %v112
  %v505 = vunpack.c.l.b16 %v113
  %v506 = vunpack.c.l.b16 %v114
  %v507 = vunpack.c.l.b16 %v115
  %v508 = vunpack.c.l.b16 %v116
  %v509 = vunpack.c.l.b16 %v117
  %v510 = vunpack.c.l.b16 %v118
  %v511 = vunpack.c.l.b16 %v119
  %v512 = vunpack.c.l.b16 %v120
  %v513 = vunpack.c.l.b16 %v121
  %v514 = vunpack.c.l.b16 %v122
  %v515 = vunpack.c.l.b16 %v123
  %v516 = vunpack.c.l.b16 %v124
  %v517 = vunpack.c.l.b16 %v125
  %v518 = vunpack.c.l.b16 %v126
  %v519 = vunpack.c.l.b16 %v127
  %v520 = vunpack.c.l.b16 %v128
  %v521 = vunpack.c.l.b16 %v129
  %v522 = vunpack.c.l.b16 %v130
  %v523 = vunpack.c.l.b16 %v131
  %v524 = vunpack.c.l.b16 %v132
  %v525 = vunpack.c.l.b16 %v133
  %v526 = vunpack.c.l.b16 %v134
  %v527 = vunpack.c.l.b16 %v135
  %v528 = vunpack.c.l.b16 %v136
  %v529 = vunpack.c.l.b16 %v137
  %v530 = vunpack.c.l.b16 %v138
  %v531 = vunpack.c.l.b16 %v139
  %v532 = vunpack.c.l.b16 %v140
  %v533 = vunpack.c.l.b16 %v141
  %v534 = vunpack.c.l.b16 %v142
  %v535 = vunpack.c.l.b16 %v143
  %v536 = vunpack.c.l.b16 %v144
  %v537 = vunpack.c.l.b16 %v145
  %v538 = vunpack.c.l.b16 %v146
  %v539 = vunpack.c.l.b16 %v147
  %v540 = vunpack.c.l.b16 %v148
  %v541 = vunpack.c.l.b16 %v149
  %v542 = vunpack.c.l.b16 %v150
  %v543 = vunpack.c.l.b16 %v151
  %v544 = vunpack.c.l.b16 %v152
  %v545 = vunpack.c.l.b16 %v153
  %v546 = vunpack.c.l.b16 %v154
  %v547 = vunpack.c.l.b16 %v155
  %v548 = vunpack.c.l.b16 %v156
  %v549 = vunpack.c.l.b16 %v157
  %v550 = vunpack.c.l.b16 %v158
  %v551 = vunpack.c.l.b16 %v159
  %v552 = vunpack.c.l.b16 %v160
  %v553 = vunpack.c.l.b16 %v161
  %v554 = vunpack.c.l.b16 %v162
  %v555 = vunpack.c.l.b16 %v163
  %v556 = vunpack.c.l.b16 %v164
  %v557 = vunpack.c.l.b16 %v165
  %v558 = vunpack.c.l.b16 %v166
  %v559 = vunpack.c.l.b16 %v167
  %v560 = vunpack.c.l.b16 %v168
  %v561 = vunpack.c.l.b16 %v169
  %v562 = vunpack.c.l.b16 %v170
  %v563 = vunpack.c.l.b16 %v171
  %v564 = vunpack.c.l.b16 %v172
  %v565 = vunpack.c.l.b16 %v173
  %v566 = vunpack.c.l.b16 %v174
  %v567 = vunpack.c.l.b16 %v175
  %v568 = vunpack.c.l.b16 %v176
  %v569 = vunpack.c.l.b16 %v177
  %v570 = vunpack.c.l.b16 %v178
  %v571 = vunpack.c.l.b16 %v179
  %v572 = vunpack.c.l.b16 %v180
  %v573 = vunpack.c.l.b16 %v181
  %v574 = vunpack.c.l.b16 %v182
  %v575 = vunpack.c.l.b16 %v183
  %v576 = vunpack.c.l.b16 %v184
  %v577 = vunpack.c.l.b16 %v185
  %v578 = vunpack.c.l.b16 %v186
  %v579 = vunpack.c.l.b16 %v187
  %v580 = vunpack.c.l.b16 %v188
  %v581 = vunpack.c.l.b16 %v189
  %v582 = vunpack.c.l.b16 %v190
  %v583 = vunpack.c.l.b16 %v191
  %v584 = vunpack.c.l.b16 %v192
  %v585 = vunpack.c.l.b16 %v193
  %v586 = vunpack.c.l.b16 %v194
  %v587 = vunpack.c.l.b16 %v195
  %v588 = vunpack.c.l.b16 %v196
  %v589 = vunpack.c.l.b16 %v197
  %v590 = vunpack.c.l.b16 %v198
  %v591 = vunpack.c.l.b16 %v199
  %v592 = vunpack.c.l.b16 %v200
  %v593 = vunpack.c.l.b16 %v201
  %v594 = vunpack.c.l.b16 %v202
  %v595 = vunpack.c.l.b16 %v203
  %v596 = vunpack.c.l.b16 %v204
  %v597 = vunpack.c.l.b16 %v205
  %v598 = vunpack.c.l.b16 %v206
  %v599 = vunpack.c.l.b16 %v207
  %v600 = vunpack.c.l.b16 %v208
  %v601 = vunpack.c.l.b16 %v209
  %v602 = vunpack.c.l.b16 %v210
  %v603 = vunpack.c.l.b16 %v211
  %v604 = vunpack.c.l.b16 %v212
  %v605 = vunpack.c.l.b16 %v213
  %v606 = vunpack.c.l.b16 %v214
  %v607 = vunpack.c.l.b16 %v215
  %v608 = vunpack.c.l.b16 %v216
  %v609 = vunpack.c.l.b16 %v217
  %v610 = vunpack.c.l.b16 %v218
  %v611 = vunpack.c.l.b16 %v219
  %v612 = vunpack.c.l.b16 %v220
  %v613 = vpack.c.b16 %v418, %v417
  %v614 = vpack.c.b16 %v420, %v419
  %v615 = vpack.c.b16 %v422, %v421
  %v616 = vpack.c.b16 %v424, %v423
  %v617 = vpack.c.b16 %v426, %v425
  %v618 = vpack.c.b16 %v428, %v427
  %v619 = vpack.c.b16 %v430, %v429
  %v620 = vpack.c.b16 %v432, %v431
  %v621 = vpack.c.b16 %v434, %v433
  %v622 = vpack.c.b16 %v436, %v435
  %v623 = vpack.c.b16 %v438, %v437
  %v624 = vpack.c.b16 %v440, %v439
  %v625 = vpack.c.b16 %v442, %v441
  %v626 = vpack.c.b16 %v444, %v443
  %v627 = vpack.c.b16 %v446, %v445
  %v628 = vpack.c.b16 %v448, %v447
  %v629 = vpack.c.b16 %v450, %v449
  %v630 = vpack.c.b16 %v452, %v451
  %v631 = vpack.c.b16 %v454, %v453
  %v632 = vpack.c.b16 %v456, %v455
  %v633 = vpack.c.b16 %v458, %v457
  %v634 = vpack.c.b16 %v460, %v459
  %v635 = vpack.c.b16 %v462, %v461
  %v636 = vpack.c.b16 %v464, %v463
  %v637 = vpack.c.b16 %v466, %v465
  %v638 = vpack.c.b16 %v468, %v467
  %v639 = vpack.c.b16 %v470, %v469
  %v640 = vpack.c.b16 %v472, %v471
  %v641 = vpack.c.b16 %v474, %v473
  %v642 = vpack.c.b16 %v476, %v475
  %v643 = vpack.c.b16 %v478, %v477
  %v644 = vpack.c.b16 %v480, %v479
  %v645 = vpack.c.b16 %v482, %v481
  %v646 = vpack.c.b16 %v484, %v483
  %v647 = vpack.c.b16 %v486, %v485
  %v648 = vpack.c.b16 %v488, %v487
  %v649 = vpack.c.b16 %v490, %v489
  %v650 = vpack.c.b16 %v492, %v491
  %v651 = vpack.c.b16 %v494, %v493
  %v652 = vpack.c.b16 %v496, %v495
  %v653 = vpack.c.b16 %v498, %v497
  %v654 = vpack.c.b16 %v500, %v499
  %v655 = vpack.c.b16 %v502, %v501
  %v656 = vpack.c.b16 %v504, %v503
  %v657 = vpack.c.b16 %v506, %v505
  %v658 = vpack.c.b16 %v508, %v507
  %v659 = vpack.c.b16 %v510, %v509
  %v660 = vpack.c.b16 %v512, %v511
  %v661 = vpack.c.b16 %v514, %v513
  %v662 = vpack.c.b16 %v516, %v515
  %v663 = vpack.c.b16 %v518, %v517
  %v664 = vpack.c.b16 %v520, %v519
  %v665 = vpack.c.b16 %v522, %v521
  %v666 = vpack.c.b16 %v524, %v523
  %v667 = vpack.c.b16 %v526, %v525
  %v668 = vpack.c.b16 %v528, %v527
  %v669 = vpack.c.b16 %v530, %v529
  %v670 = vpack.c.b16 %v532, %v531
  %v671 = vpack.c.b16 %v534, %v533
  %v672 = vpack.c.b16 %v536, %v535
  %v673 = vpack.c.b16 %v538, %v537
  %v674 = vpack.c.b16 %v540, %v539
  %v675 = vpack.c.b16 %v542, %v541
  %v676 = vpack.c.b16 %v544, %v543
  %v677 = vpack.c.b16 %v546, %v545
  %v678 = vpack.c.b16 %v548, %v547
  %v679 = vpack.c.b16 %v550, %v549
  %v680 = vpack.c.b16 %v552, %v551
  %v681 = vpack.c.b16 %v554, %v553
  %v682 = vpack.c.b16 %v556, %v555
  %v683 = vpack.c.b16 %v558, %v557
  %v684 = vpack.c.b16 %v560, %v559
  %v685 = vpack.c.b16 %v562, %v561
  %v686 = vpack.c.b16 %v564, %v563
  %v687 = vpack.c.b16 %v566, %v565
  %v688 = vpack.c.b16 %v568, %v567
  %v689 = vpack.c.b16 %v570, %v569
  %v690 = vpack.c.b16 %v572, %v571
  %v691 = vpack.c.b16 %v574, %v573
  %v692 = vpack.c.b16 %v576, %v575
  %v693 = vpack.c.b16 %v578, %v577
  %v694 = vpack.c.b16 %v580, %v579
  %v695 = vpack.c.b16 %v582, %v581
  %v696 = vpack.c.b16 %v584, %v583
  %v697 = vpack.c.b16 %v586, %v585
  %v698 = vpack.c.b16 %v588, %v587
  %v699 = vpack.c.b16 %v590, %v589
  %v700 = vpack.c.b16 %v592, %v591
  %v701 = vpack.c.b16 %v594, %v593
  %v702 = vpack.c.b16 %v596, %v595
  %v703 = vpack.c.b16 %v598, %v597
  %v704 = vpack.c.b16 %v600, %v599
  %v705 = vpack.c.b16 %v602, %v601
  %v706 = vpack.c.b16 %v604, %v603
  %v707 = vpack.c.b16 %v606, %v605
  %v708 = vpack.c.b16 %v608, %v607
  %v709 = vpack.c.b16 %v610, %v609
  %v710 = vpack.c.b16 %v612, %v611
  %v721 = vunpack.c.l.b16 %v15
  %v722 = vunpack.c.l.b16 %v16
  %v723 = vunpack.c.l.b16 %v17
  %v724 = vunpack.c.l.b16 %v18
  %v725 = vunpack.c.l.b16 %v19
  %v726 = vunpack.c.l.b16 %v20
  %v727 = vunpack.c.l.b16 %v21
  %v728 = vunpack.c.l.b16 %v22
  %v729 = vunpack.c.l.b16 %v23
  %v730 = vunpack.c.l.b16 %v24
  %v731 = vpack.c.b16 %v722, %v721
  %v732 = vpack.c.b16 %v724, %v723
  %v733 = vpack.c.b16 %v726, %v725
  %v734 = vpack.c.b16 %v728, %v727
  %v735 = vpack.c.b16 %v730, %v729
  %vm740 = vcmask 613376
  %v742 = vsel %vm740, %v613, 0
  %v745 = vsel %vm740, %v614, 0
  %v748 = vsel %vm740, %v615, 0
  %v751 = vsel %vm740, %v616, 0
  %v754 = vsel %vm740, %v617, 0
  %v757 = vsel %vm740, %v618, 0
  %v760 = vsel %vm740, %v619, 0
  %v763 = vsel %vm740, %v620, 0
  %v766 = vsel %vm740, %v621, 0
  %v769 = vsel %vm740, %v622, 0
  %v772 = vsel %vm740, %v623, 0
  %v775 = vsel %vm740, %v624, 0
  %v778 = vsel %vm740, %v625, 0
  %v781 = vsel %vm740, %v626, 0
  %v784 = vsel %vm740, %v627, 0
  %v787 = vsel %vm740, %v628, 0
  %v790 = vsel %vm740, %v629, 0
  %v793 = vsel %vm740, %v630, 0
  %v796 = vsel %vm740, %v631, 0
  %v799 = vsel %vm740, %v632, 0
  %v802 = vsel %vm740, %v633, 0
  %v805 = vsel %vm740, %v634, 0
  %v808 = vsel %vm740, %v635, 0
  %v811 = vsel %vm740, %v636, 0
  %v814 = vsel %vm740, %v637, 0
  %v817 = vsel %vm740, %v638, 0
  %v820 = vsel %vm740, %v639, 0
  %v823 = vsel %vm740, %v640, 0
  %v826 = vsel %vm740, %v641, 0
  %v829 = vsel %vm740, %v642, 0
  %v832 = vsel %vm740, %v643, 0
  %v835 = vsel %vm740, %v644, 0
  %v838 = vsel %vm740, %v645, 0
  %v841 = vsel %vm740, %v646, 0
  %v844 = vsel %vm740, %v647, 0
  %v847 = vsel %vm740, %v648, 0
  %v850 = vsel %vm740, %v649, 0
  %v853 = vsel %vm740, %v650, 0
  %v856 = vsel %vm740, %v651, 0
  %v859 = vsel %vm740, %v652, 0
  %v862 = vsel %vm740, %v653, 0
  %v865 = vsel %vm740, %v654, 0
  %v868 = vsel %vm740, %v655, 0
  %v871 = vsel %vm740, %v656, 0
  %v874 = vsel %vm740, %v657, 0
  %v877 = vsel %vm740, %v658, 0
  %v880 = vsel %vm740, %v659, 0
  %v883 = vsel %vm740, %v660, 0
  %v886 = vsel %vm740, %v661, 0
  %v889 = vsel %vm740, %v662, 0
  %v892 = vsel %vm740, %v663, 0
  %v895 = vsel %vm740, %v664, 0
  %v898 = vsel %vm740, %v665, 0
  %v901 = vsel %vm740, %v666, 0
  %v904 = vsel %vm740, %v667, 0
  %v907 = vsel %vm740, %v668, 0
  %v910 = vsel %vm740, %v669, 0
  %v913 = vsel %vm740, %v670, 0
  %v916 = vsel %vm740, %v671, 0
  %v919 = vsel %vm740, %v672, 0
  %v922 = vsel %vm740, %v673, 0
  %v925 = vsel %vm740, %v674, 0
  %v928 = vsel %vm740, %v675, 0
  %v931 = vsel %vm740, %v676, 0
  %v934 = vsel %vm740, %v677, 0
  %v937 = vsel %vm740, %v678, 0
  %v940 = vsel %vm740, %v679, 0
  %v943 = vsel %vm740, %v680, 0
  %v946 = vsel %vm740, %v681, 0
  %v949 = vsel %vm740, %v682, 0
  %v952 = vsel %vm740, %v683, 0
  %v955 = vsel %vm740, %v684, 0
  %v958 = vsel %vm740, %v685, 0
  %v961 = vsel %vm740, %v686, 0
  %v964 = vsel %vm740, %v687, 0
  %v967 = vsel %vm740, %v688, 0
  %v970 = vsel %vm740, %v689, 0
  %v973 = vsel %vm740, %v690, 0
  %v976 = vsel %vm740, %v691, 0
  %v979 = vsel %vm740, %v692, 0
  %v982 = vsel %vm740, %v693, 0
  %v985 = vsel %vm740, %v694, 0
  %v988 = vsel %vm740, %v695, 0
  %v991 = vsel %vm740, %v696, 0
  %v994 = vsel %vm740, %v697, 0
  %v997 = vsel %vm740, %v698, 0
  %v1000 = vsel %vm740, %v699, 0
  %v1003 = vsel %vm740, %v700, 0
  %v1006 = vsel %vm740, %v701, 0
  %v1009 = vsel %vm740, %v702, 0
  %v1012 = vsel %vm740, %v703, 0
  %v1015 = vsel %vm740, %v704, 0
  %v1018 = vsel %vm740, %v705, 0
  %v1021 = vsel %vm740, %v706, 0
  %v1024 = vsel %vm740, %v707, 0
  %v1027 = vsel %vm740, %v708, 0
  %v1030 = vsel %vm740, %v709, 0
  %v1033 = vsel %vm740, %v710, 0
  %vm1035 = vcmask 1044480
  %vm1036 = vcmask 1045504
  %v1037 = vsel %vm1035, 4294967295, 65535
  %v1038 = vsel %vm1036, %v1037, 0
  %v1040 = vand.u32 %v735, %v1038
  %1042 = vmatpush.bf16.msra.mxu0 0
  %1043 = vmatpush.bf16.msra.mxu0 0
  %1044 = vmatpush.bf16.msra.mxu0 0
  %1045 = vmatpush.bf16.msra.mxu0 %v1040
  %1046 = vmatpush.bf16.msra.mxu0 %v734
  %1047 = vmatpush.bf16.msra.mxu0 %v733
  %1048 = vmatpush.bf16.msra.mxu0 %v732
  %1049 = vmatpush.bf16.msra.mxu0 %v731
  %1050 = vmatmul.bf16.gmra.mxu0 %v742
  %v1051 = vpop.f32.mrf.mxu0
  %v1052 = vadd.f32 0.0, %v1051
  %v1053 = vpop.f32.mrf.mxu0
  %v1054 = vadd.f32 0.0, %v1053
  %1055 = vmatmul.bf16.gmra.mxu0 %v745
  %v1056 = vpop.f32.mrf.mxu0
  %v1057 = vadd.f32 0.0, %v1056
  %v1058 = vpop.f32.mrf.mxu0
  %v1059 = vadd.f32 0.0, %v1058
  %1060 = vmatmul.bf16.gmra.mxu0 %v748
  %v1061 = vpop.f32.mrf.mxu0
  %v1062 = vadd.f32 0.0, %v1061
  %v1063 = vpop.f32.mrf.mxu0
  %v1064 = vadd.f32 0.0, %v1063
  %1065 = vmatmul.bf16.gmra.mxu0 %v751
  %v1066 = vpop.f32.mrf.mxu0
  %v1067 = vadd.f32 0.0, %v1066
  %v1068 = vpop.f32.mrf.mxu0
  %v1069 = vadd.f32 0.0, %v1068
  %1070 = vmatmul.bf16.gmra.mxu0 %v754
  %v1071 = vpop.f32.mrf.mxu0
  %v1072 = vadd.f32 0.0, %v1071
  %v1073 = vpop.f32.mrf.mxu0
  %v1074 = vadd.f32 0.0, %v1073
  %1075 = vmatmul.bf16.gmra.mxu0 %v757
  %v1076 = vpop.f32.mrf.mxu0
  %v1077 = vadd.f32 0.0, %v1076
  %v1078 = vpop.f32.mrf.mxu0
  %v1079 = vadd.f32 0.0, %v1078
  %1080 = vmatmul.bf16.gmra.mxu0 %v760
  %v1081 = vpop.f32.mrf.mxu0
  %v1082 = vadd.f32 0.0, %v1081
  %v1083 = vpop.f32.mrf.mxu0
  %v1084 = vadd.f32 0.0, %v1083
  %1085 = vmatmul.bf16.gmra.mxu0 %v763
  %v1086 = vpop.f32.mrf.mxu0
  %v1087 = vadd.f32 0.0, %v1086
  %v1088 = vpop.f32.mrf.mxu0
  %v1089 = vadd.f32 0.0, %v1088
  %1090 = vmatmul.bf16.gmra.mxu0 %v766
  %v1091 = vpop.f32.mrf.mxu0
  %v1092 = vadd.f32 0.0, %v1091
  %v1093 = vpop.f32.mrf.mxu0
  %v1094 = vadd.f32 0.0, %v1093
  %1095 = vmatmul.bf16.gmra.mxu0 %v769
  %v1096 = vpop.f32.mrf.mxu0
  %v1097 = vadd.f32 0.0, %v1096
  %v1098 = vpop.f32.mrf.mxu0
  %v1099 = vadd.f32 0.0, %v1098
  %1100 = vmatmul.bf16.gmra.mxu0 %v772
  %v1101 = vpop.f32.mrf.mxu0
  %v1102 = vadd.f32 0.0, %v1101
  %v1103 = vpop.f32.mrf.mxu0
  %v1104 = vadd.f32 0.0, %v1103
  %1105 = vmatmul.bf16.gmra.mxu0 %v775
  %v1106 = vpop.f32.mrf.mxu0
  %v1107 = vadd.f32 0.0, %v1106
  %v1108 = vpop.f32.mrf.mxu0
  %v1109 = vadd.f32 0.0, %v1108
  %1110 = vmatmul.bf16.gmra.mxu0 %v778
  %v1111 = vpop.f32.mrf.mxu0
  %v1112 = vadd.f32 0.0, %v1111
  %v1113 = vpop.f32.mrf.mxu0
  %v1114 = vadd.f32 0.0, %v1113
  %1115 = vmatmul.bf16.gmra.mxu0 %v781
  %v1116 = vpop.f32.mrf.mxu0
  %v1117 = vadd.f32 0.0, %v1116
  %v1118 = vpop.f32.mrf.mxu0
  %v1119 = vadd.f32 0.0, %v1118
  %1120 = vmatmul.bf16.gmra.mxu0 %v784
  %v1121 = vpop.f32.mrf.mxu0
  %v1122 = vadd.f32 0.0, %v1121
  %v1123 = vpop.f32.mrf.mxu0
  %v1124 = vadd.f32 0.0, %v1123
  %1125 = vmatmul.bf16.gmra.mxu0 %v787
  %v1126 = vpop.f32.mrf.mxu0
  %v1127 = vadd.f32 0.0, %v1126
  %v1128 = vpop.f32.mrf.mxu0
  %v1129 = vadd.f32 0.0, %v1128
  %1130 = vmatmul.bf16.gmra.mxu0 %v790
  %v1131 = vpop.f32.mrf.mxu0
  %v1132 = vadd.f32 0.0, %v1131
  %v1133 = vpop.f32.mrf.mxu0
  %v1134 = vadd.f32 0.0, %v1133
  %1135 = vmatmul.bf16.gmra.mxu0 %v793
  %v1136 = vpop.f32.mrf.mxu0
  %v1137 = vadd.f32 0.0, %v1136
  %v1138 = vpop.f32.mrf.mxu0
  %v1139 = vadd.f32 0.0, %v1138
  %1140 = vmatmul.bf16.gmra.mxu0 %v796
  %v1141 = vpop.f32.mrf.mxu0
  %v1142 = vadd.f32 0.0, %v1141
  %v1143 = vpop.f32.mrf.mxu0
  %v1144 = vadd.f32 0.0, %v1143
  %1145 = vmatmul.bf16.gmra.mxu0 %v799
  %v1146 = vpop.f32.mrf.mxu0
  %v1147 = vadd.f32 0.0, %v1146
  %v1148 = vpop.f32.mrf.mxu0
  %v1149 = vadd.f32 0.0, %v1148
  %1150 = vmatmul.bf16.gmra.mxu0 %v802
  %v1151 = vpop.f32.mrf.mxu0
  %v1152 = vadd.f32 0.0, %v1151
  %v1153 = vpop.f32.mrf.mxu0
  %v1154 = vadd.f32 0.0, %v1153
  %1155 = vmatmul.bf16.gmra.mxu0 %v805
  %v1156 = vpop.f32.mrf.mxu0
  %v1157 = vadd.f32 0.0, %v1156
  %v1158 = vpop.f32.mrf.mxu0
  %v1159 = vadd.f32 0.0, %v1158
  %1160 = vmatmul.bf16.gmra.mxu0 %v808
  %v1161 = vpop.f32.mrf.mxu0
  %v1162 = vadd.f32 0.0, %v1161
  %v1163 = vpop.f32.mrf.mxu0
  %v1164 = vadd.f32 0.0, %v1163
  %1165 = vmatmul.bf16.gmra.mxu0 %v811
  %v1166 = vpop.f32.mrf.mxu0
  %v1167 = vadd.f32 0.0, %v1166
  %v1168 = vpop.f32.mrf.mxu0
  %v1169 = vadd.f32 0.0, %v1168
  %1170 = vmatmul.bf16.gmra.mxu0 %v814
  %v1171 = vpop.f32.mrf.mxu0
  %v1172 = vadd.f32 0.0, %v1171
  %v1173 = vpop.f32.mrf.mxu0
  %v1174 = vadd.f32 0.0, %v1173
  %1175 = vmatmul.bf16.gmra.mxu0 %v817
  %v1176 = vpop.f32.mrf.mxu0
  %v1177 = vadd.f32 0.0, %v1176
  %v1178 = vpop.f32.mrf.mxu0
  %v1179 = vadd.f32 0.0, %v1178
  %1180 = vmatmul.bf16.gmra.mxu0 %v820
  %v1181 = vpop.f32.mrf.mxu0
  %v1182 = vadd.f32 0.0, %v1181
  %v1183 = vpop.f32.mrf.mxu0
  %v1184 = vadd.f32 0.0, %v1183
  %1185 = vmatmul.bf16.gmra.mxu0 %v823
  %v1186 = vpop.f32.mrf.mxu0
  %v1187 = vadd.f32 0.0, %v1186
  %v1188 = vpop.f32.mrf.mxu0
  %v1189 = vadd.f32 0.0, %v1188
  %1190 = vmatmul.bf16.gmra.mxu0 %v826
  %v1191 = vpop.f32.mrf.mxu0
  %v1192 = vadd.f32 0.0, %v1191
  %v1193 = vpop.f32.mrf.mxu0
  %v1194 = vadd.f32 0.0, %v1193
  %1195 = vmatmul.bf16.gmra.mxu0 %v829
  %v1196 = vpop.f32.mrf.mxu0
  %v1197 = vadd.f32 0.0, %v1196
  %v1198 = vpop.f32.mrf.mxu0
  %v1199 = vadd.f32 0.0, %v1198
  %1200 = vmatmul.bf16.gmra.mxu0 %v832
  %v1201 = vpop.f32.mrf.mxu0
  %v1202 = vadd.f32 0.0, %v1201
  %v1203 = vpop.f32.mrf.mxu0
  %v1204 = vadd.f32 0.0, %v1203
  %1205 = vmatmul.bf16.gmra.mxu0 %v835
  %v1206 = vpop.f32.mrf.mxu0
  %v1207 = vadd.f32 0.0, %v1206
  %v1208 = vpop.f32.mrf.mxu0
  %v1209 = vadd.f32 0.0, %v1208
  %1210 = vmatmul.bf16.gmra.mxu0 %v838
  %v1211 = vpop.f32.mrf.mxu0
  %v1212 = vadd.f32 0.0, %v1211
  %v1213 = vpop.f32.mrf.mxu0
  %v1214 = vadd.f32 0.0, %v1213
  %1215 = vmatmul.bf16.gmra.mxu0 %v841
  %v1216 = vpop.f32.mrf.mxu0
  %v1217 = vadd.f32 0.0, %v1216
  %v1218 = vpop.f32.mrf.mxu0
  %v1219 = vadd.f32 0.0, %v1218
  %1220 = vmatmul.bf16.gmra.mxu0 %v844
  %v1221 = vpop.f32.mrf.mxu0
  %v1222 = vadd.f32 0.0, %v1221
  %v1223 = vpop.f32.mrf.mxu0
  %v1224 = vadd.f32 0.0, %v1223
  %1225 = vmatmul.bf16.gmra.mxu0 %v847
  %v1226 = vpop.f32.mrf.mxu0
  %v1227 = vadd.f32 0.0, %v1226
  %v1228 = vpop.f32.mrf.mxu0
  %v1229 = vadd.f32 0.0, %v1228
  %1230 = vmatmul.bf16.gmra.mxu0 %v850
  %v1231 = vpop.f32.mrf.mxu0
  %v1232 = vadd.f32 0.0, %v1231
  %v1233 = vpop.f32.mrf.mxu0
  %v1234 = vadd.f32 0.0, %v1233
  %1235 = vmatmul.bf16.gmra.mxu0 %v853
  %v1236 = vpop.f32.mrf.mxu0
  %v1237 = vadd.f32 0.0, %v1236
  %v1238 = vpop.f32.mrf.mxu0
  %v1239 = vadd.f32 0.0, %v1238
  %1240 = vmatmul.bf16.gmra.mxu0 %v856
  %v1241 = vpop.f32.mrf.mxu0
  %v1242 = vadd.f32 0.0, %v1241
  %v1243 = vpop.f32.mrf.mxu0
  %v1244 = vadd.f32 0.0, %v1243
  %1245 = vmatmul.bf16.gmra.mxu0 %v859
  %v1246 = vpop.f32.mrf.mxu0
  %v1247 = vadd.f32 0.0, %v1246
  %v1248 = vpop.f32.mrf.mxu0
  %v1249 = vadd.f32 0.0, %v1248
  %1250 = vmatmul.bf16.gmra.mxu0 %v862
  %v1251 = vpop.f32.mrf.mxu0
  %v1252 = vadd.f32 0.0, %v1251
  %v1253 = vpop.f32.mrf.mxu0
  %v1254 = vadd.f32 0.0, %v1253
  %1255 = vmatmul.bf16.gmra.mxu0 %v865
  %v1256 = vpop.f32.mrf.mxu0
  %v1257 = vadd.f32 0.0, %v1256
  %v1258 = vpop.f32.mrf.mxu0
  %v1259 = vadd.f32 0.0, %v1258
  %1260 = vmatmul.bf16.gmra.mxu0 %v868
  %v1261 = vpop.f32.mrf.mxu0
  %v1262 = vadd.f32 0.0, %v1261
  %v1263 = vpop.f32.mrf.mxu0
  %v1264 = vadd.f32 0.0, %v1263
  %1265 = vmatmul.bf16.gmra.mxu0 %v871
  %v1266 = vpop.f32.mrf.mxu0
  %v1267 = vadd.f32 0.0, %v1266
  %v1268 = vpop.f32.mrf.mxu0
  %v1269 = vadd.f32 0.0, %v1268
  %1270 = vmatmul.bf16.gmra.mxu0 %v874
  %v1271 = vpop.f32.mrf.mxu0
  %v1272 = vadd.f32 0.0, %v1271
  %v1273 = vpop.f32.mrf.mxu0
  %v1274 = vadd.f32 0.0, %v1273
  %1275 = vmatmul.bf16.gmra.mxu0 %v877
  %v1276 = vpop.f32.mrf.mxu0
  %v1277 = vadd.f32 0.0, %v1276
  %v1278 = vpop.f32.mrf.mxu0
  %v1279 = vadd.f32 0.0, %v1278
  %1280 = vmatmul.bf16.gmra.mxu0 %v880
  %v1281 = vpop.f32.mrf.mxu0
  %v1282 = vadd.f32 0.0, %v1281
  %v1283 = vpop.f32.mrf.mxu0
  %v1284 = vadd.f32 0.0, %v1283
  %1285 = vmatmul.bf16.gmra.mxu0 %v883
  %v1286 = vpop.f32.mrf.mxu0
  %v1287 = vadd.f32 0.0, %v1286
  %v1288 = vpop.f32.mrf.mxu0
  %v1289 = vadd.f32 0.0, %v1288
  %1290 = vmatmul.bf16.gmra.mxu0 %v886
  %v1291 = vpop.f32.mrf.mxu0
  %v1292 = vadd.f32 0.0, %v1291
  %v1293 = vpop.f32.mrf.mxu0
  %v1294 = vadd.f32 0.0, %v1293
  %1295 = vmatmul.bf16.gmra.mxu0 %v889
  %v1296 = vpop.f32.mrf.mxu0
  %v1297 = vadd.f32 0.0, %v1296
  %v1298 = vpop.f32.mrf.mxu0
  %v1299 = vadd.f32 0.0, %v1298
  %1300 = vmatmul.bf16.gmra.mxu0 %v892
  %v1301 = vpop.f32.mrf.mxu0
  %v1302 = vadd.f32 0.0, %v1301
  %v1303 = vpop.f32.mrf.mxu0
  %v1304 = vadd.f32 0.0, %v1303
  %1305 = vmatmul.bf16.gmra.mxu0 %v895
  %v1306 = vpop.f32.mrf.mxu0
  %v1307 = vadd.f32 0.0, %v1306
  %v1308 = vpop.f32.mrf.mxu0
  %v1309 = vadd.f32 0.0, %v1308
  %1310 = vmatmul.bf16.gmra.mxu0 %v898
  %v1311 = vpop.f32.mrf.mxu0
  %v1312 = vadd.f32 0.0, %v1311
  %v1313 = vpop.f32.mrf.mxu0
  %v1314 = vadd.f32 0.0, %v1313
  %1315 = vmatmul.bf16.gmra.mxu0 %v901
  %v1316 = vpop.f32.mrf.mxu0
  %v1317 = vadd.f32 0.0, %v1316
  %v1318 = vpop.f32.mrf.mxu0
  %v1319 = vadd.f32 0.0, %v1318
  %1320 = vmatmul.bf16.gmra.mxu0 %v904
  %v1321 = vpop.f32.mrf.mxu0
  %v1322 = vadd.f32 0.0, %v1321
  %v1323 = vpop.f32.mrf.mxu0
  %v1324 = vadd.f32 0.0, %v1323
  %1325 = vmatmul.bf16.gmra.mxu0 %v907
  %v1326 = vpop.f32.mrf.mxu0
  %v1327 = vadd.f32 0.0, %v1326
  %v1328 = vpop.f32.mrf.mxu0
  %v1329 = vadd.f32 0.0, %v1328
  %1330 = vmatmul.bf16.gmra.mxu0 %v910
  %v1331 = vpop.f32.mrf.mxu0
  %v1332 = vadd.f32 0.0, %v1331
  %v1333 = vpop.f32.mrf.mxu0
  %v1334 = vadd.f32 0.0, %v1333
  %1335 = vmatmul.bf16.gmra.mxu0 %v913
  %v1336 = vpop.f32.mrf.mxu0
  %v1337 = vadd.f32 0.0, %v1336
  %v1338 = vpop.f32.mrf.mxu0
  %v1339 = vadd.f32 0.0, %v1338
  %1340 = vmatmul.bf16.gmra.mxu0 %v916
  %v1341 = vpop.f32.mrf.mxu0
  %v1342 = vadd.f32 0.0, %v1341
  %v1343 = vpop.f32.mrf.mxu0
  %v1344 = vadd.f32 0.0, %v1343
  %1345 = vmatmul.bf16.gmra.mxu0 %v919
  %v1346 = vpop.f32.mrf.mxu0
  %v1347 = vadd.f32 0.0, %v1346
  %v1348 = vpop.f32.mrf.mxu0
  %v1349 = vadd.f32 0.0, %v1348
  %1350 = vmatmul.bf16.gmra.mxu0 %v922
  %v1351 = vpop.f32.mrf.mxu0
  %v1352 = vadd.f32 0.0, %v1351
  %v1353 = vpop.f32.mrf.mxu0
  %v1354 = vadd.f32 0.0, %v1353
  %1355 = vmatmul.bf16.gmra.mxu0 %v925
  %v1356 = vpop.f32.mrf.mxu0
  %v1357 = vadd.f32 0.0, %v1356
  %v1358 = vpop.f32.mrf.mxu0
  %v1359 = vadd.f32 0.0, %v1358
  %1360 = vmatmul.bf16.gmra.mxu0 %v928
  %v1361 = vpop.f32.mrf.mxu0
  %v1362 = vadd.f32 0.0, %v1361
  %v1363 = vpop.f32.mrf.mxu0
  %v1364 = vadd.f32 0.0, %v1363
  %1365 = vmatmul.bf16.gmra.mxu0 %v931
  %v1366 = vpop.f32.mrf.mxu0
  %v1367 = vadd.f32 0.0, %v1366
  %v1368 = vpop.f32.mrf.mxu0
  %v1369 = vadd.f32 0.0, %v1368
  %1370 = vmatmul.bf16.gmra.mxu0 %v934
  %v1371 = vpop.f32.mrf.mxu0
  %v1372 = vadd.f32 0.0, %v1371
  %v1373 = vpop.f32.mrf.mxu0
  %v1374 = vadd.f32 0.0, %v1373
  %1375 = vmatmul.bf16.gmra.mxu0 %v937
  %v1376 = vpop.f32.mrf.mxu0
  %v1377 = vadd.f32 0.0, %v1376
  %v1378 = vpop.f32.mrf.mxu0
  %v1379 = vadd.f32 0.0, %v1378
  %1380 = vmatmul.bf16.gmra.mxu0 %v940
  %v1381 = vpop.f32.mrf.mxu0
  %v1382 = vadd.f32 0.0, %v1381
  %v1383 = vpop.f32.mrf.mxu0
  %v1384 = vadd.f32 0.0, %v1383
  %1385 = vmatmul.bf16.gmra.mxu0 %v943
  %v1386 = vpop.f32.mrf.mxu0
  %v1387 = vadd.f32 0.0, %v1386
  %v1388 = vpop.f32.mrf.mxu0
  %v1389 = vadd.f32 0.0, %v1388
  %1390 = vmatmul.bf16.gmra.mxu0 %v946
  %v1391 = vpop.f32.mrf.mxu0
  %v1392 = vadd.f32 0.0, %v1391
  %v1393 = vpop.f32.mrf.mxu0
  %v1394 = vadd.f32 0.0, %v1393
  %1395 = vmatmul.bf16.gmra.mxu0 %v949
  %v1396 = vpop.f32.mrf.mxu0
  %v1397 = vadd.f32 0.0, %v1396
  %v1398 = vpop.f32.mrf.mxu0
  %v1399 = vadd.f32 0.0, %v1398
  %1400 = vmatmul.bf16.gmra.mxu0 %v952
  %v1401 = vpop.f32.mrf.mxu0
  %v1402 = vadd.f32 0.0, %v1401
  %v1403 = vpop.f32.mrf.mxu0
  %v1404 = vadd.f32 0.0, %v1403
  %1405 = vmatmul.bf16.gmra.mxu0 %v955
  %v1406 = vpop.f32.mrf.mxu0
  %v1407 = vadd.f32 0.0, %v1406
  %v1408 = vpop.f32.mrf.mxu0
  %v1409 = vadd.f32 0.0, %v1408
  %1410 = vmatmul.bf16.gmra.mxu0 %v958
  %v1411 = vpop.f32.mrf.mxu0
  %v1412 = vadd.f32 0.0, %v1411
  %v1413 = vpop.f32.mrf.mxu0
  %v1414 = vadd.f32 0.0, %v1413
  %1415 = vmatmul.bf16.gmra.mxu0 %v961
  %v1416 = vpop.f32.mrf.mxu0
  %v1417 = vadd.f32 0.0, %v1416
  %v1418 = vpop.f32.mrf.mxu0
  %v1419 = vadd.f32 0.0, %v1418
  %1420 = vmatmul.bf16.gmra.mxu0 %v964
  %v1421 = vpop.f32.mrf.mxu0
  %v1422 = vadd.f32 0.0, %v1421
  %v1423 = vpop.f32.mrf.mxu0
  %v1424 = vadd.f32 0.0, %v1423
  %1425 = vmatmul.bf16.gmra.mxu0 %v967
  %v1426 = vpop.f32.mrf.mxu0
  %v1427 = vadd.f32 0.0, %v1426
  %v1428 = vpop.f32.mrf.mxu0
  %v1429 = vadd.f32 0.0, %v1428
  %1430 = vmatmul.bf16.gmra.mxu0 %v970
  %v1431 = vpop.f32.mrf.mxu0
  %v1432 = vadd.f32 0.0, %v1431
  %v1433 = vpop.f32.mrf.mxu0
  %v1434 = vadd.f32 0.0, %v1433
  %1435 = vmatmul.bf16.gmra.mxu0 %v973
  %v1436 = vpop.f32.mrf.mxu0
  %v1437 = vadd.f32 0.0, %v1436
  %v1438 = vpop.f32.mrf.mxu0
  %v1439 = vadd.f32 0.0, %v1438
  %1440 = vmatmul.bf16.gmra.mxu0 %v976
  %v1441 = vpop.f32.mrf.mxu0
  %v1442 = vadd.f32 0.0, %v1441
  %v1443 = vpop.f32.mrf.mxu0
  %v1444 = vadd.f32 0.0, %v1443
  %1445 = vmatmul.bf16.gmra.mxu0 %v979
  %v1446 = vpop.f32.mrf.mxu0
  %v1447 = vadd.f32 0.0, %v1446
  %v1448 = vpop.f32.mrf.mxu0
  %v1449 = vadd.f32 0.0, %v1448
  %1450 = vmatmul.bf16.gmra.mxu0 %v982
  %v1451 = vpop.f32.mrf.mxu0
  %v1452 = vadd.f32 0.0, %v1451
  %v1453 = vpop.f32.mrf.mxu0
  %v1454 = vadd.f32 0.0, %v1453
  %1455 = vmatmul.bf16.gmra.mxu0 %v985
  %v1456 = vpop.f32.mrf.mxu0
  %v1457 = vadd.f32 0.0, %v1456
  %v1458 = vpop.f32.mrf.mxu0
  %v1459 = vadd.f32 0.0, %v1458
  %1460 = vmatmul.bf16.gmra.mxu0 %v988
  %v1461 = vpop.f32.mrf.mxu0
  %v1462 = vadd.f32 0.0, %v1461
  %v1463 = vpop.f32.mrf.mxu0
  %v1464 = vadd.f32 0.0, %v1463
  %1465 = vmatmul.bf16.gmra.mxu0 %v991
  %v1466 = vpop.f32.mrf.mxu0
  %v1467 = vadd.f32 0.0, %v1466
  %v1468 = vpop.f32.mrf.mxu0
  %v1469 = vadd.f32 0.0, %v1468
  %1470 = vmatmul.bf16.gmra.mxu0 %v994
  %v1471 = vpop.f32.mrf.mxu0
  %v1472 = vadd.f32 0.0, %v1471
  %v1473 = vpop.f32.mrf.mxu0
  %v1474 = vadd.f32 0.0, %v1473
  %1475 = vmatmul.bf16.gmra.mxu0 %v997
  %v1476 = vpop.f32.mrf.mxu0
  %v1477 = vadd.f32 0.0, %v1476
  %v1478 = vpop.f32.mrf.mxu0
  %v1479 = vadd.f32 0.0, %v1478
  %1480 = vmatmul.bf16.gmra.mxu0 %v1000
  %v1481 = vpop.f32.mrf.mxu0
  %v1482 = vadd.f32 0.0, %v1481
  %v1483 = vpop.f32.mrf.mxu0
  %v1484 = vadd.f32 0.0, %v1483
  %1485 = vmatmul.bf16.gmra.mxu0 %v1003
  %v1486 = vpop.f32.mrf.mxu0
  %v1487 = vadd.f32 0.0, %v1486
  %v1488 = vpop.f32.mrf.mxu0
  %v1489 = vadd.f32 0.0, %v1488
  %1490 = vmatmul.bf16.gmra.mxu0 %v1006
  %v1491 = vpop.f32.mrf.mxu0
  %v1492 = vadd.f32 0.0, %v1491
  %v1493 = vpop.f32.mrf.mxu0
  %v1494 = vadd.f32 0.0, %v1493
  %1495 = vmatmul.bf16.gmra.mxu0 %v1009
  %v1496 = vpop.f32.mrf.mxu0
  %v1497 = vadd.f32 0.0, %v1496
  %v1498 = vpop.f32.mrf.mxu0
  %v1499 = vadd.f32 0.0, %v1498
  %1500 = vmatmul.bf16.gmra.mxu0 %v1012
  %v1501 = vpop.f32.mrf.mxu0
  %v1502 = vadd.f32 0.0, %v1501
  %v1503 = vpop.f32.mrf.mxu0
  %v1504 = vadd.f32 0.0, %v1503
  %1505 = vmatmul.bf16.gmra.mxu0 %v1015
  %v1506 = vpop.f32.mrf.mxu0
  %v1507 = vadd.f32 0.0, %v1506
  %v1508 = vpop.f32.mrf.mxu0
  %v1509 = vadd.f32 0.0, %v1508
  %1510 = vmatmul.bf16.gmra.mxu0 %v1018
  %v1511 = vpop.f32.mrf.mxu0
  %v1512 = vadd.f32 0.0, %v1511
  %v1513 = vpop.f32.mrf.mxu0
  %v1514 = vadd.f32 0.0, %v1513
  %1515 = vmatmul.bf16.gmra.mxu0 %v1021
  %v1516 = vpop.f32.mrf.mxu0
  %v1517 = vadd.f32 0.0, %v1516
  %v1518 = vpop.f32.mrf.mxu0
  %v1519 = vadd.f32 0.0, %v1518
  %1520 = vmatmul.bf16.gmra.mxu0 %v1024
  %v1521 = vpop.f32.mrf.mxu0
  %v1522 = vadd.f32 0.0, %v1521
  %v1523 = vpop.f32.mrf.mxu0
  %v1524 = vadd.f32 0.0, %v1523
  %1525 = vmatmul.bf16.gmra.mxu0 %v1027
  %v1526 = vpop.f32.mrf.mxu0
  %v1527 = vadd.f32 0.0, %v1526
  %v1528 = vpop.f32.mrf.mxu0
  %v1529 = vadd.f32 0.0, %v1528
  %1530 = vmatmul.bf16.gmra.mxu0 %v1030
  %v1531 = vpop.f32.mrf.mxu0
  %v1532 = vadd.f32 0.0, %v1531
  %v1533 = vpop.f32.mrf.mxu0
  %v1534 = vadd.f32 0.0, %v1533
  %1535 = vmatmul.bf16.gmra.mxu0 %v1033
  %v1536 = vpop.f32.mrf.mxu0
  %v1537 = vadd.f32 0.0, %v1536
  %v1538 = vpop.f32.mrf.mxu0
  %v1539 = vadd.f32 0.0, %v1538
  %1540 = vdwg.mxu0
  %s1541 = scalar_lea.vmem %s0, 784
  %v1542 = vld [vmem:[%s1541] sm:$0xf]
  %v1543 = vld [vmem:[%s1541 + $0x4] sm:$0xf]
  %v1544 = vld [vmem:[%s1541 + $0x8] sm:$0xf]
  %v1545 = vld [vmem:[%s1541 + $0xc] sm:$0xf]
  %v1546 = vld [vmem:[%s1541 + $0x10] sm:$0xf]
  %v1547 = vld [vmem:[%s1541 + $0x14] sm:$0xf]
  %v1548 = vld [vmem:[%s1541 + $0x18] sm:$0xf]
  %v1549 = vld [vmem:[%s1541 + $0x1c] sm:$0xf]
  %v1550 = vld [vmem:[%s1541 + $0x20] sm:$0xf]
  %v1551 = vld [vmem:[%s1541 + $0x24] sm:$0xf]
  %v1552 = vld [vmem:[%s1541 + $0x28] sm:$0xf]
  %v1553 = vld [vmem:[%s1541 + $0x2c] sm:$0xf]
  %v1554 = vld [vmem:[%s1541 + $0x30] sm:$0xf]
  %v1555 = vld [vmem:[%s1541 + $0x34] sm:$0xf]
  %v1556 = vld [vmem:[%s1541 + $0x38] sm:$0xf]
  %v1557 = vld [vmem:[%s1541 + $0x3c] sm:$0xf]
  %v1558 = vld [vmem:[%s1541 + $0x40] sm:$0xf]
  %v1559 = vld [vmem:[%s1541 + $0x44] sm:$0xf]
  %v1560 = vld [vmem:[%s1541 + $0x48] sm:$0xf]
  %v1561 = vld [vmem:[%s1541 + $0x4c] sm:$0xf]
  %v1562 = vld [vmem:[%s1541 + $0x50] sm:$0xf]
  %v1563 = vld [vmem:[%s1541 + $0x54] sm:$0xf]
  %v1564 = vld [vmem:[%s1541 + $0x58] sm:$0xf]
  %v1565 = vld [vmem:[%s1541 + $0x5c] sm:$0xf]
  %v1566 = vld [vmem:[%s1541 + $0x60] sm:$0xf]
  %v1567 = vld [vmem:[%s1541 + $0x64] sm:$0xf]
  %v1568 = vld [vmem:[%s1541 + $0x68] sm:$0xf]
  %v1569 = vld [vmem:[%s1541 + $0x6c] sm:$0xf]
  %v1570 = vld [vmem:[%s1541 + $0x70] sm:$0xf]
  %v1571 = vld [vmem:[%s1541 + $0x74] sm:$0xf]
  %v1572 = vld [vmem:[%s1541 + $0x78] sm:$0xf]
  %v1573 = vld [vmem:[%s1541 + $0x7c] sm:$0xf]
  %v1574 = vld [vmem:[%s1541 + $0x80] sm:$0xf]
  %v1575 = vld [vmem:[%s1541 + $0x84] sm:$0xf]
  %v1576 = vld [vmem:[%s1541 + $0x88] sm:$0xf]
  %v1577 = vld [vmem:[%s1541 + $0x8c] sm:$0xf]
  %v1578 = vld [vmem:[%s1541 + $0x90] sm:$0xf]
  %v1579 = vld [vmem:[%s1541 + $0x94] sm:$0xf]
  %v1580 = vld [vmem:[%s1541 + $0x98] sm:$0xf]
  %v1581 = vld [vmem:[%s1541 + $0x9c] sm:$0xf]
  %v1582 = vld [vmem:[%s1541 + $0xa0] sm:$0xf]
  %v1583 = vld [vmem:[%s1541 + $0xa4] sm:$0xf]
  %v1584 = vld [vmem:[%s1541 + $0xa8] sm:$0xf]
  %v1585 = vld [vmem:[%s1541 + $0xac] sm:$0xf]
  %v1586 = vld [vmem:[%s1541 + $0xb0] sm:$0xf]
  %v1587 = vld [vmem:[%s1541 + $0xb4] sm:$0xf]
  %v1588 = vld [vmem:[%s1541 + $0xb8] sm:$0xf]
  %v1589 = vld [vmem:[%s1541 + $0xbc] sm:$0xf]
  %v1590 = vld [vmem:[%s1541 + $0xc0] sm:$0xf]
  %v1591 = vld [vmem:[%s1541 + $0xc4] sm:$0xf]
  %v1592 = vld [vmem:[%s1541 + $0xc8] sm:$0xf]
  %v1593 = vld [vmem:[%s1541 + $0xcc] sm:$0xf]
  %v1594 = vld [vmem:[%s1541 + $0xd0] sm:$0xf]
  %v1595 = vld [vmem:[%s1541 + $0xd4] sm:$0xf]
  %v1596 = vld [vmem:[%s1541 + $0xd8] sm:$0xf]
  %v1597 = vld [vmem:[%s1541 + $0xdc] sm:$0xf]
  %v1598 = vld [vmem:[%s1541 + $0xe0] sm:$0xf]
  %v1599 = vld [vmem:[%s1541 + $0xe4] sm:$0xf]
  %v1600 = vld [vmem:[%s1541 + $0xe8] sm:$0xf]
  %v1601 = vld [vmem:[%s1541 + $0xec] sm:$0xf]
  %v1602 = vld [vmem:[%s1541 + $0xf0] sm:$0xf]
  %v1603 = vld [vmem:[%s1541 + $0xf4] sm:$0xf]
  %v1604 = vld [vmem:[%s1541 + $0xf8] sm:$0xf]
  %v1605 = vld [vmem:[%s1541 + $0xfc] sm:$0xf]
  %v1606 = vld [vmem:[%s1541 + $0x100] sm:$0xf]
  %v1607 = vld [vmem:[%s1541 + $0x104] sm:$0xf]
  %v1608 = vld [vmem:[%s1541 + $0x108] sm:$0xf]
  %v1609 = vld [vmem:[%s1541 + $0x10c] sm:$0xf]
  %v1610 = vld [vmem:[%s1541 + $0x110] sm:$0xf]
  %v1611 = vld [vmem:[%s1541 + $0x114] sm:$0xf]
  %v1612 = vld [vmem:[%s1541 + $0x118] sm:$0xf]
  %v1613 = vld [vmem:[%s1541 + $0x11c] sm:$0xf]
  %v1614 = vld [vmem:[%s1541 + $0x120] sm:$0xf]
  %v1615 = vld [vmem:[%s1541 + $0x124] sm:$0xf]
  %v1616 = vld [vmem:[%s1541 + $0x128] sm:$0xf]
  %v1617 = vld [vmem:[%s1541 + $0x12c] sm:$0xf]
  %v1618 = vld [vmem:[%s1541 + $0x130] sm:$0xf]
  %v1619 = vld [vmem:[%s1541 + $0x134] sm:$0xf]
  %v1620 = vld [vmem:[%s1541 + $0x138] sm:$0xf]
  %v1621 = vld [vmem:[%s1541 + $0x13c] sm:$0xf]
  %v1622 = vld [vmem:[%s1541 + $0x140] sm:$0xf]
  %v1623 = vld [vmem:[%s1541 + $0x144] sm:$0xf]
  %v1624 = vld [vmem:[%s1541 + $0x148] sm:$0xf]
  %v1625 = vld [vmem:[%s1541 + $0x14c] sm:$0xf]
  %v1626 = vld [vmem:[%s1541 + $0x150] sm:$0xf]
  %v1627 = vld [vmem:[%s1541 + $0x154] sm:$0xf]
  %v1628 = vld [vmem:[%s1541 + $0x158] sm:$0xf]
  %v1629 = vld [vmem:[%s1541 + $0x15c] sm:$0xf]
  %v1630 = vld [vmem:[%s1541 + $0x160] sm:$0xf]
  %v1631 = vld [vmem:[%s1541 + $0x164] sm:$0xf]
  %v1632 = vld [vmem:[%s1541 + $0x168] sm:$0xf]
  %v1633 = vld [vmem:[%s1541 + $0x16c] sm:$0xf]
  %v1634 = vld [vmem:[%s1541 + $0x170] sm:$0xf]
  %v1635 = vld [vmem:[%s1541 + $0x174] sm:$0xf]
  %v1636 = vld [vmem:[%s1541 + $0x178] sm:$0xf]
  %v1637 = vld [vmem:[%s1541 + $0x17c] sm:$0xf]
  %v1638 = vld [vmem:[%s1541 + $0x180] sm:$0xf]
  %v1639 = vld [vmem:[%s1541 + $0x184] sm:$0xf]
  %v1640 = vld [vmem:[%s1541 + $0x188] sm:$0xf]
  %v1641 = vld [vmem:[%s1541 + $0x18c] sm:$0xf]
  %v1642 = vld [vmem:[%s1541 + $0x190] sm:$0xf]
  %v1643 = vld [vmem:[%s1541 + $0x194] sm:$0xf]
  %v1644 = vld [vmem:[%s1541 + $0x198] sm:$0xf]
  %v1645 = vld [vmem:[%s1541 + $0x19c] sm:$0xf]
  %v1646 = vld [vmem:[%s1541 + $0x1a0] sm:$0xf]
  %v1647 = vld [vmem:[%s1541 + $0x1a4] sm:$0xf]
  %v1648 = vld [vmem:[%s1541 + $0x1a8] sm:$0xf]
  %v1649 = vld [vmem:[%s1541 + $0x1ac] sm:$0xf]
  %v1650 = vld [vmem:[%s1541 + $0x1b0] sm:$0xf]
  %v1651 = vld [vmem:[%s1541 + $0x1b4] sm:$0xf]
  %v1652 = vld [vmem:[%s1541 + $0x1b8] sm:$0xf]
  %v1653 = vld [vmem:[%s1541 + $0x1bc] sm:$0xf]
  %v1654 = vld [vmem:[%s1541 + $0x1c0] sm:$0xf]
  %v1655 = vld [vmem:[%s1541 + $0x1c4] sm:$0xf]
  %v1656 = vld [vmem:[%s1541 + $0x1c8] sm:$0xf]
  %v1657 = vld [vmem:[%s1541 + $0x1cc] sm:$0xf]
  %v1658 = vld [vmem:[%s1541 + $0x1d0] sm:$0xf]
  %v1659 = vld [vmem:[%s1541 + $0x1d4] sm:$0xf]
  %v1660 = vld [vmem:[%s1541 + $0x1d8] sm:$0xf]
  %v1661 = vld [vmem:[%s1541 + $0x1dc] sm:$0xf]
  %v1662 = vld [vmem:[%s1541 + $0x1e0] sm:$0xf]
  %v1663 = vld [vmem:[%s1541 + $0x1e4] sm:$0xf]
  %v1664 = vld [vmem:[%s1541 + $0x1e8] sm:$0xf]
  %v1665 = vld [vmem:[%s1541 + $0x1ec] sm:$0xf]
  %v1666 = vld [vmem:[%s1541 + $0x1f0] sm:$0xf]
  %v1667 = vld [vmem:[%s1541 + $0x1f4] sm:$0xf]
  %v1668 = vld [vmem:[%s1541 + $0x1f8] sm:$0xf]
  %v1669 = vld [vmem:[%s1541 + $0x1fc] sm:$0xf]
  %v1670 = vld [vmem:[%s1541 + $0x200] sm:$0xf]
  %v1671 = vld [vmem:[%s1541 + $0x204] sm:$0xf]
  %v1672 = vld [vmem:[%s1541 + $0x208] sm:$0xf]
  %v1673 = vld [vmem:[%s1541 + $0x20c] sm:$0xf]
  %v1674 = vld [vmem:[%s1541 + $0x210] sm:$0xf]
  %v1675 = vld [vmem:[%s1541 + $0x214] sm:$0xf]
  %v1676 = vld [vmem:[%s1541 + $0x218] sm:$0xf]
  %v1677 = vld [vmem:[%s1541 + $0x21c] sm:$0xf]
  %v1678 = vld [vmem:[%s1541 + $0x220] sm:$0xf]
  %v1679 = vld [vmem:[%s1541 + $0x224] sm:$0xf]
  %v1680 = vld [vmem:[%s1541 + $0x228] sm:$0xf]
  %v1681 = vld [vmem:[%s1541 + $0x22c] sm:$0xf]
  %v1682 = vld [vmem:[%s1541 + $0x230] sm:$0xf]
  %v1683 = vld [vmem:[%s1541 + $0x234] sm:$0xf]
  %v1684 = vld [vmem:[%s1541 + $0x238] sm:$0xf]
  %v1685 = vld [vmem:[%s1541 + $0x23c] sm:$0xf]
  %v1686 = vld [vmem:[%s1541 + $0x240] sm:$0xf]
  %v1687 = vld [vmem:[%s1541 + $0x244] sm:$0xf]
  %v1688 = vld [vmem:[%s1541 + $0x248] sm:$0xf]
  %v1689 = vld [vmem:[%s1541 + $0x24c] sm:$0xf]
  %v1690 = vld [vmem:[%s1541 + $0x250] sm:$0xf]
  %v1691 = vld [vmem:[%s1541 + $0x254] sm:$0xf]
  %v1692 = vld [vmem:[%s1541 + $0x258] sm:$0xf]
  %v1693 = vld [vmem:[%s1541 + $0x25c] sm:$0xf]
  %v1694 = vld [vmem:[%s1541 + $0x260] sm:$0xf]
  %v1695 = vld [vmem:[%s1541 + $0x264] sm:$0xf]
  %v1696 = vld [vmem:[%s1541 + $0x268] sm:$0xf]
  %v1697 = vld [vmem:[%s1541 + $0x26c] sm:$0xf]
  %v1698 = vld [vmem:[%s1541 + $0x270] sm:$0xf]
  %v1699 = vld [vmem:[%s1541 + $0x274] sm:$0xf]
  %v1700 = vld [vmem:[%s1541 + $0x278] sm:$0xf]
  %v1701 = vld [vmem:[%s1541 + $0x27c] sm:$0xf]
  %v1702 = vld [vmem:[%s1541 + $0x280] sm:$0xf]
  %v1703 = vld [vmem:[%s1541 + $0x284] sm:$0xf]
  %v1704 = vld [vmem:[%s1541 + $0x288] sm:$0xf]
  %v1705 = vld [vmem:[%s1541 + $0x28c] sm:$0xf]
  %v1706 = vld [vmem:[%s1541 + $0x290] sm:$0xf]
  %v1707 = vld [vmem:[%s1541 + $0x294] sm:$0xf]
  %v1708 = vld [vmem:[%s1541 + $0x298] sm:$0xf]
  %v1709 = vld [vmem:[%s1541 + $0x29c] sm:$0xf]
  %v1710 = vld [vmem:[%s1541 + $0x2a0] sm:$0xf]
  %v1711 = vld [vmem:[%s1541 + $0x2a4] sm:$0xf]
  %v1712 = vld [vmem:[%s1541 + $0x2a8] sm:$0xf]
  %v1713 = vld [vmem:[%s1541 + $0x2ac] sm:$0xf]
  %v1714 = vld [vmem:[%s1541 + $0x2b0] sm:$0xf]
  %v1715 = vld [vmem:[%s1541 + $0x2b4] sm:$0xf]
  %v1716 = vld [vmem:[%s1541 + $0x2b8] sm:$0xf]
  %v1717 = vld [vmem:[%s1541 + $0x2bc] sm:$0xf]
  %v1718 = vld [vmem:[%s1541 + $0x2c0] sm:$0xf]
  %v1719 = vld [vmem:[%s1541 + $0x2c4] sm:$0xf]
  %v1720 = vld [vmem:[%s1541 + $0x2c8] sm:$0xf]
  %v1721 = vld [vmem:[%s1541 + $0x2cc] sm:$0xf]
  %v1722 = vld [vmem:[%s1541 + $0x2d0] sm:$0xf]
  %v1723 = vld [vmem:[%s1541 + $0x2d4] sm:$0xf]
  %v1724 = vld [vmem:[%s1541 + $0x2d8] sm:$0xf]
  %v1725 = vld [vmem:[%s1541 + $0x2dc] sm:$0xf]
  %v1726 = vld [vmem:[%s1541 + $0x2e0] sm:$0xf]
  %v1727 = vld [vmem:[%s1541 + $0x2e4] sm:$0xf]
  %v1728 = vld [vmem:[%s1541 + $0x2e8] sm:$0xf]
  %v1729 = vld [vmem:[%s1541 + $0x2ec] sm:$0xf]
  %v1730 = vld [vmem:[%s1541 + $0x2f0] sm:$0xf]
  %v1731 = vld [vmem:[%s1541 + $0x2f4] sm:$0xf]
  %v1732 = vld [vmem:[%s1541 + $0x2f8] sm:$0xf]
  %v1733 = vld [vmem:[%s1541 + $0x2fc] sm:$0xf]
  %v1734 = vld [vmem:[%s1541 + $0x300] sm:$0xf]
  %v1735 = vld [vmem:[%s1541 + $0x304] sm:$0xf]
  %v1736 = vld [vmem:[%s1541 + $0x308] sm:$0xf]
  %v1737 = vld [vmem:[%s1541 + $0x30c] sm:$0xf]
  %v1934 = vunpack.c.l.b16 %v1542
  %v1935 = vunpack.c.l.b16 %v1543
  %v1936 = vunpack.c.l.b16 %v1544
  %v1937 = vunpack.c.l.b16 %v1545
  %v1938 = vunpack.c.l.b16 %v1546
  %v1939 = vunpack.c.l.b16 %v1547
  %v1940 = vunpack.c.l.b16 %v1548
  %v1941 = vunpack.c.l.b16 %v1549
  %v1942 = vunpack.c.l.b16 %v1550
  %v1943 = vunpack.c.l.b16 %v1551
  %v1944 = vunpack.c.l.b16 %v1552
  %v1945 = vunpack.c.l.b16 %v1553
  %v1946 = vunpack.c.l.b16 %v1554
  %v1947 = vunpack.c.l.b16 %v1555
  %v1948 = vunpack.c.l.b16 %v1556
  %v1949 = vunpack.c.l.b16 %v1557
  %v1950 = vunpack.c.l.b16 %v1558
  %v1951 = vunpack.c.l.b16 %v1559
  %v1952 = vunpack.c.l.b16 %v1560
  %v1953 = vunpack.c.l.b16 %v1561
  %v1954 = vunpack.c.l.b16 %v1562
  %v1955 = vunpack.c.l.b16 %v1563
  %v1956 = vunpack.c.l.b16 %v1564
  %v1957 = vunpack.c.l.b16 %v1565
  %v1958 = vunpack.c.l.b16 %v1566
  %v1959 = vunpack.c.l.b16 %v1567
  %v1960 = vunpack.c.l.b16 %v1568
  %v1961 = vunpack.c.l.b16 %v1569
  %v1962 = vunpack.c.l.b16 %v1570
  %v1963 = vunpack.c.l.b16 %v1571
  %v1964 = vunpack.c.l.b16 %v1572
  %v1965 = vunpack.c.l.b16 %v1573
  %v1966 = vunpack.c.l.b16 %v1574
  %v1967 = vunpack.c.l.b16 %v1575
  %v1968 = vunpack.c.l.b16 %v1576
  %v1969 = vunpack.c.l.b16 %v1577
  %v1970 = vunpack.c.l.b16 %v1578
  %v1971 = vunpack.c.l.b16 %v1579
  %v1972 = vunpack.c.l.b16 %v1580
  %v1973 = vunpack.c.l.b16 %v1581
  %v1974 = vunpack.c.l.b16 %v1582
  %v1975 = vunpack.c.l.b16 %v1583
  %v1976 = vunpack.c.l.b16 %v1584
  %v1977 = vunpack.c.l.b16 %v1585
  %v1978 = vunpack.c.l.b16 %v1586
  %v1979 = vunpack.c.l.b16 %v1587
  %v1980 = vunpack.c.l.b16 %v1588
  %v1981 = vunpack.c.l.b16 %v1589
  %v1982 = vunpack.c.l.b16 %v1590
  %v1983 = vunpack.c.l.b16 %v1591
  %v1984 = vunpack.c.l.b16 %v1592
  %v1985 = vunpack.c.l.b16 %v1593
  %v1986 = vunpack.c.l.b16 %v1594
  %v1987 = vunpack.c.l.b16 %v1595
  %v1988 = vunpack.c.l.b16 %v1596
  %v1989 = vunpack.c.l.b16 %v1597
  %v1990 = vunpack.c.l.b16 %v1598
  %v1991 = vunpack.c.l.b16 %v1599
  %v1992 = vunpack.c.l.b16 %v1600
  %v1993 = vunpack.c.l.b16 %v1601
  %v1994 = vunpack.c.l.b16 %v1602
  %v1995 = vunpack.c.l.b16 %v1603
  %v1996 = vunpack.c.l.b16 %v1604
  %v1997 = vunpack.c.l.b16 %v1605
  %v1998 = vunpack.c.l.b16 %v1606
  %v1999 = vunpack.c.l.b16 %v1607
  %v2000 = vunpack.c.l.b16 %v1608
  %v2001 = vunpack.c.l.b16 %v1609
  %v2002 = vunpack.c.l.b16 %v1610
  %v2003 = vunpack.c.l.b16 %v1611
  %v2004 = vunpack.c.l.b16 %v1612
  %v2005 = vunpack.c.l.b16 %v1613
  %v2006 = vunpack.c.l.b16 %v1614
  %v2007 = vunpack.c.l.b16 %v1615
  %v2008 = vunpack.c.l.b16 %v1616
  %v2009 = vunpack.c.l.b16 %v1617
  %v2010 = vunpack.c.l.b16 %v1618
  %v2011 = vunpack.c.l.b16 %v1619
  %v2012 = vunpack.c.l.b16 %v1620
  %v2013 = vunpack.c.l.b16 %v1621
  %v2014 = vunpack.c.l.b16 %v1622
  %v2015 = vunpack.c.l.b16 %v1623
  %v2016 = vunpack.c.l.b16 %v1624
  %v2017 = vunpack.c.l.b16 %v1625
  %v2018 = vunpack.c.l.b16 %v1626
  %v2019 = vunpack.c.l.b16 %v1627
  %v2020 = vunpack.c.l.b16 %v1628
  %v2021 = vunpack.c.l.b16 %v1629
  %v2022 = vunpack.c.l.b16 %v1630
  %v2023 = vunpack.c.l.b16 %v1631
  %v2024 = vunpack.c.l.b16 %v1632
  %v2025 = vunpack.c.l.b16 %v1633
  %v2026 = vunpack.c.l.b16 %v1634
  %v2027 = vunpack.c.l.b16 %v1635
  %v2028 = vunpack.c.l.b16 %v1636
  %v2029 = vunpack.c.l.b16 %v1637
  %v2030 = vunpack.c.l.b16 %v1638
  %v2031 = vunpack.c.l.b16 %v1639
  %v2032 = vunpack.c.l.b16 %v1640
  %v2033 = vunpack.c.l.b16 %v1641
  %v2034 = vunpack.c.l.b16 %v1642
  %v2035 = vunpack.c.l.b16 %v1643
  %v2036 = vunpack.c.l.b16 %v1644
  %v2037 = vunpack.c.l.b16 %v1645
  %v2038 = vunpack.c.l.b16 %v1646
  %v2039 = vunpack.c.l.b16 %v1647
  %v2040 = vunpack.c.l.b16 %v1648
  %v2041 = vunpack.c.l.b16 %v1649
  %v2042 = vunpack.c.l.b16 %v1650
  %v2043 = vunpack.c.l.b16 %v1651
  %v2044 = vunpack.c.l.b16 %v1652
  %v2045 = vunpack.c.l.b16 %v1653
  %v2046 = vunpack.c.l.b16 %v1654
  %v2047 = vunpack.c.l.b16 %v1655
  %v2048 = vunpack.c.l.b16 %v1656
  %v2049 = vunpack.c.l.b16 %v1657
  %v2050 = vunpack.c.l.b16 %v1658
  %v2051 = vunpack.c.l.b16 %v1659
  %v2052 = vunpack.c.l.b16 %v1660
  %v2053 = vunpack.c.l.b16 %v1661
  %v2054 = vunpack.c.l.b16 %v1662
  %v2055 = vunpack.c.l.b16 %v1663
  %v2056 = vunpack.c.l.b16 %v1664
  %v2057 = vunpack.c.l.b16 %v1665
  %v2058 = vunpack.c.l.b16 %v1666
  %v2059 = vunpack.c.l.b16 %v1667
  %v2060 = vunpack.c.l.b16 %v1668
  %v2061 = vunpack.c.l.b16 %v1669
  %v2062 = vunpack.c.l.b16 %v1670
  %v2063 = vunpack.c.l.b16 %v1671
  %v2064 = vunpack.c.l.b16 %v1672
  %v2065 = vunpack.c.l.b16 %v1673
  %v2066 = vunpack.c.l.b16 %v1674
  %v2067 = vunpack.c.l.b16 %v1675
  %v2068 = vunpack.c.l.b16 %v1676
  %v2069 = vunpack.c.l.b16 %v1677
  %v2070 = vunpack.c.l.b16 %v1678
  %v2071 = vunpack.c.l.b16 %v1679
  %v2072 = vunpack.c.l.b16 %v1680
  %v2073 = vunpack.c.l.b16 %v1681
  %v2074 = vunpack.c.l.b16 %v1682
  %v2075 = vunpack.c.l.b16 %v1683
  %v2076 = vunpack.c.l.b16 %v1684
  %v2077 = vunpack.c.l.b16 %v1685
  %v2078 = vunpack.c.l.b16 %v1686
  %v2079 = vunpack.c.l.b16 %v1687
  %v2080 = vunpack.c.l.b16 %v1688
  %v2081 = vunpack.c.l.b16 %v1689
  %v2082 = vunpack.c.l.b16 %v1690
  %v2083 = vunpack.c.l.b16 %v1691
  %v2084 = vunpack.c.l.b16 %v1692
  %v2085 = vunpack.c.l.b16 %v1693
  %v2086 = vunpack.c.l.b16 %v1694
  %v2087 = vunpack.c.l.b16 %v1695
  %v2088 = vunpack.c.l.b16 %v1696
  %v2089 = vunpack.c.l.b16 %v1697
  %v2090 = vunpack.c.l.b16 %v1698
  %v2091 = vunpack.c.l.b16 %v1699
  %v2092 = vunpack.c.l.b16 %v1700
  %v2093 = vunpack.c.l.b16 %v1701
  %v2094 = vunpack.c.l.b16 %v1702
  %v2095 = vunpack.c.l.b16 %v1703
  %v2096 = vunpack.c.l.b16 %v1704
  %v2097 = vunpack.c.l.b16 %v1705
  %v2098 = vunpack.c.l.b16 %v1706
  %v2099 = vunpack.c.l.b16 %v1707
  %v2100 = vunpack.c.l.b16 %v1708
  %v2101 = vunpack.c.l.b16 %v1709
  %v2102 = vunpack.c.l.b16 %v1710
  %v2103 = vunpack.c.l.b16 %v1711
  %v2104 = vunpack.c.l.b16 %v1712
  %v2105 = vunpack.c.l.b16 %v1713
  %v2106 = vunpack.c.l.b16 %v1714
  %v2107 = vunpack.c.l.b16 %v1715
  %v2108 = vunpack.c.l.b16 %v1716
  %v2109 = vunpack.c.l.b16 %v1717
  %v2110 = vunpack.c.l.b16 %v1718
  %v2111 = vunpack.c.l.b16 %v1719
  %v2112 = vunpack.c.l.b16 %v1720
  %v2113 = vunpack.c.l.b16 %v1721
  %v2114 = vunpack.c.l.b16 %v1722
  %v2115 = vunpack.c.l.b16 %v1723
  %v2116 = vunpack.c.l.b16 %v1724
  %v2117 = vunpack.c.l.b16 %v1725
  %v2118 = vunpack.c.l.b16 %v1726
  %v2119 = vunpack.c.l.b16 %v1727
  %v2120 = vunpack.c.l.b16 %v1728
  %v2121 = vunpack.c.l.b16 %v1729
  %v2122 = vunpack.c.l.b16 %v1730
  %v2123 = vunpack.c.l.b16 %v1731
  %v2124 = vunpack.c.l.b16 %v1732
  %v2125 = vunpack.c.l.b16 %v1733
  %v2126 = vunpack.c.l.b16 %v1734
  %v2127 = vunpack.c.l.b16 %v1735
  %v2128 = vunpack.c.l.b16 %v1736
  %v2129 = vunpack.c.l.b16 %v1737
  %v2130 = vpack.c.b16 %v1935, %v1934
  %v2131 = vpack.c.b16 %v1937, %v1936
  %v2132 = vpack.c.b16 %v1939, %v1938
  %v2133 = vpack.c.b16 %v1941, %v1940
  %v2134 = vpack.c.b16 %v1943, %v1942
  %v2135 = vpack.c.b16 %v1945, %v1944
  %v2136 = vpack.c.b16 %v1947, %v1946
  %v2137 = vpack.c.b16 %v1949, %v1948
  %v2138 = vpack.c.b16 %v1951, %v1950
  %v2139 = vpack.c.b16 %v1953, %v1952
  %v2140 = vpack.c.b16 %v1955, %v1954
  %v2141 = vpack.c.b16 %v1957, %v1956
  %v2142 = vpack.c.b16 %v1959, %v1958
  %v2143 = vpack.c.b16 %v1961, %v1960
  %v2144 = vpack.c.b16 %v1963, %v1962
  %v2145 = vpack.c.b16 %v1965, %v1964
  %v2146 = vpack.c.b16 %v1967, %v1966
  %v2147 = vpack.c.b16 %v1969, %v1968
  %v2148 = vpack.c.b16 %v1971, %v1970
  %v2149 = vpack.c.b16 %v1973, %v1972
  %v2150 = vpack.c.b16 %v1975, %v1974
  %v2151 = vpack.c.b16 %v1977, %v1976
  %v2152 = vpack.c.b16 %v1979, %v1978
  %v2153 = vpack.c.b16 %v1981, %v1980
  %v2154 = vpack.c.b16 %v1983, %v1982
  %v2155 = vpack.c.b16 %v1985, %v1984
  %v2156 = vpack.c.b16 %v1987, %v1986
  %v2157 = vpack.c.b16 %v1989, %v1988
  %v2158 = vpack.c.b16 %v1991, %v1990
  %v2159 = vpack.c.b16 %v1993, %v1992
  %v2160 = vpack.c.b16 %v1995, %v1994
  %v2161 = vpack.c.b16 %v1997, %v1996
  %v2162 = vpack.c.b16 %v1999, %v1998
  %v2163 = vpack.c.b16 %v2001, %v2000
  %v2164 = vpack.c.b16 %v2003, %v2002
  %v2165 = vpack.c.b16 %v2005, %v2004
  %v2166 = vpack.c.b16 %v2007, %v2006
  %v2167 = vpack.c.b16 %v2009, %v2008
  %v2168 = vpack.c.b16 %v2011, %v2010
  %v2169 = vpack.c.b16 %v2013, %v2012
  %v2170 = vpack.c.b16 %v2015, %v2014
  %v2171 = vpack.c.b16 %v2017, %v2016
  %v2172 = vpack.c.b16 %v2019, %v2018
  %v2173 = vpack.c.b16 %v2021, %v2020
  %v2174 = vpack.c.b16 %v2023, %v2022
  %v2175 = vpack.c.b16 %v2025, %v2024
  %v2176 = vpack.c.b16 %v2027, %v2026
  %v2177 = vpack.c.b16 %v2029, %v2028
  %v2178 = vpack.c.b16 %v2031, %v2030
  %v2179 = vpack.c.b16 %v2033, %v2032
  %v2180 = vpack.c.b16 %v2035, %v2034
  %v2181 = vpack.c.b16 %v2037, %v2036
  %v2182 = vpack.c.b16 %v2039, %v2038
  %v2183 = vpack.c.b16 %v2041, %v2040
  %v2184 = vpack.c.b16 %v2043, %v2042
  %v2185 = vpack.c.b16 %v2045, %v2044
  %v2186 = vpack.c.b16 %v2047, %v2046
  %v2187 = vpack.c.b16 %v2049, %v2048
  %v2188 = vpack.c.b16 %v2051, %v2050
  %v2189 = vpack.c.b16 %v2053, %v2052
  %v2190 = vpack.c.b16 %v2055, %v2054
  %v2191 = vpack.c.b16 %v2057, %v2056
  %v2192 = vpack.c.b16 %v2059, %v2058
  %v2193 = vpack.c.b16 %v2061, %v2060
  %v2194 = vpack.c.b16 %v2063, %v2062
  %v2195 = vpack.c.b16 %v2065, %v2064
  %v2196 = vpack.c.b16 %v2067, %v2066
  %v2197 = vpack.c.b16 %v2069, %v2068
  %v2198 = vpack.c.b16 %v2071, %v2070
  %v2199 = vpack.c.b16 %v2073, %v2072
  %v2200 = vpack.c.b16 %v2075, %v2074
  %v2201 = vpack.c.b16 %v2077, %v2076
  %v2202 = vpack.c.b16 %v2079, %v2078
  %v2203 = vpack.c.b16 %v2081, %v2080
  %v2204 = vpack.c.b16 %v2083, %v2082
  %v2205 = vpack.c.b16 %v2085, %v2084
  %v2206 = vpack.c.b16 %v2087, %v2086
  %v2207 = vpack.c.b16 %v2089, %v2088
  %v2208 = vpack.c.b16 %v2091, %v2090
  %v2209 = vpack.c.b16 %v2093, %v2092
  %v2210 = vpack.c.b16 %v2095, %v2094
  %v2211 = vpack.c.b16 %v2097, %v2096
  %v2212 = vpack.c.b16 %v2099, %v2098
  %v2213 = vpack.c.b16 %v2101, %v2100
  %v2214 = vpack.c.b16 %v2103, %v2102
  %v2215 = vpack.c.b16 %v2105, %v2104
  %v2216 = vpack.c.b16 %v2107, %v2106
  %v2217 = vpack.c.b16 %v2109, %v2108
  %v2218 = vpack.c.b16 %v2111, %v2110
  %v2219 = vpack.c.b16 %v2113, %v2112
  %v2220 = vpack.c.b16 %v2115, %v2114
  %v2221 = vpack.c.b16 %v2117, %v2116
  %v2222 = vpack.c.b16 %v2119, %v2118
  %v2223 = vpack.c.b16 %v2121, %v2120
  %v2224 = vpack.c.b16 %v2123, %v2122
  %v2225 = vpack.c.b16 %v2125, %v2124
  %v2226 = vpack.c.b16 %v2127, %v2126
  %v2227 = vpack.c.b16 %v2129, %v2128
  %v2229 = vsel %vm740, %v2130, 0
  %v2232 = vsel %vm740, %v2131, 0
  %v2235 = vsel %vm740, %v2132, 0
  %v2238 = vsel %vm740, %v2133, 0
  %v2241 = vsel %vm740, %v2134, 0
  %v2244 = vsel %vm740, %v2135, 0
  %v2247 = vsel %vm740, %v2136, 0
  %v2250 = vsel %vm740, %v2137, 0
  %v2253 = vsel %vm740, %v2138, 0
  %v2256 = vsel %vm740, %v2139, 0
  %v2259 = vsel %vm740, %v2140, 0
  %v2262 = vsel %vm740, %v2141, 0
  %v2265 = vsel %vm740, %v2142, 0
  %v2268 = vsel %vm740, %v2143, 0
  %v2271 = vsel %vm740, %v2144, 0
  %v2274 = vsel %vm740, %v2145, 0
  %v2277 = vsel %vm740, %v2146, 0
  %v2280 = vsel %vm740, %v2147, 0
  %v2283 = vsel %vm740, %v2148, 0
  %v2286 = vsel %vm740, %v2149, 0
  %v2289 = vsel %vm740, %v2150, 0
  %v2292 = vsel %vm740, %v2151, 0
  %v2295 = vsel %vm740, %v2152, 0
  %v2298 = vsel %vm740, %v2153, 0
  %v2301 = vsel %vm740, %v2154, 0
  %v2304 = vsel %vm740, %v2155, 0
  %v2307 = vsel %vm740, %v2156, 0
  %v2310 = vsel %vm740, %v2157, 0
  %v2313 = vsel %vm740, %v2158, 0
  %v2316 = vsel %vm740, %v2159, 0
  %v2319 = vsel %vm740, %v2160, 0
  %v2322 = vsel %vm740, %v2161, 0
  %v2325 = vsel %vm740, %v2162, 0
  %v2328 = vsel %vm740, %v2163, 0
  %v2331 = vsel %vm740, %v2164, 0
  %v2334 = vsel %vm740, %v2165, 0
  %v2337 = vsel %vm740, %v2166, 0
  %v2340 = vsel %vm740, %v2167, 0
  %v2343 = vsel %vm740, %v2168, 0
  %v2346 = vsel %vm740, %v2169, 0
  %v2349 = vsel %vm740, %v2170, 0
  %v2352 = vsel %vm740, %v2171, 0
  %v2355 = vsel %vm740, %v2172, 0
  %v2358 = vsel %vm740, %v2173, 0
  %v2361 = vsel %vm740, %v2174, 0
  %v2364 = vsel %vm740, %v2175, 0
  %v2367 = vsel %vm740, %v2176, 0
  %v2370 = vsel %vm740, %v2177, 0
  %v2373 = vsel %vm740, %v2178, 0
  %v2376 = vsel %vm740, %v2179, 0
  %v2379 = vsel %vm740, %v2180, 0
  %v2382 = vsel %vm740, %v2181, 0
  %v2385 = vsel %vm740, %v2182, 0
  %v2388 = vsel %vm740, %v2183, 0
  %v2391 = vsel %vm740, %v2184, 0
  %v2394 = vsel %vm740, %v2185, 0
  %v2397 = vsel %vm740, %v2186, 0
  %v2400 = vsel %vm740, %v2187, 0
  %v2403 = vsel %vm740, %v2188, 0
  %v2406 = vsel %vm740, %v2189, 0
  %v2409 = vsel %vm740, %v2190, 0
  %v2412 = vsel %vm740, %v2191, 0
  %v2415 = vsel %vm740, %v2192, 0
  %v2418 = vsel %vm740, %v2193, 0
  %v2421 = vsel %vm740, %v2194, 0
  %v2424 = vsel %vm740, %v2195, 0
  %v2427 = vsel %vm740, %v2196, 0
  %v2430 = vsel %vm740, %v2197, 0
  %v2433 = vsel %vm740, %v2198, 0
  %v2436 = vsel %vm740, %v2199, 0
  %v2439 = vsel %vm740, %v2200, 0
  %v2442 = vsel %vm740, %v2201, 0
  %v2445 = vsel %vm740, %v2202, 0
  %v2448 = vsel %vm740, %v2203, 0
  %v2451 = vsel %vm740, %v2204, 0
  %v2454 = vsel %vm740, %v2205, 0
  %v2457 = vsel %vm740, %v2206, 0
  %v2460 = vsel %vm740, %v2207, 0
  %v2463 = vsel %vm740, %v2208, 0
  %v2466 = vsel %vm740, %v2209, 0
  %v2469 = vsel %vm740, %v2210, 0
  %v2472 = vsel %vm740, %v2211, 0
  %v2475 = vsel %vm740, %v2212, 0
  %v2478 = vsel %vm740, %v2213, 0
  %v2481 = vsel %vm740, %v2214, 0
  %v2484 = vsel %vm740, %v2215, 0
  %v2487 = vsel %vm740, %v2216, 0
  %v2490 = vsel %vm740, %v2217, 0
  %v2493 = vsel %vm740, %v2218, 0
  %v2496 = vsel %vm740, %v2219, 0
  %v2499 = vsel %vm740, %v2220, 0
  %v2502 = vsel %vm740, %v2221, 0
  %v2505 = vsel %vm740, %v2222, 0
  %v2508 = vsel %vm740, %v2223, 0
  %v2511 = vsel %vm740, %v2224, 0
  %v2514 = vsel %vm740, %v2225, 0
  %v2517 = vsel %vm740, %v2226, 0
  %v2520 = vsel %vm740, %v2227, 0
  %2522 = vmatpush.bf16.msra.mxu0 0
  %2523 = vmatpush.bf16.msra.mxu0 0
  %2524 = vmatpush.bf16.msra.mxu0 0
  %2525 = vmatpush.bf16.msra.mxu0 %v1040
  %2526 = vmatpush.bf16.msra.mxu0 %v734
  %2527 = vmatpush.bf16.msra.mxu0 %v733
  %2528 = vmatpush.bf16.msra.mxu0 %v732
  %2529 = vmatpush.bf16.msra.mxu0 %v731
  %2530 = vmatmul.bf16.gmra.mxu0 %v2229
  %v2531 = vpop.f32.mrf.mxu0
  %v2532 = vadd.f32 0.0, %v2531
  %v2533 = vpop.f32.mrf.mxu0
  %v2534 = vadd.f32 0.0, %v2533
  %2535 = vmatmul.bf16.gmra.mxu0 %v2232
  %v2536 = vpop.f32.mrf.mxu0
  %v2537 = vadd.f32 0.0, %v2536
  %v2538 = vpop.f32.mrf.mxu0
  %v2539 = vadd.f32 0.0, %v2538
  %2540 = vmatmul.bf16.gmra.mxu0 %v2235
  %v2541 = vpop.f32.mrf.mxu0
  %v2542 = vadd.f32 0.0, %v2541
  %v2543 = vpop.f32.mrf.mxu0
  %v2544 = vadd.f32 0.0, %v2543
  %2545 = vmatmul.bf16.gmra.mxu0 %v2238
  %v2546 = vpop.f32.mrf.mxu0
  %v2547 = vadd.f32 0.0, %v2546
  %v2548 = vpop.f32.mrf.mxu0
  %v2549 = vadd.f32 0.0, %v2548
  %2550 = vmatmul.bf16.gmra.mxu0 %v2241
  %v2551 = vpop.f32.mrf.mxu0
  %v2552 = vadd.f32 0.0, %v2551
  %v2553 = vpop.f32.mrf.mxu0
  %v2554 = vadd.f32 0.0, %v2553
  %2555 = vmatmul.bf16.gmra.mxu0 %v2244
  %v2556 = vpop.f32.mrf.mxu0
  %v2557 = vadd.f32 0.0, %v2556
  %v2558 = vpop.f32.mrf.mxu0
  %v2559 = vadd.f32 0.0, %v2558
  %2560 = vmatmul.bf16.gmra.mxu0 %v2247
  %v2561 = vpop.f32.mrf.mxu0
  %v2562 = vadd.f32 0.0, %v2561
  %v2563 = vpop.f32.mrf.mxu0
  %v2564 = vadd.f32 0.0, %v2563
  %2565 = vmatmul.bf16.gmra.mxu0 %v2250
  %v2566 = vpop.f32.mrf.mxu0
  %v2567 = vadd.f32 0.0, %v2566
  %v2568 = vpop.f32.mrf.mxu0
  %v2569 = vadd.f32 0.0, %v2568
  %2570 = vmatmul.bf16.gmra.mxu0 %v2253
  %v2571 = vpop.f32.mrf.mxu0
  %v2572 = vadd.f32 0.0, %v2571
  %v2573 = vpop.f32.mrf.mxu0
  %v2574 = vadd.f32 0.0, %v2573
  %2575 = vmatmul.bf16.gmra.mxu0 %v2256
  %v2576 = vpop.f32.mrf.mxu0
  %v2577 = vadd.f32 0.0, %v2576
  %v2578 = vpop.f32.mrf.mxu0
  %v2579 = vadd.f32 0.0, %v2578
  %2580 = vmatmul.bf16.gmra.mxu0 %v2259
  %v2581 = vpop.f32.mrf.mxu0
  %v2582 = vadd.f32 0.0, %v2581
  %v2583 = vpop.f32.mrf.mxu0
  %v2584 = vadd.f32 0.0, %v2583
  %2585 = vmatmul.bf16.gmra.mxu0 %v2262
  %v2586 = vpop.f32.mrf.mxu0
  %v2587 = vadd.f32 0.0, %v2586
  %v2588 = vpop.f32.mrf.mxu0
  %v2589 = vadd.f32 0.0, %v2588
  %2590 = vmatmul.bf16.gmra.mxu0 %v2265
  %v2591 = vpop.f32.mrf.mxu0
  %v2592 = vadd.f32 0.0, %v2591
  %v2593 = vpop.f32.mrf.mxu0
  %v2594 = vadd.f32 0.0, %v2593
  %2595 = vmatmul.bf16.gmra.mxu0 %v2268
  %v2596 = vpop.f32.mrf.mxu0
  %v2597 = vadd.f32 0.0, %v2596
  %v2598 = vpop.f32.mrf.mxu0
  %v2599 = vadd.f32 0.0, %v2598
  %2600 = vmatmul.bf16.gmra.mxu0 %v2271
  %v2601 = vpop.f32.mrf.mxu0
  %v2602 = vadd.f32 0.0, %v2601
  %v2603 = vpop.f32.mrf.mxu0
  %v2604 = vadd.f32 0.0, %v2603
  %2605 = vmatmul.bf16.gmra.mxu0 %v2274
  %v2606 = vpop.f32.mrf.mxu0
  %v2607 = vadd.f32 0.0, %v2606
  %v2608 = vpop.f32.mrf.mxu0
  %v2609 = vadd.f32 0.0, %v2608
  %2610 = vmatmul.bf16.gmra.mxu0 %v2277
  %v2611 = vpop.f32.mrf.mxu0
  %v2612 = vadd.f32 0.0, %v2611
  %v2613 = vpop.f32.mrf.mxu0
  %v2614 = vadd.f32 0.0, %v2613
  %2615 = vmatmul.bf16.gmra.mxu0 %v2280
  %v2616 = vpop.f32.mrf.mxu0
  %v2617 = vadd.f32 0.0, %v2616
  %v2618 = vpop.f32.mrf.mxu0
  %v2619 = vadd.f32 0.0, %v2618
  %2620 = vmatmul.bf16.gmra.mxu0 %v2283
  %v2621 = vpop.f32.mrf.mxu0
  %v2622 = vadd.f32 0.0, %v2621
  %v2623 = vpop.f32.mrf.mxu0
  %v2624 = vadd.f32 0.0, %v2623
  %2625 = vmatmul.bf16.gmra.mxu0 %v2286
  %v2626 = vpop.f32.mrf.mxu0
  %v2627 = vadd.f32 0.0, %v2626
  %v2628 = vpop.f32.mrf.mxu0
  %v2629 = vadd.f32 0.0, %v2628
  %2630 = vmatmul.bf16.gmra.mxu0 %v2289
  %v2631 = vpop.f32.mrf.mxu0
  %v2632 = vadd.f32 0.0, %v2631
  %v2633 = vpop.f32.mrf.mxu0
  %v2634 = vadd.f32 0.0, %v2633
  %2635 = vmatmul.bf16.gmra.mxu0 %v2292
  %v2636 = vpop.f32.mrf.mxu0
  %v2637 = vadd.f32 0.0, %v2636
  %v2638 = vpop.f32.mrf.mxu0
  %v2639 = vadd.f32 0.0, %v2638
  %2640 = vmatmul.bf16.gmra.mxu0 %v2295
  %v2641 = vpop.f32.mrf.mxu0
  %v2642 = vadd.f32 0.0, %v2641
  %v2643 = vpop.f32.mrf.mxu0
  %v2644 = vadd.f32 0.0, %v2643
  %2645 = vmatmul.bf16.gmra.mxu0 %v2298
  %v2646 = vpop.f32.mrf.mxu0
  %v2647 = vadd.f32 0.0, %v2646
  %v2648 = vpop.f32.mrf.mxu0
  %v2649 = vadd.f32 0.0, %v2648
  %2650 = vmatmul.bf16.gmra.mxu0 %v2301
  %v2651 = vpop.f32.mrf.mxu0
  %v2652 = vadd.f32 0.0, %v2651
  %v2653 = vpop.f32.mrf.mxu0
  %v2654 = vadd.f32 0.0, %v2653
  %2655 = vmatmul.bf16.gmra.mxu0 %v2304
  %v2656 = vpop.f32.mrf.mxu0
  %v2657 = vadd.f32 0.0, %v2656
  %v2658 = vpop.f32.mrf.mxu0
  %v2659 = vadd.f32 0.0, %v2658
  %2660 = vmatmul.bf16.gmra.mxu0 %v2307
  %v2661 = vpop.f32.mrf.mxu0
  %v2662 = vadd.f32 0.0, %v2661
  %v2663 = vpop.f32.mrf.mxu0
  %v2664 = vadd.f32 0.0, %v2663
  %2665 = vmatmul.bf16.gmra.mxu0 %v2310
  %v2666 = vpop.f32.mrf.mxu0
  %v2667 = vadd.f32 0.0, %v2666
  %v2668 = vpop.f32.mrf.mxu0
  %v2669 = vadd.f32 0.0, %v2668
  %2670 = vmatmul.bf16.gmra.mxu0 %v2313
  %v2671 = vpop.f32.mrf.mxu0
  %v2672 = vadd.f32 0.0, %v2671
  %v2673 = vpop.f32.mrf.mxu0
  %v2674 = vadd.f32 0.0, %v2673
  %2675 = vmatmul.bf16.gmra.mxu0 %v2316
  %v2676 = vpop.f32.mrf.mxu0
  %v2677 = vadd.f32 0.0, %v2676
  %v2678 = vpop.f32.mrf.mxu0
  %v2679 = vadd.f32 0.0, %v2678
  %2680 = vmatmul.bf16.gmra.mxu0 %v2319
  %v2681 = vpop.f32.mrf.mxu0
  %v2682 = vadd.f32 0.0, %v2681
  %v2683 = vpop.f32.mrf.mxu0
  %v2684 = vadd.f32 0.0, %v2683
  %2685 = vmatmul.bf16.gmra.mxu0 %v2322
  %v2686 = vpop.f32.mrf.mxu0
  %v2687 = vadd.f32 0.0, %v2686
  %v2688 = vpop.f32.mrf.mxu0
  %v2689 = vadd.f32 0.0, %v2688
  %2690 = vmatmul.bf16.gmra.mxu0 %v2325
  %v2691 = vpop.f32.mrf.mxu0
  %v2692 = vadd.f32 0.0, %v2691
  %v2693 = vpop.f32.mrf.mxu0
  %v2694 = vadd.f32 0.0, %v2693
  %2695 = vmatmul.bf16.gmra.mxu0 %v2328
  %v2696 = vpop.f32.mrf.mxu0
  %v2697 = vadd.f32 0.0, %v2696
  %v2698 = vpop.f32.mrf.mxu0
  %v2699 = vadd.f32 0.0, %v2698
  %2700 = vmatmul.bf16.gmra.mxu0 %v2331
  %v2701 = vpop.f32.mrf.mxu0
  %v2702 = vadd.f32 0.0, %v2701
  %v2703 = vpop.f32.mrf.mxu0
  %v2704 = vadd.f32 0.0, %v2703
  %2705 = vmatmul.bf16.gmra.mxu0 %v2334
  %v2706 = vpop.f32.mrf.mxu0
  %v2707 = vadd.f32 0.0, %v2706
  %v2708 = vpop.f32.mrf.mxu0
  %v2709 = vadd.f32 0.0, %v2708
  %2710 = vmatmul.bf16.gmra.mxu0 %v2337
  %v2711 = vpop.f32.mrf.mxu0
  %v2712 = vadd.f32 0.0, %v2711
  %v2713 = vpop.f32.mrf.mxu0
  %v2714 = vadd.f32 0.0, %v2713
  %2715 = vmatmul.bf16.gmra.mxu0 %v2340
  %v2716 = vpop.f32.mrf.mxu0
  %v2717 = vadd.f32 0.0, %v2716
  %v2718 = vpop.f32.mrf.mxu0
  %v2719 = vadd.f32 0.0, %v2718
  %2720 = vmatmul.bf16.gmra.mxu0 %v2343
  %v2721 = vpop.f32.mrf.mxu0
  %v2722 = vadd.f32 0.0, %v2721
  %v2723 = vpop.f32.mrf.mxu0
  %v2724 = vadd.f32 0.0, %v2723
  %2725 = vmatmul.bf16.gmra.mxu0 %v2346
  %v2726 = vpop.f32.mrf.mxu0
  %v2727 = vadd.f32 0.0, %v2726
  %v2728 = vpop.f32.mrf.mxu0
  %v2729 = vadd.f32 0.0, %v2728
  %2730 = vmatmul.bf16.gmra.mxu0 %v2349
  %v2731 = vpop.f32.mrf.mxu0
  %v2732 = vadd.f32 0.0, %v2731
  %v2733 = vpop.f32.mrf.mxu0
  %v2734 = vadd.f32 0.0, %v2733
  %2735 = vmatmul.bf16.gmra.mxu0 %v2352
  %v2736 = vpop.f32.mrf.mxu0
  %v2737 = vadd.f32 0.0, %v2736
  %v2738 = vpop.f32.mrf.mxu0
  %v2739 = vadd.f32 0.0, %v2738
  %2740 = vmatmul.bf16.gmra.mxu0 %v2355
  %v2741 = vpop.f32.mrf.mxu0
  %v2742 = vadd.f32 0.0, %v2741
  %v2743 = vpop.f32.mrf.mxu0
  %v2744 = vadd.f32 0.0, %v2743
  %2745 = vmatmul.bf16.gmra.mxu0 %v2358
  %v2746 = vpop.f32.mrf.mxu0
  %v2747 = vadd.f32 0.0, %v2746
  %v2748 = vpop.f32.mrf.mxu0
  %v2749 = vadd.f32 0.0, %v2748
  %2750 = vmatmul.bf16.gmra.mxu0 %v2361
  %v2751 = vpop.f32.mrf.mxu0
  %v2752 = vadd.f32 0.0, %v2751
  %v2753 = vpop.f32.mrf.mxu0
  %v2754 = vadd.f32 0.0, %v2753
  %2755 = vmatmul.bf16.gmra.mxu0 %v2364
  %v2756 = vpop.f32.mrf.mxu0
  %v2757 = vadd.f32 0.0, %v2756
  %v2758 = vpop.f32.mrf.mxu0
  %v2759 = vadd.f32 0.0, %v2758
  %2760 = vmatmul.bf16.gmra.mxu0 %v2367
  %v2761 = vpop.f32.mrf.mxu0
  %v2762 = vadd.f32 0.0, %v2761
  %v2763 = vpop.f32.mrf.mxu0
  %v2764 = vadd.f32 0.0, %v2763
  %2765 = vmatmul.bf16.gmra.mxu0 %v2370
  %v2766 = vpop.f32.mrf.mxu0
  %v2767 = vadd.f32 0.0, %v2766
  %v2768 = vpop.f32.mrf.mxu0
  %v2769 = vadd.f32 0.0, %v2768
  %2770 = vmatmul.bf16.gmra.mxu0 %v2373
  %v2771 = vpop.f32.mrf.mxu0
  %v2772 = vadd.f32 0.0, %v2771
  %v2773 = vpop.f32.mrf.mxu0
  %v2774 = vadd.f32 0.0, %v2773
  %2775 = vmatmul.bf16.gmra.mxu0 %v2376
  %v2776 = vpop.f32.mrf.mxu0
  %v2777 = vadd.f32 0.0, %v2776
  %v2778 = vpop.f32.mrf.mxu0
  %v2779 = vadd.f32 0.0, %v2778
  %2780 = vmatmul.bf16.gmra.mxu0 %v2379
  %v2781 = vpop.f32.mrf.mxu0
  %v2782 = vadd.f32 0.0, %v2781
  %v2783 = vpop.f32.mrf.mxu0
  %v2784 = vadd.f32 0.0, %v2783
  %2785 = vmatmul.bf16.gmra.mxu0 %v2382
  %v2786 = vpop.f32.mrf.mxu0
  %v2787 = vadd.f32 0.0, %v2786
  %v2788 = vpop.f32.mrf.mxu0
  %v2789 = vadd.f32 0.0, %v2788
  %2790 = vmatmul.bf16.gmra.mxu0 %v2385
  %v2791 = vpop.f32.mrf.mxu0
  %v2792 = vadd.f32 0.0, %v2791
  %v2793 = vpop.f32.mrf.mxu0
  %v2794 = vadd.f32 0.0, %v2793
  %2795 = vmatmul.bf16.gmra.mxu0 %v2388
  %v2796 = vpop.f32.mrf.mxu0
  %v2797 = vadd.f32 0.0, %v2796
  %v2798 = vpop.f32.mrf.mxu0
  %v2799 = vadd.f32 0.0, %v2798
  %2800 = vmatmul.bf16.gmra.mxu0 %v2391
  %v2801 = vpop.f32.mrf.mxu0
  %v2802 = vadd.f32 0.0, %v2801
  %v2803 = vpop.f32.mrf.mxu0
  %v2804 = vadd.f32 0.0, %v2803
  %2805 = vmatmul.bf16.gmra.mxu0 %v2394
  %v2806 = vpop.f32.mrf.mxu0
  %v2807 = vadd.f32 0.0, %v2806
  %v2808 = vpop.f32.mrf.mxu0
  %v2809 = vadd.f32 0.0, %v2808
  %2810 = vmatmul.bf16.gmra.mxu0 %v2397
  %v2811 = vpop.f32.mrf.mxu0
  %v2812 = vadd.f32 0.0, %v2811
  %v2813 = vpop.f32.mrf.mxu0
  %v2814 = vadd.f32 0.0, %v2813
  %2815 = vmatmul.bf16.gmra.mxu0 %v2400
  %v2816 = vpop.f32.mrf.mxu0
  %v2817 = vadd.f32 0.0, %v2816
  %v2818 = vpop.f32.mrf.mxu0
  %v2819 = vadd.f32 0.0, %v2818
  %2820 = vmatmul.bf16.gmra.mxu0 %v2403
  %v2821 = vpop.f32.mrf.mxu0
  %v2822 = vadd.f32 0.0, %v2821
  %v2823 = vpop.f32.mrf.mxu0
  %v2824 = vadd.f32 0.0, %v2823
  %2825 = vmatmul.bf16.gmra.mxu0 %v2406
  %v2826 = vpop.f32.mrf.mxu0
  %v2827 = vadd.f32 0.0, %v2826
  %v2828 = vpop.f32.mrf.mxu0
  %v2829 = vadd.f32 0.0, %v2828
  %2830 = vmatmul.bf16.gmra.mxu0 %v2409
  %v2831 = vpop.f32.mrf.mxu0
  %v2832 = vadd.f32 0.0, %v2831
  %v2833 = vpop.f32.mrf.mxu0
  %v2834 = vadd.f32 0.0, %v2833
  %2835 = vmatmul.bf16.gmra.mxu0 %v2412
  %v2836 = vpop.f32.mrf.mxu0
  %v2837 = vadd.f32 0.0, %v2836
  %v2838 = vpop.f32.mrf.mxu0
  %v2839 = vadd.f32 0.0, %v2838
  %2840 = vmatmul.bf16.gmra.mxu0 %v2415
  %v2841 = vpop.f32.mrf.mxu0
  %v2842 = vadd.f32 0.0, %v2841
  %v2843 = vpop.f32.mrf.mxu0
  %v2844 = vadd.f32 0.0, %v2843
  %2845 = vmatmul.bf16.gmra.mxu0 %v2418
  %v2846 = vpop.f32.mrf.mxu0
  %v2847 = vadd.f32 0.0, %v2846
  %v2848 = vpop.f32.mrf.mxu0
  %v2849 = vadd.f32 0.0, %v2848
  %2850 = vmatmul.bf16.gmra.mxu0 %v2421
  %v2851 = vpop.f32.mrf.mxu0
  %v2852 = vadd.f32 0.0, %v2851
  %v2853 = vpop.f32.mrf.mxu0
  %v2854 = vadd.f32 0.0, %v2853
  %2855 = vmatmul.bf16.gmra.mxu0 %v2424
  %v2856 = vpop.f32.mrf.mxu0
  %v2857 = vadd.f32 0.0, %v2856
  %v2858 = vpop.f32.mrf.mxu0
  %v2859 = vadd.f32 0.0, %v2858
  %2860 = vmatmul.bf16.gmra.mxu0 %v2427
  %v2861 = vpop.f32.mrf.mxu0
  %v2862 = vadd.f32 0.0, %v2861
  %v2863 = vpop.f32.mrf.mxu0
  %v2864 = vadd.f32 0.0, %v2863
  %2865 = vmatmul.bf16.gmra.mxu0 %v2430
  %v2866 = vpop.f32.mrf.mxu0
  %v2867 = vadd.f32 0.0, %v2866
  %v2868 = vpop.f32.mrf.mxu0
  %v2869 = vadd.f32 0.0, %v2868
  %2870 = vmatmul.bf16.gmra.mxu0 %v2433
  %v2871 = vpop.f32.mrf.mxu0
  %v2872 = vadd.f32 0.0, %v2871
  %v2873 = vpop.f32.mrf.mxu0
  %v2874 = vadd.f32 0.0, %v2873
  %2875 = vmatmul.bf16.gmra.mxu0 %v2436
  %v2876 = vpop.f32.mrf.mxu0
  %v2877 = vadd.f32 0.0, %v2876
  %v2878 = vpop.f32.mrf.mxu0
  %v2879 = vadd.f32 0.0, %v2878
  %2880 = vmatmul.bf16.gmra.mxu0 %v2439
  %v2881 = vpop.f32.mrf.mxu0
  %v2882 = vadd.f32 0.0, %v2881
  %v2883 = vpop.f32.mrf.mxu0
  %v2884 = vadd.f32 0.0, %v2883
  %2885 = vmatmul.bf16.gmra.mxu0 %v2442
  %v2886 = vpop.f32.mrf.mxu0
  %v2887 = vadd.f32 0.0, %v2886
  %v2888 = vpop.f32.mrf.mxu0
  %v2889 = vadd.f32 0.0, %v2888
  %2890 = vmatmul.bf16.gmra.mxu0 %v2445
  %v2891 = vpop.f32.mrf.mxu0
  %v2892 = vadd.f32 0.0, %v2891
  %v2893 = vpop.f32.mrf.mxu0
  %v2894 = vadd.f32 0.0, %v2893
  %2895 = vmatmul.bf16.gmra.mxu0 %v2448
  %v2896 = vpop.f32.mrf.mxu0
  %v2897 = vadd.f32 0.0, %v2896
  %v2898 = vpop.f32.mrf.mxu0
  %v2899 = vadd.f32 0.0, %v2898
  %2900 = vmatmul.bf16.gmra.mxu0 %v2451
  %v2901 = vpop.f32.mrf.mxu0
  %v2902 = vadd.f32 0.0, %v2901
  %v2903 = vpop.f32.mrf.mxu0
  %v2904 = vadd.f32 0.0, %v2903
  %2905 = vmatmul.bf16.gmra.mxu0 %v2454
  %v2906 = vpop.f32.mrf.mxu0
  %v2907 = vadd.f32 0.0, %v2906
  %v2908 = vpop.f32.mrf.mxu0
  %v2909 = vadd.f32 0.0, %v2908
  %2910 = vmatmul.bf16.gmra.mxu0 %v2457
  %v2911 = vpop.f32.mrf.mxu0
  %v2912 = vadd.f32 0.0, %v2911
  %v2913 = vpop.f32.mrf.mxu0
  %v2914 = vadd.f32 0.0, %v2913
  %2915 = vmatmul.bf16.gmra.mxu0 %v2460
  %v2916 = vpop.f32.mrf.mxu0
  %v2917 = vadd.f32 0.0, %v2916
  %v2918 = vpop.f32.mrf.mxu0
  %v2919 = vadd.f32 0.0, %v2918
  %2920 = vmatmul.bf16.gmra.mxu0 %v2463
  %v2921 = vpop.f32.mrf.mxu0
  %v2922 = vadd.f32 0.0, %v2921
  %v2923 = vpop.f32.mrf.mxu0
  %v2924 = vadd.f32 0.0, %v2923
  %2925 = vmatmul.bf16.gmra.mxu0 %v2466
  %v2926 = vpop.f32.mrf.mxu0
  %v2927 = vadd.f32 0.0, %v2926
  %v2928 = vpop.f32.mrf.mxu0
  %v2929 = vadd.f32 0.0, %v2928
  %2930 = vmatmul.bf16.gmra.mxu0 %v2469
  %v2931 = vpop.f32.mrf.mxu0
  %v2932 = vadd.f32 0.0, %v2931
  %v2933 = vpop.f32.mrf.mxu0
  %v2934 = vadd.f32 0.0, %v2933
  %2935 = vmatmul.bf16.gmra.mxu0 %v2472
  %v2936 = vpop.f32.mrf.mxu0
  %v2937 = vadd.f32 0.0, %v2936
  %v2938 = vpop.f32.mrf.mxu0
  %v2939 = vadd.f32 0.0, %v2938
  %2940 = vmatmul.bf16.gmra.mxu0 %v2475
  %v2941 = vpop.f32.mrf.mxu0
  %v2942 = vadd.f32 0.0, %v2941
  %v2943 = vpop.f32.mrf.mxu0
  %v2944 = vadd.f32 0.0, %v2943
  %2945 = vmatmul.bf16.gmra.mxu0 %v2478
  %v2946 = vpop.f32.mrf.mxu0
  %v2947 = vadd.f32 0.0, %v2946
  %v2948 = vpop.f32.mrf.mxu0
  %v2949 = vadd.f32 0.0, %v2948
  %2950 = vmatmul.bf16.gmra.mxu0 %v2481
  %v2951 = vpop.f32.mrf.mxu0
  %v2952 = vadd.f32 0.0, %v2951
  %v2953 = vpop.f32.mrf.mxu0
  %v2954 = vadd.f32 0.0, %v2953
  %2955 = vmatmul.bf16.gmra.mxu0 %v2484
  %v2956 = vpop.f32.mrf.mxu0
  %v2957 = vadd.f32 0.0, %v2956
  %v2958 = vpop.f32.mrf.mxu0
  %v2959 = vadd.f32 0.0, %v2958
  %2960 = vmatmul.bf16.gmra.mxu0 %v2487
  %v2961 = vpop.f32.mrf.mxu0
  %v2962 = vadd.f32 0.0, %v2961
  %v2963 = vpop.f32.mrf.mxu0
  %v2964 = vadd.f32 0.0, %v2963
  %2965 = vmatmul.bf16.gmra.mxu0 %v2490
  %v2966 = vpop.f32.mrf.mxu0
  %v2967 = vadd.f32 0.0, %v2966
  %v2968 = vpop.f32.mrf.mxu0
  %v2969 = vadd.f32 0.0, %v2968
  %2970 = vmatmul.bf16.gmra.mxu0 %v2493
  %v2971 = vpop.f32.mrf.mxu0
  %v2972 = vadd.f32 0.0, %v2971
  %v2973 = vpop.f32.mrf.mxu0
  %v2974 = vadd.f32 0.0, %v2973
  %2975 = vmatmul.bf16.gmra.mxu0 %v2496
  %v2976 = vpop.f32.mrf.mxu0
  %v2977 = vadd.f32 0.0, %v2976
  %v2978 = vpop.f32.mrf.mxu0
  %v2979 = vadd.f32 0.0, %v2978
  %2980 = vmatmul.bf16.gmra.mxu0 %v2499
  %v2981 = vpop.f32.mrf.mxu0
  %v2982 = vadd.f32 0.0, %v2981
  %v2983 = vpop.f32.mrf.mxu0
  %v2984 = vadd.f32 0.0, %v2983
  %2985 = vmatmul.bf16.gmra.mxu0 %v2502
  %v2986 = vpop.f32.mrf.mxu0
  %v2987 = vadd.f32 0.0, %v2986
  %v2988 = vpop.f32.mrf.mxu0
  %v2989 = vadd.f32 0.0, %v2988
  %2990 = vmatmul.bf16.gmra.mxu0 %v2505
  %v2991 = vpop.f32.mrf.mxu0
  %v2992 = vadd.f32 0.0, %v2991
  %v2993 = vpop.f32.mrf.mxu0
  %v2994 = vadd.f32 0.0, %v2993
  %2995 = vmatmul.bf16.gmra.mxu0 %v2508
  %v2996 = vpop.f32.mrf.mxu0
  %v2997 = vadd.f32 0.0, %v2996
  %v2998 = vpop.f32.mrf.mxu0
  %v2999 = vadd.f32 0.0, %v2998
  %3000 = vmatmul.bf16.gmra.mxu0 %v2511
  %v3001 = vpop.f32.mrf.mxu0
  %v3002 = vadd.f32 0.0, %v3001
  %v3003 = vpop.f32.mrf.mxu0
  %v3004 = vadd.f32 0.0, %v3003
  %3005 = vmatmul.bf16.gmra.mxu0 %v2514
  %v3006 = vpop.f32.mrf.mxu0
  %v3007 = vadd.f32 0.0, %v3006
  %v3008 = vpop.f32.mrf.mxu0
  %v3009 = vadd.f32 0.0, %v3008
  %3010 = vmatmul.bf16.gmra.mxu0 %v2517
  %v3011 = vpop.f32.mrf.mxu0
  %v3012 = vadd.f32 0.0, %v3011
  %v3013 = vpop.f32.mrf.mxu0
  %v3014 = vadd.f32 0.0, %v3013
  %3015 = vmatmul.bf16.gmra.mxu0 %v2520
  %v3016 = vpop.f32.mrf.mxu0
  %v3017 = vadd.f32 0.0, %v3016
  %v3018 = vpop.f32.mrf.mxu0
  %v3019 = vadd.f32 0.0, %v3018
  %3020 = vdwg.mxu0
  %v3021 = vmax.f32 %v1052, %v2532
  %v3022 = vmax.f32 %v1054, %v2534
  %v3023 = vmax.f32 %v1057, %v2537
  %v3024 = vmax.f32 %v1059, %v2539
  %v3025 = vmax.f32 %v1062, %v2542
  %v3026 = vmax.f32 %v1064, %v2544
  %v3027 = vmax.f32 %v1067, %v2547
  %v3028 = vmax.f32 %v1069, %v2549
  %v3029 = vmax.f32 %v1072, %v2552
  %v3030 = vmax.f32 %v1074, %v2554
  %v3031 = vmax.f32 %v1077, %v2557
  %v3032 = vmax.f32 %v1079, %v2559
  %v3033 = vmax.f32 %v1082, %v2562
  %v3034 = vmax.f32 %v1084, %v2564
  %v3035 = vmax.f32 %v1087, %v2567
  %v3036 = vmax.f32 %v1089, %v2569
  %v3037 = vmax.f32 %v1092, %v2572
  %v3038 = vmax.f32 %v1094, %v2574
  %v3039 = vmax.f32 %v1097, %v2577
  %v3040 = vmax.f32 %v1099, %v2579
  %v3041 = vmax.f32 %v1102, %v2582
  %v3042 = vmax.f32 %v1104, %v2584
  %v3043 = vmax.f32 %v1107, %v2587
  %v3044 = vmax.f32 %v1109, %v2589
  %v3045 = vmax.f32 %v1112, %v2592
  %v3046 = vmax.f32 %v1114, %v2594
  %v3047 = vmax.f32 %v1117, %v2597
  %v3048 = vmax.f32 %v1119, %v2599
  %v3049 = vmax.f32 %v1122, %v2602
  %v3050 = vmax.f32 %v1124, %v2604
  %v3051 = vmax.f32 %v1127, %v2607
  %v3052 = vmax.f32 %v1129, %v2609
  %v3053 = vmax.f32 %v1132, %v2612
  %v3054 = vmax.f32 %v1134, %v2614
  %v3055 = vmax.f32 %v1137, %v2617
  %v3056 = vmax.f32 %v1139, %v2619
  %v3057 = vmax.f32 %v1142, %v2622
  %v3058 = vmax.f32 %v1144, %v2624
  %v3059 = vmax.f32 %v1147, %v2627
  %v3060 = vmax.f32 %v1149, %v2629
  %v3061 = vmax.f32 %v1152, %v2632
  %v3062 = vmax.f32 %v1154, %v2634
  %v3063 = vmax.f32 %v1157, %v2637
  %v3064 = vmax.f32 %v1159, %v2639
  %v3065 = vmax.f32 %v1162, %v2642
  %v3066 = vmax.f32 %v1164, %v2644
  %v3067 = vmax.f32 %v1167, %v2647
  %v3068 = vmax.f32 %v1169, %v2649
  %v3069 = vmax.f32 %v1172, %v2652
  %v3070 = vmax.f32 %v1174, %v2654
  %v3071 = vmax.f32 %v1177, %v2657
  %v3072 = vmax.f32 %v1179, %v2659
  %v3073 = vmax.f32 %v1182, %v2662
  %v3074 = vmax.f32 %v1184, %v2664
  %v3075 = vmax.f32 %v1187, %v2667
  %v3076 = vmax.f32 %v1189, %v2669
  %v3077 = vmax.f32 %v1192, %v2672
  %v3078 = vmax.f32 %v1194, %v2674
  %v3079 = vmax.f32 %v1197, %v2677
  %v3080 = vmax.f32 %v1199, %v2679
  %v3081 = vmax.f32 %v1202, %v2682
  %v3082 = vmax.f32 %v1204, %v2684
  %v3083 = vmax.f32 %v1207, %v2687
  %v3084 = vmax.f32 %v1209, %v2689
  %v3085 = vmax.f32 %v1212, %v2692
  %v3086 = vmax.f32 %v1214, %v2694
  %v3087 = vmax.f32 %v1217, %v2697
  %v3088 = vmax.f32 %v1219, %v2699
  %v3089 = vmax.f32 %v1222, %v2702
  %v3090 = vmax.f32 %v1224, %v2704
  %v3091 = vmax.f32 %v1227, %v2707
  %v3092 = vmax.f32 %v1229, %v2709
  %v3093 = vmax.f32 %v1232, %v2712
  %v3094 = vmax.f32 %v1234, %v2714
  %v3095 = vmax.f32 %v1237, %v2717
  %v3096 = vmax.f32 %v1239, %v2719
  %v3097 = vmax.f32 %v1242, %v2722
  %v3098 = vmax.f32 %v1244, %v2724
  %v3099 = vmax.f32 %v1247, %v2727
  %v3100 = vmax.f32 %v1249, %v2729
  %v3101 = vmax.f32 %v1252, %v2732
  %v3102 = vmax.f32 %v1254, %v2734
  %v3103 = vmax.f32 %v1257, %v2737
  %v3104 = vmax.f32 %v1259, %v2739
  %v3105 = vmax.f32 %v1262, %v2742
  %v3106 = vmax.f32 %v1264, %v2744
  %v3107 = vmax.f32 %v1267, %v2747
  %v3108 = vmax.f32 %v1269, %v2749
  %v3109 = vmax.f32 %v1272, %v2752
  %v3110 = vmax.f32 %v1274, %v2754
  %v3111 = vmax.f32 %v1277, %v2757
  %v3112 = vmax.f32 %v1279, %v2759
  %v3113 = vmax.f32 %v1282, %v2762
  %v3114 = vmax.f32 %v1284, %v2764
  %v3115 = vmax.f32 %v1287, %v2767
  %v3116 = vmax.f32 %v1289, %v2769
  %v3117 = vmax.f32 %v1292, %v2772
  %v3118 = vmax.f32 %v1294, %v2774
  %v3119 = vmax.f32 %v1297, %v2777
  %v3120 = vmax.f32 %v1299, %v2779
  %v3121 = vmax.f32 %v1302, %v2782
  %v3122 = vmax.f32 %v1304, %v2784
  %v3123 = vmax.f32 %v1307, %v2787
  %v3124 = vmax.f32 %v1309, %v2789
  %v3125 = vmax.f32 %v1312, %v2792
  %v3126 = vmax.f32 %v1314, %v2794
  %v3127 = vmax.f32 %v1317, %v2797
  %v3128 = vmax.f32 %v1319, %v2799
  %v3129 = vmax.f32 %v1322, %v2802
  %v3130 = vmax.f32 %v1324, %v2804
  %v3131 = vmax.f32 %v1327, %v2807
  %v3132 = vmax.f32 %v1329, %v2809
  %v3133 = vmax.f32 %v1332, %v2812
  %v3134 = vmax.f32 %v1334, %v2814
  %v3135 = vmax.f32 %v1337, %v2817
  %v3136 = vmax.f32 %v1339, %v2819
  %v3137 = vmax.f32 %v1342, %v2822
  %v3138 = vmax.f32 %v1344, %v2824
  %v3139 = vmax.f32 %v1347, %v2827
  %v3140 = vmax.f32 %v1349, %v2829
  %v3141 = vmax.f32 %v1352, %v2832
  %v3142 = vmax.f32 %v1354, %v2834
  %v3143 = vmax.f32 %v1357, %v2837
  %v3144 = vmax.f32 %v1359, %v2839
  %v3145 = vmax.f32 %v1362, %v2842
  %v3146 = vmax.f32 %v1364, %v2844
  %v3147 = vmax.f32 %v1367, %v2847
  %v3148 = vmax.f32 %v1369, %v2849
  %v3149 = vmax.f32 %v1372, %v2852
  %v3150 = vmax.f32 %v1374, %v2854
  %v3151 = vmax.f32 %v1377, %v2857
  %v3152 = vmax.f32 %v1379, %v2859
  %v3153 = vmax.f32 %v1382, %v2862
  %v3154 = vmax.f32 %v1384, %v2864
  %v3155 = vmax.f32 %v1387, %v2867
  %v3156 = vmax.f32 %v1389, %v2869
  %v3157 = vmax.f32 %v1392, %v2872
  %v3158 = vmax.f32 %v1394, %v2874
  %v3159 = vmax.f32 %v1397, %v2877
  %v3160 = vmax.f32 %v1399, %v2879
  %v3161 = vmax.f32 %v1402, %v2882
  %v3162 = vmax.f32 %v1404, %v2884
  %v3163 = vmax.f32 %v1407, %v2887
  %v3164 = vmax.f32 %v1409, %v2889
  %v3165 = vmax.f32 %v1412, %v2892
  %v3166 = vmax.f32 %v1414, %v2894
  %v3167 = vmax.f32 %v1417, %v2897
  %v3168 = vmax.f32 %v1419, %v2899
  %v3169 = vmax.f32 %v1422, %v2902
  %v3170 = vmax.f32 %v1424, %v2904
  %v3171 = vmax.f32 %v1427, %v2907
  %v3172 = vmax.f32 %v1429, %v2909
  %v3173 = vmax.f32 %v1432, %v2912
  %v3174 = vmax.f32 %v1434, %v2914
  %v3175 = vmax.f32 %v1437, %v2917
  %v3176 = vmax.f32 %v1439, %v2919
  %v3177 = vmax.f32 %v1442, %v2922
  %v3178 = vmax.f32 %v1444, %v2924
  %v3179 = vmax.f32 %v1447, %v2927
  %v3180 = vmax.f32 %v1449, %v2929
  %v3181 = vmax.f32 %v1452, %v2932
  %v3182 = vmax.f32 %v1454, %v2934
  %v3183 = vmax.f32 %v1457, %v2937
  %v3184 = vmax.f32 %v1459, %v2939
  %v3185 = vmax.f32 %v1462, %v2942
  %v3186 = vmax.f32 %v1464, %v2944
  %v3187 = vmax.f32 %v1467, %v2947
  %v3188 = vmax.f32 %v1469, %v2949
  %v3189 = vmax.f32 %v1472, %v2952
  %v3190 = vmax.f32 %v1474, %v2954
  %v3191 = vmax.f32 %v1477, %v2957
  %v3192 = vmax.f32 %v1479, %v2959
  %v3193 = vmax.f32 %v1482, %v2962
  %v3194 = vmax.f32 %v1484, %v2964
  %v3195 = vmax.f32 %v1487, %v2967
  %v3196 = vmax.f32 %v1489, %v2969
  %v3197 = vmax.f32 %v1492, %v2972
  %v3198 = vmax.f32 %v1494, %v2974
  %v3199 = vmax.f32 %v1497, %v2977
  %v3200 = vmax.f32 %v1499, %v2979
  %v3201 = vmax.f32 %v1502, %v2982
  %v3202 = vmax.f32 %v1504, %v2984
  %v3203 = vmax.f32 %v1507, %v2987
  %v3204 = vmax.f32 %v1509, %v2989
  %v3205 = vmax.f32 %v1512, %v2992
  %v3206 = vmax.f32 %v1514, %v2994
  %v3207 = vmax.f32 %v1517, %v2997
  %v3208 = vmax.f32 %v1519, %v2999
  %v3209 = vmax.f32 %v1522, %v3002
  %v3210 = vmax.f32 %v1524, %v3004
  %v3211 = vmax.f32 %v1527, %v3007
  %v3212 = vmax.f32 %v1529, %v3009
  %v3213 = vmax.f32 %v1532, %v3012
  %v3214 = vmax.f32 %v1534, %v3014
  %v3215 = vmax.f32 %v1537, %v3017
  %v3216 = vmax.f32 %v1539, %v3019
  %s3217 = scalar_lea.vmem %s0, 1568
  %v3218 = vld [vmem:[%s3217] sm:$0xf]
  %v3219 = vld [vmem:[%s3217 + $0x4] sm:$0xf]
  %v3220 = vld [vmem:[%s3217 + $0x8] sm:$0xf]
  %v3221 = vld [vmem:[%s3217 + $0xc] sm:$0xf]
  %v3222 = vld [vmem:[%s3217 + $0x10] sm:$0xf]
  %v3223 = vld [vmem:[%s3217 + $0x14] sm:$0xf]
  %v3224 = vld [vmem:[%s3217 + $0x18] sm:$0xf]
  %v3225 = vld [vmem:[%s3217 + $0x1c] sm:$0xf]
  %v3226 = vld [vmem:[%s3217 + $0x20] sm:$0xf]
  %v3227 = vld [vmem:[%s3217 + $0x24] sm:$0xf]
  %v3228 = vld [vmem:[%s3217 + $0x28] sm:$0xf]
  %v3229 = vld [vmem:[%s3217 + $0x2c] sm:$0xf]
  %v3230 = vld [vmem:[%s3217 + $0x30] sm:$0xf]
  %v3231 = vld [vmem:[%s3217 + $0x34] sm:$0xf]
  %v3232 = vld [vmem:[%s3217 + $0x38] sm:$0xf]
  %v3233 = vld [vmem:[%s3217 + $0x3c] sm:$0xf]
  %v3234 = vld [vmem:[%s3217 + $0x40] sm:$0xf]
  %v3235 = vld [vmem:[%s3217 + $0x44] sm:$0xf]
  %v3236 = vld [vmem:[%s3217 + $0x48] sm:$0xf]
  %v3237 = vld [vmem:[%s3217 + $0x4c] sm:$0xf]
  %v3238 = vld [vmem:[%s3217 + $0x50] sm:$0xf]
  %v3239 = vld [vmem:[%s3217 + $0x54] sm:$0xf]
  %v3240 = vld [vmem:[%s3217 + $0x58] sm:$0xf]
  %v3241 = vld [vmem:[%s3217 + $0x5c] sm:$0xf]
  %v3242 = vld [vmem:[%s3217 + $0x60] sm:$0xf]
  %v3243 = vld [vmem:[%s3217 + $0x64] sm:$0xf]
  %v3244 = vld [vmem:[%s3217 + $0x68] sm:$0xf]
  %v3245 = vld [vmem:[%s3217 + $0x6c] sm:$0xf]
  %v3246 = vld [vmem:[%s3217 + $0x70] sm:$0xf]
  %v3247 = vld [vmem:[%s3217 + $0x74] sm:$0xf]
  %v3248 = vld [vmem:[%s3217 + $0x78] sm:$0xf]
  %v3249 = vld [vmem:[%s3217 + $0x7c] sm:$0xf]
  %v3250 = vld [vmem:[%s3217 + $0x80] sm:$0xf]
  %v3251 = vld [vmem:[%s3217 + $0x84] sm:$0xf]
  %v3252 = vld [vmem:[%s3217 + $0x88] sm:$0xf]
  %v3253 = vld [vmem:[%s3217 + $0x8c] sm:$0xf]
  %v3254 = vld [vmem:[%s3217 + $0x90] sm:$0xf]
  %v3255 = vld [vmem:[%s3217 + $0x94] sm:$0xf]
  %v3256 = vld [vmem:[%s3217 + $0x98] sm:$0xf]
  %v3257 = vld [vmem:[%s3217 + $0x9c] sm:$0xf]
  %v3258 = vld [vmem:[%s3217 + $0xa0] sm:$0xf]
  %v3259 = vld [vmem:[%s3217 + $0xa4] sm:$0xf]
  %v3260 = vld [vmem:[%s3217 + $0xa8] sm:$0xf]
  %v3261 = vld [vmem:[%s3217 + $0xac] sm:$0xf]
  %v3262 = vld [vmem:[%s3217 + $0xb0] sm:$0xf]
  %v3263 = vld [vmem:[%s3217 + $0xb4] sm:$0xf]
  %v3264 = vld [vmem:[%s3217 + $0xb8] sm:$0xf]
  %v3265 = vld [vmem:[%s3217 + $0xbc] sm:$0xf]
  %v3266 = vld [vmem:[%s3217 + $0xc0] sm:$0xf]
  %v3267 = vld [vmem:[%s3217 + $0xc4] sm:$0xf]
  %v3268 = vld [vmem:[%s3217 + $0xc8] sm:$0xf]
  %v3269 = vld [vmem:[%s3217 + $0xcc] sm:$0xf]
  %v3270 = vld [vmem:[%s3217 + $0xd0] sm:$0xf]
  %v3271 = vld [vmem:[%s3217 + $0xd4] sm:$0xf]
  %v3272 = vld [vmem:[%s3217 + $0xd8] sm:$0xf]
  %v3273 = vld [vmem:[%s3217 + $0xdc] sm:$0xf]
  %v3274 = vld [vmem:[%s3217 + $0xe0] sm:$0xf]
  %v3275 = vld [vmem:[%s3217 + $0xe4] sm:$0xf]
  %v3276 = vld [vmem:[%s3217 + $0xe8] sm:$0xf]
  %v3277 = vld [vmem:[%s3217 + $0xec] sm:$0xf]
  %v3278 = vld [vmem:[%s3217 + $0xf0] sm:$0xf]
  %v3279 = vld [vmem:[%s3217 + $0xf4] sm:$0xf]
  %v3280 = vld [vmem:[%s3217 + $0xf8] sm:$0xf]
  %v3281 = vld [vmem:[%s3217 + $0xfc] sm:$0xf]
  %v3282 = vld [vmem:[%s3217 + $0x100] sm:$0xf]
  %v3283 = vld [vmem:[%s3217 + $0x104] sm:$0xf]
  %v3284 = vld [vmem:[%s3217 + $0x108] sm:$0xf]
  %v3285 = vld [vmem:[%s3217 + $0x10c] sm:$0xf]
  %v3286 = vld [vmem:[%s3217 + $0x110] sm:$0xf]
  %v3287 = vld [vmem:[%s3217 + $0x114] sm:$0xf]
  %v3288 = vld [vmem:[%s3217 + $0x118] sm:$0xf]
  %v3289 = vld [vmem:[%s3217 + $0x11c] sm:$0xf]
  %v3290 = vld [vmem:[%s3217 + $0x120] sm:$0xf]
  %v3291 = vld [vmem:[%s3217 + $0x124] sm:$0xf]
  %v3292 = vld [vmem:[%s3217 + $0x128] sm:$0xf]
  %v3293 = vld [vmem:[%s3217 + $0x12c] sm:$0xf]
  %v3294 = vld [vmem:[%s3217 + $0x130] sm:$0xf]
  %v3295 = vld [vmem:[%s3217 + $0x134] sm:$0xf]
  %v3296 = vld [vmem:[%s3217 + $0x138] sm:$0xf]
  %v3297 = vld [vmem:[%s3217 + $0x13c] sm:$0xf]
  %v3298 = vld [vmem:[%s3217 + $0x140] sm:$0xf]
  %v3299 = vld [vmem:[%s3217 + $0x144] sm:$0xf]
  %v3300 = vld [vmem:[%s3217 + $0x148] sm:$0xf]
  %v3301 = vld [vmem:[%s3217 + $0x14c] sm:$0xf]
  %v3302 = vld [vmem:[%s3217 + $0x150] sm:$0xf]
  %v3303 = vld [vmem:[%s3217 + $0x154] sm:$0xf]
  %v3304 = vld [vmem:[%s3217 + $0x158] sm:$0xf]
  %v3305 = vld [vmem:[%s3217 + $0x15c] sm:$0xf]
  %v3306 = vld [vmem:[%s3217 + $0x160] sm:$0xf]
  %v3307 = vld [vmem:[%s3217 + $0x164] sm:$0xf]
  %v3308 = vld [vmem:[%s3217 + $0x168] sm:$0xf]
  %v3309 = vld [vmem:[%s3217 + $0x16c] sm:$0xf]
  %v3310 = vld [vmem:[%s3217 + $0x170] sm:$0xf]
  %v3311 = vld [vmem:[%s3217 + $0x174] sm:$0xf]
  %v3312 = vld [vmem:[%s3217 + $0x178] sm:$0xf]
  %v3313 = vld [vmem:[%s3217 + $0x17c] sm:$0xf]
  %v3314 = vld [vmem:[%s3217 + $0x180] sm:$0xf]
  %v3315 = vld [vmem:[%s3217 + $0x184] sm:$0xf]
  %v3316 = vld [vmem:[%s3217 + $0x188] sm:$0xf]
  %v3317 = vld [vmem:[%s3217 + $0x18c] sm:$0xf]
  %v3318 = vld [vmem:[%s3217 + $0x190] sm:$0xf]
  %v3319 = vld [vmem:[%s3217 + $0x194] sm:$0xf]
  %v3320 = vld [vmem:[%s3217 + $0x198] sm:$0xf]
  %v3321 = vld [vmem:[%s3217 + $0x19c] sm:$0xf]
  %v3322 = vld [vmem:[%s3217 + $0x1a0] sm:$0xf]
  %v3323 = vld [vmem:[%s3217 + $0x1a4] sm:$0xf]
  %v3324 = vld [vmem:[%s3217 + $0x1a8] sm:$0xf]
  %v3325 = vld [vmem:[%s3217 + $0x1ac] sm:$0xf]
  %v3326 = vld [vmem:[%s3217 + $0x1b0] sm:$0xf]
  %v3327 = vld [vmem:[%s3217 + $0x1b4] sm:$0xf]
  %v3328 = vld [vmem:[%s3217 + $0x1b8] sm:$0xf]
  %v3329 = vld [vmem:[%s3217 + $0x1bc] sm:$0xf]
  %v3330 = vld [vmem:[%s3217 + $0x1c0] sm:$0xf]
  %v3331 = vld [vmem:[%s3217 + $0x1c4] sm:$0xf]
  %v3332 = vld [vmem:[%s3217 + $0x1c8] sm:$0xf]
  %v3333 = vld [vmem:[%s3217 + $0x1cc] sm:$0xf]
  %v3334 = vld [vmem:[%s3217 + $0x1d0] sm:$0xf]
  %v3335 = vld [vmem:[%s3217 + $0x1d4] sm:$0xf]
  %v3336 = vld [vmem:[%s3217 + $0x1d8] sm:$0xf]
  %v3337 = vld [vmem:[%s3217 + $0x1dc] sm:$0xf]
  %v3338 = vld [vmem:[%s3217 + $0x1e0] sm:$0xf]
  %v3339 = vld [vmem:[%s3217 + $0x1e4] sm:$0xf]
  %v3340 = vld [vmem:[%s3217 + $0x1e8] sm:$0xf]
  %v3341 = vld [vmem:[%s3217 + $0x1ec] sm:$0xf]
  %v3342 = vld [vmem:[%s3217 + $0x1f0] sm:$0xf]
  %v3343 = vld [vmem:[%s3217 + $0x1f4] sm:$0xf]
  %v3344 = vld [vmem:[%s3217 + $0x1f8] sm:$0xf]
  %v3345 = vld [vmem:[%s3217 + $0x1fc] sm:$0xf]
  %v3346 = vld [vmem:[%s3217 + $0x200] sm:$0xf]
  %v3347 = vld [vmem:[%s3217 + $0x204] sm:$0xf]
  %v3348 = vld [vmem:[%s3217 + $0x208] sm:$0xf]
  %v3349 = vld [vmem:[%s3217 + $0x20c] sm:$0xf]
  %v3350 = vld [vmem:[%s3217 + $0x210] sm:$0xf]
  %v3351 = vld [vmem:[%s3217 + $0x214] sm:$0xf]
  %v3352 = vld [vmem:[%s3217 + $0x218] sm:$0xf]
  %v3353 = vld [vmem:[%s3217 + $0x21c] sm:$0xf]
  %v3354 = vld [vmem:[%s3217 + $0x220] sm:$0xf]
  %v3355 = vld [vmem:[%s3217 + $0x224] sm:$0xf]
  %v3356 = vld [vmem:[%s3217 + $0x228] sm:$0xf]
  %v3357 = vld [vmem:[%s3217 + $0x22c] sm:$0xf]
  %v3358 = vld [vmem:[%s3217 + $0x230] sm:$0xf]
  %v3359 = vld [vmem:[%s3217 + $0x234] sm:$0xf]
  %v3360 = vld [vmem:[%s3217 + $0x238] sm:$0xf]
  %v3361 = vld [vmem:[%s3217 + $0x23c] sm:$0xf]
  %v3362 = vld [vmem:[%s3217 + $0x240] sm:$0xf]
  %v3363 = vld [vmem:[%s3217 + $0x244] sm:$0xf]
  %v3364 = vld [vmem:[%s3217 + $0x248] sm:$0xf]
  %v3365 = vld [vmem:[%s3217 + $0x24c] sm:$0xf]
  %v3366 = vld [vmem:[%s3217 + $0x250] sm:$0xf]
  %v3367 = vld [vmem:[%s3217 + $0x254] sm:$0xf]
  %v3368 = vld [vmem:[%s3217 + $0x258] sm:$0xf]
  %v3369 = vld [vmem:[%s3217 + $0x25c] sm:$0xf]
  %v3370 = vld [vmem:[%s3217 + $0x260] sm:$0xf]
  %v3371 = vld [vmem:[%s3217 + $0x264] sm:$0xf]
  %v3372 = vld [vmem:[%s3217 + $0x268] sm:$0xf]
  %v3373 = vld [vmem:[%s3217 + $0x26c] sm:$0xf]
  %v3374 = vld [vmem:[%s3217 + $0x270] sm:$0xf]
  %v3375 = vld [vmem:[%s3217 + $0x274] sm:$0xf]
  %v3376 = vld [vmem:[%s3217 + $0x278] sm:$0xf]
  %v3377 = vld [vmem:[%s3217 + $0x27c] sm:$0xf]
  %v3378 = vld [vmem:[%s3217 + $0x280] sm:$0xf]
  %v3379 = vld [vmem:[%s3217 + $0x284] sm:$0xf]
  %v3380 = vld [vmem:[%s3217 + $0x288] sm:$0xf]
  %v3381 = vld [vmem:[%s3217 + $0x28c] sm:$0xf]
  %v3382 = vld [vmem:[%s3217 + $0x290] sm:$0xf]
  %v3383 = vld [vmem:[%s3217 + $0x294] sm:$0xf]
  %v3384 = vld [vmem:[%s3217 + $0x298] sm:$0xf]
  %v3385 = vld [vmem:[%s3217 + $0x29c] sm:$0xf]
  %v3386 = vld [vmem:[%s3217 + $0x2a0] sm:$0xf]
  %v3387 = vld [vmem:[%s3217 + $0x2a4] sm:$0xf]
  %v3388 = vld [vmem:[%s3217 + $0x2a8] sm:$0xf]
  %v3389 = vld [vmem:[%s3217 + $0x2ac] sm:$0xf]
  %v3390 = vld [vmem:[%s3217 + $0x2b0] sm:$0xf]
  %v3391 = vld [vmem:[%s3217 + $0x2b4] sm:$0xf]
  %v3392 = vld [vmem:[%s3217 + $0x2b8] sm:$0xf]
  %v3393 = vld [vmem:[%s3217 + $0x2bc] sm:$0xf]
  %v3394 = vld [vmem:[%s3217 + $0x2c0] sm:$0xf]
  %v3395 = vld [vmem:[%s3217 + $0x2c4] sm:$0xf]
  %v3396 = vld [vmem:[%s3217 + $0x2c8] sm:$0xf]
  %v3397 = vld [vmem:[%s3217 + $0x2cc] sm:$0xf]
  %v3398 = vld [vmem:[%s3217 + $0x2d0] sm:$0xf]
  %v3399 = vld [vmem:[%s3217 + $0x2d4] sm:$0xf]
  %v3400 = vld [vmem:[%s3217 + $0x2d8] sm:$0xf]
  %v3401 = vld [vmem:[%s3217 + $0x2dc] sm:$0xf]
  %v3402 = vld [vmem:[%s3217 + $0x2e0] sm:$0xf]
  %v3403 = vld [vmem:[%s3217 + $0x2e4] sm:$0xf]
  %v3404 = vld [vmem:[%s3217 + $0x2e8] sm:$0xf]
  %v3405 = vld [vmem:[%s3217 + $0x2ec] sm:$0xf]
  %v3406 = vld [vmem:[%s3217 + $0x2f0] sm:$0xf]
  %v3407 = vld [vmem:[%s3217 + $0x2f4] sm:$0xf]
  %v3408 = vld [vmem:[%s3217 + $0x2f8] sm:$0xf]
  %v3409 = vld [vmem:[%s3217 + $0x2fc] sm:$0xf]
  %v3410 = vld [vmem:[%s3217 + $0x300] sm:$0xf]
  %v3411 = vld [vmem:[%s3217 + $0x304] sm:$0xf]
  %v3412 = vld [vmem:[%s3217 + $0x308] sm:$0xf]
  %v3413 = vld [vmem:[%s3217 + $0x30c] sm:$0xf]
  %v3610 = vunpack.c.l.b16 %v3218
  %v3611 = vunpack.c.l.b16 %v3219
  %v3612 = vunpack.c.l.b16 %v3220
  %v3613 = vunpack.c.l.b16 %v3221
  %v3614 = vunpack.c.l.b16 %v3222
  %v3615 = vunpack.c.l.b16 %v3223
  %v3616 = vunpack.c.l.b16 %v3224
  %v3617 = vunpack.c.l.b16 %v3225
  %v3618 = vunpack.c.l.b16 %v3226
  %v3619 = vunpack.c.l.b16 %v3227
  %v3620 = vunpack.c.l.b16 %v3228
  %v3621 = vunpack.c.l.b16 %v3229
  %v3622 = vunpack.c.l.b16 %v3230
  %v3623 = vunpack.c.l.b16 %v3231
  %v3624 = vunpack.c.l.b16 %v3232
  %v3625 = vunpack.c.l.b16 %v3233
  %v3626 = vunpack.c.l.b16 %v3234
  %v3627 = vunpack.c.l.b16 %v3235
  %v3628 = vunpack.c.l.b16 %v3236
  %v3629 = vunpack.c.l.b16 %v3237
  %v3630 = vunpack.c.l.b16 %v3238
  %v3631 = vunpack.c.l.b16 %v3239
  %v3632 = vunpack.c.l.b16 %v3240
  %v3633 = vunpack.c.l.b16 %v3241
  %v3634 = vunpack.c.l.b16 %v3242
  %v3635 = vunpack.c.l.b16 %v3243
  %v3636 = vunpack.c.l.b16 %v3244
  %v3637 = vunpack.c.l.b16 %v3245
  %v3638 = vunpack.c.l.b16 %v3246
  %v3639 = vunpack.c.l.b16 %v3247
  %v3640 = vunpack.c.l.b16 %v3248
  %v3641 = vunpack.c.l.b16 %v3249
  %v3642 = vunpack.c.l.b16 %v3250
  %v3643 = vunpack.c.l.b16 %v3251
  %v3644 = vunpack.c.l.b16 %v3252
  %v3645 = vunpack.c.l.b16 %v3253
  %v3646 = vunpack.c.l.b16 %v3254
  %v3647 = vunpack.c.l.b16 %v3255
  %v3648 = vunpack.c.l.b16 %v3256
  %v3649 = vunpack.c.l.b16 %v3257
  %v3650 = vunpack.c.l.b16 %v3258
  %v3651 = vunpack.c.l.b16 %v3259
  %v3652 = vunpack.c.l.b16 %v3260
  %v3653 = vunpack.c.l.b16 %v3261
  %v3654 = vunpack.c.l.b16 %v3262
  %v3655 = vunpack.c.l.b16 %v3263
  %v3656 = vunpack.c.l.b16 %v3264
  %v3657 = vunpack.c.l.b16 %v3265
  %v3658 = vunpack.c.l.b16 %v3266
  %v3659 = vunpack.c.l.b16 %v3267
  %v3660 = vunpack.c.l.b16 %v3268
  %v3661 = vunpack.c.l.b16 %v3269
  %v3662 = vunpack.c.l.b16 %v3270
  %v3663 = vunpack.c.l.b16 %v3271
  %v3664 = vunpack.c.l.b16 %v3272
  %v3665 = vunpack.c.l.b16 %v3273
  %v3666 = vunpack.c.l.b16 %v3274
  %v3667 = vunpack.c.l.b16 %v3275
  %v3668 = vunpack.c.l.b16 %v3276
  %v3669 = vunpack.c.l.b16 %v3277
  %v3670 = vunpack.c.l.b16 %v3278
  %v3671 = vunpack.c.l.b16 %v3279
  %v3672 = vunpack.c.l.b16 %v3280
  %v3673 = vunpack.c.l.b16 %v3281
  %v3674 = vunpack.c.l.b16 %v3282
  %v3675 = vunpack.c.l.b16 %v3283
  %v3676 = vunpack.c.l.b16 %v3284
  %v3677 = vunpack.c.l.b16 %v3285
  %v3678 = vunpack.c.l.b16 %v3286
  %v3679 = vunpack.c.l.b16 %v3287
  %v3680 = vunpack.c.l.b16 %v3288
  %v3681 = vunpack.c.l.b16 %v3289
  %v3682 = vunpack.c.l.b16 %v3290
  %v3683 = vunpack.c.l.b16 %v3291
  %v3684 = vunpack.c.l.b16 %v3292
  %v3685 = vunpack.c.l.b16 %v3293
  %v3686 = vunpack.c.l.b16 %v3294
  %v3687 = vunpack.c.l.b16 %v3295
  %v3688 = vunpack.c.l.b16 %v3296
  %v3689 = vunpack.c.l.b16 %v3297
  %v3690 = vunpack.c.l.b16 %v3298
  %v3691 = vunpack.c.l.b16 %v3299
  %v3692 = vunpack.c.l.b16 %v3300
  %v3693 = vunpack.c.l.b16 %v3301
  %v3694 = vunpack.c.l.b16 %v3302
  %v3695 = vunpack.c.l.b16 %v3303
  %v3696 = vunpack.c.l.b16 %v3304
  %v3697 = vunpack.c.l.b16 %v3305
  %v3698 = vunpack.c.l.b16 %v3306
  %v3699 = vunpack.c.l.b16 %v3307
  %v3700 = vunpack.c.l.b16 %v3308
  %v3701 = vunpack.c.l.b16 %v3309
  %v3702 = vunpack.c.l.b16 %v3310
  %v3703 = vunpack.c.l.b16 %v3311
  %v3704 = vunpack.c.l.b16 %v3312
  %v3705 = vunpack.c.l.b16 %v3313
  %v3706 = vunpack.c.l.b16 %v3314
  %v3707 = vunpack.c.l.b16 %v3315
  %v3708 = vunpack.c.l.b16 %v3316
  %v3709 = vunpack.c.l.b16 %v3317
  %v3710 = vunpack.c.l.b16 %v3318
  %v3711 = vunpack.c.l.b16 %v3319
  %v3712 = vunpack.c.l.b16 %v3320
  %v3713 = vunpack.c.l.b16 %v3321
  %v3714 = vunpack.c.l.b16 %v3322
  %v3715 = vunpack.c.l.b16 %v3323
  %v3716 = vunpack.c.l.b16 %v3324
  %v3717 = vunpack.c.l.b16 %v3325
  %v3718 = vunpack.c.l.b16 %v3326
  %v3719 = vunpack.c.l.b16 %v3327
  %v3720 = vunpack.c.l.b16 %v3328
  %v3721 = vunpack.c.l.b16 %v3329
  %v3722 = vunpack.c.l.b16 %v3330
  %v3723 = vunpack.c.l.b16 %v3331
  %v3724 = vunpack.c.l.b16 %v3332
  %v3725 = vunpack.c.l.b16 %v3333
  %v3726 = vunpack.c.l.b16 %v3334
  %v3727 = vunpack.c.l.b16 %v3335
  %v3728 = vunpack.c.l.b16 %v3336
  %v3729 = vunpack.c.l.b16 %v3337
  %v3730 = vunpack.c.l.b16 %v3338
  %v3731 = vunpack.c.l.b16 %v3339
  %v3732 = vunpack.c.l.b16 %v3340
  %v3733 = vunpack.c.l.b16 %v3341
  %v3734 = vunpack.c.l.b16 %v3342
  %v3735 = vunpack.c.l.b16 %v3343
  %v3736 = vunpack.c.l.b16 %v3344
  %v3737 = vunpack.c.l.b16 %v3345
  %v3738 = vunpack.c.l.b16 %v3346
  %v3739 = vunpack.c.l.b16 %v3347
  %v3740 = vunpack.c.l.b16 %v3348
  %v3741 = vunpack.c.l.b16 %v3349
  %v3742 = vunpack.c.l.b16 %v3350
  %v3743 = vunpack.c.l.b16 %v3351
  %v3744 = vunpack.c.l.b16 %v3352
  %v3745 = vunpack.c.l.b16 %v3353
  %v3746 = vunpack.c.l.b16 %v3354
  %v3747 = vunpack.c.l.b16 %v3355
  %v3748 = vunpack.c.l.b16 %v3356
  %v3749 = vunpack.c.l.b16 %v3357
  %v3750 = vunpack.c.l.b16 %v3358
  %v3751 = vunpack.c.l.b16 %v3359
  %v3752 = vunpack.c.l.b16 %v3360
  %v3753 = vunpack.c.l.b16 %v3361
  %v3754 = vunpack.c.l.b16 %v3362
  %v3755 = vunpack.c.l.b16 %v3363
  %v3756 = vunpack.c.l.b16 %v3364
  %v3757 = vunpack.c.l.b16 %v3365
  %v3758 = vunpack.c.l.b16 %v3366
  %v3759 = vunpack.c.l.b16 %v3367
  %v3760 = vunpack.c.l.b16 %v3368
  %v3761 = vunpack.c.l.b16 %v3369
  %v3762 = vunpack.c.l.b16 %v3370
  %v3763 = vunpack.c.l.b16 %v3371
  %v3764 = vunpack.c.l.b16 %v3372
  %v3765 = vunpack.c.l.b16 %v3373
  %v3766 = vunpack.c.l.b16 %v3374
  %v3767 = vunpack.c.l.b16 %v3375
  %v3768 = vunpack.c.l.b16 %v3376
  %v3769 = vunpack.c.l.b16 %v3377
  %v3770 = vunpack.c.l.b16 %v3378
  %v3771 = vunpack.c.l.b16 %v3379
  %v3772 = vunpack.c.l.b16 %v3380
  %v3773 = vunpack.c.l.b16 %v3381
  %v3774 = vunpack.c.l.b16 %v3382
  %v3775 = vunpack.c.l.b16 %v3383
  %v3776 = vunpack.c.l.b16 %v3384
  %v3777 = vunpack.c.l.b16 %v3385
  %v3778 = vunpack.c.l.b16 %v3386
  %v3779 = vunpack.c.l.b16 %v3387
  %v3780 = vunpack.c.l.b16 %v3388
  %v3781 = vunpack.c.l.b16 %v3389
  %v3782 = vunpack.c.l.b16 %v3390
  %v3783 = vunpack.c.l.b16 %v3391
  %v3784 = vunpack.c.l.b16 %v3392
  %v3785 = vunpack.c.l.b16 %v3393
  %v3786 = vunpack.c.l.b16 %v3394
  %v3787 = vunpack.c.l.b16 %v3395
  %v3788 = vunpack.c.l.b16 %v3396
  %v3789 = vunpack.c.l.b16 %v3397
  %v3790 = vunpack.c.l.b16 %v3398
  %v3791 = vunpack.c.l.b16 %v3399
  %v3792 = vunpack.c.l.b16 %v3400
  %v3793 = vunpack.c.l.b16 %v3401
  %v3794 = vunpack.c.l.b16 %v3402
  %v3795 = vunpack.c.l.b16 %v3403
  %v3796 = vunpack.c.l.b16 %v3404
  %v3797 = vunpack.c.l.b16 %v3405
  %v3798 = vunpack.c.l.b16 %v3406
  %v3799 = vunpack.c.l.b16 %v3407
  %v3800 = vunpack.c.l.b16 %v3408
  %v3801 = vunpack.c.l.b16 %v3409
  %v3802 = vunpack.c.l.b16 %v3410
  %v3803 = vunpack.c.l.b16 %v3411
  %v3804 = vunpack.c.l.b16 %v3412
  %v3805 = vunpack.c.l.b16 %v3413
  %v3806 = vpack.c.b16 %v3611, %v3610
  %v3807 = vpack.c.b16 %v3613, %v3612
  %v3808 = vpack.c.b16 %v3615, %v3614
  %v3809 = vpack.c.b16 %v3617, %v3616
  %v3810 = vpack.c.b16 %v3619, %v3618
  %v3811 = vpack.c.b16 %v3621, %v3620
  %v3812 = vpack.c.b16 %v3623, %v3622
  %v3813 = vpack.c.b16 %v3625, %v3624
  %v3814 = vpack.c.b16 %v3627, %v3626
  %v3815 = vpack.c.b16 %v3629, %v3628
  %v3816 = vpack.c.b16 %v3631, %v3630
  %v3817 = vpack.c.b16 %v3633, %v3632
  %v3818 = vpack.c.b16 %v3635, %v3634
  %v3819 = vpack.c.b16 %v3637, %v3636
  %v3820 = vpack.c.b16 %v3639, %v3638
  %v3821 = vpack.c.b16 %v3641, %v3640
  %v3822 = vpack.c.b16 %v3643, %v3642
  %v3823 = vpack.c.b16 %v3645, %v3644
  %v3824 = vpack.c.b16 %v3647, %v3646
  %v3825 = vpack.c.b16 %v3649, %v3648
  %v3826 = vpack.c.b16 %v3651, %v3650
  %v3827 = vpack.c.b16 %v3653, %v3652
  %v3828 = vpack.c.b16 %v3655, %v3654
  %v3829 = vpack.c.b16 %v3657, %v3656
  %v3830 = vpack.c.b16 %v3659, %v3658
  %v3831 = vpack.c.b16 %v3661, %v3660
  %v3832 = vpack.c.b16 %v3663, %v3662
  %v3833 = vpack.c.b16 %v3665, %v3664
  %v3834 = vpack.c.b16 %v3667, %v3666
  %v3835 = vpack.c.b16 %v3669, %v3668
  %v3836 = vpack.c.b16 %v3671, %v3670
  %v3837 = vpack.c.b16 %v3673, %v3672
  %v3838 = vpack.c.b16 %v3675, %v3674
  %v3839 = vpack.c.b16 %v3677, %v3676
  %v3840 = vpack.c.b16 %v3679, %v3678
  %v3841 = vpack.c.b16 %v3681, %v3680
  %v3842 = vpack.c.b16 %v3683, %v3682
  %v3843 = vpack.c.b16 %v3685, %v3684
  %v3844 = vpack.c.b16 %v3687, %v3686
  %v3845 = vpack.c.b16 %v3689, %v3688
  %v3846 = vpack.c.b16 %v3691, %v3690
  %v3847 = vpack.c.b16 %v3693, %v3692
  %v3848 = vpack.c.b16 %v3695, %v3694
  %v3849 = vpack.c.b16 %v3697, %v3696
  %v3850 = vpack.c.b16 %v3699, %v3698
  %v3851 = vpack.c.b16 %v3701, %v3700
  %v3852 = vpack.c.b16 %v3703, %v3702
  %v3853 = vpack.c.b16 %v3705, %v3704
  %v3854 = vpack.c.b16 %v3707, %v3706
  %v3855 = vpack.c.b16 %v3709, %v3708
  %v3856 = vpack.c.b16 %v3711, %v3710
  %v3857 = vpack.c.b16 %v3713, %v3712
  %v3858 = vpack.c.b16 %v3715, %v3714
  %v3859 = vpack.c.b16 %v3717, %v3716
  %v3860 = vpack.c.b16 %v3719, %v3718
  %v3861 = vpack.c.b16 %v3721, %v3720
  %v3862 = vpack.c.b16 %v3723, %v3722
  %v3863 = vpack.c.b16 %v3725, %v3724
  %v3864 = vpack.c.b16 %v3727, %v3726
  %v3865 = vpack.c.b16 %v3729, %v3728
  %v3866 = vpack.c.b16 %v3731, %v3730
  %v3867 = vpack.c.b16 %v3733, %v3732
  %v3868 = vpack.c.b16 %v3735, %v3734
  %v3869 = vpack.c.b16 %v3737, %v3736
  %v3870 = vpack.c.b16 %v3739, %v3738
  %v3871 = vpack.c.b16 %v3741, %v3740
  %v3872 = vpack.c.b16 %v3743, %v3742
  %v3873 = vpack.c.b16 %v3745, %v3744
  %v3874 = vpack.c.b16 %v3747, %v3746
  %v3875 = vpack.c.b16 %v3749, %v3748
  %v3876 = vpack.c.b16 %v3751, %v3750
  %v3877 = vpack.c.b16 %v3753, %v3752
  %v3878 = vpack.c.b16 %v3755, %v3754
  %v3879 = vpack.c.b16 %v3757, %v3756
  %v3880 = vpack.c.b16 %v3759, %v3758
  %v3881 = vpack.c.b16 %v3761, %v3760
  %v3882 = vpack.c.b16 %v3763, %v3762
  %v3883 = vpack.c.b16 %v3765, %v3764
  %v3884 = vpack.c.b16 %v3767, %v3766
  %v3885 = vpack.c.b16 %v3769, %v3768
  %v3886 = vpack.c.b16 %v3771, %v3770
  %v3887 = vpack.c.b16 %v3773, %v3772
  %v3888 = vpack.c.b16 %v3775, %v3774
  %v3889 = vpack.c.b16 %v3777, %v3776
  %v3890 = vpack.c.b16 %v3779, %v3778
  %v3891 = vpack.c.b16 %v3781, %v3780
  %v3892 = vpack.c.b16 %v3783, %v3782
  %v3893 = vpack.c.b16 %v3785, %v3784
  %v3894 = vpack.c.b16 %v3787, %v3786
  %v3895 = vpack.c.b16 %v3789, %v3788
  %v3896 = vpack.c.b16 %v3791, %v3790
  %v3897 = vpack.c.b16 %v3793, %v3792
  %v3898 = vpack.c.b16 %v3795, %v3794
  %v3899 = vpack.c.b16 %v3797, %v3796
  %v3900 = vpack.c.b16 %v3799, %v3798
  %v3901 = vpack.c.b16 %v3801, %v3800
  %v3902 = vpack.c.b16 %v3803, %v3802
  %v3903 = vpack.c.b16 %v3805, %v3804
  %v3905 = vsel %vm740, %v3806, 0
  %v3908 = vsel %vm740, %v3807, 0
  %v3911 = vsel %vm740, %v3808, 0
  %v3914 = vsel %vm740, %v3809, 0
  %v3917 = vsel %vm740, %v3810, 0
  %v3920 = vsel %vm740, %v3811, 0
  %v3923 = vsel %vm740, %v3812, 0
  %v3926 = vsel %vm740, %v3813, 0
  %v3929 = vsel %vm740, %v3814, 0
  %v3932 = vsel %vm740, %v3815, 0
  %v3935 = vsel %vm740, %v3816, 0
  %v3938 = vsel %vm740, %v3817, 0
  %v3941 = vsel %vm740, %v3818, 0
  %v3944 = vsel %vm740, %v3819, 0
  %v3947 = vsel %vm740, %v3820, 0
  %v3950 = vsel %vm740, %v3821, 0
  %v3953 = vsel %vm740, %v3822, 0
  %v3956 = vsel %vm740, %v3823, 0
  %v3959 = vsel %vm740, %v3824, 0
  %v3962 = vsel %vm740, %v3825, 0
  %v3965 = vsel %vm740, %v3826, 0
  %v3968 = vsel %vm740, %v3827, 0
  %v3971 = vsel %vm740, %v3828, 0
  %v3974 = vsel %vm740, %v3829, 0
  %v3977 = vsel %vm740, %v3830, 0
  %v3980 = vsel %vm740, %v3831, 0
  %v3983 = vsel %vm740, %v3832, 0
  %v3986 = vsel %vm740, %v3833, 0
  %v3989 = vsel %vm740, %v3834, 0
  %v3992 = vsel %vm740, %v3835, 0
  %v3995 = vsel %vm740, %v3836, 0
  %v3998 = vsel %vm740, %v3837, 0
  %v4001 = vsel %vm740, %v3838, 0
  %v4004 = vsel %vm740, %v3839, 0
  %v4007 = vsel %vm740, %v3840, 0
  %v4010 = vsel %vm740, %v3841, 0
  %v4013 = vsel %vm740, %v3842, 0
  %v4016 = vsel %vm740, %v3843, 0
  %v4019 = vsel %vm740, %v3844, 0
  %v4022 = vsel %vm740, %v3845, 0
  %v4025 = vsel %vm740, %v3846, 0
  %v4028 = vsel %vm740, %v3847, 0
  %v4031 = vsel %vm740, %v3848, 0
  %v4034 = vsel %vm740, %v3849, 0
  %v4037 = vsel %vm740, %v3850, 0
  %v4040 = vsel %vm740, %v3851, 0
  %v4043 = vsel %vm740, %v3852, 0
  %v4046 = vsel %vm740, %v3853, 0
  %v4049 = vsel %vm740, %v3854, 0
  %v4052 = vsel %vm740, %v3855, 0
  %v4055 = vsel %vm740, %v3856, 0
  %v4058 = vsel %vm740, %v3857, 0
  %v4061 = vsel %vm740, %v3858, 0
  %v4064 = vsel %vm740, %v3859, 0
  %v4067 = vsel %vm740, %v3860, 0
  %v4070 = vsel %vm740, %v3861, 0
  %v4073 = vsel %vm740, %v3862, 0
  %v4076 = vsel %vm740, %v3863, 0
  %v4079 = vsel %vm740, %v3864, 0
  %v4082 = vsel %vm740, %v3865, 0
  %v4085 = vsel %vm740, %v3866, 0
  %v4088 = vsel %vm740, %v3867, 0
  %v4091 = vsel %vm740, %v3868, 0
  %v4094 = vsel %vm740, %v3869, 0
  %v4097 = vsel %vm740, %v3870, 0
  %v4100 = vsel %vm740, %v3871, 0
  %v4103 = vsel %vm740, %v3872, 0
  %v4106 = vsel %vm740, %v3873, 0
  %v4109 = vsel %vm740, %v3874, 0
  %v4112 = vsel %vm740, %v3875, 0
  %v4115 = vsel %vm740, %v3876, 0
  %v4118 = vsel %vm740, %v3877, 0
  %v4121 = vsel %vm740, %v3878, 0
  %v4124 = vsel %vm740, %v3879, 0
  %v4127 = vsel %vm740, %v3880, 0
  %v4130 = vsel %vm740, %v3881, 0
  %v4133 = vsel %vm740, %v3882, 0
  %v4136 = vsel %vm740, %v3883, 0
  %v4139 = vsel %vm740, %v3884, 0
  %v4142 = vsel %vm740, %v3885, 0
  %v4145 = vsel %vm740, %v3886, 0
  %v4148 = vsel %vm740, %v3887, 0
  %v4151 = vsel %vm740, %v3888, 0
  %v4154 = vsel %vm740, %v3889, 0
  %v4157 = vsel %vm740, %v3890, 0
  %v4160 = vsel %vm740, %v3891, 0
  %v4163 = vsel %vm740, %v3892, 0
  %v4166 = vsel %vm740, %v3893, 0
  %v4169 = vsel %vm740, %v3894, 0
  %v4172 = vsel %vm740, %v3895, 0
  %v4175 = vsel %vm740, %v3896, 0
  %v4178 = vsel %vm740, %v3897, 0
  %v4181 = vsel %vm740, %v3898, 0
  %v4184 = vsel %vm740, %v3899, 0
  %v4187 = vsel %vm740, %v3900, 0
  %v4190 = vsel %vm740, %v3901, 0
  %v4193 = vsel %vm740, %v3902, 0
  %v4196 = vsel %vm740, %v3903, 0
  %4198 = vmatpush.bf16.msra.mxu0 0
  %4199 = vmatpush.bf16.msra.mxu0 0
  %4200 = vmatpush.bf16.msra.mxu0 0
  %4201 = vmatpush.bf16.msra.mxu0 %v1040
  %4202 = vmatpush.bf16.msra.mxu0 %v734
  %4203 = vmatpush.bf16.msra.mxu0 %v733
  %4204 = vmatpush.bf16.msra.mxu0 %v732
  %4205 = vmatpush.bf16.msra.mxu0 %v731
  %4206 = vmatmul.bf16.gmra.mxu0 %v3905
  %v4207 = vpop.f32.mrf.mxu0
  %v4208 = vadd.f32 0.0, %v4207
  %v4209 = vpop.f32.mrf.mxu0
  %v4210 = vadd.f32 0.0, %v4209
  %4211 = vmatmul.bf16.gmra.mxu0 %v3908
  %v4212 = vpop.f32.mrf.mxu0
  %v4213 = vadd.f32 0.0, %v4212
  %v4214 = vpop.f32.mrf.mxu0
  %v4215 = vadd.f32 0.0, %v4214
  %4216 = vmatmul.bf16.gmra.mxu0 %v3911
  %v4217 = vpop.f32.mrf.mxu0
  %v4218 = vadd.f32 0.0, %v4217
  %v4219 = vpop.f32.mrf.mxu0
  %v4220 = vadd.f32 0.0, %v4219
  %4221 = vmatmul.bf16.gmra.mxu0 %v3914
  %v4222 = vpop.f32.mrf.mxu0
  %v4223 = vadd.f32 0.0, %v4222
  %v4224 = vpop.f32.mrf.mxu0
  %v4225 = vadd.f32 0.0, %v4224
  %4226 = vmatmul.bf16.gmra.mxu0 %v3917
  %v4227 = vpop.f32.mrf.mxu0
  %v4228 = vadd.f32 0.0, %v4227
  %v4229 = vpop.f32.mrf.mxu0
  %v4230 = vadd.f32 0.0, %v4229
  %4231 = vmatmul.bf16.gmra.mxu0 %v3920
  %v4232 = vpop.f32.mrf.mxu0
  %v4233 = vadd.f32 0.0, %v4232
  %v4234 = vpop.f32.mrf.mxu0
  %v4235 = vadd.f32 0.0, %v4234
  %4236 = vmatmul.bf16.gmra.mxu0 %v3923
  %v4237 = vpop.f32.mrf.mxu0
  %v4238 = vadd.f32 0.0, %v4237
  %v4239 = vpop.f32.mrf.mxu0
  %v4240 = vadd.f32 0.0, %v4239
  %4241 = vmatmul.bf16.gmra.mxu0 %v3926
  %v4242 = vpop.f32.mrf.mxu0
  %v4243 = vadd.f32 0.0, %v4242
  %v4244 = vpop.f32.mrf.mxu0
  %v4245 = vadd.f32 0.0, %v4244
  %4246 = vmatmul.bf16.gmra.mxu0 %v3929
  %v4247 = vpop.f32.mrf.mxu0
  %v4248 = vadd.f32 0.0, %v4247
  %v4249 = vpop.f32.mrf.mxu0
  %v4250 = vadd.f32 0.0, %v4249
  %4251 = vmatmul.bf16.gmra.mxu0 %v3932
  %v4252 = vpop.f32.mrf.mxu0
  %v4253 = vadd.f32 0.0, %v4252
  %v4254 = vpop.f32.mrf.mxu0
  %v4255 = vadd.f32 0.0, %v4254
  %4256 = vmatmul.bf16.gmra.mxu0 %v3935
  %v4257 = vpop.f32.mrf.mxu0
  %v4258 = vadd.f32 0.0, %v4257
  %v4259 = vpop.f32.mrf.mxu0
  %v4260 = vadd.f32 0.0, %v4259
  %4261 = vmatmul.bf16.gmra.mxu0 %v3938
  %v4262 = vpop.f32.mrf.mxu0
  %v4263 = vadd.f32 0.0, %v4262
  %v4264 = vpop.f32.mrf.mxu0
  %v4265 = vadd.f32 0.0, %v4264
  %4266 = vmatmul.bf16.gmra.mxu0 %v3941
  %v4267 = vpop.f32.mrf.mxu0
  %v4268 = vadd.f32 0.0, %v4267
  %v4269 = vpop.f32.mrf.mxu0
  %v4270 = vadd.f32 0.0, %v4269
  %4271 = vmatmul.bf16.gmra.mxu0 %v3944
  %v4272 = vpop.f32.mrf.mxu0
  %v4273 = vadd.f32 0.0, %v4272
  %v4274 = vpop.f32.mrf.mxu0
  %v4275 = vadd.f32 0.0, %v4274
  %4276 = vmatmul.bf16.gmra.mxu0 %v3947
  %v4277 = vpop.f32.mrf.mxu0
  %v4278 = vadd.f32 0.0, %v4277
  %v4279 = vpop.f32.mrf.mxu0
  %v4280 = vadd.f32 0.0, %v4279
  %4281 = vmatmul.bf16.gmra.mxu0 %v3950
  %v4282 = vpop.f32.mrf.mxu0
  %v4283 = vadd.f32 0.0, %v4282
  %v4284 = vpop.f32.mrf.mxu0
  %v4285 = vadd.f32 0.0, %v4284
  %4286 = vmatmul.bf16.gmra.mxu0 %v3953
  %v4287 = vpop.f32.mrf.mxu0
  %v4288 = vadd.f32 0.0, %v4287
  %v4289 = vpop.f32.mrf.mxu0
  %v4290 = vadd.f32 0.0, %v4289
  %4291 = vmatmul.bf16.gmra.mxu0 %v3956
  %v4292 = vpop.f32.mrf.mxu0
  %v4293 = vadd.f32 0.0, %v4292
  %v4294 = vpop.f32.mrf.mxu0
  %v4295 = vadd.f32 0.0, %v4294
  %4296 = vmatmul.bf16.gmra.mxu0 %v3959
  %v4297 = vpop.f32.mrf.mxu0
  %v4298 = vadd.f32 0.0, %v4297
  %v4299 = vpop.f32.mrf.mxu0
  %v4300 = vadd.f32 0.0, %v4299
  %4301 = vmatmul.bf16.gmra.mxu0 %v3962
  %v4302 = vpop.f32.mrf.mxu0
  %v4303 = vadd.f32 0.0, %v4302
  %v4304 = vpop.f32.mrf.mxu0
  %v4305 = vadd.f32 0.0, %v4304
  %4306 = vmatmul.bf16.gmra.mxu0 %v3965
  %v4307 = vpop.f32.mrf.mxu0
  %v4308 = vadd.f32 0.0, %v4307
  %v4309 = vpop.f32.mrf.mxu0
  %v4310 = vadd.f32 0.0, %v4309
  %4311 = vmatmul.bf16.gmra.mxu0 %v3968
  %v4312 = vpop.f32.mrf.mxu0
  %v4313 = vadd.f32 0.0, %v4312
  %v4314 = vpop.f32.mrf.mxu0
  %v4315 = vadd.f32 0.0, %v4314
  %4316 = vmatmul.bf16.gmra.mxu0 %v3971
  %v4317 = vpop.f32.mrf.mxu0
  %v4318 = vadd.f32 0.0, %v4317
  %v4319 = vpop.f32.mrf.mxu0
  %v4320 = vadd.f32 0.0, %v4319
  %4321 = vmatmul.bf16.gmra.mxu0 %v3974
  %v4322 = vpop.f32.mrf.mxu0
  %v4323 = vadd.f32 0.0, %v4322
  %v4324 = vpop.f32.mrf.mxu0
  %v4325 = vadd.f32 0.0, %v4324
  %4326 = vmatmul.bf16.gmra.mxu0 %v3977
  %v4327 = vpop.f32.mrf.mxu0
  %v4328 = vadd.f32 0.0, %v4327
  %v4329 = vpop.f32.mrf.mxu0
  %v4330 = vadd.f32 0.0, %v4329
  %4331 = vmatmul.bf16.gmra.mxu0 %v3980
  %v4332 = vpop.f32.mrf.mxu0
  %v4333 = vadd.f32 0.0, %v4332
  %v4334 = vpop.f32.mrf.mxu0
  %v4335 = vadd.f32 0.0, %v4334
  %4336 = vmatmul.bf16.gmra.mxu0 %v3983
  %v4337 = vpop.f32.mrf.mxu0
  %v4338 = vadd.f32 0.0, %v4337
  %v4339 = vpop.f32.mrf.mxu0
  %v4340 = vadd.f32 0.0, %v4339
  %4341 = vmatmul.bf16.gmra.mxu0 %v3986
  %v4342 = vpop.f32.mrf.mxu0
  %v4343 = vadd.f32 0.0, %v4342
  %v4344 = vpop.f32.mrf.mxu0
  %v4345 = vadd.f32 0.0, %v4344
  %4346 = vmatmul.bf16.gmra.mxu0 %v3989
  %v4347 = vpop.f32.mrf.mxu0
  %v4348 = vadd.f32 0.0, %v4347
  %v4349 = vpop.f32.mrf.mxu0
  %v4350 = vadd.f32 0.0, %v4349
  %4351 = vmatmul.bf16.gmra.mxu0 %v3992
  %v4352 = vpop.f32.mrf.mxu0
  %v4353 = vadd.f32 0.0, %v4352
  %v4354 = vpop.f32.mrf.mxu0
  %v4355 = vadd.f32 0.0, %v4354
  %4356 = vmatmul.bf16.gmra.mxu0 %v3995
  %v4357 = vpop.f32.mrf.mxu0
  %v4358 = vadd.f32 0.0, %v4357
  %v4359 = vpop.f32.mrf.mxu0
  %v4360 = vadd.f32 0.0, %v4359
  %4361 = vmatmul.bf16.gmra.mxu0 %v3998
  %v4362 = vpop.f32.mrf.mxu0
  %v4363 = vadd.f32 0.0, %v4362
  %v4364 = vpop.f32.mrf.mxu0
  %v4365 = vadd.f32 0.0, %v4364
  %4366 = vmatmul.bf16.gmra.mxu0 %v4001
  %v4367 = vpop.f32.mrf.mxu0
  %v4368 = vadd.f32 0.0, %v4367
  %v4369 = vpop.f32.mrf.mxu0
  %v4370 = vadd.f32 0.0, %v4369
  %4371 = vmatmul.bf16.gmra.mxu0 %v4004
  %v4372 = vpop.f32.mrf.mxu0
  %v4373 = vadd.f32 0.0, %v4372
  %v4374 = vpop.f32.mrf.mxu0
  %v4375 = vadd.f32 0.0, %v4374
  %4376 = vmatmul.bf16.gmra.mxu0 %v4007
  %v4377 = vpop.f32.mrf.mxu0
  %v4378 = vadd.f32 0.0, %v4377
  %v4379 = vpop.f32.mrf.mxu0
  %v4380 = vadd.f32 0.0, %v4379
  %4381 = vmatmul.bf16.gmra.mxu0 %v4010
  %v4382 = vpop.f32.mrf.mxu0
  %v4383 = vadd.f32 0.0, %v4382
  %v4384 = vpop.f32.mrf.mxu0
  %v4385 = vadd.f32 0.0, %v4384
  %4386 = vmatmul.bf16.gmra.mxu0 %v4013
  %v4387 = vpop.f32.mrf.mxu0
  %v4388 = vadd.f32 0.0, %v4387
  %v4389 = vpop.f32.mrf.mxu0
  %v4390 = vadd.f32 0.0, %v4389
  %4391 = vmatmul.bf16.gmra.mxu0 %v4016
  %v4392 = vpop.f32.mrf.mxu0
  %v4393 = vadd.f32 0.0, %v4392
  %v4394 = vpop.f32.mrf.mxu0
  %v4395 = vadd.f32 0.0, %v4394
  %4396 = vmatmul.bf16.gmra.mxu0 %v4019
  %v4397 = vpop.f32.mrf.mxu0
  %v4398 = vadd.f32 0.0, %v4397
  %v4399 = vpop.f32.mrf.mxu0
  %v4400 = vadd.f32 0.0, %v4399
  %4401 = vmatmul.bf16.gmra.mxu0 %v4022
  %v4402 = vpop.f32.mrf.mxu0
  %v4403 = vadd.f32 0.0, %v4402
  %v4404 = vpop.f32.mrf.mxu0
  %v4405 = vadd.f32 0.0, %v4404
  %4406 = vmatmul.bf16.gmra.mxu0 %v4025
  %v4407 = vpop.f32.mrf.mxu0
  %v4408 = vadd.f32 0.0, %v4407
  %v4409 = vpop.f32.mrf.mxu0
  %v4410 = vadd.f32 0.0, %v4409
  %4411 = vmatmul.bf16.gmra.mxu0 %v4028
  %v4412 = vpop.f32.mrf.mxu0
  %v4413 = vadd.f32 0.0, %v4412
  %v4414 = vpop.f32.mrf.mxu0
  %v4415 = vadd.f32 0.0, %v4414
  %4416 = vmatmul.bf16.gmra.mxu0 %v4031
  %v4417 = vpop.f32.mrf.mxu0
  %v4418 = vadd.f32 0.0, %v4417
  %v4419 = vpop.f32.mrf.mxu0
  %v4420 = vadd.f32 0.0, %v4419
  %4421 = vmatmul.bf16.gmra.mxu0 %v4034
  %v4422 = vpop.f32.mrf.mxu0
  %v4423 = vadd.f32 0.0, %v4422
  %v4424 = vpop.f32.mrf.mxu0
  %v4425 = vadd.f32 0.0, %v4424
  %4426 = vmatmul.bf16.gmra.mxu0 %v4037
  %v4427 = vpop.f32.mrf.mxu0
  %v4428 = vadd.f32 0.0, %v4427
  %v4429 = vpop.f32.mrf.mxu0
  %v4430 = vadd.f32 0.0, %v4429
  %4431 = vmatmul.bf16.gmra.mxu0 %v4040
  %v4432 = vpop.f32.mrf.mxu0
  %v4433 = vadd.f32 0.0, %v4432
  %v4434 = vpop.f32.mrf.mxu0
  %v4435 = vadd.f32 0.0, %v4434
  %4436 = vmatmul.bf16.gmra.mxu0 %v4043
  %v4437 = vpop.f32.mrf.mxu0
  %v4438 = vadd.f32 0.0, %v4437
  %v4439 = vpop.f32.mrf.mxu0
  %v4440 = vadd.f32 0.0, %v4439
  %4441 = vmatmul.bf16.gmra.mxu0 %v4046
  %v4442 = vpop.f32.mrf.mxu0
  %v4443 = vadd.f32 0.0, %v4442
  %v4444 = vpop.f32.mrf.mxu0
  %v4445 = vadd.f32 0.0, %v4444
  %4446 = vmatmul.bf16.gmra.mxu0 %v4049
  %v4447 = vpop.f32.mrf.mxu0
  %v4448 = vadd.f32 0.0, %v4447
  %v4449 = vpop.f32.mrf.mxu0
  %v4450 = vadd.f32 0.0, %v4449
  %4451 = vmatmul.bf16.gmra.mxu0 %v4052
  %v4452 = vpop.f32.mrf.mxu0
  %v4453 = vadd.f32 0.0, %v4452
  %v4454 = vpop.f32.mrf.mxu0
  %v4455 = vadd.f32 0.0, %v4454
  %4456 = vmatmul.bf16.gmra.mxu0 %v4055
  %v4457 = vpop.f32.mrf.mxu0
  %v4458 = vadd.f32 0.0, %v4457
  %v4459 = vpop.f32.mrf.mxu0
  %v4460 = vadd.f32 0.0, %v4459
  %4461 = vmatmul.bf16.gmra.mxu0 %v4058
  %v4462 = vpop.f32.mrf.mxu0
  %v4463 = vadd.f32 0.0, %v4462
  %v4464 = vpop.f32.mrf.mxu0
  %v4465 = vadd.f32 0.0, %v4464
  %4466 = vmatmul.bf16.gmra.mxu0 %v4061
  %v4467 = vpop.f32.mrf.mxu0
  %v4468 = vadd.f32 0.0, %v4467
  %v4469 = vpop.f32.mrf.mxu0
  %v4470 = vadd.f32 0.0, %v4469
  %4471 = vmatmul.bf16.gmra.mxu0 %v4064
  %v4472 = vpop.f32.mrf.mxu0
  %v4473 = vadd.f32 0.0, %v4472
  %v4474 = vpop.f32.mrf.mxu0
  %v4475 = vadd.f32 0.0, %v4474
  %4476 = vmatmul.bf16.gmra.mxu0 %v4067
  %v4477 = vpop.f32.mrf.mxu0
  %v4478 = vadd.f32 0.0, %v4477
  %v4479 = vpop.f32.mrf.mxu0
  %v4480 = vadd.f32 0.0, %v4479
  %4481 = vmatmul.bf16.gmra.mxu0 %v4070
  %v4482 = vpop.f32.mrf.mxu0
  %v4483 = vadd.f32 0.0, %v4482
  %v4484 = vpop.f32.mrf.mxu0
  %v4485 = vadd.f32 0.0, %v4484
  %4486 = vmatmul.bf16.gmra.mxu0 %v4073
  %v4487 = vpop.f32.mrf.mxu0
  %v4488 = vadd.f32 0.0, %v4487
  %v4489 = vpop.f32.mrf.mxu0
  %v4490 = vadd.f32 0.0, %v4489
  %4491 = vmatmul.bf16.gmra.mxu0 %v4076
  %v4492 = vpop.f32.mrf.mxu0
  %v4493 = vadd.f32 0.0, %v4492
  %v4494 = vpop.f32.mrf.mxu0
  %v4495 = vadd.f32 0.0, %v4494
  %4496 = vmatmul.bf16.gmra.mxu0 %v4079
  %v4497 = vpop.f32.mrf.mxu0
  %v4498 = vadd.f32 0.0, %v4497
  %v4499 = vpop.f32.mrf.mxu0
  %v4500 = vadd.f32 0.0, %v4499
  %4501 = vmatmul.bf16.gmra.mxu0 %v4082
  %v4502 = vpop.f32.mrf.mxu0
  %v4503 = vadd.f32 0.0, %v4502
  %v4504 = vpop.f32.mrf.mxu0
  %v4505 = vadd.f32 0.0, %v4504
  %4506 = vmatmul.bf16.gmra.mxu0 %v4085
  %v4507 = vpop.f32.mrf.mxu0
  %v4508 = vadd.f32 0.0, %v4507
  %v4509 = vpop.f32.mrf.mxu0
  %v4510 = vadd.f32 0.0, %v4509
  %4511 = vmatmul.bf16.gmra.mxu0 %v4088
  %v4512 = vpop.f32.mrf.mxu0
  %v4513 = vadd.f32 0.0, %v4512
  %v4514 = vpop.f32.mrf.mxu0
  %v4515 = vadd.f32 0.0, %v4514
  %4516 = vmatmul.bf16.gmra.mxu0 %v4091
  %v4517 = vpop.f32.mrf.mxu0
  %v4518 = vadd.f32 0.0, %v4517
  %v4519 = vpop.f32.mrf.mxu0
  %v4520 = vadd.f32 0.0, %v4519
  %4521 = vmatmul.bf16.gmra.mxu0 %v4094
  %v4522 = vpop.f32.mrf.mxu0
  %v4523 = vadd.f32 0.0, %v4522
  %v4524 = vpop.f32.mrf.mxu0
  %v4525 = vadd.f32 0.0, %v4524
  %4526 = vmatmul.bf16.gmra.mxu0 %v4097
  %v4527 = vpop.f32.mrf.mxu0
  %v4528 = vadd.f32 0.0, %v4527
  %v4529 = vpop.f32.mrf.mxu0
  %v4530 = vadd.f32 0.0, %v4529
  %4531 = vmatmul.bf16.gmra.mxu0 %v4100
  %v4532 = vpop.f32.mrf.mxu0
  %v4533 = vadd.f32 0.0, %v4532
  %v4534 = vpop.f32.mrf.mxu0
  %v4535 = vadd.f32 0.0, %v4534
  %4536 = vmatmul.bf16.gmra.mxu0 %v4103
  %v4537 = vpop.f32.mrf.mxu0
  %v4538 = vadd.f32 0.0, %v4537
  %v4539 = vpop.f32.mrf.mxu0
  %v4540 = vadd.f32 0.0, %v4539
  %4541 = vmatmul.bf16.gmra.mxu0 %v4106
  %v4542 = vpop.f32.mrf.mxu0
  %v4543 = vadd.f32 0.0, %v4542
  %v4544 = vpop.f32.mrf.mxu0
  %v4545 = vadd.f32 0.0, %v4544
  %4546 = vmatmul.bf16.gmra.mxu0 %v4109
  %v4547 = vpop.f32.mrf.mxu0
  %v4548 = vadd.f32 0.0, %v4547
  %v4549 = vpop.f32.mrf.mxu0
  %v4550 = vadd.f32 0.0, %v4549
  %4551 = vmatmul.bf16.gmra.mxu0 %v4112
  %v4552 = vpop.f32.mrf.mxu0
  %v4553 = vadd.f32 0.0, %v4552
  %v4554 = vpop.f32.mrf.mxu0
  %v4555 = vadd.f32 0.0, %v4554
  %4556 = vmatmul.bf16.gmra.mxu0 %v4115
  %v4557 = vpop.f32.mrf.mxu0
  %v4558 = vadd.f32 0.0, %v4557
  %v4559 = vpop.f32.mrf.mxu0
  %v4560 = vadd.f32 0.0, %v4559
  %4561 = vmatmul.bf16.gmra.mxu0 %v4118
  %v4562 = vpop.f32.mrf.mxu0
  %v4563 = vadd.f32 0.0, %v4562
  %v4564 = vpop.f32.mrf.mxu0
  %v4565 = vadd.f32 0.0, %v4564
  %4566 = vmatmul.bf16.gmra.mxu0 %v4121
  %v4567 = vpop.f32.mrf.mxu0
  %v4568 = vadd.f32 0.0, %v4567
  %v4569 = vpop.f32.mrf.mxu0
  %v4570 = vadd.f32 0.0, %v4569
  %4571 = vmatmul.bf16.gmra.mxu0 %v4124
  %v4572 = vpop.f32.mrf.mxu0
  %v4573 = vadd.f32 0.0, %v4572
  %v4574 = vpop.f32.mrf.mxu0
  %v4575 = vadd.f32 0.0, %v4574
  %4576 = vmatmul.bf16.gmra.mxu0 %v4127
  %v4577 = vpop.f32.mrf.mxu0
  %v4578 = vadd.f32 0.0, %v4577
  %v4579 = vpop.f32.mrf.mxu0
  %v4580 = vadd.f32 0.0, %v4579
  %4581 = vmatmul.bf16.gmra.mxu0 %v4130
  %v4582 = vpop.f32.mrf.mxu0
  %v4583 = vadd.f32 0.0, %v4582
  %v4584 = vpop.f32.mrf.mxu0
  %v4585 = vadd.f32 0.0, %v4584
  %4586 = vmatmul.bf16.gmra.mxu0 %v4133
  %v4587 = vpop.f32.mrf.mxu0
  %v4588 = vadd.f32 0.0, %v4587
  %v4589 = vpop.f32.mrf.mxu0
  %v4590 = vadd.f32 0.0, %v4589
  %4591 = vmatmul.bf16.gmra.mxu0 %v4136
  %v4592 = vpop.f32.mrf.mxu0
  %v4593 = vadd.f32 0.0, %v4592
  %v4594 = vpop.f32.mrf.mxu0
  %v4595 = vadd.f32 0.0, %v4594
  %4596 = vmatmul.bf16.gmra.mxu0 %v4139
  %v4597 = vpop.f32.mrf.mxu0
  %v4598 = vadd.f32 0.0, %v4597
  %v4599 = vpop.f32.mrf.mxu0
  %v4600 = vadd.f32 0.0, %v4599
  %4601 = vmatmul.bf16.gmra.mxu0 %v4142
  %v4602 = vpop.f32.mrf.mxu0
  %v4603 = vadd.f32 0.0, %v4602
  %v4604 = vpop.f32.mrf.mxu0
  %v4605 = vadd.f32 0.0, %v4604
  %4606 = vmatmul.bf16.gmra.mxu0 %v4145
  %v4607 = vpop.f32.mrf.mxu0
  %v4608 = vadd.f32 0.0, %v4607
  %v4609 = vpop.f32.mrf.mxu0
  %v4610 = vadd.f32 0.0, %v4609
  %4611 = vmatmul.bf16.gmra.mxu0 %v4148
  %v4612 = vpop.f32.mrf.mxu0
  %v4613 = vadd.f32 0.0, %v4612
  %v4614 = vpop.f32.mrf.mxu0
  %v4615 = vadd.f32 0.0, %v4614
  %4616 = vmatmul.bf16.gmra.mxu0 %v4151
  %v4617 = vpop.f32.mrf.mxu0
  %v4618 = vadd.f32 0.0, %v4617
  %v4619 = vpop.f32.mrf.mxu0
  %v4620 = vadd.f32 0.0, %v4619
  %4621 = vmatmul.bf16.gmra.mxu0 %v4154
  %v4622 = vpop.f32.mrf.mxu0
  %v4623 = vadd.f32 0.0, %v4622
  %v4624 = vpop.f32.mrf.mxu0
  %v4625 = vadd.f32 0.0, %v4624
  %4626 = vmatmul.bf16.gmra.mxu0 %v4157
  %v4627 = vpop.f32.mrf.mxu0
  %v4628 = vadd.f32 0.0, %v4627
  %v4629 = vpop.f32.mrf.mxu0
  %v4630 = vadd.f32 0.0, %v4629
  %4631 = vmatmul.bf16.gmra.mxu0 %v4160
  %v4632 = vpop.f32.mrf.mxu0
  %v4633 = vadd.f32 0.0, %v4632
  %v4634 = vpop.f32.mrf.mxu0
  %v4635 = vadd.f32 0.0, %v4634
  %4636 = vmatmul.bf16.gmra.mxu0 %v4163
  %v4637 = vpop.f32.mrf.mxu0
  %v4638 = vadd.f32 0.0, %v4637
  %v4639 = vpop.f32.mrf.mxu0
  %v4640 = vadd.f32 0.0, %v4639
  %4641 = vmatmul.bf16.gmra.mxu0 %v4166
  %v4642 = vpop.f32.mrf.mxu0
  %v4643 = vadd.f32 0.0, %v4642
  %v4644 = vpop.f32.mrf.mxu0
  %v4645 = vadd.f32 0.0, %v4644
  %4646 = vmatmul.bf16.gmra.mxu0 %v4169
  %v4647 = vpop.f32.mrf.mxu0
  %v4648 = vadd.f32 0.0, %v4647
  %v4649 = vpop.f32.mrf.mxu0
  %v4650 = vadd.f32 0.0, %v4649
  %4651 = vmatmul.bf16.gmra.mxu0 %v4172
  %v4652 = vpop.f32.mrf.mxu0
  %v4653 = vadd.f32 0.0, %v4652
  %v4654 = vpop.f32.mrf.mxu0
  %v4655 = vadd.f32 0.0, %v4654
  %4656 = vmatmul.bf16.gmra.mxu0 %v4175
  %v4657 = vpop.f32.mrf.mxu0
  %v4658 = vadd.f32 0.0, %v4657
  %v4659 = vpop.f32.mrf.mxu0
  %v4660 = vadd.f32 0.0, %v4659
  %4661 = vmatmul.bf16.gmra.mxu0 %v4178
  %v4662 = vpop.f32.mrf.mxu0
  %v4663 = vadd.f32 0.0, %v4662
  %v4664 = vpop.f32.mrf.mxu0
  %v4665 = vadd.f32 0.0, %v4664
  %4666 = vmatmul.bf16.gmra.mxu0 %v4181
  %v4667 = vpop.f32.mrf.mxu0
  %v4668 = vadd.f32 0.0, %v4667
  %v4669 = vpop.f32.mrf.mxu0
  %v4670 = vadd.f32 0.0, %v4669
  %4671 = vmatmul.bf16.gmra.mxu0 %v4184
  %v4672 = vpop.f32.mrf.mxu0
  %v4673 = vadd.f32 0.0, %v4672
  %v4674 = vpop.f32.mrf.mxu0
  %v4675 = vadd.f32 0.0, %v4674
  %4676 = vmatmul.bf16.gmra.mxu0 %v4187
  %v4677 = vpop.f32.mrf.mxu0
  %v4678 = vadd.f32 0.0, %v4677
  %v4679 = vpop.f32.mrf.mxu0
  %v4680 = vadd.f32 0.0, %v4679
  %4681 = vmatmul.bf16.gmra.mxu0 %v4190
  %v4682 = vpop.f32.mrf.mxu0
  %v4683 = vadd.f32 0.0, %v4682
  %v4684 = vpop.f32.mrf.mxu0
  %v4685 = vadd.f32 0.0, %v4684
  %4686 = vmatmul.bf16.gmra.mxu0 %v4193
  %v4687 = vpop.f32.mrf.mxu0
  %v4688 = vadd.f32 0.0, %v4687
  %v4689 = vpop.f32.mrf.mxu0
  %v4690 = vadd.f32 0.0, %v4689
  %4691 = vmatmul.bf16.gmra.mxu0 %v4196
  %v4692 = vpop.f32.mrf.mxu0
  %v4693 = vadd.f32 0.0, %v4692
  %v4694 = vpop.f32.mrf.mxu0
  %v4695 = vadd.f32 0.0, %v4694
  %4696 = vdwg.mxu0
  %v4697 = vmax.f32 %v3021, %v4208
  %v4698 = vmax.f32 %v3022, %v4210
  %v4699 = vmax.f32 %v3023, %v4213
  %v4700 = vmax.f32 %v3024, %v4215
  %v4701 = vmax.f32 %v3025, %v4218
  %v4702 = vmax.f32 %v3026, %v4220
  %v4703 = vmax.f32 %v3027, %v4223
  %v4704 = vmax.f32 %v3028, %v4225
  %v4705 = vmax.f32 %v3029, %v4228
  %v4706 = vmax.f32 %v3030, %v4230
  %v4707 = vmax.f32 %v3031, %v4233
  %v4708 = vmax.f32 %v3032, %v4235
  %v4709 = vmax.f32 %v3033, %v4238
  %v4710 = vmax.f32 %v3034, %v4240
  %v4711 = vmax.f32 %v3035, %v4243
  %v4712 = vmax.f32 %v3036, %v4245
  %v4713 = vmax.f32 %v3037, %v4248
  %v4714 = vmax.f32 %v3038, %v4250
  %v4715 = vmax.f32 %v3039, %v4253
  %v4716 = vmax.f32 %v3040, %v4255
  %v4717 = vmax.f32 %v3041, %v4258
  %v4718 = vmax.f32 %v3042, %v4260
  %v4719 = vmax.f32 %v3043, %v4263
  %v4720 = vmax.f32 %v3044, %v4265
  %v4721 = vmax.f32 %v3045, %v4268
  %v4722 = vmax.f32 %v3046, %v4270
  %v4723 = vmax.f32 %v3047, %v4273
  %v4724 = vmax.f32 %v3048, %v4275
  %v4725 = vmax.f32 %v3049, %v4278
  %v4726 = vmax.f32 %v3050, %v4280
  %v4727 = vmax.f32 %v3051, %v4283
  %v4728 = vmax.f32 %v3052, %v4285
  %v4729 = vmax.f32 %v3053, %v4288
  %v4730 = vmax.f32 %v3054, %v4290
  %v4731 = vmax.f32 %v3055, %v4293
  %v4732 = vmax.f32 %v3056, %v4295
  %v4733 = vmax.f32 %v3057, %v4298
  %v4734 = vmax.f32 %v3058, %v4300
  %v4735 = vmax.f32 %v3059, %v4303
  %v4736 = vmax.f32 %v3060, %v4305
  %v4737 = vmax.f32 %v3061, %v4308
  %v4738 = vmax.f32 %v3062, %v4310
  %v4739 = vmax.f32 %v3063, %v4313
  %v4740 = vmax.f32 %v3064, %v4315
  %v4741 = vmax.f32 %v3065, %v4318
  %v4742 = vmax.f32 %v3066, %v4320
  %v4743 = vmax.f32 %v3067, %v4323
  %v4744 = vmax.f32 %v3068, %v4325
  %v4745 = vmax.f32 %v3069, %v4328
  %v4746 = vmax.f32 %v3070, %v4330
  %v4747 = vmax.f32 %v3071, %v4333
  %v4748 = vmax.f32 %v3072, %v4335
  %v4749 = vmax.f32 %v3073, %v4338
  %v4750 = vmax.f32 %v3074, %v4340
  %v4751 = vmax.f32 %v3075, %v4343
  %v4752 = vmax.f32 %v3076, %v4345
  %v4753 = vmax.f32 %v3077, %v4348
  %v4754 = vmax.f32 %v3078, %v4350
  %v4755 = vmax.f32 %v3079, %v4353
  %v4756 = vmax.f32 %v3080, %v4355
  %v4757 = vmax.f32 %v3081, %v4358
  %v4758 = vmax.f32 %v3082, %v4360
  %v4759 = vmax.f32 %v3083, %v4363
  %v4760 = vmax.f32 %v3084, %v4365
  %v4761 = vmax.f32 %v3085, %v4368
  %v4762 = vmax.f32 %v3086, %v4370
  %v4763 = vmax.f32 %v3087, %v4373
  %v4764 = vmax.f32 %v3088, %v4375
  %v4765 = vmax.f32 %v3089, %v4378
  %v4766 = vmax.f32 %v3090, %v4380
  %v4767 = vmax.f32 %v3091, %v4383
  %v4768 = vmax.f32 %v3092, %v4385
  %v4769 = vmax.f32 %v3093, %v4388
  %v4770 = vmax.f32 %v3094, %v4390
  %v4771 = vmax.f32 %v3095, %v4393
  %v4772 = vmax.f32 %v3096, %v4395
  %v4773 = vmax.f32 %v3097, %v4398
  %v4774 = vmax.f32 %v3098, %v4400
  %v4775 = vmax.f32 %v3099, %v4403
  %v4776 = vmax.f32 %v3100, %v4405
  %v4777 = vmax.f32 %v3101, %v4408
  %v4778 = vmax.f32 %v3102, %v4410
  %v4779 = vmax.f32 %v3103, %v4413
  %v4780 = vmax.f32 %v3104, %v4415
  %v4781 = vmax.f32 %v3105, %v4418
  %v4782 = vmax.f32 %v3106, %v4420
  %v4783 = vmax.f32 %v3107, %v4423
  %v4784 = vmax.f32 %v3108, %v4425
  %v4785 = vmax.f32 %v3109, %v4428
  %v4786 = vmax.f32 %v3110, %v4430
  %v4787 = vmax.f32 %v3111, %v4433
  %v4788 = vmax.f32 %v3112, %v4435
  %v4789 = vmax.f32 %v3113, %v4438
  %v4790 = vmax.f32 %v3114, %v4440
  %v4791 = vmax.f32 %v3115, %v4443
  %v4792 = vmax.f32 %v3116, %v4445
  %v4793 = vmax.f32 %v3117, %v4448
  %v4794 = vmax.f32 %v3118, %v4450
  %v4795 = vmax.f32 %v3119, %v4453
  %v4796 = vmax.f32 %v3120, %v4455
  %v4797 = vmax.f32 %v3121, %v4458
  %v4798 = vmax.f32 %v3122, %v4460
  %v4799 = vmax.f32 %v3123, %v4463
  %v4800 = vmax.f32 %v3124, %v4465
  %v4801 = vmax.f32 %v3125, %v4468
  %v4802 = vmax.f32 %v3126, %v4470
  %v4803 = vmax.f32 %v3127, %v4473
  %v4804 = vmax.f32 %v3128, %v4475
  %v4805 = vmax.f32 %v3129, %v4478
  %v4806 = vmax.f32 %v3130, %v4480
  %v4807 = vmax.f32 %v3131, %v4483
  %v4808 = vmax.f32 %v3132, %v4485
  %v4809 = vmax.f32 %v3133, %v4488
  %v4810 = vmax.f32 %v3134, %v4490
  %v4811 = vmax.f32 %v3135, %v4493
  %v4812 = vmax.f32 %v3136, %v4495
  %v4813 = vmax.f32 %v3137, %v4498
  %v4814 = vmax.f32 %v3138, %v4500
  %v4815 = vmax.f32 %v3139, %v4503
  %v4816 = vmax.f32 %v3140, %v4505
  %v4817 = vmax.f32 %v3141, %v4508
  %v4818 = vmax.f32 %v3142, %v4510
  %v4819 = vmax.f32 %v3143, %v4513
  %v4820 = vmax.f32 %v3144, %v4515
  %v4821 = vmax.f32 %v3145, %v4518
  %v4822 = vmax.f32 %v3146, %v4520
  %v4823 = vmax.f32 %v3147, %v4523
  %v4824 = vmax.f32 %v3148, %v4525
  %v4825 = vmax.f32 %v3149, %v4528
  %v4826 = vmax.f32 %v3150, %v4530
  %v4827 = vmax.f32 %v3151, %v4533
  %v4828 = vmax.f32 %v3152, %v4535
  %v4829 = vmax.f32 %v3153, %v4538
  %v4830 = vmax.f32 %v3154, %v4540
  %v4831 = vmax.f32 %v3155, %v4543
  %v4832 = vmax.f32 %v3156, %v4545
  %v4833 = vmax.f32 %v3157, %v4548
  %v4834 = vmax.f32 %v3158, %v4550
  %v4835 = vmax.f32 %v3159, %v4553
  %v4836 = vmax.f32 %v3160, %v4555
  %v4837 = vmax.f32 %v3161, %v4558
  %v4838 = vmax.f32 %v3162, %v4560
  %v4839 = vmax.f32 %v3163, %v4563
  %v4840 = vmax.f32 %v3164, %v4565
  %v4841 = vmax.f32 %v3165, %v4568
  %v4842 = vmax.f32 %v3166, %v4570
  %v4843 = vmax.f32 %v3167, %v4573
  %v4844 = vmax.f32 %v3168, %v4575
  %v4845 = vmax.f32 %v3169, %v4578
  %v4846 = vmax.f32 %v3170, %v4580
  %v4847 = vmax.f32 %v3171, %v4583
  %v4848 = vmax.f32 %v3172, %v4585
  %v4849 = vmax.f32 %v3173, %v4588
  %v4850 = vmax.f32 %v3174, %v4590
  %v4851 = vmax.f32 %v3175, %v4593
  %v4852 = vmax.f32 %v3176, %v4595
  %v4853 = vmax.f32 %v3177, %v4598
  %v4854 = vmax.f32 %v3178, %v4600
  %v4855 = vmax.f32 %v3179, %v4603
  %v4856 = vmax.f32 %v3180, %v4605
  %v4857 = vmax.f32 %v3181, %v4608
  %v4858 = vmax.f32 %v3182, %v4610
  %v4859 = vmax.f32 %v3183, %v4613
  %v4860 = vmax.f32 %v3184, %v4615
  %v4861 = vmax.f32 %v3185, %v4618
  %v4862 = vmax.f32 %v3186, %v4620
  %v4863 = vmax.f32 %v3187, %v4623
  %v4864 = vmax.f32 %v3188, %v4625
  %v4865 = vmax.f32 %v3189, %v4628
  %v4866 = vmax.f32 %v3190, %v4630
  %v4867 = vmax.f32 %v3191, %v4633
  %v4868 = vmax.f32 %v3192, %v4635
  %v4869 = vmax.f32 %v3193, %v4638
  %v4870 = vmax.f32 %v3194, %v4640
  %v4871 = vmax.f32 %v3195, %v4643
  %v4872 = vmax.f32 %v3196, %v4645
  %v4873 = vmax.f32 %v3197, %v4648
  %v4874 = vmax.f32 %v3198, %v4650
  %v4875 = vmax.f32 %v3199, %v4653
  %v4876 = vmax.f32 %v3200, %v4655
  %v4877 = vmax.f32 %v3201, %v4658
  %v4878 = vmax.f32 %v3202, %v4660
  %v4879 = vmax.f32 %v3203, %v4663
  %v4880 = vmax.f32 %v3204, %v4665
  %v4881 = vmax.f32 %v3205, %v4668
  %v4882 = vmax.f32 %v3206, %v4670
  %v4883 = vmax.f32 %v3207, %v4673
  %v4884 = vmax.f32 %v3208, %v4675
  %v4885 = vmax.f32 %v3209, %v4678
  %v4886 = vmax.f32 %v3210, %v4680
  %v4887 = vmax.f32 %v3211, %v4683
  %v4888 = vmax.f32 %v3212, %v4685
  %v4889 = vmax.f32 %v3213, %v4688
  %v4890 = vmax.f32 %v3214, %v4690
  %v4891 = vmax.f32 %v3215, %v4693
  %v4892 = vmax.f32 %v3216, %v4695
  %s4893 = scalar_lea.vmem %s0, 2352
  %v4894 = vld [vmem:[%s4893] sm:$0xf]
  %v4895 = vld [vmem:[%s4893 + $0x4] sm:$0xf]
  %v4896 = vld [vmem:[%s4893 + $0x8] sm:$0xf]
  %v4897 = vld [vmem:[%s4893 + $0xc] sm:$0xf]
  %v4898 = vld [vmem:[%s4893 + $0x10] sm:$0xf]
  %v4899 = vld [vmem:[%s4893 + $0x14] sm:$0xf]
  %v4900 = vld [vmem:[%s4893 + $0x18] sm:$0xf]
  %v4901 = vld [vmem:[%s4893 + $0x1c] sm:$0xf]
  %v4902 = vld [vmem:[%s4893 + $0x20] sm:$0xf]
  %v4903 = vld [vmem:[%s4893 + $0x24] sm:$0xf]
  %v4904 = vld [vmem:[%s4893 + $0x28] sm:$0xf]
  %v4905 = vld [vmem:[%s4893 + $0x2c] sm:$0xf]
  %v4906 = vld [vmem:[%s4893 + $0x30] sm:$0xf]
  %v4907 = vld [vmem:[%s4893 + $0x34] sm:$0xf]
  %v4908 = vld [vmem:[%s4893 + $0x38] sm:$0xf]
  %v4909 = vld [vmem:[%s4893 + $0x3c] sm:$0xf]
  %v4910 = vld [vmem:[%s4893 + $0x40] sm:$0xf]
  %v4911 = vld [vmem:[%s4893 + $0x44] sm:$0xf]
  %v4912 = vld [vmem:[%s4893 + $0x48] sm:$0xf]
  %v4913 = vld [vmem:[%s4893 + $0x4c] sm:$0xf]
  %v4914 = vld [vmem:[%s4893 + $0x50] sm:$0xf]
  %v4915 = vld [vmem:[%s4893 + $0x54] sm:$0xf]
  %v4916 = vld [vmem:[%s4893 + $0x58] sm:$0xf]
  %v4917 = vld [vmem:[%s4893 + $0x5c] sm:$0xf]
  %v4918 = vld [vmem:[%s4893 + $0x60] sm:$0xf]
  %v4919 = vld [vmem:[%s4893 + $0x64] sm:$0xf]
  %v4920 = vld [vmem:[%s4893 + $0x68] sm:$0xf]
  %v4921 = vld [vmem:[%s4893 + $0x6c] sm:$0xf]
  %v4922 = vld [vmem:[%s4893 + $0x70] sm:$0xf]
  %v4923 = vld [vmem:[%s4893 + $0x74] sm:$0xf]
  %v4924 = vld [vmem:[%s4893 + $0x78] sm:$0xf]
  %v4925 = vld [vmem:[%s4893 + $0x7c] sm:$0xf]
  %v4926 = vld [vmem:[%s4893 + $0x80] sm:$0xf]
  %v4927 = vld [vmem:[%s4893 + $0x84] sm:$0xf]
  %v4928 = vld [vmem:[%s4893 + $0x88] sm:$0xf]
  %v4929 = vld [vmem:[%s4893 + $0x8c] sm:$0xf]
  %v4930 = vld [vmem:[%s4893 + $0x90] sm:$0xf]
  %v4931 = vld [vmem:[%s4893 + $0x94] sm:$0xf]
  %v4932 = vld [vmem:[%s4893 + $0x98] sm:$0xf]
  %v4933 = vld [vmem:[%s4893 + $0x9c] sm:$0xf]
  %v4934 = vld [vmem:[%s4893 + $0xa0] sm:$0xf]
  %v4935 = vld [vmem:[%s4893 + $0xa4] sm:$0xf]
  %v4936 = vld [vmem:[%s4893 + $0xa8] sm:$0xf]
  %v4937 = vld [vmem:[%s4893 + $0xac] sm:$0xf]
  %v4938 = vld [vmem:[%s4893 + $0xb0] sm:$0xf]
  %v4939 = vld [vmem:[%s4893 + $0xb4] sm:$0xf]
  %v4940 = vld [vmem:[%s4893 + $0xb8] sm:$0xf]
  %v4941 = vld [vmem:[%s4893 + $0xbc] sm:$0xf]
  %v4942 = vld [vmem:[%s4893 + $0xc0] sm:$0xf]
  %v4943 = vld [vmem:[%s4893 + $0xc4] sm:$0xf]
  %v4944 = vld [vmem:[%s4893 + $0xc8] sm:$0xf]
  %v4945 = vld [vmem:[%s4893 + $0xcc] sm:$0xf]
  %v4946 = vld [vmem:[%s4893 + $0xd0] sm:$0xf]
  %v4947 = vld [vmem:[%s4893 + $0xd4] sm:$0xf]
  %v4948 = vld [vmem:[%s4893 + $0xd8] sm:$0xf]
  %v4949 = vld [vmem:[%s4893 + $0xdc] sm:$0xf]
  %v4950 = vld [vmem:[%s4893 + $0xe0] sm:$0xf]
  %v4951 = vld [vmem:[%s4893 + $0xe4] sm:$0xf]
  %v4952 = vld [vmem:[%s4893 + $0xe8] sm:$0xf]
  %v4953 = vld [vmem:[%s4893 + $0xec] sm:$0xf]
  %v4954 = vld [vmem:[%s4893 + $0xf0] sm:$0xf]
  %v4955 = vld [vmem:[%s4893 + $0xf4] sm:$0xf]
  %v4956 = vld [vmem:[%s4893 + $0xf8] sm:$0xf]
  %v4957 = vld [vmem:[%s4893 + $0xfc] sm:$0xf]
  %v4958 = vld [vmem:[%s4893 + $0x100] sm:$0xf]
  %v4959 = vld [vmem:[%s4893 + $0x104] sm:$0xf]
  %v4960 = vld [vmem:[%s4893 + $0x108] sm:$0xf]
  %v4961 = vld [vmem:[%s4893 + $0x10c] sm:$0xf]
  %v4962 = vld [vmem:[%s4893 + $0x110] sm:$0xf]
  %v4963 = vld [vmem:[%s4893 + $0x114] sm:$0xf]
  %v4964 = vld [vmem:[%s4893 + $0x118] sm:$0xf]
  %v4965 = vld [vmem:[%s4893 + $0x11c] sm:$0xf]
  %v4966 = vld [vmem:[%s4893 + $0x120] sm:$0xf]
  %v4967 = vld [vmem:[%s4893 + $0x124] sm:$0xf]
  %v4968 = vld [vmem:[%s4893 + $0x128] sm:$0xf]
  %v4969 = vld [vmem:[%s4893 + $0x12c] sm:$0xf]
  %v4970 = vld [vmem:[%s4893 + $0x130] sm:$0xf]
  %v4971 = vld [vmem:[%s4893 + $0x134] sm:$0xf]
  %v4972 = vld [vmem:[%s4893 + $0x138] sm:$0xf]
  %v4973 = vld [vmem:[%s4893 + $0x13c] sm:$0xf]
  %v4974 = vld [vmem:[%s4893 + $0x140] sm:$0xf]
  %v4975 = vld [vmem:[%s4893 + $0x144] sm:$0xf]
  %v4976 = vld [vmem:[%s4893 + $0x148] sm:$0xf]
  %v4977 = vld [vmem:[%s4893 + $0x14c] sm:$0xf]
  %v4978 = vld [vmem:[%s4893 + $0x150] sm:$0xf]
  %v4979 = vld [vmem:[%s4893 + $0x154] sm:$0xf]
  %v4980 = vld [vmem:[%s4893 + $0x158] sm:$0xf]
  %v4981 = vld [vmem:[%s4893 + $0x15c] sm:$0xf]
  %v4982 = vld [vmem:[%s4893 + $0x160] sm:$0xf]
  %v4983 = vld [vmem:[%s4893 + $0x164] sm:$0xf]
  %v4984 = vld [vmem:[%s4893 + $0x168] sm:$0xf]
  %v4985 = vld [vmem:[%s4893 + $0x16c] sm:$0xf]
  %v4986 = vld [vmem:[%s4893 + $0x170] sm:$0xf]
  %v4987 = vld [vmem:[%s4893 + $0x174] sm:$0xf]
  %v4988 = vld [vmem:[%s4893 + $0x178] sm:$0xf]
  %v4989 = vld [vmem:[%s4893 + $0x17c] sm:$0xf]
  %v4990 = vld [vmem:[%s4893 + $0x180] sm:$0xf]
  %v4991 = vld [vmem:[%s4893 + $0x184] sm:$0xf]
  %v4992 = vld [vmem:[%s4893 + $0x188] sm:$0xf]
  %v4993 = vld [vmem:[%s4893 + $0x18c] sm:$0xf]
  %v4994 = vld [vmem:[%s4893 + $0x190] sm:$0xf]
  %v4995 = vld [vmem:[%s4893 + $0x194] sm:$0xf]
  %v4996 = vld [vmem:[%s4893 + $0x198] sm:$0xf]
  %v4997 = vld [vmem:[%s4893 + $0x19c] sm:$0xf]
  %v4998 = vld [vmem:[%s4893 + $0x1a0] sm:$0xf]
  %v4999 = vld [vmem:[%s4893 + $0x1a4] sm:$0xf]
  %v5000 = vld [vmem:[%s4893 + $0x1a8] sm:$0xf]
  %v5001 = vld [vmem:[%s4893 + $0x1ac] sm:$0xf]
  %v5002 = vld [vmem:[%s4893 + $0x1b0] sm:$0xf]
  %v5003 = vld [vmem:[%s4893 + $0x1b4] sm:$0xf]
  %v5004 = vld [vmem:[%s4893 + $0x1b8] sm:$0xf]
  %v5005 = vld [vmem:[%s4893 + $0x1bc] sm:$0xf]
  %v5006 = vld [vmem:[%s4893 + $0x1c0] sm:$0xf]
  %v5007 = vld [vmem:[%s4893 + $0x1c4] sm:$0xf]
  %v5008 = vld [vmem:[%s4893 + $0x1c8] sm:$0xf]
  %v5009 = vld [vmem:[%s4893 + $0x1cc] sm:$0xf]
  %v5010 = vld [vmem:[%s4893 + $0x1d0] sm:$0xf]
  %v5011 = vld [vmem:[%s4893 + $0x1d4] sm:$0xf]
  %v5012 = vld [vmem:[%s4893 + $0x1d8] sm:$0xf]
  %v5013 = vld [vmem:[%s4893 + $0x1dc] sm:$0xf]
  %v5014 = vld [vmem:[%s4893 + $0x1e0] sm:$0xf]
  %v5015 = vld [vmem:[%s4893 + $0x1e4] sm:$0xf]
  %v5016 = vld [vmem:[%s4893 + $0x1e8] sm:$0xf]
  %v5017 = vld [vmem:[%s4893 + $0x1ec] sm:$0xf]
  %v5018 = vld [vmem:[%s4893 + $0x1f0] sm:$0xf]
  %v5019 = vld [vmem:[%s4893 + $0x1f4] sm:$0xf]
  %v5020 = vld [vmem:[%s4893 + $0x1f8] sm:$0xf]
  %v5021 = vld [vmem:[%s4893 + $0x1fc] sm:$0xf]
  %v5022 = vld [vmem:[%s4893 + $0x200] sm:$0xf]
  %v5023 = vld [vmem:[%s4893 + $0x204] sm:$0xf]
  %v5024 = vld [vmem:[%s4893 + $0x208] sm:$0xf]
  %v5025 = vld [vmem:[%s4893 + $0x20c] sm:$0xf]
  %v5026 = vld [vmem:[%s4893 + $0x210] sm:$0xf]
  %v5027 = vld [vmem:[%s4893 + $0x214] sm:$0xf]
  %v5028 = vld [vmem:[%s4893 + $0x218] sm:$0xf]
  %v5029 = vld [vmem:[%s4893 + $0x21c] sm:$0xf]
  %v5030 = vld [vmem:[%s4893 + $0x220] sm:$0xf]
  %v5031 = vld [vmem:[%s4893 + $0x224] sm:$0xf]
  %v5032 = vld [vmem:[%s4893 + $0x228] sm:$0xf]
  %v5033 = vld [vmem:[%s4893 + $0x22c] sm:$0xf]
  %v5034 = vld [vmem:[%s4893 + $0x230] sm:$0xf]
  %v5035 = vld [vmem:[%s4893 + $0x234] sm:$0xf]
  %v5036 = vld [vmem:[%s4893 + $0x238] sm:$0xf]
  %v5037 = vld [vmem:[%s4893 + $0x23c] sm:$0xf]
  %v5038 = vld [vmem:[%s4893 + $0x240] sm:$0xf]
  %v5039 = vld [vmem:[%s4893 + $0x244] sm:$0xf]
  %v5040 = vld [vmem:[%s4893 + $0x248] sm:$0xf]
  %v5041 = vld [vmem:[%s4893 + $0x24c] sm:$0xf]
  %v5042 = vld [vmem:[%s4893 + $0x250] sm:$0xf]
  %v5043 = vld [vmem:[%s4893 + $0x254] sm:$0xf]
  %v5044 = vld [vmem:[%s4893 + $0x258] sm:$0xf]
  %v5045 = vld [vmem:[%s4893 + $0x25c] sm:$0xf]
  %v5046 = vld [vmem:[%s4893 + $0x260] sm:$0xf]
  %v5047 = vld [vmem:[%s4893 + $0x264] sm:$0xf]
  %v5048 = vld [vmem:[%s4893 + $0x268] sm:$0xf]
  %v5049 = vld [vmem:[%s4893 + $0x26c] sm:$0xf]
  %v5050 = vld [vmem:[%s4893 + $0x270] sm:$0xf]
  %v5051 = vld [vmem:[%s4893 + $0x274] sm:$0xf]
  %v5052 = vld [vmem:[%s4893 + $0x278] sm:$0xf]
  %v5053 = vld [vmem:[%s4893 + $0x27c] sm:$0xf]
  %v5054 = vld [vmem:[%s4893 + $0x280] sm:$0xf]
  %v5055 = vld [vmem:[%s4893 + $0x284] sm:$0xf]
  %v5056 = vld [vmem:[%s4893 + $0x288] sm:$0xf]
  %v5057 = vld [vmem:[%s4893 + $0x28c] sm:$0xf]
  %v5058 = vld [vmem:[%s4893 + $0x290] sm:$0xf]
  %v5059 = vld [vmem:[%s4893 + $0x294] sm:$0xf]
  %v5060 = vld [vmem:[%s4893 + $0x298] sm:$0xf]
  %v5061 = vld [vmem:[%s4893 + $0x29c] sm:$0xf]
  %v5062 = vld [vmem:[%s4893 + $0x2a0] sm:$0xf]
  %v5063 = vld [vmem:[%s4893 + $0x2a4] sm:$0xf]
  %v5064 = vld [vmem:[%s4893 + $0x2a8] sm:$0xf]
  %v5065 = vld [vmem:[%s4893 + $0x2ac] sm:$0xf]
  %v5066 = vld [vmem:[%s4893 + $0x2b0] sm:$0xf]
  %v5067 = vld [vmem:[%s4893 + $0x2b4] sm:$0xf]
  %v5068 = vld [vmem:[%s4893 + $0x2b8] sm:$0xf]
  %v5069 = vld [vmem:[%s4893 + $0x2bc] sm:$0xf]
  %v5070 = vld [vmem:[%s4893 + $0x2c0] sm:$0xf]
  %v5071 = vld [vmem:[%s4893 + $0x2c4] sm:$0xf]
  %v5072 = vld [vmem:[%s4893 + $0x2c8] sm:$0xf]
  %v5073 = vld [vmem:[%s4893 + $0x2cc] sm:$0xf]
  %v5074 = vld [vmem:[%s4893 + $0x2d0] sm:$0xf]
  %v5075 = vld [vmem:[%s4893 + $0x2d4] sm:$0xf]
  %v5076 = vld [vmem:[%s4893 + $0x2d8] sm:$0xf]
  %v5077 = vld [vmem:[%s4893 + $0x2dc] sm:$0xf]
  %v5078 = vld [vmem:[%s4893 + $0x2e0] sm:$0xf]
  %v5079 = vld [vmem:[%s4893 + $0x2e4] sm:$0xf]
  %v5080 = vld [vmem:[%s4893 + $0x2e8] sm:$0xf]
  %v5081 = vld [vmem:[%s4893 + $0x2ec] sm:$0xf]
  %v5082 = vld [vmem:[%s4893 + $0x2f0] sm:$0xf]
  %v5083 = vld [vmem:[%s4893 + $0x2f4] sm:$0xf]
  %v5084 = vld [vmem:[%s4893 + $0x2f8] sm:$0xf]
  %v5085 = vld [vmem:[%s4893 + $0x2fc] sm:$0xf]
  %v5086 = vld [vmem:[%s4893 + $0x300] sm:$0xf]
  %v5087 = vld [vmem:[%s4893 + $0x304] sm:$0xf]
  %v5088 = vld [vmem:[%s4893 + $0x308] sm:$0xf]
  %v5089 = vld [vmem:[%s4893 + $0x30c] sm:$0xf]
  %v5286 = vunpack.c.l.b16 %v4894
  %v5287 = vunpack.c.l.b16 %v4895
  %v5288 = vunpack.c.l.b16 %v4896
  %v5289 = vunpack.c.l.b16 %v4897
  %v5290 = vunpack.c.l.b16 %v4898
  %v5291 = vunpack.c.l.b16 %v4899
  %v5292 = vunpack.c.l.b16 %v4900
  %v5293 = vunpack.c.l.b16 %v4901
  %v5294 = vunpack.c.l.b16 %v4902
  %v5295 = vunpack.c.l.b16 %v4903
  %v5296 = vunpack.c.l.b16 %v4904
  %v5297 = vunpack.c.l.b16 %v4905
  %v5298 = vunpack.c.l.b16 %v4906
  %v5299 = vunpack.c.l.b16 %v4907
  %v5300 = vunpack.c.l.b16 %v4908
  %v5301 = vunpack.c.l.b16 %v4909
  %v5302 = vunpack.c.l.b16 %v4910
  %v5303 = vunpack.c.l.b16 %v4911
  %v5304 = vunpack.c.l.b16 %v4912
  %v5305 = vunpack.c.l.b16 %v4913
  %v5306 = vunpack.c.l.b16 %v4914
  %v5307 = vunpack.c.l.b16 %v4915
  %v5308 = vunpack.c.l.b16 %v4916
  %v5309 = vunpack.c.l.b16 %v4917
  %v5310 = vunpack.c.l.b16 %v4918
  %v5311 = vunpack.c.l.b16 %v4919
  %v5312 = vunpack.c.l.b16 %v4920
  %v5313 = vunpack.c.l.b16 %v4921
  %v5314 = vunpack.c.l.b16 %v4922
  %v5315 = vunpack.c.l.b16 %v4923
  %v5316 = vunpack.c.l.b16 %v4924
  %v5317 = vunpack.c.l.b16 %v4925
  %v5318 = vunpack.c.l.b16 %v4926
  %v5319 = vunpack.c.l.b16 %v4927
  %v5320 = vunpack.c.l.b16 %v4928
  %v5321 = vunpack.c.l.b16 %v4929
  %v5322 = vunpack.c.l.b16 %v4930
  %v5323 = vunpack.c.l.b16 %v4931
  %v5324 = vunpack.c.l.b16 %v4932
  %v5325 = vunpack.c.l.b16 %v4933
  %v5326 = vunpack.c.l.b16 %v4934
  %v5327 = vunpack.c.l.b16 %v4935
  %v5328 = vunpack.c.l.b16 %v4936
  %v5329 = vunpack.c.l.b16 %v4937
  %v5330 = vunpack.c.l.b16 %v4938
  %v5331 = vunpack.c.l.b16 %v4939
  %v5332 = vunpack.c.l.b16 %v4940
  %v5333 = vunpack.c.l.b16 %v4941
  %v5334 = vunpack.c.l.b16 %v4942
  %v5335 = vunpack.c.l.b16 %v4943
  %v5336 = vunpack.c.l.b16 %v4944
  %v5337 = vunpack.c.l.b16 %v4945
  %v5338 = vunpack.c.l.b16 %v4946
  %v5339 = vunpack.c.l.b16 %v4947
  %v5340 = vunpack.c.l.b16 %v4948
  %v5341 = vunpack.c.l.b16 %v4949
  %v5342 = vunpack.c.l.b16 %v4950
  %v5343 = vunpack.c.l.b16 %v4951
  %v5344 = vunpack.c.l.b16 %v4952
  %v5345 = vunpack.c.l.b16 %v4953
  %v5346 = vunpack.c.l.b16 %v4954
  %v5347 = vunpack.c.l.b16 %v4955
  %v5348 = vunpack.c.l.b16 %v4956
  %v5349 = vunpack.c.l.b16 %v4957
  %v5350 = vunpack.c.l.b16 %v4958
  %v5351 = vunpack.c.l.b16 %v4959
  %v5352 = vunpack.c.l.b16 %v4960
  %v5353 = vunpack.c.l.b16 %v4961
  %v5354 = vunpack.c.l.b16 %v4962
  %v5355 = vunpack.c.l.b16 %v4963
  %v5356 = vunpack.c.l.b16 %v4964
  %v5357 = vunpack.c.l.b16 %v4965
  %v5358 = vunpack.c.l.b16 %v4966
  %v5359 = vunpack.c.l.b16 %v4967
  %v5360 = vunpack.c.l.b16 %v4968
  %v5361 = vunpack.c.l.b16 %v4969
  %v5362 = vunpack.c.l.b16 %v4970
  %v5363 = vunpack.c.l.b16 %v4971
  %v5364 = vunpack.c.l.b16 %v4972
  %v5365 = vunpack.c.l.b16 %v4973
  %v5366 = vunpack.c.l.b16 %v4974
  %v5367 = vunpack.c.l.b16 %v4975
  %v5368 = vunpack.c.l.b16 %v4976
  %v5369 = vunpack.c.l.b16 %v4977
  %v5370 = vunpack.c.l.b16 %v4978
  %v5371 = vunpack.c.l.b16 %v4979
  %v5372 = vunpack.c.l.b16 %v4980
  %v5373 = vunpack.c.l.b16 %v4981
  %v5374 = vunpack.c.l.b16 %v4982
  %v5375 = vunpack.c.l.b16 %v4983
  %v5376 = vunpack.c.l.b16 %v4984
  %v5377 = vunpack.c.l.b16 %v4985
  %v5378 = vunpack.c.l.b16 %v4986
  %v5379 = vunpack.c.l.b16 %v4987
  %v5380 = vunpack.c.l.b16 %v4988
  %v5381 = vunpack.c.l.b16 %v4989
  %v5382 = vunpack.c.l.b16 %v4990
  %v5383 = vunpack.c.l.b16 %v4991
  %v5384 = vunpack.c.l.b16 %v4992
  %v5385 = vunpack.c.l.b16 %v4993
  %v5386 = vunpack.c.l.b16 %v4994
  %v5387 = vunpack.c.l.b16 %v4995
  %v5388 = vunpack.c.l.b16 %v4996
  %v5389 = vunpack.c.l.b16 %v4997
  %v5390 = vunpack.c.l.b16 %v4998
  %v5391 = vunpack.c.l.b16 %v4999
  %v5392 = vunpack.c.l.b16 %v5000
  %v5393 = vunpack.c.l.b16 %v5001
  %v5394 = vunpack.c.l.b16 %v5002
  %v5395 = vunpack.c.l.b16 %v5003
  %v5396 = vunpack.c.l.b16 %v5004
  %v5397 = vunpack.c.l.b16 %v5005
  %v5398 = vunpack.c.l.b16 %v5006
  %v5399 = vunpack.c.l.b16 %v5007
  %v5400 = vunpack.c.l.b16 %v5008
  %v5401 = vunpack.c.l.b16 %v5009
  %v5402 = vunpack.c.l.b16 %v5010
  %v5403 = vunpack.c.l.b16 %v5011
  %v5404 = vunpack.c.l.b16 %v5012
  %v5405 = vunpack.c.l.b16 %v5013
  %v5406 = vunpack.c.l.b16 %v5014
  %v5407 = vunpack.c.l.b16 %v5015
  %v5408 = vunpack.c.l.b16 %v5016
  %v5409 = vunpack.c.l.b16 %v5017
  %v5410 = vunpack.c.l.b16 %v5018
  %v5411 = vunpack.c.l.b16 %v5019
  %v5412 = vunpack.c.l.b16 %v5020
  %v5413 = vunpack.c.l.b16 %v5021
  %v5414 = vunpack.c.l.b16 %v5022
  %v5415 = vunpack.c.l.b16 %v5023
  %v5416 = vunpack.c.l.b16 %v5024
  %v5417 = vunpack.c.l.b16 %v5025
  %v5418 = vunpack.c.l.b16 %v5026
  %v5419 = vunpack.c.l.b16 %v5027
  %v5420 = vunpack.c.l.b16 %v5028
  %v5421 = vunpack.c.l.b16 %v5029
  %v5422 = vunpack.c.l.b16 %v5030
  %v5423 = vunpack.c.l.b16 %v5031
  %v5424 = vunpack.c.l.b16 %v5032
  %v5425 = vunpack.c.l.b16 %v5033
  %v5426 = vunpack.c.l.b16 %v5034
  %v5427 = vunpack.c.l.b16 %v5035
  %v5428 = vunpack.c.l.b16 %v5036
  %v5429 = vunpack.c.l.b16 %v5037
  %v5430 = vunpack.c.l.b16 %v5038
  %v5431 = vunpack.c.l.b16 %v5039
  %v5432 = vunpack.c.l.b16 %v5040
  %v5433 = vunpack.c.l.b16 %v5041
  %v5434 = vunpack.c.l.b16 %v5042
  %v5435 = vunpack.c.l.b16 %v5043
  %v5436 = vunpack.c.l.b16 %v5044
  %v5437 = vunpack.c.l.b16 %v5045
  %v5438 = vunpack.c.l.b16 %v5046
  %v5439 = vunpack.c.l.b16 %v5047
  %v5440 = vunpack.c.l.b16 %v5048
  %v5441 = vunpack.c.l.b16 %v5049
  %v5442 = vunpack.c.l.b16 %v5050
  %v5443 = vunpack.c.l.b16 %v5051
  %v5444 = vunpack.c.l.b16 %v5052
  %v5445 = vunpack.c.l.b16 %v5053
  %v5446 = vunpack.c.l.b16 %v5054
  %v5447 = vunpack.c.l.b16 %v5055
  %v5448 = vunpack.c.l.b16 %v5056
  %v5449 = vunpack.c.l.b16 %v5057
  %v5450 = vunpack.c.l.b16 %v5058
  %v5451 = vunpack.c.l.b16 %v5059
  %v5452 = vunpack.c.l.b16 %v5060
  %v5453 = vunpack.c.l.b16 %v5061
  %v5454 = vunpack.c.l.b16 %v5062
  %v5455 = vunpack.c.l.b16 %v5063
  %v5456 = vunpack.c.l.b16 %v5064
  %v5457 = vunpack.c.l.b16 %v5065
  %v5458 = vunpack.c.l.b16 %v5066
  %v5459 = vunpack.c.l.b16 %v5067
  %v5460 = vunpack.c.l.b16 %v5068
  %v5461 = vunpack.c.l.b16 %v5069
  %v5462 = vunpack.c.l.b16 %v5070
  %v5463 = vunpack.c.l.b16 %v5071
  %v5464 = vunpack.c.l.b16 %v5072
  %v5465 = vunpack.c.l.b16 %v5073
  %v5466 = vunpack.c.l.b16 %v5074
  %v5467 = vunpack.c.l.b16 %v5075
  %v5468 = vunpack.c.l.b16 %v5076
  %v5469 = vunpack.c.l.b16 %v5077
  %v5470 = vunpack.c.l.b16 %v5078
  %v5471 = vunpack.c.l.b16 %v5079
  %v5472 = vunpack.c.l.b16 %v5080
  %v5473 = vunpack.c.l.b16 %v5081
  %v5474 = vunpack.c.l.b16 %v5082
  %v5475 = vunpack.c.l.b16 %v5083
  %v5476 = vunpack.c.l.b16 %v5084
  %v5477 = vunpack.c.l.b16 %v5085
  %v5478 = vunpack.c.l.b16 %v5086
  %v5479 = vunpack.c.l.b16 %v5087
  %v5480 = vunpack.c.l.b16 %v5088
  %v5481 = vunpack.c.l.b16 %v5089
  %v5482 = vpack.c.b16 %v5287, %v5286
  %v5483 = vpack.c.b16 %v5289, %v5288
  %v5484 = vpack.c.b16 %v5291, %v5290
  %v5485 = vpack.c.b16 %v5293, %v5292
  %v5486 = vpack.c.b16 %v5295, %v5294
  %v5487 = vpack.c.b16 %v5297, %v5296
  %v5488 = vpack.c.b16 %v5299, %v5298
  %v5489 = vpack.c.b16 %v5301, %v5300
  %v5490 = vpack.c.b16 %v5303, %v5302
  %v5491 = vpack.c.b16 %v5305, %v5304
  %v5492 = vpack.c.b16 %v5307, %v5306
  %v5493 = vpack.c.b16 %v5309, %v5308
  %v5494 = vpack.c.b16 %v5311, %v5310
  %v5495 = vpack.c.b16 %v5313, %v5312
  %v5496 = vpack.c.b16 %v5315, %v5314
  %v5497 = vpack.c.b16 %v5317, %v5316
  %v5498 = vpack.c.b16 %v5319, %v5318
  %v5499 = vpack.c.b16 %v5321, %v5320
  %v5500 = vpack.c.b16 %v5323, %v5322
  %v5501 = vpack.c.b16 %v5325, %v5324
  %v5502 = vpack.c.b16 %v5327, %v5326
  %v5503 = vpack.c.b16 %v5329, %v5328
  %v5504 = vpack.c.b16 %v5331, %v5330
  %v5505 = vpack.c.b16 %v5333, %v5332
  %v5506 = vpack.c.b16 %v5335, %v5334
  %v5507 = vpack.c.b16 %v5337, %v5336
  %v5508 = vpack.c.b16 %v5339, %v5338
  %v5509 = vpack.c.b16 %v5341, %v5340
  %v5510 = vpack.c.b16 %v5343, %v5342
  %v5511 = vpack.c.b16 %v5345, %v5344
  %v5512 = vpack.c.b16 %v5347, %v5346
  %v5513 = vpack.c.b16 %v5349, %v5348
  %v5514 = vpack.c.b16 %v5351, %v5350
  %v5515 = vpack.c.b16 %v5353, %v5352
  %v5516 = vpack.c.b16 %v5355, %v5354
  %v5517 = vpack.c.b16 %v5357, %v5356
  %v5518 = vpack.c.b16 %v5359, %v5358
  %v5519 = vpack.c.b16 %v5361, %v5360
  %v5520 = vpack.c.b16 %v5363, %v5362
  %v5521 = vpack.c.b16 %v5365, %v5364
  %v5522 = vpack.c.b16 %v5367, %v5366
  %v5523 = vpack.c.b16 %v5369, %v5368
  %v5524 = vpack.c.b16 %v5371, %v5370
  %v5525 = vpack.c.b16 %v5373, %v5372
  %v5526 = vpack.c.b16 %v5375, %v5374
  %v5527 = vpack.c.b16 %v5377, %v5376
  %v5528 = vpack.c.b16 %v5379, %v5378
  %v5529 = vpack.c.b16 %v5381, %v5380
  %v5530 = vpack.c.b16 %v5383, %v5382
  %v5531 = vpack.c.b16 %v5385, %v5384
  %v5532 = vpack.c.b16 %v5387, %v5386
  %v5533 = vpack.c.b16 %v5389, %v5388
  %v5534 = vpack.c.b16 %v5391, %v5390
  %v5535 = vpack.c.b16 %v5393, %v5392
  %v5536 = vpack.c.b16 %v5395, %v5394
  %v5537 = vpack.c.b16 %v5397, %v5396
  %v5538 = vpack.c.b16 %v5399, %v5398
  %v5539 = vpack.c.b16 %v5401, %v5400
  %v5540 = vpack.c.b16 %v5403, %v5402
  %v5541 = vpack.c.b16 %v5405, %v5404
  %v5542 = vpack.c.b16 %v5407, %v5406
  %v5543 = vpack.c.b16 %v5409, %v5408
  %v5544 = vpack.c.b16 %v5411, %v5410
  %v5545 = vpack.c.b16 %v5413, %v5412
  %v5546 = vpack.c.b16 %v5415, %v5414
  %v5547 = vpack.c.b16 %v5417, %v5416
  %v5548 = vpack.c.b16 %v5419, %v5418
  %v5549 = vpack.c.b16 %v5421, %v5420
  %v5550 = vpack.c.b16 %v5423, %v5422
  %v5551 = vpack.c.b16 %v5425, %v5424
  %v5552 = vpack.c.b16 %v5427, %v5426
  %v5553 = vpack.c.b16 %v5429, %v5428
  %v5554 = vpack.c.b16 %v5431, %v5430
  %v5555 = vpack.c.b16 %v5433, %v5432
  %v5556 = vpack.c.b16 %v5435, %v5434
  %v5557 = vpack.c.b16 %v5437, %v5436
  %v5558 = vpack.c.b16 %v5439, %v5438
  %v5559 = vpack.c.b16 %v5441, %v5440
  %v5560 = vpack.c.b16 %v5443, %v5442
  %v5561 = vpack.c.b16 %v5445, %v5444
  %v5562 = vpack.c.b16 %v5447, %v5446
  %v5563 = vpack.c.b16 %v5449, %v5448
  %v5564 = vpack.c.b16 %v5451, %v5450
  %v5565 = vpack.c.b16 %v5453, %v5452
  %v5566 = vpack.c.b16 %v5455, %v5454
  %v5567 = vpack.c.b16 %v5457, %v5456
  %v5568 = vpack.c.b16 %v5459, %v5458
  %v5569 = vpack.c.b16 %v5461, %v5460
  %v5570 = vpack.c.b16 %v5463, %v5462
  %v5571 = vpack.c.b16 %v5465, %v5464
  %v5572 = vpack.c.b16 %v5467, %v5466
  %v5573 = vpack.c.b16 %v5469, %v5468
  %v5574 = vpack.c.b16 %v5471, %v5470
  %v5575 = vpack.c.b16 %v5473, %v5472
  %v5576 = vpack.c.b16 %v5475, %v5474
  %v5577 = vpack.c.b16 %v5477, %v5476
  %v5578 = vpack.c.b16 %v5479, %v5478
  %v5579 = vpack.c.b16 %v5481, %v5480
  %v5581 = vsel %vm740, %v5482, 0
  %v5584 = vsel %vm740, %v5483, 0
  %v5587 = vsel %vm740, %v5484, 0
  %v5590 = vsel %vm740, %v5485, 0
  %v5593 = vsel %vm740, %v5486, 0
  %v5596 = vsel %vm740, %v5487, 0
  %v5599 = vsel %vm740, %v5488, 0
  %v5602 = vsel %vm740, %v5489, 0
  %v5605 = vsel %vm740, %v5490, 0
  %v5608 = vsel %vm740, %v5491, 0
  %v5611 = vsel %vm740, %v5492, 0
  %v5614 = vsel %vm740, %v5493, 0
  %v5617 = vsel %vm740, %v5494, 0
  %v5620 = vsel %vm740, %v5495, 0
  %v5623 = vsel %vm740, %v5496, 0
  %v5626 = vsel %vm740, %v5497, 0
  %v5629 = vsel %vm740, %v5498, 0
  %v5632 = vsel %vm740, %v5499, 0
  %v5635 = vsel %vm740, %v5500, 0
  %v5638 = vsel %vm740, %v5501, 0
  %v5641 = vsel %vm740, %v5502, 0
  %v5644 = vsel %vm740, %v5503, 0
  %v5647 = vsel %vm740, %v5504, 0
  %v5650 = vsel %vm740, %v5505, 0
  %v5653 = vsel %vm740, %v5506, 0
  %v5656 = vsel %vm740, %v5507, 0
  %v5659 = vsel %vm740, %v5508, 0
  %v5662 = vsel %vm740, %v5509, 0
  %v5665 = vsel %vm740, %v5510, 0
  %v5668 = vsel %vm740, %v5511, 0
  %v5671 = vsel %vm740, %v5512, 0
  %v5674 = vsel %vm740, %v5513, 0
  %v5677 = vsel %vm740, %v5514, 0
  %v5680 = vsel %vm740, %v5515, 0
  %v5683 = vsel %vm740, %v5516, 0
  %v5686 = vsel %vm740, %v5517, 0
  %v5689 = vsel %vm740, %v5518, 0
  %v5692 = vsel %vm740, %v5519, 0
  %v5695 = vsel %vm740, %v5520, 0
  %v5698 = vsel %vm740, %v5521, 0
  %v5701 = vsel %vm740, %v5522, 0
  %v5704 = vsel %vm740, %v5523, 0
  %v5707 = vsel %vm740, %v5524, 0
  %v5710 = vsel %vm740, %v5525, 0
  %v5713 = vsel %vm740, %v5526, 0
  %v5716 = vsel %vm740, %v5527, 0
  %v5719 = vsel %vm740, %v5528, 0
  %v5722 = vsel %vm740, %v5529, 0
  %v5725 = vsel %vm740, %v5530, 0
  %v5728 = vsel %vm740, %v5531, 0
  %v5731 = vsel %vm740, %v5532, 0
  %v5734 = vsel %vm740, %v5533, 0
  %v5737 = vsel %vm740, %v5534, 0
  %v5740 = vsel %vm740, %v5535, 0
  %v5743 = vsel %vm740, %v5536, 0
  %v5746 = vsel %vm740, %v5537, 0
  %v5749 = vsel %vm740, %v5538, 0
  %v5752 = vsel %vm740, %v5539, 0
  %v5755 = vsel %vm740, %v5540, 0
  %v5758 = vsel %vm740, %v5541, 0
  %v5761 = vsel %vm740, %v5542, 0
  %v5764 = vsel %vm740, %v5543, 0
  %v5767 = vsel %vm740, %v5544, 0
  %v5770 = vsel %vm740, %v5545, 0
  %v5773 = vsel %vm740, %v5546, 0
  %v5776 = vsel %vm740, %v5547, 0
  %v5779 = vsel %vm740, %v5548, 0
  %v5782 = vsel %vm740, %v5549, 0
  %v5785 = vsel %vm740, %v5550, 0
  %v5788 = vsel %vm740, %v5551, 0
  %v5791 = vsel %vm740, %v5552, 0
  %v5794 = vsel %vm740, %v5553, 0
  %v5797 = vsel %vm740, %v5554, 0
  %v5800 = vsel %vm740, %v5555, 0
  %v5803 = vsel %vm740, %v5556, 0
  %v5806 = vsel %vm740, %v5557, 0
  %v5809 = vsel %vm740, %v5558, 0
  %v5812 = vsel %vm740, %v5559, 0
  %v5815 = vsel %vm740, %v5560, 0
  %v5818 = vsel %vm740, %v5561, 0
  %v5821 = vsel %vm740, %v5562, 0
  %v5824 = vsel %vm740, %v5563, 0
  %v5827 = vsel %vm740, %v5564, 0
  %v5830 = vsel %vm740, %v5565, 0
  %v5833 = vsel %vm740, %v5566, 0
  %v5836 = vsel %vm740, %v5567, 0
  %v5839 = vsel %vm740, %v5568, 0
  %v5842 = vsel %vm740, %v5569, 0
  %v5845 = vsel %vm740, %v5570, 0
  %v5848 = vsel %vm740, %v5571, 0
  %v5851 = vsel %vm740, %v5572, 0
  %v5854 = vsel %vm740, %v5573, 0
  %v5857 = vsel %vm740, %v5574, 0
  %v5860 = vsel %vm740, %v5575, 0
  %v5863 = vsel %vm740, %v5576, 0
  %v5866 = vsel %vm740, %v5577, 0
  %v5869 = vsel %vm740, %v5578, 0
  %v5872 = vsel %vm740, %v5579, 0
  %5874 = vmatpush.bf16.msra.mxu0 0
  %5875 = vmatpush.bf16.msra.mxu0 0
  %5876 = vmatpush.bf16.msra.mxu0 0
  %5877 = vmatpush.bf16.msra.mxu0 %v1040
  %5878 = vmatpush.bf16.msra.mxu0 %v734
  %5879 = vmatpush.bf16.msra.mxu0 %v733
  %5880 = vmatpush.bf16.msra.mxu0 %v732
  %5881 = vmatpush.bf16.msra.mxu0 %v731
  %5882 = vmatmul.bf16.gmra.mxu0 %v5581
  %v5883 = vpop.f32.mrf.mxu0
  %v5884 = vadd.f32 0.0, %v5883
  %v5885 = vpop.f32.mrf.mxu0
  %v5886 = vadd.f32 0.0, %v5885
  %5887 = vmatmul.bf16.gmra.mxu0 %v5584
  %v5888 = vpop.f32.mrf.mxu0
  %v5889 = vadd.f32 0.0, %v5888
  %v5890 = vpop.f32.mrf.mxu0
  %v5891 = vadd.f32 0.0, %v5890
  %5892 = vmatmul.bf16.gmra.mxu0 %v5587
  %v5893 = vpop.f32.mrf.mxu0
  %v5894 = vadd.f32 0.0, %v5893
  %v5895 = vpop.f32.mrf.mxu0
  %v5896 = vadd.f32 0.0, %v5895
  %5897 = vmatmul.bf16.gmra.mxu0 %v5590
  %v5898 = vpop.f32.mrf.mxu0
  %v5899 = vadd.f32 0.0, %v5898
  %v5900 = vpop.f32.mrf.mxu0
  %v5901 = vadd.f32 0.0, %v5900
  %5902 = vmatmul.bf16.gmra.mxu0 %v5593
  %v5903 = vpop.f32.mrf.mxu0
  %v5904 = vadd.f32 0.0, %v5903
  %v5905 = vpop.f32.mrf.mxu0
  %v5906 = vadd.f32 0.0, %v5905
  %5907 = vmatmul.bf16.gmra.mxu0 %v5596
  %v5908 = vpop.f32.mrf.mxu0
  %v5909 = vadd.f32 0.0, %v5908
  %v5910 = vpop.f32.mrf.mxu0
  %v5911 = vadd.f32 0.0, %v5910
  %5912 = vmatmul.bf16.gmra.mxu0 %v5599
  %v5913 = vpop.f32.mrf.mxu0
  %v5914 = vadd.f32 0.0, %v5913
  %v5915 = vpop.f32.mrf.mxu0
  %v5916 = vadd.f32 0.0, %v5915
  %5917 = vmatmul.bf16.gmra.mxu0 %v5602
  %v5918 = vpop.f32.mrf.mxu0
  %v5919 = vadd.f32 0.0, %v5918
  %v5920 = vpop.f32.mrf.mxu0
  %v5921 = vadd.f32 0.0, %v5920
  %5922 = vmatmul.bf16.gmra.mxu0 %v5605
  %v5923 = vpop.f32.mrf.mxu0
  %v5924 = vadd.f32 0.0, %v5923
  %v5925 = vpop.f32.mrf.mxu0
  %v5926 = vadd.f32 0.0, %v5925
  %5927 = vmatmul.bf16.gmra.mxu0 %v5608
  %v5928 = vpop.f32.mrf.mxu0
  %v5929 = vadd.f32 0.0, %v5928
  %v5930 = vpop.f32.mrf.mxu0
  %v5931 = vadd.f32 0.0, %v5930
  %5932 = vmatmul.bf16.gmra.mxu0 %v5611
  %v5933 = vpop.f32.mrf.mxu0
  %v5934 = vadd.f32 0.0, %v5933
  %v5935 = vpop.f32.mrf.mxu0
  %v5936 = vadd.f32 0.0, %v5935
  %5937 = vmatmul.bf16.gmra.mxu0 %v5614
  %v5938 = vpop.f32.mrf.mxu0
  %v5939 = vadd.f32 0.0, %v5938
  %v5940 = vpop.f32.mrf.mxu0
  %v5941 = vadd.f32 0.0, %v5940
  %5942 = vmatmul.bf16.gmra.mxu0 %v5617
  %v5943 = vpop.f32.mrf.mxu0
  %v5944 = vadd.f32 0.0, %v5943
  %v5945 = vpop.f32.mrf.mxu0
  %v5946 = vadd.f32 0.0, %v5945
  %5947 = vmatmul.bf16.gmra.mxu0 %v5620
  %v5948 = vpop.f32.mrf.mxu0
  %v5949 = vadd.f32 0.0, %v5948
  %v5950 = vpop.f32.mrf.mxu0
  %v5951 = vadd.f32 0.0, %v5950
  %5952 = vmatmul.bf16.gmra.mxu0 %v5623
  %v5953 = vpop.f32.mrf.mxu0
  %v5954 = vadd.f32 0.0, %v5953
  %v5955 = vpop.f32.mrf.mxu0
  %v5956 = vadd.f32 0.0, %v5955
  %5957 = vmatmul.bf16.gmra.mxu0 %v5626
  %v5958 = vpop.f32.mrf.mxu0
  %v5959 = vadd.f32 0.0, %v5958
  %v5960 = vpop.f32.mrf.mxu0
  %v5961 = vadd.f32 0.0, %v5960
  %5962 = vmatmul.bf16.gmra.mxu0 %v5629
  %v5963 = vpop.f32.mrf.mxu0
  %v5964 = vadd.f32 0.0, %v5963
  %v5965 = vpop.f32.mrf.mxu0
  %v5966 = vadd.f32 0.0, %v5965
  %5967 = vmatmul.bf16.gmra.mxu0 %v5632
  %v5968 = vpop.f32.mrf.mxu0
  %v5969 = vadd.f32 0.0, %v5968
  %v5970 = vpop.f32.mrf.mxu0
  %v5971 = vadd.f32 0.0, %v5970
  %5972 = vmatmul.bf16.gmra.mxu0 %v5635
  %v5973 = vpop.f32.mrf.mxu0
  %v5974 = vadd.f32 0.0, %v5973
  %v5975 = vpop.f32.mrf.mxu0
  %v5976 = vadd.f32 0.0, %v5975
  %5977 = vmatmul.bf16.gmra.mxu0 %v5638
  %v5978 = vpop.f32.mrf.mxu0
  %v5979 = vadd.f32 0.0, %v5978
  %v5980 = vpop.f32.mrf.mxu0
  %v5981 = vadd.f32 0.0, %v5980
  %5982 = vmatmul.bf16.gmra.mxu0 %v5641
  %v5983 = vpop.f32.mrf.mxu0
  %v5984 = vadd.f32 0.0, %v5983
  %v5985 = vpop.f32.mrf.mxu0
  %v5986 = vadd.f32 0.0, %v5985
  %5987 = vmatmul.bf16.gmra.mxu0 %v5644
  %v5988 = vpop.f32.mrf.mxu0
  %v5989 = vadd.f32 0.0, %v5988
  %v5990 = vpop.f32.mrf.mxu0
  %v5991 = vadd.f32 0.0, %v5990
  %5992 = vmatmul.bf16.gmra.mxu0 %v5647
  %v5993 = vpop.f32.mrf.mxu0
  %v5994 = vadd.f32 0.0, %v5993
  %v5995 = vpop.f32.mrf.mxu0
  %v5996 = vadd.f32 0.0, %v5995
  %5997 = vmatmul.bf16.gmra.mxu0 %v5650
  %v5998 = vpop.f32.mrf.mxu0
  %v5999 = vadd.f32 0.0, %v5998
  %v6000 = vpop.f32.mrf.mxu0
  %v6001 = vadd.f32 0.0, %v6000
  %6002 = vmatmul.bf16.gmra.mxu0 %v5653
  %v6003 = vpop.f32.mrf.mxu0
  %v6004 = vadd.f32 0.0, %v6003
  %v6005 = vpop.f32.mrf.mxu0
  %v6006 = vadd.f32 0.0, %v6005
  %6007 = vmatmul.bf16.gmra.mxu0 %v5656
  %v6008 = vpop.f32.mrf.mxu0
  %v6009 = vadd.f32 0.0, %v6008
  %v6010 = vpop.f32.mrf.mxu0
  %v6011 = vadd.f32 0.0, %v6010
  %6012 = vmatmul.bf16.gmra.mxu0 %v5659
  %v6013 = vpop.f32.mrf.mxu0
  %v6014 = vadd.f32 0.0, %v6013
  %v6015 = vpop.f32.mrf.mxu0
  %v6016 = vadd.f32 0.0, %v6015
  %6017 = vmatmul.bf16.gmra.mxu0 %v5662
  %v6018 = vpop.f32.mrf.mxu0
  %v6019 = vadd.f32 0.0, %v6018
  %v6020 = vpop.f32.mrf.mxu0
  %v6021 = vadd.f32 0.0, %v6020
  %6022 = vmatmul.bf16.gmra.mxu0 %v5665
  %v6023 = vpop.f32.mrf.mxu0
  %v6024 = vadd.f32 0.0, %v6023
  %v6025 = vpop.f32.mrf.mxu0
  %v6026 = vadd.f32 0.0, %v6025
  %6027 = vmatmul.bf16.gmra.mxu0 %v5668
  %v6028 = vpop.f32.mrf.mxu0
  %v6029 = vadd.f32 0.0, %v6028
  %v6030 = vpop.f32.mrf.mxu0
  %v6031 = vadd.f32 0.0, %v6030
  %6032 = vmatmul.bf16.gmra.mxu0 %v5671
  %v6033 = vpop.f32.mrf.mxu0
  %v6034 = vadd.f32 0.0, %v6033
  %v6035 = vpop.f32.mrf.mxu0
  %v6036 = vadd.f32 0.0, %v6035
  %6037 = vmatmul.bf16.gmra.mxu0 %v5674
  %v6038 = vpop.f32.mrf.mxu0
  %v6039 = vadd.f32 0.0, %v6038
  %v6040 = vpop.f32.mrf.mxu0
  %v6041 = vadd.f32 0.0, %v6040
  %6042 = vmatmul.bf16.gmra.mxu0 %v5677
  %v6043 = vpop.f32.mrf.mxu0
  %v6044 = vadd.f32 0.0, %v6043
  %v6045 = vpop.f32.mrf.mxu0
  %v6046 = vadd.f32 0.0, %v6045
  %6047 = vmatmul.bf16.gmra.mxu0 %v5680
  %v6048 = vpop.f32.mrf.mxu0
  %v6049 = vadd.f32 0.0, %v6048
  %v6050 = vpop.f32.mrf.mxu0
  %v6051 = vadd.f32 0.0, %v6050
  %6052 = vmatmul.bf16.gmra.mxu0 %v5683
  %v6053 = vpop.f32.mrf.mxu0
  %v6054 = vadd.f32 0.0, %v6053
  %v6055 = vpop.f32.mrf.mxu0
  %v6056 = vadd.f32 0.0, %v6055
  %6057 = vmatmul.bf16.gmra.mxu0 %v5686
  %v6058 = vpop.f32.mrf.mxu0
  %v6059 = vadd.f32 0.0, %v6058
  %v6060 = vpop.f32.mrf.mxu0
  %v6061 = vadd.f32 0.0, %v6060
  %6062 = vmatmul.bf16.gmra.mxu0 %v5689
  %v6063 = vpop.f32.mrf.mxu0
  %v6064 = vadd.f32 0.0, %v6063
  %v6065 = vpop.f32.mrf.mxu0
  %v6066 = vadd.f32 0.0, %v6065
  %6067 = vmatmul.bf16.gmra.mxu0 %v5692
  %v6068 = vpop.f32.mrf.mxu0
  %v6069 = vadd.f32 0.0, %v6068
  %v6070 = vpop.f32.mrf.mxu0
  %v6071 = vadd.f32 0.0, %v6070
  %6072 = vmatmul.bf16.gmra.mxu0 %v5695
  %v6073 = vpop.f32.mrf.mxu0
  %v6074 = vadd.f32 0.0, %v6073
  %v6075 = vpop.f32.mrf.mxu0
  %v6076 = vadd.f32 0.0, %v6075
  %6077 = vmatmul.bf16.gmra.mxu0 %v5698
  %v6078 = vpop.f32.mrf.mxu0
  %v6079 = vadd.f32 0.0, %v6078
  %v6080 = vpop.f32.mrf.mxu0
  %v6081 = vadd.f32 0.0, %v6080
  %6082 = vmatmul.bf16.gmra.mxu0 %v5701
  %v6083 = vpop.f32.mrf.mxu0
  %v6084 = vadd.f32 0.0, %v6083
  %v6085 = vpop.f32.mrf.mxu0
  %v6086 = vadd.f32 0.0, %v6085
  %6087 = vmatmul.bf16.gmra.mxu0 %v5704
  %v6088 = vpop.f32.mrf.mxu0
  %v6089 = vadd.f32 0.0, %v6088
  %v6090 = vpop.f32.mrf.mxu0
  %v6091 = vadd.f32 0.0, %v6090
  %6092 = vmatmul.bf16.gmra.mxu0 %v5707
  %v6093 = vpop.f32.mrf.mxu0
  %v6094 = vadd.f32 0.0, %v6093
  %v6095 = vpop.f32.mrf.mxu0
  %v6096 = vadd.f32 0.0, %v6095
  %6097 = vmatmul.bf16.gmra.mxu0 %v5710
  %v6098 = vpop.f32.mrf.mxu0
  %v6099 = vadd.f32 0.0, %v6098
  %v6100 = vpop.f32.mrf.mxu0
  %v6101 = vadd.f32 0.0, %v6100
  %6102 = vmatmul.bf16.gmra.mxu0 %v5713
  %v6103 = vpop.f32.mrf.mxu0
  %v6104 = vadd.f32 0.0, %v6103
  %v6105 = vpop.f32.mrf.mxu0
  %v6106 = vadd.f32 0.0, %v6105
  %6107 = vmatmul.bf16.gmra.mxu0 %v5716
  %v6108 = vpop.f32.mrf.mxu0
  %v6109 = vadd.f32 0.0, %v6108
  %v6110 = vpop.f32.mrf.mxu0
  %v6111 = vadd.f32 0.0, %v6110
  %6112 = vmatmul.bf16.gmra.mxu0 %v5719
  %v6113 = vpop.f32.mrf.mxu0
  %v6114 = vadd.f32 0.0, %v6113
  %v6115 = vpop.f32.mrf.mxu0
  %v6116 = vadd.f32 0.0, %v6115
  %6117 = vmatmul.bf16.gmra.mxu0 %v5722
  %v6118 = vpop.f32.mrf.mxu0
  %v6119 = vadd.f32 0.0, %v6118
  %v6120 = vpop.f32.mrf.mxu0
  %v6121 = vadd.f32 0.0, %v6120
  %6122 = vmatmul.bf16.gmra.mxu0 %v5725
  %v6123 = vpop.f32.mrf.mxu0
  %v6124 = vadd.f32 0.0, %v6123
  %v6125 = vpop.f32.mrf.mxu0
  %v6126 = vadd.f32 0.0, %v6125
  %6127 = vmatmul.bf16.gmra.mxu0 %v5728
  %v6128 = vpop.f32.mrf.mxu0
  %v6129 = vadd.f32 0.0, %v6128
  %v6130 = vpop.f32.mrf.mxu0
  %v6131 = vadd.f32 0.0, %v6130
  %6132 = vmatmul.bf16.gmra.mxu0 %v5731
  %v6133 = vpop.f32.mrf.mxu0
  %v6134 = vadd.f32 0.0, %v6133
  %v6135 = vpop.f32.mrf.mxu0
  %v6136 = vadd.f32 0.0, %v6135
  %6137 = vmatmul.bf16.gmra.mxu0 %v5734
  %v6138 = vpop.f32.mrf.mxu0
  %v6139 = vadd.f32 0.0, %v6138
  %v6140 = vpop.f32.mrf.mxu0
  %v6141 = vadd.f32 0.0, %v6140
  %6142 = vmatmul.bf16.gmra.mxu0 %v5737
  %v6143 = vpop.f32.mrf.mxu0
  %v6144 = vadd.f32 0.0, %v6143
  %v6145 = vpop.f32.mrf.mxu0
  %v6146 = vadd.f32 0.0, %v6145
  %6147 = vmatmul.bf16.gmra.mxu0 %v5740
  %v6148 = vpop.f32.mrf.mxu0
  %v6149 = vadd.f32 0.0, %v6148
  %v6150 = vpop.f32.mrf.mxu0
  %v6151 = vadd.f32 0.0, %v6150
  %6152 = vmatmul.bf16.gmra.mxu0 %v5743
  %v6153 = vpop.f32.mrf.mxu0
  %v6154 = vadd.f32 0.0, %v6153
  %v6155 = vpop.f32.mrf.mxu0
  %v6156 = vadd.f32 0.0, %v6155
  %6157 = vmatmul.bf16.gmra.mxu0 %v5746
  %v6158 = vpop.f32.mrf.mxu0
  %v6159 = vadd.f32 0.0, %v6158
  %v6160 = vpop.f32.mrf.mxu0
  %v6161 = vadd.f32 0.0, %v6160
  %6162 = vmatmul.bf16.gmra.mxu0 %v5749
  %v6163 = vpop.f32.mrf.mxu0
  %v6164 = vadd.f32 0.0, %v6163
  %v6165 = vpop.f32.mrf.mxu0
  %v6166 = vadd.f32 0.0, %v6165
  %6167 = vmatmul.bf16.gmra.mxu0 %v5752
  %v6168 = vpop.f32.mrf.mxu0
  %v6169 = vadd.f32 0.0, %v6168
  %v6170 = vpop.f32.mrf.mxu0
  %v6171 = vadd.f32 0.0, %v6170
  %6172 = vmatmul.bf16.gmra.mxu0 %v5755
  %v6173 = vpop.f32.mrf.mxu0
  %v6174 = vadd.f32 0.0, %v6173
  %v6175 = vpop.f32.mrf.mxu0
  %v6176 = vadd.f32 0.0, %v6175
  %6177 = vmatmul.bf16.gmra.mxu0 %v5758
  %v6178 = vpop.f32.mrf.mxu0
  %v6179 = vadd.f32 0.0, %v6178
  %v6180 = vpop.f32.mrf.mxu0
  %v6181 = vadd.f32 0.0, %v6180
  %6182 = vmatmul.bf16.gmra.mxu0 %v5761
  %v6183 = vpop.f32.mrf.mxu0
  %v6184 = vadd.f32 0.0, %v6183
  %v6185 = vpop.f32.mrf.mxu0
  %v6186 = vadd.f32 0.0, %v6185
  %6187 = vmatmul.bf16.gmra.mxu0 %v5764
  %v6188 = vpop.f32.mrf.mxu0
  %v6189 = vadd.f32 0.0, %v6188
  %v6190 = vpop.f32.mrf.mxu0
  %v6191 = vadd.f32 0.0, %v6190
  %6192 = vmatmul.bf16.gmra.mxu0 %v5767
  %v6193 = vpop.f32.mrf.mxu0
  %v6194 = vadd.f32 0.0, %v6193
  %v6195 = vpop.f32.mrf.mxu0
  %v6196 = vadd.f32 0.0, %v6195
  %6197 = vmatmul.bf16.gmra.mxu0 %v5770
  %v6198 = vpop.f32.mrf.mxu0
  %v6199 = vadd.f32 0.0, %v6198
  %v6200 = vpop.f32.mrf.mxu0
  %v6201 = vadd.f32 0.0, %v6200
  %6202 = vmatmul.bf16.gmra.mxu0 %v5773
  %v6203 = vpop.f32.mrf.mxu0
  %v6204 = vadd.f32 0.0, %v6203
  %v6205 = vpop.f32.mrf.mxu0
  %v6206 = vadd.f32 0.0, %v6205
  %6207 = vmatmul.bf16.gmra.mxu0 %v5776
  %v6208 = vpop.f32.mrf.mxu0
  %v6209 = vadd.f32 0.0, %v6208
  %v6210 = vpop.f32.mrf.mxu0
  %v6211 = vadd.f32 0.0, %v6210
  %6212 = vmatmul.bf16.gmra.mxu0 %v5779
  %v6213 = vpop.f32.mrf.mxu0
  %v6214 = vadd.f32 0.0, %v6213
  %v6215 = vpop.f32.mrf.mxu0
  %v6216 = vadd.f32 0.0, %v6215
  %6217 = vmatmul.bf16.gmra.mxu0 %v5782
  %v6218 = vpop.f32.mrf.mxu0
  %v6219 = vadd.f32 0.0, %v6218
  %v6220 = vpop.f32.mrf.mxu0
  %v6221 = vadd.f32 0.0, %v6220
  %6222 = vmatmul.bf16.gmra.mxu0 %v5785
  %v6223 = vpop.f32.mrf.mxu0
  %v6224 = vadd.f32 0.0, %v6223
  %v6225 = vpop.f32.mrf.mxu0
  %v6226 = vadd.f32 0.0, %v6225
  %6227 = vmatmul.bf16.gmra.mxu0 %v5788
  %v6228 = vpop.f32.mrf.mxu0
  %v6229 = vadd.f32 0.0, %v6228
  %v6230 = vpop.f32.mrf.mxu0
  %v6231 = vadd.f32 0.0, %v6230
  %6232 = vmatmul.bf16.gmra.mxu0 %v5791
  %v6233 = vpop.f32.mrf.mxu0
  %v6234 = vadd.f32 0.0, %v6233
  %v6235 = vpop.f32.mrf.mxu0
  %v6236 = vadd.f32 0.0, %v6235
  %6237 = vmatmul.bf16.gmra.mxu0 %v5794
  %v6238 = vpop.f32.mrf.mxu0
  %v6239 = vadd.f32 0.0, %v6238
  %v6240 = vpop.f32.mrf.mxu0
  %v6241 = vadd.f32 0.0, %v6240
  %6242 = vmatmul.bf16.gmra.mxu0 %v5797
  %v6243 = vpop.f32.mrf.mxu0
  %v6244 = vadd.f32 0.0, %v6243
  %v6245 = vpop.f32.mrf.mxu0
  %v6246 = vadd.f32 0.0, %v6245
  %6247 = vmatmul.bf16.gmra.mxu0 %v5800
  %v6248 = vpop.f32.mrf.mxu0
  %v6249 = vadd.f32 0.0, %v6248
  %v6250 = vpop.f32.mrf.mxu0
  %v6251 = vadd.f32 0.0, %v6250
  %6252 = vmatmul.bf16.gmra.mxu0 %v5803
  %v6253 = vpop.f32.mrf.mxu0
  %v6254 = vadd.f32 0.0, %v6253
  %v6255 = vpop.f32.mrf.mxu0
  %v6256 = vadd.f32 0.0, %v6255
  %6257 = vmatmul.bf16.gmra.mxu0 %v5806
  %v6258 = vpop.f32.mrf.mxu0
  %v6259 = vadd.f32 0.0, %v6258
  %v6260 = vpop.f32.mrf.mxu0
  %v6261 = vadd.f32 0.0, %v6260
  %6262 = vmatmul.bf16.gmra.mxu0 %v5809
  %v6263 = vpop.f32.mrf.mxu0
  %v6264 = vadd.f32 0.0, %v6263
  %v6265 = vpop.f32.mrf.mxu0
  %v6266 = vadd.f32 0.0, %v6265
  %6267 = vmatmul.bf16.gmra.mxu0 %v5812
  %v6268 = vpop.f32.mrf.mxu0
  %v6269 = vadd.f32 0.0, %v6268
  %v6270 = vpop.f32.mrf.mxu0
  %v6271 = vadd.f32 0.0, %v6270
  %6272 = vmatmul.bf16.gmra.mxu0 %v5815
  %v6273 = vpop.f32.mrf.mxu0
  %v6274 = vadd.f32 0.0, %v6273
  %v6275 = vpop.f32.mrf.mxu0
  %v6276 = vadd.f32 0.0, %v6275
  %6277 = vmatmul.bf16.gmra.mxu0 %v5818
  %v6278 = vpop.f32.mrf.mxu0
  %v6279 = vadd.f32 0.0, %v6278
  %v6280 = vpop.f32.mrf.mxu0
  %v6281 = vadd.f32 0.0, %v6280
  %6282 = vmatmul.bf16.gmra.mxu0 %v5821
  %v6283 = vpop.f32.mrf.mxu0
  %v6284 = vadd.f32 0.0, %v6283
  %v6285 = vpop.f32.mrf.mxu0
  %v6286 = vadd.f32 0.0, %v6285
  %6287 = vmatmul.bf16.gmra.mxu0 %v5824
  %v6288 = vpop.f32.mrf.mxu0
  %v6289 = vadd.f32 0.0, %v6288
  %v6290 = vpop.f32.mrf.mxu0
  %v6291 = vadd.f32 0.0, %v6290
  %6292 = vmatmul.bf16.gmra.mxu0 %v5827
  %v6293 = vpop.f32.mrf.mxu0
  %v6294 = vadd.f32 0.0, %v6293
  %v6295 = vpop.f32.mrf.mxu0
  %v6296 = vadd.f32 0.0, %v6295
  %6297 = vmatmul.bf16.gmra.mxu0 %v5830
  %v6298 = vpop.f32.mrf.mxu0
  %v6299 = vadd.f32 0.0, %v6298
  %v6300 = vpop.f32.mrf.mxu0
  %v6301 = vadd.f32 0.0, %v6300
  %6302 = vmatmul.bf16.gmra.mxu0 %v5833
  %v6303 = vpop.f32.mrf.mxu0
  %v6304 = vadd.f32 0.0, %v6303
  %v6305 = vpop.f32.mrf.mxu0
  %v6306 = vadd.f32 0.0, %v6305
  %6307 = vmatmul.bf16.gmra.mxu0 %v5836
  %v6308 = vpop.f32.mrf.mxu0
  %v6309 = vadd.f32 0.0, %v6308
  %v6310 = vpop.f32.mrf.mxu0
  %v6311 = vadd.f32 0.0, %v6310
  %6312 = vmatmul.bf16.gmra.mxu0 %v5839
  %v6313 = vpop.f32.mrf.mxu0
  %v6314 = vadd.f32 0.0, %v6313
  %v6315 = vpop.f32.mrf.mxu0
  %v6316 = vadd.f32 0.0, %v6315
  %6317 = vmatmul.bf16.gmra.mxu0 %v5842
  %v6318 = vpop.f32.mrf.mxu0
  %v6319 = vadd.f32 0.0, %v6318
  %v6320 = vpop.f32.mrf.mxu0
  %v6321 = vadd.f32 0.0, %v6320
  %6322 = vmatmul.bf16.gmra.mxu0 %v5845
  %v6323 = vpop.f32.mrf.mxu0
  %v6324 = vadd.f32 0.0, %v6323
  %v6325 = vpop.f32.mrf.mxu0
  %v6326 = vadd.f32 0.0, %v6325
  %6327 = vmatmul.bf16.gmra.mxu0 %v5848
  %v6328 = vpop.f32.mrf.mxu0
  %v6329 = vadd.f32 0.0, %v6328
  %v6330 = vpop.f32.mrf.mxu0
  %v6331 = vadd.f32 0.0, %v6330
  %6332 = vmatmul.bf16.gmra.mxu0 %v5851
  %v6333 = vpop.f32.mrf.mxu0
  %v6334 = vadd.f32 0.0, %v6333
  %v6335 = vpop.f32.mrf.mxu0
  %v6336 = vadd.f32 0.0, %v6335
  %6337 = vmatmul.bf16.gmra.mxu0 %v5854
  %v6338 = vpop.f32.mrf.mxu0
  %v6339 = vadd.f32 0.0, %v6338
  %v6340 = vpop.f32.mrf.mxu0
  %v6341 = vadd.f32 0.0, %v6340
  %6342 = vmatmul.bf16.gmra.mxu0 %v5857
  %v6343 = vpop.f32.mrf.mxu0
  %v6344 = vadd.f32 0.0, %v6343
  %v6345 = vpop.f32.mrf.mxu0
  %v6346 = vadd.f32 0.0, %v6345
  %6347 = vmatmul.bf16.gmra.mxu0 %v5860
  %v6348 = vpop.f32.mrf.mxu0
  %v6349 = vadd.f32 0.0, %v6348
  %v6350 = vpop.f32.mrf.mxu0
  %v6351 = vadd.f32 0.0, %v6350
  %6352 = vmatmul.bf16.gmra.mxu0 %v5863
  %v6353 = vpop.f32.mrf.mxu0
  %v6354 = vadd.f32 0.0, %v6353
  %v6355 = vpop.f32.mrf.mxu0
  %v6356 = vadd.f32 0.0, %v6355
  %6357 = vmatmul.bf16.gmra.mxu0 %v5866
  %v6358 = vpop.f32.mrf.mxu0
  %v6359 = vadd.f32 0.0, %v6358
  %v6360 = vpop.f32.mrf.mxu0
  %v6361 = vadd.f32 0.0, %v6360
  %6362 = vmatmul.bf16.gmra.mxu0 %v5869
  %v6363 = vpop.f32.mrf.mxu0
  %v6364 = vadd.f32 0.0, %v6363
  %v6365 = vpop.f32.mrf.mxu0
  %v6366 = vadd.f32 0.0, %v6365
  %6367 = vmatmul.bf16.gmra.mxu0 %v5872
  %v6368 = vpop.f32.mrf.mxu0
  %v6369 = vadd.f32 0.0, %v6368
  %v6370 = vpop.f32.mrf.mxu0
  %v6371 = vadd.f32 0.0, %v6370
  %6372 = vdwg.mxu0
  %v6373 = vmax.f32 %v4697, %v5884
  %v6374 = vmax.f32 %v4698, %v5886
  %v6375 = vmax.f32 %v4699, %v5889
  %v6376 = vmax.f32 %v4700, %v5891
  %v6377 = vmax.f32 %v4701, %v5894
  %v6378 = vmax.f32 %v4702, %v5896
  %v6379 = vmax.f32 %v4703, %v5899
  %v6380 = vmax.f32 %v4704, %v5901
  %v6381 = vmax.f32 %v4705, %v5904
  %v6382 = vmax.f32 %v4706, %v5906
  %v6383 = vmax.f32 %v4707, %v5909
  %v6384 = vmax.f32 %v4708, %v5911
  %v6385 = vmax.f32 %v4709, %v5914
  %v6386 = vmax.f32 %v4710, %v5916
  %v6387 = vmax.f32 %v4711, %v5919
  %v6388 = vmax.f32 %v4712, %v5921
  %v6389 = vmax.f32 %v4713, %v5924
  %v6390 = vmax.f32 %v4714, %v5926
  %v6391 = vmax.f32 %v4715, %v5929
  %v6392 = vmax.f32 %v4716, %v5931
  %v6393 = vmax.f32 %v4717, %v5934
  %v6394 = vmax.f32 %v4718, %v5936
  %v6395 = vmax.f32 %v4719, %v5939
  %v6396 = vmax.f32 %v4720, %v5941
  %v6397 = vmax.f32 %v4721, %v5944
  %v6398 = vmax.f32 %v4722, %v5946
  %v6399 = vmax.f32 %v4723, %v5949
  %v6400 = vmax.f32 %v4724, %v5951
  %v6401 = vmax.f32 %v4725, %v5954
  %v6402 = vmax.f32 %v4726, %v5956
  %v6403 = vmax.f32 %v4727, %v5959
  %v6404 = vmax.f32 %v4728, %v5961
  %v6405 = vmax.f32 %v4729, %v5964
  %v6406 = vmax.f32 %v4730, %v5966
  %v6407 = vmax.f32 %v4731, %v5969
  %v6408 = vmax.f32 %v4732, %v5971
  %v6409 = vmax.f32 %v4733, %v5974
  %v6410 = vmax.f32 %v4734, %v5976
  %v6411 = vmax.f32 %v4735, %v5979
  %v6412 = vmax.f32 %v4736, %v5981
  %v6413 = vmax.f32 %v4737, %v5984
  %v6414 = vmax.f32 %v4738, %v5986
  %v6415 = vmax.f32 %v4739, %v5989
  %v6416 = vmax.f32 %v4740, %v5991
  %v6417 = vmax.f32 %v4741, %v5994
  %v6418 = vmax.f32 %v4742, %v5996
  %v6419 = vmax.f32 %v4743, %v5999
  %v6420 = vmax.f32 %v4744, %v6001
  %v6421 = vmax.f32 %v4745, %v6004
  %v6422 = vmax.f32 %v4746, %v6006
  %v6423 = vmax.f32 %v4747, %v6009
  %v6424 = vmax.f32 %v4748, %v6011
  %v6425 = vmax.f32 %v4749, %v6014
  %v6426 = vmax.f32 %v4750, %v6016
  %v6427 = vmax.f32 %v4751, %v6019
  %v6428 = vmax.f32 %v4752, %v6021
  %v6429 = vmax.f32 %v4753, %v6024
  %v6430 = vmax.f32 %v4754, %v6026
  %v6431 = vmax.f32 %v4755, %v6029
  %v6432 = vmax.f32 %v4756, %v6031
  %v6433 = vmax.f32 %v4757, %v6034
  %v6434 = vmax.f32 %v4758, %v6036
  %v6435 = vmax.f32 %v4759, %v6039
  %v6436 = vmax.f32 %v4760, %v6041
  %v6437 = vmax.f32 %v4761, %v6044
  %v6438 = vmax.f32 %v4762, %v6046
  %v6439 = vmax.f32 %v4763, %v6049
  %v6440 = vmax.f32 %v4764, %v6051
  %v6441 = vmax.f32 %v4765, %v6054
  %v6442 = vmax.f32 %v4766, %v6056
  %v6443 = vmax.f32 %v4767, %v6059
  %v6444 = vmax.f32 %v4768, %v6061
  %v6445 = vmax.f32 %v4769, %v6064
  %v6446 = vmax.f32 %v4770, %v6066
  %v6447 = vmax.f32 %v4771, %v6069
  %v6448 = vmax.f32 %v4772, %v6071
  %v6449 = vmax.f32 %v4773, %v6074
  %v6450 = vmax.f32 %v4774, %v6076
  %v6451 = vmax.f32 %v4775, %v6079
  %v6452 = vmax.f32 %v4776, %v6081
  %v6453 = vmax.f32 %v4777, %v6084
  %v6454 = vmax.f32 %v4778, %v6086
  %v6455 = vmax.f32 %v4779, %v6089
  %v6456 = vmax.f32 %v4780, %v6091
  %v6457 = vmax.f32 %v4781, %v6094
  %v6458 = vmax.f32 %v4782, %v6096
  %v6459 = vmax.f32 %v4783, %v6099
  %v6460 = vmax.f32 %v4784, %v6101
  %v6461 = vmax.f32 %v4785, %v6104
  %v6462 = vmax.f32 %v4786, %v6106
  %v6463 = vmax.f32 %v4787, %v6109
  %v6464 = vmax.f32 %v4788, %v6111
  %v6465 = vmax.f32 %v4789, %v6114
  %v6466 = vmax.f32 %v4790, %v6116
  %v6467 = vmax.f32 %v4791, %v6119
  %v6468 = vmax.f32 %v4792, %v6121
  %v6469 = vmax.f32 %v4793, %v6124
  %v6470 = vmax.f32 %v4794, %v6126
  %v6471 = vmax.f32 %v4795, %v6129
  %v6472 = vmax.f32 %v4796, %v6131
  %v6473 = vmax.f32 %v4797, %v6134
  %v6474 = vmax.f32 %v4798, %v6136
  %v6475 = vmax.f32 %v4799, %v6139
  %v6476 = vmax.f32 %v4800, %v6141
  %v6477 = vmax.f32 %v4801, %v6144
  %v6478 = vmax.f32 %v4802, %v6146
  %v6479 = vmax.f32 %v4803, %v6149
  %v6480 = vmax.f32 %v4804, %v6151
  %v6481 = vmax.f32 %v4805, %v6154
  %v6482 = vmax.f32 %v4806, %v6156
  %v6483 = vmax.f32 %v4807, %v6159
  %v6484 = vmax.f32 %v4808, %v6161
  %v6485 = vmax.f32 %v4809, %v6164
  %v6486 = vmax.f32 %v4810, %v6166
  %v6487 = vmax.f32 %v4811, %v6169
  %v6488 = vmax.f32 %v4812, %v6171
  %v6489 = vmax.f32 %v4813, %v6174
  %v6490 = vmax.f32 %v4814, %v6176
  %v6491 = vmax.f32 %v4815, %v6179
  %v6492 = vmax.f32 %v4816, %v6181
  %v6493 = vmax.f32 %v4817, %v6184
  %v6494 = vmax.f32 %v4818, %v6186
  %v6495 = vmax.f32 %v4819, %v6189
  %v6496 = vmax.f32 %v4820, %v6191
  %v6497 = vmax.f32 %v4821, %v6194
  %v6498 = vmax.f32 %v4822, %v6196
  %v6499 = vmax.f32 %v4823, %v6199
  %v6500 = vmax.f32 %v4824, %v6201
  %v6501 = vmax.f32 %v4825, %v6204
  %v6502 = vmax.f32 %v4826, %v6206
  %v6503 = vmax.f32 %v4827, %v6209
  %v6504 = vmax.f32 %v4828, %v6211
  %v6505 = vmax.f32 %v4829, %v6214
  %v6506 = vmax.f32 %v4830, %v6216
  %v6507 = vmax.f32 %v4831, %v6219
  %v6508 = vmax.f32 %v4832, %v6221
  %v6509 = vmax.f32 %v4833, %v6224
  %v6510 = vmax.f32 %v4834, %v6226
  %v6511 = vmax.f32 %v4835, %v6229
  %v6512 = vmax.f32 %v4836, %v6231
  %v6513 = vmax.f32 %v4837, %v6234
  %v6514 = vmax.f32 %v4838, %v6236
  %v6515 = vmax.f32 %v4839, %v6239
  %v6516 = vmax.f32 %v4840, %v6241
  %v6517 = vmax.f32 %v4841, %v6244
  %v6518 = vmax.f32 %v4842, %v6246
  %v6519 = vmax.f32 %v4843, %v6249
  %v6520 = vmax.f32 %v4844, %v6251
  %v6521 = vmax.f32 %v4845, %v6254
  %v6522 = vmax.f32 %v4846, %v6256
  %v6523 = vmax.f32 %v4847, %v6259
  %v6524 = vmax.f32 %v4848, %v6261
  %v6525 = vmax.f32 %v4849, %v6264
  %v6526 = vmax.f32 %v4850, %v6266
  %v6527 = vmax.f32 %v4851, %v6269
  %v6528 = vmax.f32 %v4852, %v6271
  %v6529 = vmax.f32 %v4853, %v6274
  %v6530 = vmax.f32 %v4854, %v6276
  %v6531 = vmax.f32 %v4855, %v6279
  %v6532 = vmax.f32 %v4856, %v6281
  %v6533 = vmax.f32 %v4857, %v6284
  %v6534 = vmax.f32 %v4858, %v6286
  %v6535 = vmax.f32 %v4859, %v6289
  %v6536 = vmax.f32 %v4860, %v6291
  %v6537 = vmax.f32 %v4861, %v6294
  %v6538 = vmax.f32 %v4862, %v6296
  %v6539 = vmax.f32 %v4863, %v6299
  %v6540 = vmax.f32 %v4864, %v6301
  %v6541 = vmax.f32 %v4865, %v6304
  %v6542 = vmax.f32 %v4866, %v6306
  %v6543 = vmax.f32 %v4867, %v6309
  %v6544 = vmax.f32 %v4868, %v6311
  %v6545 = vmax.f32 %v4869, %v6314
  %v6546 = vmax.f32 %v4870, %v6316
  %v6547 = vmax.f32 %v4871, %v6319
  %v6548 = vmax.f32 %v4872, %v6321
  %v6549 = vmax.f32 %v4873, %v6324
  %v6550 = vmax.f32 %v4874, %v6326
  %v6551 = vmax.f32 %v4875, %v6329
  %v6552 = vmax.f32 %v4876, %v6331
  %v6553 = vmax.f32 %v4877, %v6334
  %v6554 = vmax.f32 %v4878, %v6336
  %v6555 = vmax.f32 %v4879, %v6339
  %v6556 = vmax.f32 %v4880, %v6341
  %v6557 = vmax.f32 %v4881, %v6344
  %v6558 = vmax.f32 %v4882, %v6346
  %v6559 = vmax.f32 %v4883, %v6349
  %v6560 = vmax.f32 %v4884, %v6351
  %v6561 = vmax.f32 %v4885, %v6354
  %v6562 = vmax.f32 %v4886, %v6356
  %v6563 = vmax.f32 %v4887, %v6359
  %v6564 = vmax.f32 %v4888, %v6361
  %v6565 = vmax.f32 %v4889, %v6364
  %v6566 = vmax.f32 %v4890, %v6366
  %v6567 = vmax.f32 %v4891, %v6369
  %v6568 = vmax.f32 %v4892, %v6371
  %v6569 = vld [vmem:[%s2] sm:$0x1]
  %v6571 = vperm.slane %v6569, 0
  %v6573 = vadd.f32 %v6373, %v6571
  %v6574 = vadd.f32 %v6374, %v6571
  %v6575 = vadd.f32 %v6375, %v6571
  %v6576 = vadd.f32 %v6376, %v6571
  %v6577 = vadd.f32 %v6377, %v6571
  %v6578 = vadd.f32 %v6378, %v6571
  %v6579 = vadd.f32 %v6379, %v6571
  %v6580 = vadd.f32 %v6380, %v6571
  %v6581 = vadd.f32 %v6381, %v6571
  %v6582 = vadd.f32 %v6382, %v6571
  %v6583 = vadd.f32 %v6383, %v6571
  %v6584 = vadd.f32 %v6384, %v6571
  %v6585 = vadd.f32 %v6385, %v6571
  %v6586 = vadd.f32 %v6386, %v6571
  %v6587 = vadd.f32 %v6387, %v6571
  %v6588 = vadd.f32 %v6388, %v6571
  %v6589 = vadd.f32 %v6389, %v6571
  %v6590 = vadd.f32 %v6390, %v6571
  %v6591 = vadd.f32 %v6391, %v6571
  %v6592 = vadd.f32 %v6392, %v6571
  %v6593 = vadd.f32 %v6393, %v6571
  %v6594 = vadd.f32 %v6394, %v6571
  %v6595 = vadd.f32 %v6395, %v6571
  %v6596 = vadd.f32 %v6396, %v6571
  %v6597 = vadd.f32 %v6397, %v6571
  %v6598 = vadd.f32 %v6398, %v6571
  %v6599 = vadd.f32 %v6399, %v6571
  %v6600 = vadd.f32 %v6400, %v6571
  %v6601 = vadd.f32 %v6401, %v6571
  %v6602 = vadd.f32 %v6402, %v6571
  %v6603 = vadd.f32 %v6403, %v6571
  %v6604 = vadd.f32 %v6404, %v6571
  %v6605 = vadd.f32 %v6405, %v6571
  %v6606 = vadd.f32 %v6406, %v6571
  %v6607 = vadd.f32 %v6407, %v6571
  %v6608 = vadd.f32 %v6408, %v6571
  %v6609 = vadd.f32 %v6409, %v6571
  %v6610 = vadd.f32 %v6410, %v6571
  %v6611 = vadd.f32 %v6411, %v6571
  %v6612 = vadd.f32 %v6412, %v6571
  %v6613 = vadd.f32 %v6413, %v6571
  %v6614 = vadd.f32 %v6414, %v6571
  %v6615 = vadd.f32 %v6415, %v6571
  %v6616 = vadd.f32 %v6416, %v6571
  %v6617 = vadd.f32 %v6417, %v6571
  %v6618 = vadd.f32 %v6418, %v6571
  %v6619 = vadd.f32 %v6419, %v6571
  %v6620 = vadd.f32 %v6420, %v6571
  %v6621 = vadd.f32 %v6421, %v6571
  %v6622 = vadd.f32 %v6422, %v6571
  %v6623 = vadd.f32 %v6423, %v6571
  %v6624 = vadd.f32 %v6424, %v6571
  %v6625 = vadd.f32 %v6425, %v6571
  %v6626 = vadd.f32 %v6426, %v6571
  %v6627 = vadd.f32 %v6427, %v6571
  %v6628 = vadd.f32 %v6428, %v6571
  %v6629 = vadd.f32 %v6429, %v6571
  %v6630 = vadd.f32 %v6430, %v6571
  %v6631 = vadd.f32 %v6431, %v6571
  %v6632 = vadd.f32 %v6432, %v6571
  %v6633 = vadd.f32 %v6433, %v6571
  %v6634 = vadd.f32 %v6434, %v6571
  %v6635 = vadd.f32 %v6435, %v6571
  %v6636 = vadd.f32 %v6436, %v6571
  %v6637 = vadd.f32 %v6437, %v6571
  %v6638 = vadd.f32 %v6438, %v6571
  %v6639 = vadd.f32 %v6439, %v6571
  %v6640 = vadd.f32 %v6440, %v6571
  %v6641 = vadd.f32 %v6441, %v6571
  %v6642 = vadd.f32 %v6442, %v6571
  %v6643 = vadd.f32 %v6443, %v6571
  %v6644 = vadd.f32 %v6444, %v6571
  %v6645 = vadd.f32 %v6445, %v6571
  %v6646 = vadd.f32 %v6446, %v6571
  %v6647 = vadd.f32 %v6447, %v6571
  %v6648 = vadd.f32 %v6448, %v6571
  %v6649 = vadd.f32 %v6449, %v6571
  %v6650 = vadd.f32 %v6450, %v6571
  %v6651 = vadd.f32 %v6451, %v6571
  %v6652 = vadd.f32 %v6452, %v6571
  %v6653 = vadd.f32 %v6453, %v6571
  %v6654 = vadd.f32 %v6454, %v6571
  %v6655 = vadd.f32 %v6455, %v6571
  %v6656 = vadd.f32 %v6456, %v6571
  %v6657 = vadd.f32 %v6457, %v6571
  %v6658 = vadd.f32 %v6458, %v6571
  %v6659 = vadd.f32 %v6459, %v6571
  %v6660 = vadd.f32 %v6460, %v6571
  %v6661 = vadd.f32 %v6461, %v6571
  %v6662 = vadd.f32 %v6462, %v6571
  %v6663 = vadd.f32 %v6463, %v6571
  %v6664 = vadd.f32 %v6464, %v6571
  %v6665 = vadd.f32 %v6465, %v6571
  %v6666 = vadd.f32 %v6466, %v6571
  %v6667 = vadd.f32 %v6467, %v6571
  %v6668 = vadd.f32 %v6468, %v6571
  %v6669 = vadd.f32 %v6469, %v6571
  %v6670 = vadd.f32 %v6470, %v6571
  %v6671 = vadd.f32 %v6471, %v6571
  %v6672 = vadd.f32 %v6472, %v6571
  %v6673 = vadd.f32 %v6473, %v6571
  %v6674 = vadd.f32 %v6474, %v6571
  %v6675 = vadd.f32 %v6475, %v6571
  %v6676 = vadd.f32 %v6476, %v6571
  %v6677 = vadd.f32 %v6477, %v6571
  %v6678 = vadd.f32 %v6478, %v6571
  %v6679 = vadd.f32 %v6479, %v6571
  %v6680 = vadd.f32 %v6480, %v6571
  %v6681 = vadd.f32 %v6481, %v6571
  %v6682 = vadd.f32 %v6482, %v6571
  %v6683 = vadd.f32 %v6483, %v6571
  %v6684 = vadd.f32 %v6484, %v6571
  %v6685 = vadd.f32 %v6485, %v6571
  %v6686 = vadd.f32 %v6486, %v6571
  %v6687 = vadd.f32 %v6487, %v6571
  %v6688 = vadd.f32 %v6488, %v6571
  %v6689 = vadd.f32 %v6489, %v6571
  %v6690 = vadd.f32 %v6490, %v6571
  %v6691 = vadd.f32 %v6491, %v6571
  %v6692 = vadd.f32 %v6492, %v6571
  %v6693 = vadd.f32 %v6493, %v6571
  %v6694 = vadd.f32 %v6494, %v6571
  %v6695 = vadd.f32 %v6495, %v6571
  %v6696 = vadd.f32 %v6496, %v6571
  %v6697 = vadd.f32 %v6497, %v6571
  %v6698 = vadd.f32 %v6498, %v6571
  %v6699 = vadd.f32 %v6499, %v6571
  %v6700 = vadd.f32 %v6500, %v6571
  %v6701 = vadd.f32 %v6501, %v6571
  %v6702 = vadd.f32 %v6502, %v6571
  %v6703 = vadd.f32 %v6503, %v6571
  %v6704 = vadd.f32 %v6504, %v6571
  %v6705 = vadd.f32 %v6505, %v6571
  %v6706 = vadd.f32 %v6506, %v6571
  %v6707 = vadd.f32 %v6507, %v6571
  %v6708 = vadd.f32 %v6508, %v6571
  %v6709 = vadd.f32 %v6509, %v6571
  %v6710 = vadd.f32 %v6510, %v6571
  %v6711 = vadd.f32 %v6511, %v6571
  %v6712 = vadd.f32 %v6512, %v6571
  %v6713 = vadd.f32 %v6513, %v6571
  %v6714 = vadd.f32 %v6514, %v6571
  %v6715 = vadd.f32 %v6515, %v6571
  %v6716 = vadd.f32 %v6516, %v6571
  %v6717 = vadd.f32 %v6517, %v6571
  %v6718 = vadd.f32 %v6518, %v6571
  %v6719 = vadd.f32 %v6519, %v6571
  %v6720 = vadd.f32 %v6520, %v6571
  %v6721 = vadd.f32 %v6521, %v6571
  %v6722 = vadd.f32 %v6522, %v6571
  %v6723 = vadd.f32 %v6523, %v6571
  %v6724 = vadd.f32 %v6524, %v6571
  %v6725 = vadd.f32 %v6525, %v6571
  %v6726 = vadd.f32 %v6526, %v6571
  %v6727 = vadd.f32 %v6527, %v6571
  %v6728 = vadd.f32 %v6528, %v6571
  %v6729 = vadd.f32 %v6529, %v6571
  %v6730 = vadd.f32 %v6530, %v6571
  %v6731 = vadd.f32 %v6531, %v6571
  %v6732 = vadd.f32 %v6532, %v6571
  %v6733 = vadd.f32 %v6533, %v6571
  %v6734 = vadd.f32 %v6534, %v6571
  %v6735 = vadd.f32 %v6535, %v6571
  %v6736 = vadd.f32 %v6536, %v6571
  %v6737 = vadd.f32 %v6537, %v6571
  %v6738 = vadd.f32 %v6538, %v6571
  %v6739 = vadd.f32 %v6539, %v6571
  %v6740 = vadd.f32 %v6540, %v6571
  %v6741 = vadd.f32 %v6541, %v6571
  %v6742 = vadd.f32 %v6542, %v6571
  %v6743 = vadd.f32 %v6543, %v6571
  %v6744 = vadd.f32 %v6544, %v6571
  %v6745 = vadd.f32 %v6545, %v6571
  %v6746 = vadd.f32 %v6546, %v6571
  %v6747 = vadd.f32 %v6547, %v6571
  %v6748 = vadd.f32 %v6548, %v6571
  %v6749 = vadd.f32 %v6549, %v6571
  %v6750 = vadd.f32 %v6550, %v6571
  %v6751 = vadd.f32 %v6551, %v6571
  %v6752 = vadd.f32 %v6552, %v6571
  %v6753 = vadd.f32 %v6553, %v6571
  %v6754 = vadd.f32 %v6554, %v6571
  %v6755 = vadd.f32 %v6555, %v6571
  %v6756 = vadd.f32 %v6556, %v6571
  %v6757 = vadd.f32 %v6557, %v6571
  %v6758 = vadd.f32 %v6558, %v6571
  %v6759 = vadd.f32 %v6559, %v6571
  %v6760 = vadd.f32 %v6560, %v6571
  %v6761 = vadd.f32 %v6561, %v6571
  %v6762 = vadd.f32 %v6562, %v6571
  %v6763 = vadd.f32 %v6563, %v6571
  %v6764 = vadd.f32 %v6564, %v6571
  %v6765 = vadd.f32 %v6565, %v6571
  %v6766 = vadd.f32 %v6566, %v6571
  %v6767 = vadd.f32 %v6567, %v6571
  %v6768 = vadd.f32 %v6568, %v6571
  %v6769 = vmax.f32 %v6573, 0.0
  %v6770 = vmax.f32 %v6574, 0.0
  %v6771 = vmax.f32 %v6575, 0.0
  %v6772 = vmax.f32 %v6576, 0.0
  %v6773 = vmax.f32 %v6577, 0.0
  %v6774 = vmax.f32 %v6578, 0.0
  %v6775 = vmax.f32 %v6579, 0.0
  %v6776 = vmax.f32 %v6580, 0.0
  %v6777 = vmax.f32 %v6581, 0.0
  %v6778 = vmax.f32 %v6582, 0.0
  %v6779 = vmax.f32 %v6583, 0.0
  %v6780 = vmax.f32 %v6584, 0.0
  %v6781 = vmax.f32 %v6585, 0.0
  %v6782 = vmax.f32 %v6586, 0.0
  %v6783 = vmax.f32 %v6587, 0.0
  %v6784 = vmax.f32 %v6588, 0.0
  %v6785 = vmax.f32 %v6589, 0.0
  %v6786 = vmax.f32 %v6590, 0.0
  %v6787 = vmax.f32 %v6591, 0.0
  %v6788 = vmax.f32 %v6592, 0.0
  %v6789 = vmax.f32 %v6593, 0.0
  %v6790 = vmax.f32 %v6594, 0.0
  %v6791 = vmax.f32 %v6595, 0.0
  %v6792 = vmax.f32 %v6596, 0.0
  %v6793 = vmax.f32 %v6597, 0.0
  %v6794 = vmax.f32 %v6598, 0.0
  %v6795 = vmax.f32 %v6599, 0.0
  %v6796 = vmax.f32 %v6600, 0.0
  %v6797 = vmax.f32 %v6601, 0.0
  %v6798 = vmax.f32 %v6602, 0.0
  %v6799 = vmax.f32 %v6603, 0.0
  %v6800 = vmax.f32 %v6604, 0.0
  %v6801 = vmax.f32 %v6605, 0.0
  %v6802 = vmax.f32 %v6606, 0.0
  %v6803 = vmax.f32 %v6607, 0.0
  %v6804 = vmax.f32 %v6608, 0.0
  %v6805 = vmax.f32 %v6609, 0.0
  %v6806 = vmax.f32 %v6610, 0.0
  %v6807 = vmax.f32 %v6611, 0.0
  %v6808 = vmax.f32 %v6612, 0.0
  %v6809 = vmax.f32 %v6613, 0.0
  %v6810 = vmax.f32 %v6614, 0.0
  %v6811 = vmax.f32 %v6615, 0.0
  %v6812 = vmax.f32 %v6616, 0.0
  %v6813 = vmax.f32 %v6617, 0.0
  %v6814 = vmax.f32 %v6618, 0.0
  %v6815 = vmax.f32 %v6619, 0.0
  %v6816 = vmax.f32 %v6620, 0.0
  %v6817 = vmax.f32 %v6621, 0.0
  %v6818 = vmax.f32 %v6622, 0.0
  %v6819 = vmax.f32 %v6623, 0.0
  %v6820 = vmax.f32 %v6624, 0.0
  %v6821 = vmax.f32 %v6625, 0.0
  %v6822 = vmax.f32 %v6626, 0.0
  %v6823 = vmax.f32 %v6627, 0.0
  %v6824 = vmax.f32 %v6628, 0.0
  %v6825 = vmax.f32 %v6629, 0.0
  %v6826 = vmax.f32 %v6630, 0.0
  %v6827 = vmax.f32 %v6631, 0.0
  %v6828 = vmax.f32 %v6632, 0.0
  %v6829 = vmax.f32 %v6633, 0.0
  %v6830 = vmax.f32 %v6634, 0.0
  %v6831 = vmax.f32 %v6635, 0.0
  %v6832 = vmax.f32 %v6636, 0.0
  %v6833 = vmax.f32 %v6637, 0.0
  %v6834 = vmax.f32 %v6638, 0.0
  %v6835 = vmax.f32 %v6639, 0.0
  %v6836 = vmax.f32 %v6640, 0.0
  %v6837 = vmax.f32 %v6641, 0.0
  %v6838 = vmax.f32 %v6642, 0.0
  %v6839 = vmax.f32 %v6643, 0.0
  %v6840 = vmax.f32 %v6644, 0.0
  %v6841 = vmax.f32 %v6645, 0.0
  %v6842 = vmax.f32 %v6646, 0.0
  %v6843 = vmax.f32 %v6647, 0.0
  %v6844 = vmax.f32 %v6648, 0.0
  %v6845 = vmax.f32 %v6649, 0.0
  %v6846 = vmax.f32 %v6650, 0.0
  %v6847 = vmax.f32 %v6651, 0.0
  %v6848 = vmax.f32 %v6652, 0.0
  %v6849 = vmax.f32 %v6653, 0.0
  %v6850 = vmax.f32 %v6654, 0.0
  %v6851 = vmax.f32 %v6655, 0.0
  %v6852 = vmax.f32 %v6656, 0.0
  %v6853 = vmax.f32 %v6657, 0.0
  %v6854 = vmax.f32 %v6658, 0.0
  %v6855 = vmax.f32 %v6659, 0.0
  %v6856 = vmax.f32 %v6660, 0.0
  %v6857 = vmax.f32 %v6661, 0.0
  %v6858 = vmax.f32 %v6662, 0.0
  %v6859 = vmax.f32 %v6663, 0.0
  %v6860 = vmax.f32 %v6664, 0.0
  %v6861 = vmax.f32 %v6665, 0.0
  %v6862 = vmax.f32 %v6666, 0.0
  %v6863 = vmax.f32 %v6667, 0.0
  %v6864 = vmax.f32 %v6668, 0.0
  %v6865 = vmax.f32 %v6669, 0.0
  %v6866 = vmax.f32 %v6670, 0.0
  %v6867 = vmax.f32 %v6671, 0.0
  %v6868 = vmax.f32 %v6672, 0.0
  %v6869 = vmax.f32 %v6673, 0.0
  %v6870 = vmax.f32 %v6674, 0.0
  %v6871 = vmax.f32 %v6675, 0.0
  %v6872 = vmax.f32 %v6676, 0.0
  %v6873 = vmax.f32 %v6677, 0.0
  %v6874 = vmax.f32 %v6678, 0.0
  %v6875 = vmax.f32 %v6679, 0.0
  %v6876 = vmax.f32 %v6680, 0.0
  %v6877 = vmax.f32 %v6681, 0.0
  %v6878 = vmax.f32 %v6682, 0.0
  %v6879 = vmax.f32 %v6683, 0.0
  %v6880 = vmax.f32 %v6684, 0.0
  %v6881 = vmax.f32 %v6685, 0.0
  %v6882 = vmax.f32 %v6686, 0.0
  %v6883 = vmax.f32 %v6687, 0.0
  %v6884 = vmax.f32 %v6688, 0.0
  %v6885 = vmax.f32 %v6689, 0.0
  %v6886 = vmax.f32 %v6690, 0.0
  %v6887 = vmax.f32 %v6691, 0.0
  %v6888 = vmax.f32 %v6692, 0.0
  %v6889 = vmax.f32 %v6693, 0.0
  %v6890 = vmax.f32 %v6694, 0.0
  %v6891 = vmax.f32 %v6695, 0.0
  %v6892 = vmax.f32 %v6696, 0.0
  %v6893 = vmax.f32 %v6697, 0.0
  %v6894 = vmax.f32 %v6698, 0.0
  %v6895 = vmax.f32 %v6699, 0.0
  %v6896 = vmax.f32 %v6700, 0.0
  %v6897 = vmax.f32 %v6701, 0.0
  %v6898 = vmax.f32 %v6702, 0.0
  %v6899 = vmax.f32 %v6703, 0.0
  %v6900 = vmax.f32 %v6704, 0.0
  %v6901 = vmax.f32 %v6705, 0.0
  %v6902 = vmax.f32 %v6706, 0.0
  %v6903 = vmax.f32 %v6707, 0.0
  %v6904 = vmax.f32 %v6708, 0.0
  %v6905 = vmax.f32 %v6709, 0.0
  %v6906 = vmax.f32 %v6710, 0.0
  %v6907 = vmax.f32 %v6711, 0.0
  %v6908 = vmax.f32 %v6712, 0.0
  %v6909 = vmax.f32 %v6713, 0.0
  %v6910 = vmax.f32 %v6714, 0.0
  %v6911 = vmax.f32 %v6715, 0.0
  %v6912 = vmax.f32 %v6716, 0.0
  %v6913 = vmax.f32 %v6717, 0.0
  %v6914 = vmax.f32 %v6718, 0.0
  %v6915 = vmax.f32 %v6719, 0.0
  %v6916 = vmax.f32 %v6720, 0.0
  %v6917 = vmax.f32 %v6721, 0.0
  %v6918 = vmax.f32 %v6722, 0.0
  %v6919 = vmax.f32 %v6723, 0.0
  %v6920 = vmax.f32 %v6724, 0.0
  %v6921 = vmax.f32 %v6725, 0.0
  %v6922 = vmax.f32 %v6726, 0.0
  %v6923 = vmax.f32 %v6727, 0.0
  %v6924 = vmax.f32 %v6728, 0.0
  %v6925 = vmax.f32 %v6729, 0.0
  %v6926 = vmax.f32 %v6730, 0.0
  %v6927 = vmax.f32 %v6731, 0.0
  %v6928 = vmax.f32 %v6732, 0.0
  %v6929 = vmax.f32 %v6733, 0.0
  %v6930 = vmax.f32 %v6734, 0.0
  %v6931 = vmax.f32 %v6735, 0.0
  %v6932 = vmax.f32 %v6736, 0.0
  %v6933 = vmax.f32 %v6737, 0.0
  %v6934 = vmax.f32 %v6738, 0.0
  %v6935 = vmax.f32 %v6739, 0.0
  %v6936 = vmax.f32 %v6740, 0.0
  %v6937 = vmax.f32 %v6741, 0.0
  %v6938 = vmax.f32 %v6742, 0.0
  %v6939 = vmax.f32 %v6743, 0.0
  %v6940 = vmax.f32 %v6744, 0.0
  %v6941 = vmax.f32 %v6745, 0.0
  %v6942 = vmax.f32 %v6746, 0.0
  %v6943 = vmax.f32 %v6747, 0.0
  %v6944 = vmax.f32 %v6748, 0.0
  %v6945 = vmax.f32 %v6749, 0.0
  %v6946 = vmax.f32 %v6750, 0.0
  %v6947 = vmax.f32 %v6751, 0.0
  %v6948 = vmax.f32 %v6752, 0.0
  %v6949 = vmax.f32 %v6753, 0.0
  %v6950 = vmax.f32 %v6754, 0.0
  %v6951 = vmax.f32 %v6755, 0.0
  %v6952 = vmax.f32 %v6756, 0.0
  %v6953 = vmax.f32 %v6757, 0.0
  %v6954 = vmax.f32 %v6758, 0.0
  %v6955 = vmax.f32 %v6759, 0.0
  %v6956 = vmax.f32 %v6760, 0.0
  %v6957 = vmax.f32 %v6761, 0.0
  %v6958 = vmax.f32 %v6762, 0.0
  %v6959 = vmax.f32 %v6763, 0.0
  %v6960 = vmax.f32 %v6764, 0.0
  %v6961 = vmax.f32 %v6765, 0.0
  %v6962 = vmax.f32 %v6766, 0.0
  %v6963 = vmax.f32 %v6767, 0.0
  %v6964 = vmax.f32 %v6768, 0.0
  %v6965 = vpack.c.bf16 %v6769, %v6769
  %v6966 = vpack.c.bf16 %v6770, %v6770
  %v6967 = vpack.c.bf16 %v6771, %v6771
  %v6968 = vpack.c.bf16 %v6772, %v6772
  %v6969 = vpack.c.bf16 %v6773, %v6773
  %v6970 = vpack.c.bf16 %v6774, %v6774
  %v6971 = vpack.c.bf16 %v6775, %v6775
  %v6972 = vpack.c.bf16 %v6776, %v6776
  %v6973 = vpack.c.bf16 %v6777, %v6777
  %v6974 = vpack.c.bf16 %v6778, %v6778
  %v6975 = vpack.c.bf16 %v6779, %v6779
  %v6976 = vpack.c.bf16 %v6780, %v6780
  %v6977 = vpack.c.bf16 %v6781, %v6781
  %v6978 = vpack.c.bf16 %v6782, %v6782
  %v6979 = vpack.c.bf16 %v6783, %v6783
  %v6980 = vpack.c.bf16 %v6784, %v6784
  %v6981 = vpack.c.bf16 %v6785, %v6785
  %v6982 = vpack.c.bf16 %v6786, %v6786
  %v6983 = vpack.c.bf16 %v6787, %v6787
  %v6984 = vpack.c.bf16 %v6788, %v6788
  %v6985 = vpack.c.bf16 %v6789, %v6789
  %v6986 = vpack.c.bf16 %v6790, %v6790
  %v6987 = vpack.c.bf16 %v6791, %v6791
  %v6988 = vpack.c.bf16 %v6792, %v6792
  %v6989 = vpack.c.bf16 %v6793, %v6793
  %v6990 = vpack.c.bf16 %v6794, %v6794
  %v6991 = vpack.c.bf16 %v6795, %v6795
  %v6992 = vpack.c.bf16 %v6796, %v6796
  %v6993 = vpack.c.bf16 %v6797, %v6797
  %v6994 = vpack.c.bf16 %v6798, %v6798
  %v6995 = vpack.c.bf16 %v6799, %v6799
  %v6996 = vpack.c.bf16 %v6800, %v6800
  %v6997 = vpack.c.bf16 %v6801, %v6801
  %v6998 = vpack.c.bf16 %v6802, %v6802
  %v6999 = vpack.c.bf16 %v6803, %v6803
  %v7000 = vpack.c.bf16 %v6804, %v6804
  %v7001 = vpack.c.bf16 %v6805, %v6805
  %v7002 = vpack.c.bf16 %v6806, %v6806
  %v7003 = vpack.c.bf16 %v6807, %v6807
  %v7004 = vpack.c.bf16 %v6808, %v6808
  %v7005 = vpack.c.bf16 %v6809, %v6809
  %v7006 = vpack.c.bf16 %v6810, %v6810
  %v7007 = vpack.c.bf16 %v6811, %v6811
  %v7008 = vpack.c.bf16 %v6812, %v6812
  %v7009 = vpack.c.bf16 %v6813, %v6813
  %v7010 = vpack.c.bf16 %v6814, %v6814
  %v7011 = vpack.c.bf16 %v6815, %v6815
  %v7012 = vpack.c.bf16 %v6816, %v6816
  %v7013 = vpack.c.bf16 %v6817, %v6817
  %v7014 = vpack.c.bf16 %v6818, %v6818
  %v7015 = vpack.c.bf16 %v6819, %v6819
  %v7016 = vpack.c.bf16 %v6820, %v6820
  %v7017 = vpack.c.bf16 %v6821, %v6821
  %v7018 = vpack.c.bf16 %v6822, %v6822
  %v7019 = vpack.c.bf16 %v6823, %v6823
  %v7020 = vpack.c.bf16 %v6824, %v6824
  %v7021 = vpack.c.bf16 %v6825, %v6825
  %v7022 = vpack.c.bf16 %v6826, %v6826
  %v7023 = vpack.c.bf16 %v6827, %v6827
  %v7024 = vpack.c.bf16 %v6828, %v6828
  %v7025 = vpack.c.bf16 %v6829, %v6829
  %v7026 = vpack.c.bf16 %v6830, %v6830
  %v7027 = vpack.c.bf16 %v6831, %v6831
  %v7028 = vpack.c.bf16 %v6832, %v6832
  %v7029 = vpack.c.bf16 %v6833, %v6833
  %v7030 = vpack.c.bf16 %v6834, %v6834
  %v7031 = vpack.c.bf16 %v6835, %v6835
  %v7032 = vpack.c.bf16 %v6836, %v6836
  %v7033 = vpack.c.bf16 %v6837, %v6837
  %v7034 = vpack.c.bf16 %v6838, %v6838
  %v7035 = vpack.c.bf16 %v6839, %v6839
  %v7036 = vpack.c.bf16 %v6840, %v6840
  %v7037 = vpack.c.bf16 %v6841, %v6841
  %v7038 = vpack.c.bf16 %v6842, %v6842
  %v7039 = vpack.c.bf16 %v6843, %v6843
  %v7040 = vpack.c.bf16 %v6844, %v6844
  %v7041 = vpack.c.bf16 %v6845, %v6845
  %v7042 = vpack.c.bf16 %v6846, %v6846
  %v7043 = vpack.c.bf16 %v6847, %v6847
  %v7044 = vpack.c.bf16 %v6848, %v6848
  %v7045 = vpack.c.bf16 %v6849, %v6849
  %v7046 = vpack.c.bf16 %v6850, %v6850
  %v7047 = vpack.c.bf16 %v6851, %v6851
  %v7048 = vpack.c.bf16 %v6852, %v6852
  %v7049 = vpack.c.bf16 %v6853, %v6853
  %v7050 = vpack.c.bf16 %v6854, %v6854
  %v7051 = vpack.c.bf16 %v6855, %v6855
  %v7052 = vpack.c.bf16 %v6856, %v6856
  %v7053 = vpack.c.bf16 %v6857, %v6857
  %v7054 = vpack.c.bf16 %v6858, %v6858
  %v7055 = vpack.c.bf16 %v6859, %v6859
  %v7056 = vpack.c.bf16 %v6860, %v6860
  %v7057 = vpack.c.bf16 %v6861, %v6861
  %v7058 = vpack.c.bf16 %v6862, %v6862
  %v7059 = vpack.c.bf16 %v6863, %v6863
  %v7060 = vpack.c.bf16 %v6864, %v6864
  %v7061 = vpack.c.bf16 %v6865, %v6865
  %v7062 = vpack.c.bf16 %v6866, %v6866
  %v7063 = vpack.c.bf16 %v6867, %v6867
  %v7064 = vpack.c.bf16 %v6868, %v6868
  %v7065 = vpack.c.bf16 %v6869, %v6869
  %v7066 = vpack.c.bf16 %v6870, %v6870
  %v7067 = vpack.c.bf16 %v6871, %v6871
  %v7068 = vpack.c.bf16 %v6872, %v6872
  %v7069 = vpack.c.bf16 %v6873, %v6873
  %v7070 = vpack.c.bf16 %v6874, %v6874
  %v7071 = vpack.c.bf16 %v6875, %v6875
  %v7072 = vpack.c.bf16 %v6876, %v6876
  %v7073 = vpack.c.bf16 %v6877, %v6877
  %v7074 = vpack.c.bf16 %v6878, %v6878
  %v7075 = vpack.c.bf16 %v6879, %v6879
  %v7076 = vpack.c.bf16 %v6880, %v6880
  %v7077 = vpack.c.bf16 %v6881, %v6881
  %v7078 = vpack.c.bf16 %v6882, %v6882
  %v7079 = vpack.c.bf16 %v6883, %v6883
  %v7080 = vpack.c.bf16 %v6884, %v6884
  %v7081 = vpack.c.bf16 %v6885, %v6885
  %v7082 = vpack.c.bf16 %v6886, %v6886
  %v7083 = vpack.c.bf16 %v6887, %v6887
  %v7084 = vpack.c.bf16 %v6888, %v6888
  %v7085 = vpack.c.bf16 %v6889, %v6889
  %v7086 = vpack.c.bf16 %v6890, %v6890
  %v7087 = vpack.c.bf16 %v6891, %v6891
  %v7088 = vpack.c.bf16 %v6892, %v6892
  %v7089 = vpack.c.bf16 %v6893, %v6893
  %v7090 = vpack.c.bf16 %v6894, %v6894
  %v7091 = vpack.c.bf16 %v6895, %v6895
  %v7092 = vpack.c.bf16 %v6896, %v6896
  %v7093 = vpack.c.bf16 %v6897, %v6897
  %v7094 = vpack.c.bf16 %v6898, %v6898
  %v7095 = vpack.c.bf16 %v6899, %v6899
  %v7096 = vpack.c.bf16 %v6900, %v6900
  %v7097 = vpack.c.bf16 %v6901, %v6901
  %v7098 = vpack.c.bf16 %v6902, %v6902
  %v7099 = vpack.c.bf16 %v6903, %v6903
  %v7100 = vpack.c.bf16 %v6904, %v6904
  %v7101 = vpack.c.bf16 %v6905, %v6905
  %v7102 = vpack.c.bf16 %v6906, %v6906
  %v7103 = vpack.c.bf16 %v6907, %v6907
  %v7104 = vpack.c.bf16 %v6908, %v6908
  %v7105 = vpack.c.bf16 %v6909, %v6909
  %v7106 = vpack.c.bf16 %v6910, %v6910
  %v7107 = vpack.c.bf16 %v6911, %v6911
  %v7108 = vpack.c.bf16 %v6912, %v6912
  %v7109 = vpack.c.bf16 %v6913, %v6913
  %v7110 = vpack.c.bf16 %v6914, %v6914
  %v7111 = vpack.c.bf16 %v6915, %v6915
  %v7112 = vpack.c.bf16 %v6916, %v6916
  %v7113 = vpack.c.bf16 %v6917, %v6917
  %v7114 = vpack.c.bf16 %v6918, %v6918
  %v7115 = vpack.c.bf16 %v6919, %v6919
  %v7116 = vpack.c.bf16 %v6920, %v6920
  %v7117 = vpack.c.bf16 %v6921, %v6921
  %v7118 = vpack.c.bf16 %v6922, %v6922
  %v7119 = vpack.c.bf16 %v6923, %v6923
  %v7120 = vpack.c.bf16 %v6924, %v6924
  %v7121 = vpack.c.bf16 %v6925, %v6925
  %v7122 = vpack.c.bf16 %v6926, %v6926
  %v7123 = vpack.c.bf16 %v6927, %v6927
  %v7124 = vpack.c.bf16 %v6928, %v6928
  %v7125 = vpack.c.bf16 %v6929, %v6929
  %v7126 = vpack.c.bf16 %v6930, %v6930
  %v7127 = vpack.c.bf16 %v6931, %v6931
  %v7128 = vpack.c.bf16 %v6932, %v6932
  %v7129 = vpack.c.bf16 %v6933, %v6933
  %v7130 = vpack.c.bf16 %v6934, %v6934
  %v7131 = vpack.c.bf16 %v6935, %v6935
  %v7132 = vpack.c.bf16 %v6936, %v6936
  %v7133 = vpack.c.bf16 %v6937, %v6937
  %v7134 = vpack.c.bf16 %v6938, %v6938
  %v7135 = vpack.c.bf16 %v6939, %v6939
  %v7136 = vpack.c.bf16 %v6940, %v6940
  %v7137 = vpack.c.bf16 %v6941, %v6941
  %v7138 = vpack.c.bf16 %v6942, %v6942
  %v7139 = vpack.c.bf16 %v6943, %v6943
  %v7140 = vpack.c.bf16 %v6944, %v6944
  %v7141 = vpack.c.bf16 %v6945, %v6945
  %v7142 = vpack.c.bf16 %v6946, %v6946
  %v7143 = vpack.c.bf16 %v6947, %v6947
  %v7144 = vpack.c.bf16 %v6948, %v6948
  %v7145 = vpack.c.bf16 %v6949, %v6949
  %v7146 = vpack.c.bf16 %v6950, %v6950
  %v7147 = vpack.c.bf16 %v6951, %v6951
  %v7148 = vpack.c.bf16 %v6952, %v6952
  %v7149 = vpack.c.bf16 %v6953, %v6953
  %v7150 = vpack.c.bf16 %v6954, %v6954
  %v7151 = vpack.c.bf16 %v6955, %v6955
  %v7152 = vpack.c.bf16 %v6956, %v6956
  %v7153 = vpack.c.bf16 %v6957, %v6957
  %v7154 = vpack.c.bf16 %v6958, %v6958
  %v7155 = vpack.c.bf16 %v6959, %v6959
  %v7156 = vpack.c.bf16 %v6960, %v6960
  %v7157 = vpack.c.bf16 %v6961, %v6961
  %v7158 = vpack.c.bf16 %v6962, %v6962
  %v7159 = vpack.c.bf16 %v6963, %v6963
  %v7160 = vpack.c.bf16 %v6964, %v6964
  %vm7161 = vcmask 44032
  %7162 = vst.msk [vmem:[%s3] sm:$0xf] %vm7161, %v6965
  %7163 = vst.msk [vmem:[%s3 + $0x4] sm:$0xf] %vm7161, %v6966
  %7164 = vst.msk [vmem:[%s3 + $0x8] sm:$0xf] %vm7161, %v6967
  %7165 = vst.msk [vmem:[%s3 + $0xc] sm:$0xf] %vm7161, %v6968
  %7166 = vst.msk [vmem:[%s3 + $0x10] sm:$0xf] %vm7161, %v6969
  %7167 = vst.msk [vmem:[%s3 + $0x14] sm:$0xf] %vm7161, %v6970
  %7168 = vst.msk [vmem:[%s3 + $0x18] sm:$0xf] %vm7161, %v6971
  %7169 = vst.msk [vmem:[%s3 + $0x1c] sm:$0xf] %vm7161, %v6972
  %7170 = vst.msk [vmem:[%s3 + $0x20] sm:$0xf] %vm7161, %v6973
  %7171 = vst.msk [vmem:[%s3 + $0x24] sm:$0xf] %vm7161, %v6974
  %7172 = vst.msk [vmem:[%s3 + $0x28] sm:$0xf] %vm7161, %v6975
  %7173 = vst.msk [vmem:[%s3 + $0x2c] sm:$0xf] %vm7161, %v6976
  %7174 = vst.msk [vmem:[%s3 + $0x30] sm:$0xf] %vm7161, %v6977
  %7175 = vst.msk [vmem:[%s3 + $0x34] sm:$0xf] %vm7161, %v6978
  %7176 = vst.msk [vmem:[%s3 + $0x38] sm:$0xf] %vm7161, %v6979
  %7177 = vst.msk [vmem:[%s3 + $0x3c] sm:$0xf] %vm7161, %v6980
  %7178 = vst.msk [vmem:[%s3 + $0x40] sm:$0xf] %vm7161, %v6981
  %7179 = vst.msk [vmem:[%s3 + $0x44] sm:$0xf] %vm7161, %v6982
  %7180 = vst.msk [vmem:[%s3 + $0x48] sm:$0xf] %vm7161, %v6983
  %7181 = vst.msk [vmem:[%s3 + $0x4c] sm:$0xf] %vm7161, %v6984
  %7182 = vst.msk [vmem:[%s3 + $0x50] sm:$0xf] %vm7161, %v6985
  %7183 = vst.msk [vmem:[%s3 + $0x54] sm:$0xf] %vm7161, %v6986
  %7184 = vst.msk [vmem:[%s3 + $0x58] sm:$0xf] %vm7161, %v6987
  %7185 = vst.msk [vmem:[%s3 + $0x5c] sm:$0xf] %vm7161, %v6988
  %7186 = vst.msk [vmem:[%s3 + $0x60] sm:$0xf] %vm7161, %v6989
  %7187 = vst.msk [vmem:[%s3 + $0x64] sm:$0xf] %vm7161, %v6990
  %7188 = vst.msk [vmem:[%s3 + $0x68] sm:$0xf] %vm7161, %v6991
  %7189 = vst.msk [vmem:[%s3 + $0x6c] sm:$0xf] %vm7161, %v6992
  %7190 = vst.msk [vmem:[%s3 + $0x70] sm:$0xf] %vm7161, %v6993
  %7191 = vst.msk [vmem:[%s3 + $0x74] sm:$0xf] %vm7161, %v6994
  %7192 = vst.msk [vmem:[%s3 + $0x78] sm:$0xf] %vm7161, %v6995
  %7193 = vst.msk [vmem:[%s3 + $0x7c] sm:$0xf] %vm7161, %v6996
  %7194 = vst.msk [vmem:[%s3 + $0x80] sm:$0xf] %vm7161, %v6997
  %7195 = vst.msk [vmem:[%s3 + $0x84] sm:$0xf] %vm7161, %v6998
  %7196 = vst.msk [vmem:[%s3 + $0x88] sm:$0xf] %vm7161, %v6999
  %7197 = vst.msk [vmem:[%s3 + $0x8c] sm:$0xf] %vm7161, %v7000
  %7198 = vst.msk [vmem:[%s3 + $0x90] sm:$0xf] %vm7161, %v7001
  %7199 = vst.msk [vmem:[%s3 + $0x94] sm:$0xf] %vm7161, %v7002
  %7200 = vst.msk [vmem:[%s3 + $0x98] sm:$0xf] %vm7161, %v7003
  %7201 = vst.msk [vmem:[%s3 + $0x9c] sm:$0xf] %vm7161, %v7004
  %7202 = vst.msk [vmem:[%s3 + $0xa0] sm:$0xf] %vm7161, %v7005
  %7203 = vst.msk [vmem:[%s3 + $0xa4] sm:$0xf] %vm7161, %v7006
  %7204 = vst.msk [vmem:[%s3 + $0xa8] sm:$0xf] %vm7161, %v7007
  %7205 = vst.msk [vmem:[%s3 + $0xac] sm:$0xf] %vm7161, %v7008
  %7206 = vst.msk [vmem:[%s3 + $0xb0] sm:$0xf] %vm7161, %v7009
  %7207 = vst.msk [vmem:[%s3 + $0xb4] sm:$0xf] %vm7161, %v7010
  %7208 = vst.msk [vmem:[%s3 + $0xb8] sm:$0xf] %vm7161, %v7011
  %7209 = vst.msk [vmem:[%s3 + $0xbc] sm:$0xf] %vm7161, %v7012
  %7210 = vst.msk [vmem:[%s3 + $0xc0] sm:$0xf] %vm7161, %v7013
  %7211 = vst.msk [vmem:[%s3 + $0xc4] sm:$0xf] %vm7161, %v7014
  %7212 = vst.msk [vmem:[%s3 + $0xc8] sm:$0xf] %vm7161, %v7015
  %7213 = vst.msk [vmem:[%s3 + $0xcc] sm:$0xf] %vm7161, %v7016
  %7214 = vst.msk [vmem:[%s3 + $0xd0] sm:$0xf] %vm7161, %v7017
  %7215 = vst.msk [vmem:[%s3 + $0xd4] sm:$0xf] %vm7161, %v7018
  %7216 = vst.msk [vmem:[%s3 + $0xd8] sm:$0xf] %vm7161, %v7019
  %7217 = vst.msk [vmem:[%s3 + $0xdc] sm:$0xf] %vm7161, %v7020
  %7218 = vst.msk [vmem:[%s3 + $0xe0] sm:$0xf] %vm7161, %v7021
  %7219 = vst.msk [vmem:[%s3 + $0xe4] sm:$0xf] %vm7161, %v7022
  %7220 = vst.msk [vmem:[%s3 + $0xe8] sm:$0xf] %vm7161, %v7023
  %7221 = vst.msk [vmem:[%s3 + $0xec] sm:$0xf] %vm7161, %v7024
  %7222 = vst.msk [vmem:[%s3 + $0xf0] sm:$0xf] %vm7161, %v7025
  %7223 = vst.msk [vmem:[%s3 + $0xf4] sm:$0xf] %vm7161, %v7026
  %7224 = vst.msk [vmem:[%s3 + $0xf8] sm:$0xf] %vm7161, %v7027
  %7225 = vst.msk [vmem:[%s3 + $0xfc] sm:$0xf] %vm7161, %v7028
  %7226 = vst.msk [vmem:[%s3 + $0x100] sm:$0xf] %vm7161, %v7029
  %7227 = vst.msk [vmem:[%s3 + $0x104] sm:$0xf] %vm7161, %v7030
  %7228 = vst.msk [vmem:[%s3 + $0x108] sm:$0xf] %vm7161, %v7031
  %7229 = vst.msk [vmem:[%s3 + $0x10c] sm:$0xf] %vm7161, %v7032
  %7230 = vst.msk [vmem:[%s3 + $0x110] sm:$0xf] %vm7161, %v7033
  %7231 = vst.msk [vmem:[%s3 + $0x114] sm:$0xf] %vm7161, %v7034
  %7232 = vst.msk [vmem:[%s3 + $0x118] sm:$0xf] %vm7161, %v7035
  %7233 = vst.msk [vmem:[%s3 + $0x11c] sm:$0xf] %vm7161, %v7036
  %7234 = vst.msk [vmem:[%s3 + $0x120] sm:$0xf] %vm7161, %v7037
  %7235 = vst.msk [vmem:[%s3 + $0x124] sm:$0xf] %vm7161, %v7038
  %7236 = vst.msk [vmem:[%s3 + $0x128] sm:$0xf] %vm7161, %v7039
  %7237 = vst.msk [vmem:[%s3 + $0x12c] sm:$0xf] %vm7161, %v7040
  %7238 = vst.msk [vmem:[%s3 + $0x130] sm:$0xf] %vm7161, %v7041
  %7239 = vst.msk [vmem:[%s3 + $0x134] sm:$0xf] %vm7161, %v7042
  %7240 = vst.msk [vmem:[%s3 + $0x138] sm:$0xf] %vm7161, %v7043
  %7241 = vst.msk [vmem:[%s3 + $0x13c] sm:$0xf] %vm7161, %v7044
  %7242 = vst.msk [vmem:[%s3 + $0x140] sm:$0xf] %vm7161, %v7045
  %7243 = vst.msk [vmem:[%s3 + $0x144] sm:$0xf] %vm7161, %v7046
  %7244 = vst.msk [vmem:[%s3 + $0x148] sm:$0xf] %vm7161, %v7047
  %7245 = vst.msk [vmem:[%s3 + $0x14c] sm:$0xf] %vm7161, %v7048
  %7246 = vst.msk [vmem:[%s3 + $0x150] sm:$0xf] %vm7161, %v7049
  %7247 = vst.msk [vmem:[%s3 + $0x154] sm:$0xf] %vm7161, %v7050
  %7248 = vst.msk [vmem:[%s3 + $0x158] sm:$0xf] %vm7161, %v7051
  %7249 = vst.msk [vmem:[%s3 + $0x15c] sm:$0xf] %vm7161, %v7052
  %7250 = vst.msk [vmem:[%s3 + $0x160] sm:$0xf] %vm7161, %v7053
  %7251 = vst.msk [vmem:[%s3 + $0x164] sm:$0xf] %vm7161, %v7054
  %7252 = vst.msk [vmem:[%s3 + $0x168] sm:$0xf] %vm7161, %v7055
  %7253 = vst.msk [vmem:[%s3 + $0x16c] sm:$0xf] %vm7161, %v7056
  %7254 = vst.msk [vmem:[%s3 + $0x170] sm:$0xf] %vm7161, %v7057
  %7255 = vst.msk [vmem:[%s3 + $0x174] sm:$0xf] %vm7161, %v7058
  %7256 = vst.msk [vmem:[%s3 + $0x178] sm:$0xf] %vm7161, %v7059
  %7257 = vst.msk [vmem:[%s3 + $0x17c] sm:$0xf] %vm7161, %v7060
  %7258 = vst.msk [vmem:[%s3 + $0x180] sm:$0xf] %vm7161, %v7061
  %7259 = vst.msk [vmem:[%s3 + $0x184] sm:$0xf] %vm7161, %v7062
  %7260 = vst.msk [vmem:[%s3 + $0x188] sm:$0xf] %vm7161, %v7063
  %7261 = vst.msk [vmem:[%s3 + $0x18c] sm:$0xf] %vm7161, %v7064
  %7262 = vst.msk [vmem:[%s3 + $0x190] sm:$0xf] %vm7161, %v7065
  %7263 = vst.msk [vmem:[%s3 + $0x194] sm:$0xf] %vm7161, %v7066
  %7264 = vst.msk [vmem:[%s3 + $0x198] sm:$0xf] %vm7161, %v7067
  %7265 = vst.msk [vmem:[%s3 + $0x19c] sm:$0xf] %vm7161, %v7068
  %7266 = vst.msk [vmem:[%s3 + $0x1a0] sm:$0xf] %vm7161, %v7069
  %7267 = vst.msk [vmem:[%s3 + $0x1a4] sm:$0xf] %vm7161, %v7070
  %7268 = vst.msk [vmem:[%s3 + $0x1a8] sm:$0xf] %vm7161, %v7071
  %7269 = vst.msk [vmem:[%s3 + $0x1ac] sm:$0xf] %vm7161, %v7072
  %7270 = vst.msk [vmem:[%s3 + $0x1b0] sm:$0xf] %vm7161, %v7073
  %7271 = vst.msk [vmem:[%s3 + $0x1b4] sm:$0xf] %vm7161, %v7074
  %7272 = vst.msk [vmem:[%s3 + $0x1b8] sm:$0xf] %vm7161, %v7075
  %7273 = vst.msk [vmem:[%s3 + $0x1bc] sm:$0xf] %vm7161, %v7076
  %7274 = vst.msk [vmem:[%s3 + $0x1c0] sm:$0xf] %vm7161, %v7077
  %7275 = vst.msk [vmem:[%s3 + $0x1c4] sm:$0xf] %vm7161, %v7078
  %7276 = vst.msk [vmem:[%s3 + $0x1c8] sm:$0xf] %vm7161, %v7079
  %7277 = vst.msk [vmem:[%s3 + $0x1cc] sm:$0xf] %vm7161, %v7080
  %7278 = vst.msk [vmem:[%s3 + $0x1d0] sm:$0xf] %vm7161, %v7081
  %7279 = vst.msk [vmem:[%s3 + $0x1d4] sm:$0xf] %vm7161, %v7082
  %7280 = vst.msk [vmem:[%s3 + $0x1d8] sm:$0xf] %vm7161, %v7083
  %7281 = vst.msk [vmem:[%s3 + $0x1dc] sm:$0xf] %vm7161, %v7084
  %7282 = vst.msk [vmem:[%s3 + $0x1e0] sm:$0xf] %vm7161, %v7085
  %7283 = vst.msk [vmem:[%s3 + $0x1e4] sm:$0xf] %vm7161, %v7086
  %7284 = vst.msk [vmem:[%s3 + $0x1e8] sm:$0xf] %vm7161, %v7087
  %7285 = vst.msk [vmem:[%s3 + $0x1ec] sm:$0xf] %vm7161, %v7088
  %7286 = vst.msk [vmem:[%s3 + $0x1f0] sm:$0xf] %vm7161, %v7089
  %7287 = vst.msk [vmem:[%s3 + $0x1f4] sm:$0xf] %vm7161, %v7090
  %7288 = vst.msk [vmem:[%s3 + $0x1f8] sm:$0xf] %vm7161, %v7091
  %7289 = vst.msk [vmem:[%s3 + $0x1fc] sm:$0xf] %vm7161, %v7092
  %7290 = vst.msk [vmem:[%s3 + $0x200] sm:$0xf] %vm7161, %v7093
  %7291 = vst.msk [vmem:[%s3 + $0x204] sm:$0xf] %vm7161, %v7094
  %7292 = vst.msk [vmem:[%s3 + $0x208] sm:$0xf] %vm7161, %v7095
  %7293 = vst.msk [vmem:[%s3 + $0x20c] sm:$0xf] %vm7161, %v7096
  %7294 = vst.msk [vmem:[%s3 + $0x210] sm:$0xf] %vm7161, %v7097
  %7295 = vst.msk [vmem:[%s3 + $0x214] sm:$0xf] %vm7161, %v7098
  %7296 = vst.msk [vmem:[%s3 + $0x218] sm:$0xf] %vm7161, %v7099
  %7297 = vst.msk [vmem:[%s3 + $0x21c] sm:$0xf] %vm7161, %v7100
  %7298 = vst.msk [vmem:[%s3 + $0x220] sm:$0xf] %vm7161, %v7101
  %7299 = vst.msk [vmem:[%s3 + $0x224] sm:$0xf] %vm7161, %v7102
  %7300 = vst.msk [vmem:[%s3 + $0x228] sm:$0xf] %vm7161, %v7103
  %7301 = vst.msk [vmem:[%s3 + $0x22c] sm:$0xf] %vm7161, %v7104
  %7302 = vst.msk [vmem:[%s3 + $0x230] sm:$0xf] %vm7161, %v7105
  %7303 = vst.msk [vmem:[%s3 + $0x234] sm:$0xf] %vm7161, %v7106
  %7304 = vst.msk [vmem:[%s3 + $0x238] sm:$0xf] %vm7161, %v7107
  %7305 = vst.msk [vmem:[%s3 + $0x23c] sm:$0xf] %vm7161, %v7108
  %7306 = vst.msk [vmem:[%s3 + $0x240] sm:$0xf] %vm7161, %v7109
  %7307 = vst.msk [vmem:[%s3 + $0x244] sm:$0xf] %vm7161, %v7110
  %7308 = vst.msk [vmem:[%s3 + $0x248] sm:$0xf] %vm7161, %v7111
  %7309 = vst.msk [vmem:[%s3 + $0x24c] sm:$0xf] %vm7161, %v7112
  %7310 = vst.msk [vmem:[%s3 + $0x250] sm:$0xf] %vm7161, %v7113
  %7311 = vst.msk [vmem:[%s3 + $0x254] sm:$0xf] %vm7161, %v7114
  %7312 = vst.msk [vmem:[%s3 + $0x258] sm:$0xf] %vm7161, %v7115
  %7313 = vst.msk [vmem:[%s3 + $0x25c] sm:$0xf] %vm7161, %v7116
  %7314 = vst.msk [vmem:[%s3 + $0x260] sm:$0xf] %vm7161, %v7117
  %7315 = vst.msk [vmem:[%s3 + $0x264] sm:$0xf] %vm7161, %v7118
  %7316 = vst.msk [vmem:[%s3 + $0x268] sm:$0xf] %vm7161, %v7119
  %7317 = vst.msk [vmem:[%s3 + $0x26c] sm:$0xf] %vm7161, %v7120
  %7318 = vst.msk [vmem:[%s3 + $0x270] sm:$0xf] %vm7161, %v7121
  %7319 = vst.msk [vmem:[%s3 + $0x274] sm:$0xf] %vm7161, %v7122
  %7320 = vst.msk [vmem:[%s3 + $0x278] sm:$0xf] %vm7161, %v7123
  %7321 = vst.msk [vmem:[%s3 + $0x27c] sm:$0xf] %vm7161, %v7124
  %7322 = vst.msk [vmem:[%s3 + $0x280] sm:$0xf] %vm7161, %v7125
  %7323 = vst.msk [vmem:[%s3 + $0x284] sm:$0xf] %vm7161, %v7126
  %7324 = vst.msk [vmem:[%s3 + $0x288] sm:$0xf] %vm7161, %v7127
  %7325 = vst.msk [vmem:[%s3 + $0x28c] sm:$0xf] %vm7161, %v7128
  %7326 = vst.msk [vmem:[%s3 + $0x290] sm:$0xf] %vm7161, %v7129
  %7327 = vst.msk [vmem:[%s3 + $0x294] sm:$0xf] %vm7161, %v7130
  %7328 = vst.msk [vmem:[%s3 + $0x298] sm:$0xf] %vm7161, %v7131
  %7329 = vst.msk [vmem:[%s3 + $0x29c] sm:$0xf] %vm7161, %v7132
  %7330 = vst.msk [vmem:[%s3 + $0x2a0] sm:$0xf] %vm7161, %v7133
  %7331 = vst.msk [vmem:[%s3 + $0x2a4] sm:$0xf] %vm7161, %v7134
  %7332 = vst.msk [vmem:[%s3 + $0x2a8] sm:$0xf] %vm7161, %v7135
  %7333 = vst.msk [vmem:[%s3 + $0x2ac] sm:$0xf] %vm7161, %v7136
  %7334 = vst.msk [vmem:[%s3 + $0x2b0] sm:$0xf] %vm7161, %v7137
  %7335 = vst.msk [vmem:[%s3 + $0x2b4] sm:$0xf] %vm7161, %v7138
  %7336 = vst.msk [vmem:[%s3 + $0x2b8] sm:$0xf] %vm7161, %v7139
  %7337 = vst.msk [vmem:[%s3 + $0x2bc] sm:$0xf] %vm7161, %v7140
  %7338 = vst.msk [vmem:[%s3 + $0x2c0] sm:$0xf] %vm7161, %v7141
  %7339 = vst.msk [vmem:[%s3 + $0x2c4] sm:$0xf] %vm7161, %v7142
  %7340 = vst.msk [vmem:[%s3 + $0x2c8] sm:$0xf] %vm7161, %v7143
  %7341 = vst.msk [vmem:[%s3 + $0x2cc] sm:$0xf] %vm7161, %v7144
  %7342 = vst.msk [vmem:[%s3 + $0x2d0] sm:$0xf] %vm7161, %v7145
  %7343 = vst.msk [vmem:[%s3 + $0x2d4] sm:$0xf] %vm7161, %v7146
  %7344 = vst.msk [vmem:[%s3 + $0x2d8] sm:$0xf] %vm7161, %v7147
  %7345 = vst.msk [vmem:[%s3 + $0x2dc] sm:$0xf] %vm7161, %v7148
  %7346 = vst.msk [vmem:[%s3 + $0x2e0] sm:$0xf] %vm7161, %v7149
  %7347 = vst.msk [vmem:[%s3 + $0x2e4] sm:$0xf] %vm7161, %v7150
  %7348 = vst.msk [vmem:[%s3 + $0x2e8] sm:$0xf] %vm7161, %v7151
  %7349 = vst.msk [vmem:[%s3 + $0x2ec] sm:$0xf] %vm7161, %v7152
  %7350 = vst.msk [vmem:[%s3 + $0x2f0] sm:$0xf] %vm7161, %v7153
  %7351 = vst.msk [vmem:[%s3 + $0x2f4] sm:$0xf] %vm7161, %v7154
  %7352 = vst.msk [vmem:[%s3 + $0x2f8] sm:$0xf] %vm7161, %v7155
  %7353 = vst.msk [vmem:[%s3 + $0x2fc] sm:$0xf] %vm7161, %v7156
  %7354 = vst.msk [vmem:[%s3 + $0x300] sm:$0xf] %vm7161, %v7157
  %7355 = vst.msk [vmem:[%s3 + $0x304] sm:$0xf] %vm7161, %v7158
  %7356 = vst.msk [vmem:[%s3 + $0x308] sm:$0xf] %vm7161, %v7159
  %7357 = vst.msk [vmem:[%s3 + $0x30c] sm:$0xf] %vm7161, %v7160
  // Predicated region
  $region14: #{lenet5_cifar_forward.3} parent=0 // pred_check
    _
  $region15: #{lenet5_cifar_forward.3} parent=0 // pred_check_branch
    %7359 = sbr.rel (0) target = $region17
  $region16: #{lenet5_cifar_forward.3} parent=0 // pred_region
    _
  $region17: #{lenet5_cifar_forward.3} parent=0 // pred_fallthru
    _
  // Predicated region
  $region18: #{lenet5_cifar_forward.3} parent=0 // pred_check
    _
  $region19: #{lenet5_cifar_forward.3} parent=0 // pred_check_branch
    %7361 = sbr.rel (0) target = $region21
  $region20: #{lenet5_cifar_forward.3} parent=0 // pred_region
    _
  $region21: #{lenet5_cifar_forward.3} parent=0 // pred_fallthru
    _

// kernel: lenet5_cifar_forward.4
$region0: #{lenet5_cifar_forward.4}
  #allocation0 [shape = 'u32[]', space=smem, size = 0x4, offset = 0x4, fixed_abs, tag = 'smem constant byte address 0x4 - core index']
  #allocation1 [shape = 'u32[72,128]{1,0:T(1,128)}', space=vmem, size = 0x9000, scoped, tag = 'internal scratch']
  %s0 = inlined_call_operand.vmem [shape: bf16[4,200,150], index: 0, kind: input, shape index: {}]
  %s1 = inlined_call_operand.vmem [shape: bf16[150,16], index: 1, kind: input, shape index: {}]
  %s2 = inlined_call_operand.vmem [shape: f32[1,16], index: 2, kind: input, shape index: {}]
  %s3 = inlined_call_operand.vmem [shape: bf16[200,16], index: 3, kind: output, shape index: {}]
  %s4 = sld [smem:[#allocation0]]
  $region22: #{lenet5_cifar_forward.4} parent=0
    _
  %s6 = ssub.s32 1, %s4
  %s7 = scalar_select 0, %s6, %s4
  // Predicated region
  $region2: #{lenet5_cifar_forward.4} parent=0 // pred_check
    _
  $region3: #{lenet5_cifar_forward.4} parent=0 // pred_check_branch
    %9 = sbr.rel (0) target = $region5
  $region4: #{lenet5_cifar_forward.4} parent=0 // pred_region
    _
  $region5: #{lenet5_cifar_forward.4} parent=0 // pred_fallthru
    _
  // Predicated region
  $region6: #{lenet5_cifar_forward.4} parent=0 // pred_check
    _
  $region7: #{lenet5_cifar_forward.4} parent=0 // pred_check_branch
    %11 = sbr.rel (0) target = $region9
  $region8: #{lenet5_cifar_forward.4} parent=0 // pred_region
    _
  $region9: #{lenet5_cifar_forward.4} parent=0 // pred_fallthru
    _
  // Predicated region
  $region10: #{lenet5_cifar_forward.4} parent=0 // pred_check
    _
  $region11: #{lenet5_cifar_forward.4} parent=0 // pred_check_branch
    %13 = sbr.rel (0) target = $region13
  $region12: #{lenet5_cifar_forward.4} parent=0 // pred_region
    _
  $region13: #{lenet5_cifar_forward.4} parent=0 // pred_fallthru
    _
  %v15 = vld [vmem:[%s1] sm:$0xf]
  %v16 = vld [vmem:[%s1 + $0x4] sm:$0xf]
  %v17 = vld [vmem:[%s1 + $0x8] sm:$0xf]
  %v18 = vld [vmem:[%s1 + $0xc] sm:$0xf]
  %v19 = vld [vmem:[%s1 + $0x10] sm:$0xf]
  %v20 = vld [vmem:[%s1 + $0x14] sm:$0xf]
  %v21 = vld [vmem:[%s1 + $0x18] sm:$0xf]
  %v22 = vld [vmem:[%s1 + $0x1c] sm:$0xf]
  %v23 = vld [vmem:[%s1 + $0x20] sm:$0xf]
  %v24 = vld [vmem:[%s1 + $0x24] sm:$0xf]
  %v25 = vld [vmem:[%s1 + $0x28] sm:$0xf]
  %v26 = vld [vmem:[%s1 + $0x2c] sm:$0xf]
  %v27 = vld [vmem:[%s1 + $0x30] sm:$0xf]
  %v28 = vld [vmem:[%s1 + $0x34] sm:$0xf]
  %v29 = vld [vmem:[%s1 + $0x38] sm:$0xf]
  %v30 = vld [vmem:[%s1 + $0x3c] sm:$0xf]
  %v31 = vld [vmem:[%s1 + $0x40] sm:$0xf]
  %v32 = vld [vmem:[%s1 + $0x44] sm:$0xf]
  %v33 = vld [vmem:[%s1 + $0x48] sm:$0x7]
  %v34 = vld [vmem:[%s0] sm:$0xff]
  %v35 = vld [vmem:[%s0 + $0x8] sm:$0xff]
  %v36 = vld [vmem:[%s0 + $0x10] sm:$0xff]
  %v37 = vld [vmem:[%s0 + $0x18] sm:$0xff]
  %v38 = vld [vmem:[%s0 + $0x20] sm:$0xff]
  %v39 = vld [vmem:[%s0 + $0x28] sm:$0xff]
  %v40 = vld [vmem:[%s0 + $0x30] sm:$0xff]
  %v41 = vld [vmem:[%s0 + $0x38] sm:$0xff]
  %v42 = vld [vmem:[%s0 + $0x40] sm:$0xff]
  %v43 = vld [vmem:[%s0 + $0x48] sm:$0xff]
  %v44 = vld [vmem:[%s0 + $0x50] sm:$0xff]
  %v45 = vld [vmem:[%s0 + $0x58] sm:$0xff]
  %v46 = vld [vmem:[%s0 + $0x60] sm:$0xff]
  %v47 = vld [vmem:[%s0 + $0x68] sm:$0xff]
  %v48 = vld [vmem:[%s0 + $0x70] sm:$0xff]
  %v49 = vld [vmem:[%s0 + $0x78] sm:$0xff]
  %v50 = vld [vmem:[%s0 + $0x80] sm:$0xff]
  %v51 = vld [vmem:[%s0 + $0x88] sm:$0xff]
  %v52 = vld [vmem:[%s0 + $0x90] sm:$0xff]
  %v53 = vld [vmem:[%s0 + $0x98] sm:$0xff]
  %v54 = vld [vmem:[%s0 + $0xa0] sm:$0xff]
  %v55 = vld [vmem:[%s0 + $0xa8] sm:$0xff]
  %v56 = vld [vmem:[%s0 + $0xb0] sm:$0xff]
  %v57 = vld [vmem:[%s0 + $0xb8] sm:$0xff]
  %v58 = vld [vmem:[%s0 + $0xc0] sm:$0xff]
  %v84 = vunpack.c.l.b16 %v34
  %v85 = vunpack.c.h.b16 %v34
  %v86 = vunpack.c.l.b16 %v35
  %v87 = vunpack.c.h.b16 %v35
  %v88 = vunpack.c.l.b16 %v36
  %v89 = vunpack.c.h.b16 %v36
  %v90 = vunpack.c.l.b16 %v37
  %v91 = vunpack.c.h.b16 %v37
  %v92 = vunpack.c.l.b16 %v38
  %v93 = vunpack.c.h.b16 %v38
  %v94 = vunpack.c.l.b16 %v39
  %v95 = vunpack.c.h.b16 %v39
  %v96 = vunpack.c.l.b16 %v40
  %v97 = vunpack.c.h.b16 %v40
  %v98 = vunpack.c.l.b16 %v41
  %v99 = vunpack.c.h.b16 %v41
  %v100 = vunpack.c.l.b16 %v42
  %v101 = vunpack.c.h.b16 %v42
  %v102 = vunpack.c.l.b16 %v43
  %v103 = vunpack.c.h.b16 %v43
  %v104 = vunpack.c.l.b16 %v44
  %v105 = vunpack.c.h.b16 %v44
  %v106 = vunpack.c.l.b16 %v45
  %v107 = vunpack.c.h.b16 %v45
  %v108 = vunpack.c.l.b16 %v46
  %v109 = vunpack.c.h.b16 %v46
  %v110 = vunpack.c.l.b16 %v47
  %v111 = vunpack.c.h.b16 %v47
  %v112 = vunpack.c.l.b16 %v48
  %v113 = vunpack.c.h.b16 %v48
  %v114 = vunpack.c.l.b16 %v49
  %v115 = vunpack.c.h.b16 %v49
  %v116 = vunpack.c.l.b16 %v50
  %v117 = vunpack.c.h.b16 %v50
  %v118 = vunpack.c.l.b16 %v51
  %v119 = vunpack.c.h.b16 %v51
  %v120 = vunpack.c.l.b16 %v52
  %v121 = vunpack.c.h.b16 %v52
  %v122 = vunpack.c.l.b16 %v53
  %v123 = vunpack.c.h.b16 %v53
  %v124 = vunpack.c.l.b16 %v54
  %v125 = vunpack.c.h.b16 %v54
  %v126 = vunpack.c.l.b16 %v55
  %v127 = vunpack.c.h.b16 %v55
  %v128 = vunpack.c.l.b16 %v56
  %v129 = vunpack.c.h.b16 %v56
  %v130 = vunpack.c.l.b16 %v57
  %v131 = vunpack.c.h.b16 %v57
  %v132 = vunpack.c.l.b16 %v58
  %v133 = vunpack.c.h.b16 %v58
  %v134 = vpack.c.b16 %v86, %v84
  %v135 = vpack.c.b16 %v87, %v85
  %v136 = vpack.c.b16 %v90, %v88
  %v137 = vpack.c.b16 %v91, %v89
  %v138 = vpack.c.b16 %v94, %v92
  %v139 = vpack.c.b16 %v95, %v93
  %v140 = vpack.c.b16 %v98, %v96
  %v141 = vpack.c.b16 %v99, %v97
  %v142 = vpack.c.b16 %v102, %v100
  %v143 = vpack.c.b16 %v103, %v101
  %v144 = vpack.c.b16 %v106, %v104
  %v145 = vpack.c.b16 %v107, %v105
  %v146 = vpack.c.b16 %v110, %v108
  %v147 = vpack.c.b16 %v111, %v109
  %v148 = vpack.c.b16 %v114, %v112
  %v149 = vpack.c.b16 %v115, %v113
  %v150 = vpack.c.b16 %v118, %v116
  %v151 = vpack.c.b16 %v119, %v117
  %v152 = vpack.c.b16 %v122, %v120
  %v153 = vpack.c.b16 %v123, %v121
  %v154 = vpack.c.b16 %v126, %v124
  %v155 = vpack.c.b16 %v127, %v125
  %v156 = vpack.c.b16 %v130, %v128
  %v157 = vpack.c.b16 %v131, %v129
  %v158 = vpack.c.b16 %v132, %v132
  %v159 = vpack.c.b16 %v133, %v133
  %v192 = vunpack.c.l.b16 %v15
  %v193 = vunpack.c.l.b16 %v16
  %v194 = vunpack.c.l.b16 %v17
  %v195 = vunpack.c.l.b16 %v18
  %v196 = vunpack.c.l.b16 %v19
  %v197 = vunpack.c.l.b16 %v20
  %v198 = vunpack.c.l.b16 %v21
  %v199 = vunpack.c.l.b16 %v22
  %v200 = vunpack.c.l.b16 %v23
  %v201 = vunpack.c.l.b16 %v24
  %v202 = vunpack.c.l.b16 %v25
  %v203 = vunpack.c.l.b16 %v26
  %v204 = vunpack.c.l.b16 %v27
  %v205 = vunpack.c.l.b16 %v28
  %v206 = vunpack.c.l.b16 %v29
  %v207 = vunpack.c.l.b16 %v30
  %v208 = vunpack.c.l.b16 %v31
  %v209 = vunpack.c.l.b16 %v32
  %v210 = vunpack.c.l.b16 %v33
  %v211 = vpack.c.b16 %v193, %v192
  %v212 = vpack.c.b16 %v195, %v194
  %v213 = vpack.c.b16 %v197, %v196
  %v214 = vpack.c.b16 %v199, %v198
  %v215 = vpack.c.b16 %v201, %v200
  %v216 = vpack.c.b16 %v203, %v202
  %v217 = vpack.c.b16 %v205, %v204
  %v218 = vpack.c.b16 %v207, %v206
  %v219 = vpack.c.b16 %v209, %v208
  %v220 = vpack.c.b16 %v210, %v210
  %vm230 = vcmask 179200
  %v232 = vsel %vm230, %v135, 0
  %v235 = vsel %vm230, %v137, 0
  %v238 = vsel %vm230, %v139, 0
  %v241 = vsel %vm230, %v141, 0
  %v244 = vsel %vm230, %v143, 0
  %v247 = vsel %vm230, %v145, 0
  %v250 = vsel %vm230, %v147, 0
  %v253 = vsel %vm230, %v149, 0
  %v256 = vsel %vm230, %v151, 0
  %v259 = vsel %vm230, %v153, 0
  %v262 = vsel %vm230, %v155, 0
  %v265 = vsel %vm230, %v157, 0
  %v268 = vsel %vm230, %v159, 0
  %vm270 = vcmask 1042432
  %v272 = vsel %vm270, %v220, 0
  %274 = vmatpush.bf16.msra.mxu0 %v218
  %275 = vmatpush.bf16.msra.mxu0 %v217
  %276 = vmatpush.bf16.msra.mxu0 %v216
  %277 = vmatpush.bf16.msra.mxu0 %v215
  %278 = vmatpush.bf16.msra.mxu0 %v214
  %279 = vmatpush.bf16.msra.mxu0 %v213
  %280 = vmatpush.bf16.msra.mxu0 %v212
  %281 = vmatpush.bf16.msra.mxu0 %v211
  %282 = vmatmul.bf16.gmra.mxu0 %v134
  %v283 = vpop.f32.mrf.mxu0
  %v284 = vadd.f32 0.0, %v283
  %v285 = vpop.f32.mrf.mxu0
  %v286 = vadd.f32 0.0, %v285
  %287 = vmatmul.bf16.gmra.mxu0 %v136
  %v288 = vpop.f32.mrf.mxu0
  %v289 = vadd.f32 0.0, %v288
  %v290 = vpop.f32.mrf.mxu0
  %v291 = vadd.f32 0.0, %v290
  %292 = vmatmul.bf16.gmra.mxu0 %v138
  %v293 = vpop.f32.mrf.mxu0
  %v294 = vadd.f32 0.0, %v293
  %v295 = vpop.f32.mrf.mxu0
  %v296 = vadd.f32 0.0, %v295
  %297 = vmatmul.bf16.gmra.mxu0 %v140
  %v298 = vpop.f32.mrf.mxu0
  %v299 = vadd.f32 0.0, %v298
  %v300 = vpop.f32.mrf.mxu0
  %v301 = vadd.f32 0.0, %v300
  %302 = vmatmul.bf16.gmra.mxu0 %v142
  %v303 = vpop.f32.mrf.mxu0
  %v304 = vadd.f32 0.0, %v303
  %v305 = vpop.f32.mrf.mxu0
  %v306 = vadd.f32 0.0, %v305
  %307 = vmatmul.bf16.gmra.mxu0 %v144
  %v308 = vpop.f32.mrf.mxu0
  %v309 = vadd.f32 0.0, %v308
  %v310 = vpop.f32.mrf.mxu0
  %v311 = vadd.f32 0.0, %v310
  %312 = vmatmul.bf16.gmra.mxu0 %v146
  %v313 = vpop.f32.mrf.mxu0
  %v314 = vadd.f32 0.0, %v313
  %v315 = vpop.f32.mrf.mxu0
  %v316 = vadd.f32 0.0, %v315
  %317 = vmatmul.bf16.gmra.mxu0 %v148
  %v318 = vpop.f32.mrf.mxu0
  %v319 = vadd.f32 0.0, %v318
  %v320 = vpop.f32.mrf.mxu0
  %v321 = vadd.f32 0.0, %v320
  %322 = vmatmul.bf16.gmra.mxu0 %v150
  %v323 = vpop.f32.mrf.mxu0
  %v324 = vadd.f32 0.0, %v323
  %v325 = vpop.f32.mrf.mxu0
  %v326 = vadd.f32 0.0, %v325
  %327 = vmatmul.bf16.gmra.mxu0 %v152
  %v328 = vpop.f32.mrf.mxu0
  %v329 = vadd.f32 0.0, %v328
  %v330 = vpop.f32.mrf.mxu0
  %v331 = vadd.f32 0.0, %v330
  %332 = vmatmul.bf16.gmra.mxu0 %v154
  %v333 = vpop.f32.mrf.mxu0
  %v334 = vadd.f32 0.0, %v333
  %v335 = vpop.f32.mrf.mxu0
  %v336 = vadd.f32 0.0, %v335
  %337 = vmatmul.bf16.gmra.mxu0 %v156
  %v338 = vpop.f32.mrf.mxu0
  %v339 = vadd.f32 0.0, %v338
  %v340 = vpop.f32.mrf.mxu0
  %v341 = vadd.f32 0.0, %v340
  %342 = vmatmul.bf16.gmra.mxu0 %v158
  %v343 = vpop.f32.mrf.mxu0
  %v344 = vadd.f32 0.0, %v343
  %v345 = vpop.f32.mrf.mxu0
  %346 = vdwg.mxu0
  %347 = vmatpush.bf16.msra.mxu0 0
  %348 = vmatpush.bf16.msra.mxu0 0
  %349 = vmatpush.bf16.msra.mxu0 0
  %350 = vmatpush.bf16.msra.mxu0 0
  %351 = vmatpush.bf16.msra.mxu0 0
  %352 = vmatpush.bf16.msra.mxu0 0
  %353 = vmatpush.bf16.msra.mxu0 %v272
  %354 = vmatpush.bf16.msra.mxu0 %v219
  %355 = vmatmul.bf16.gmra.mxu0 %v232
  %v356 = vpop.f32.mrf.mxu0
  %v357 = vadd.f32 %v284, %v356
  %v358 = vpop.f32.mrf.mxu0
  %v359 = vadd.f32 %v286, %v358
  %360 = vmatmul.bf16.gmra.mxu0 %v235
  %v361 = vpop.f32.mrf.mxu0
  %v362 = vadd.f32 %v289, %v361
  %v363 = vpop.f32.mrf.mxu0
  %v364 = vadd.f32 %v291, %v363
  %365 = vmatmul.bf16.gmra.mxu0 %v238
  %v366 = vpop.f32.mrf.mxu0
  %v367 = vadd.f32 %v294, %v366
  %v368 = vpop.f32.mrf.mxu0
  %v369 = vadd.f32 %v296, %v368
  %370 = vmatmul.bf16.gmra.mxu0 %v241
  %v371 = vpop.f32.mrf.mxu0
  %v372 = vadd.f32 %v299, %v371
  %v373 = vpop.f32.mrf.mxu0
  %v374 = vadd.f32 %v301, %v373
  %375 = vmatmul.bf16.gmra.mxu0 %v244
  %v376 = vpop.f32.mrf.mxu0
  %v377 = vadd.f32 %v304, %v376
  %v378 = vpop.f32.mrf.mxu0
  %v379 = vadd.f32 %v306, %v378
  %380 = vmatmul.bf16.gmra.mxu0 %v247
  %v381 = vpop.f32.mrf.mxu0
  %v382 = vadd.f32 %v309, %v381
  %v383 = vpop.f32.mrf.mxu0
  %v384 = vadd.f32 %v311, %v383
  %385 = vmatmul.bf16.gmra.mxu0 %v250
  %v386 = vpop.f32.mrf.mxu0
  %v387 = vadd.f32 %v314, %v386
  %v388 = vpop.f32.mrf.mxu0
  %v389 = vadd.f32 %v316, %v388
  %390 = vmatmul.bf16.gmra.mxu0 %v253
  %v391 = vpop.f32.mrf.mxu0
  %v392 = vadd.f32 %v319, %v391
  %v393 = vpop.f32.mrf.mxu0
  %v394 = vadd.f32 %v321, %v393
  %395 = vmatmul.bf16.gmra.mxu0 %v256
  %v396 = vpop.f32.mrf.mxu0
  %v397 = vadd.f32 %v324, %v396
  %v398 = vpop.f32.mrf.mxu0
  %v399 = vadd.f32 %v326, %v398
  %400 = vmatmul.bf16.gmra.mxu0 %v259
  %v401 = vpop.f32.mrf.mxu0
  %v402 = vadd.f32 %v329, %v401
  %v403 = vpop.f32.mrf.mxu0
  %v404 = vadd.f32 %v331, %v403
  %405 = vmatmul.bf16.gmra.mxu0 %v262
  %v406 = vpop.f32.mrf.mxu0
  %v407 = vadd.f32 %v334, %v406
  %v408 = vpop.f32.mrf.mxu0
  %v409 = vadd.f32 %v336, %v408
  %410 = vmatmul.bf16.gmra.mxu0 %v265
  %v411 = vpop.f32.mrf.mxu0
  %v412 = vadd.f32 %v339, %v411
  %v413 = vpop.f32.mrf.mxu0
  %v414 = vadd.f32 %v341, %v413
  %415 = vmatmul.bf16.gmra.mxu0 %v268
  %v416 = vpop.f32.mrf.mxu0
  %v417 = vadd.f32 %v344, %v416
  %v418 = vpop.f32.mrf.mxu0
  %419 = vdwg.mxu0
  %s420 = scalar_lea.vmem %s0, 200
  %v421 = vld [vmem:[%s420] sm:$0xff]
  %v422 = vld [vmem:[%s420 + $0x8] sm:$0xff]
  %v423 = vld [vmem:[%s420 + $0x10] sm:$0xff]
  %v424 = vld [vmem:[%s420 + $0x18] sm:$0xff]
  %v425 = vld [vmem:[%s420 + $0x20] sm:$0xff]
  %v426 = vld [vmem:[%s420 + $0x28] sm:$0xff]
  %v427 = vld [vmem:[%s420 + $0x30] sm:$0xff]
  %v428 = vld [vmem:[%s420 + $0x38] sm:$0xff]
  %v429 = vld [vmem:[%s420 + $0x40] sm:$0xff]
  %v430 = vld [vmem:[%s420 + $0x48] sm:$0xff]
  %v431 = vld [vmem:[%s420 + $0x50] sm:$0xff]
  %v432 = vld [vmem:[%s420 + $0x58] sm:$0xff]
  %v433 = vld [vmem:[%s420 + $0x60] sm:$0xff]
  %v434 = vld [vmem:[%s420 + $0x68] sm:$0xff]
  %v435 = vld [vmem:[%s420 + $0x70] sm:$0xff]
  %v436 = vld [vmem:[%s420 + $0x78] sm:$0xff]
  %v437 = vld [vmem:[%s420 + $0x80] sm:$0xff]
  %v438 = vld [vmem:[%s420 + $0x88] sm:$0xff]
  %v439 = vld [vmem:[%s420 + $0x90] sm:$0xff]
  %v440 = vld [vmem:[%s420 + $0x98] sm:$0xff]
  %v441 = vld [vmem:[%s420 + $0xa0] sm:$0xff]
  %v442 = vld [vmem:[%s420 + $0xa8] sm:$0xff]
  %v443 = vld [vmem:[%s420 + $0xb0] sm:$0xff]
  %v444 = vld [vmem:[%s420 + $0xb8] sm:$0xff]
  %v445 = vld [vmem:[%s420 + $0xc0] sm:$0xff]
  %v471 = vunpack.c.l.b16 %v421
  %v472 = vunpack.c.h.b16 %v421
  %v473 = vunpack.c.l.b16 %v422
  %v474 = vunpack.c.h.b16 %v422
  %v475 = vunpack.c.l.b16 %v423
  %v476 = vunpack.c.h.b16 %v423
  %v477 = vunpack.c.l.b16 %v424
  %v478 = vunpack.c.h.b16 %v424
  %v479 = vunpack.c.l.b16 %v425
  %v480 = vunpack.c.h.b16 %v425
  %v481 = vunpack.c.l.b16 %v426
  %v482 = vunpack.c.h.b16 %v426
  %v483 = vunpack.c.l.b16 %v427
  %v484 = vunpack.c.h.b16 %v427
  %v485 = vunpack.c.l.b16 %v428
  %v486 = vunpack.c.h.b16 %v428
  %v487 = vunpack.c.l.b16 %v429
  %v488 = vunpack.c.h.b16 %v429
  %v489 = vunpack.c.l.b16 %v430
  %v490 = vunpack.c.h.b16 %v430
  %v491 = vunpack.c.l.b16 %v431
  %v492 = vunpack.c.h.b16 %v431
  %v493 = vunpack.c.l.b16 %v432
  %v494 = vunpack.c.h.b16 %v432
  %v495 = vunpack.c.l.b16 %v433
  %v496 = vunpack.c.h.b16 %v433
  %v497 = vunpack.c.l.b16 %v434
  %v498 = vunpack.c.h.b16 %v434
  %v499 = vunpack.c.l.b16 %v435
  %v500 = vunpack.c.h.b16 %v435
  %v501 = vunpack.c.l.b16 %v436
  %v502 = vunpack.c.h.b16 %v436
  %v503 = vunpack.c.l.b16 %v437
  %v504 = vunpack.c.h.b16 %v437
  %v505 = vunpack.c.l.b16 %v438
  %v506 = vunpack.c.h.b16 %v438
  %v507 = vunpack.c.l.b16 %v439
  %v508 = vunpack.c.h.b16 %v439
  %v509 = vunpack.c.l.b16 %v440
  %v510 = vunpack.c.h.b16 %v440
  %v511 = vunpack.c.l.b16 %v441
  %v512 = vunpack.c.h.b16 %v441
  %v513 = vunpack.c.l.b16 %v442
  %v514 = vunpack.c.h.b16 %v442
  %v515 = vunpack.c.l.b16 %v443
  %v516 = vunpack.c.h.b16 %v443
  %v517 = vunpack.c.l.b16 %v444
  %v518 = vunpack.c.h.b16 %v444
  %v519 = vunpack.c.l.b16 %v445
  %v520 = vunpack.c.h.b16 %v445
  %v521 = vpack.c.b16 %v473, %v471
  %v522 = vpack.c.b16 %v474, %v472
  %v523 = vpack.c.b16 %v477, %v475
  %v524 = vpack.c.b16 %v478, %v476
  %v525 = vpack.c.b16 %v481, %v479
  %v526 = vpack.c.b16 %v482, %v480
  %v527 = vpack.c.b16 %v485, %v483
  %v528 = vpack.c.b16 %v486, %v484
  %v529 = vpack.c.b16 %v489, %v487
  %v530 = vpack.c.b16 %v490, %v488
  %v531 = vpack.c.b16 %v493, %v491
  %v532 = vpack.c.b16 %v494, %v492
  %v533 = vpack.c.b16 %v497, %v495
  %v534 = vpack.c.b16 %v498, %v496
  %v535 = vpack.c.b16 %v501, %v499
  %v536 = vpack.c.b16 %v502, %v500
  %v537 = vpack.c.b16 %v505, %v503
  %v538 = vpack.c.b16 %v506, %v504
  %v539 = vpack.c.b16 %v509, %v507
  %v540 = vpack.c.b16 %v510, %v508
  %v541 = vpack.c.b16 %v513, %v511
  %v542 = vpack.c.b16 %v514, %v512
  %v543 = vpack.c.b16 %v517, %v515
  %v544 = vpack.c.b16 %v518, %v516
  %v545 = vpack.c.b16 %v519, %v519
  %v546 = vpack.c.b16 %v520, %v520
  %v561 = vsel %vm230, %v522, 0
  %v564 = vsel %vm230, %v524, 0
  %v567 = vsel %vm230, %v526, 0
  %v570 = vsel %vm230, %v528, 0
  %v573 = vsel %vm230, %v530, 0
  %v576 = vsel %vm230, %v532, 0
  %v579 = vsel %vm230, %v534, 0
  %v582 = vsel %vm230, %v536, 0
  %v585 = vsel %vm230, %v538, 0
  %v588 = vsel %vm230, %v540, 0
  %v591 = vsel %vm230, %v542, 0
  %v594 = vsel %vm230, %v544, 0
  %v597 = vsel %vm230, %v546, 0
  %599 = vmatpush.bf16.msra.mxu0 %v218
  %600 = vmatpush.bf16.msra.mxu0 %v217
  %601 = vmatpush.bf16.msra.mxu0 %v216
  %602 = vmatpush.bf16.msra.mxu0 %v215
  %603 = vmatpush.bf16.msra.mxu0 %v214
  %604 = vmatpush.bf16.msra.mxu0 %v213
  %605 = vmatpush.bf16.msra.mxu0 %v212
  %606 = vmatpush.bf16.msra.mxu0 %v211
  %607 = vmatmul.bf16.gmra.mxu0 %v521
  %v608 = vpop.f32.mrf.mxu0
  %v609 = vadd.f32 0.0, %v608
  %v610 = vpop.f32.mrf.mxu0
  %v611 = vadd.f32 0.0, %v610
  %612 = vmatmul.bf16.gmra.mxu0 %v523
  %v613 = vpop.f32.mrf.mxu0
  %v614 = vadd.f32 0.0, %v613
  %v615 = vpop.f32.mrf.mxu0
  %v616 = vadd.f32 0.0, %v615
  %617 = vmatmul.bf16.gmra.mxu0 %v525
  %v618 = vpop.f32.mrf.mxu0
  %v619 = vadd.f32 0.0, %v618
  %v620 = vpop.f32.mrf.mxu0
  %v621 = vadd.f32 0.0, %v620
  %622 = vmatmul.bf16.gmra.mxu0 %v527
  %v623 = vpop.f32.mrf.mxu0
  %v624 = vadd.f32 0.0, %v623
  %v625 = vpop.f32.mrf.mxu0
  %v626 = vadd.f32 0.0, %v625
  %627 = vmatmul.bf16.gmra.mxu0 %v529
  %v628 = vpop.f32.mrf.mxu0
  %v629 = vadd.f32 0.0, %v628
  %v630 = vpop.f32.mrf.mxu0
  %v631 = vadd.f32 0.0, %v630
  %632 = vmatmul.bf16.gmra.mxu0 %v531
  %v633 = vpop.f32.mrf.mxu0
  %v634 = vadd.f32 0.0, %v633
  %v635 = vpop.f32.mrf.mxu0
  %v636 = vadd.f32 0.0, %v635
  %637 = vmatmul.bf16.gmra.mxu0 %v533
  %v638 = vpop.f32.mrf.mxu0
  %v639 = vadd.f32 0.0, %v638
  %v640 = vpop.f32.mrf.mxu0
  %v641 = vadd.f32 0.0, %v640
  %642 = vmatmul.bf16.gmra.mxu0 %v535
  %v643 = vpop.f32.mrf.mxu0
  %v644 = vadd.f32 0.0, %v643
  %v645 = vpop.f32.mrf.mxu0
  %v646 = vadd.f32 0.0, %v645
  %647 = vmatmul.bf16.gmra.mxu0 %v537
  %v648 = vpop.f32.mrf.mxu0
  %v649 = vadd.f32 0.0, %v648
  %v650 = vpop.f32.mrf.mxu0
  %v651 = vadd.f32 0.0, %v650
  %652 = vmatmul.bf16.gmra.mxu0 %v539
  %v653 = vpop.f32.mrf.mxu0
  %v654 = vadd.f32 0.0, %v653
  %v655 = vpop.f32.mrf.mxu0
  %v656 = vadd.f32 0.0, %v655
  %657 = vmatmul.bf16.gmra.mxu0 %v541
  %v658 = vpop.f32.mrf.mxu0
  %v659 = vadd.f32 0.0, %v658
  %v660 = vpop.f32.mrf.mxu0
  %v661 = vadd.f32 0.0, %v660
  %662 = vmatmul.bf16.gmra.mxu0 %v543
  %v663 = vpop.f32.mrf.mxu0
  %v664 = vadd.f32 0.0, %v663
  %v665 = vpop.f32.mrf.mxu0
  %v666 = vadd.f32 0.0, %v665
  %667 = vmatmul.bf16.gmra.mxu0 %v545
  %v668 = vpop.f32.mrf.mxu0
  %v669 = vadd.f32 0.0, %v668
  %v670 = vpop.f32.mrf.mxu0
  %671 = vdwg.mxu0
  %672 = vmatpush.bf16.msra.mxu0 0
  %673 = vmatpush.bf16.msra.mxu0 0
  %674 = vmatpush.bf16.msra.mxu0 0
  %675 = vmatpush.bf16.msra.mxu0 0
  %676 = vmatpush.bf16.msra.mxu0 0
  %677 = vmatpush.bf16.msra.mxu0 0
  %678 = vmatpush.bf16.msra.mxu0 %v272
  %679 = vmatpush.bf16.msra.mxu0 %v219
  %680 = vmatmul.bf16.gmra.mxu0 %v561
  %v681 = vpop.f32.mrf.mxu0
  %v682 = vadd.f32 %v609, %v681
  %v683 = vpop.f32.mrf.mxu0
  %v684 = vadd.f32 %v611, %v683
  %685 = vmatmul.bf16.gmra.mxu0 %v564
  %v686 = vpop.f32.mrf.mxu0
  %v687 = vadd.f32 %v614, %v686
  %v688 = vpop.f32.mrf.mxu0
  %v689 = vadd.f32 %v616, %v688
  %690 = vmatmul.bf16.gmra.mxu0 %v567
  %v691 = vpop.f32.mrf.mxu0
  %v692 = vadd.f32 %v619, %v691
  %v693 = vpop.f32.mrf.mxu0
  %v694 = vadd.f32 %v621, %v693
  %695 = vmatmul.bf16.gmra.mxu0 %v570
  %v696 = vpop.f32.mrf.mxu0
  %v697 = vadd.f32 %v624, %v696
  %v698 = vpop.f32.mrf.mxu0
  %v699 = vadd.f32 %v626, %v698
  %700 = vmatmul.bf16.gmra.mxu0 %v573
  %v701 = vpop.f32.mrf.mxu0
  %v702 = vadd.f32 %v629, %v701
  %v703 = vpop.f32.mrf.mxu0
  %v704 = vadd.f32 %v631, %v703
  %705 = vmatmul.bf16.gmra.mxu0 %v576
  %v706 = vpop.f32.mrf.mxu0
  %v707 = vadd.f32 %v634, %v706
  %v708 = vpop.f32.mrf.mxu0
  %v709 = vadd.f32 %v636, %v708
  %710 = vmatmul.bf16.gmra.mxu0 %v579
  %v711 = vpop.f32.mrf.mxu0
  %v712 = vadd.f32 %v639, %v711
  %v713 = vpop.f32.mrf.mxu0
  %v714 = vadd.f32 %v641, %v713
  %715 = vmatmul.bf16.gmra.mxu0 %v582
  %v716 = vpop.f32.mrf.mxu0
  %v717 = vadd.f32 %v644, %v716
  %v718 = vpop.f32.mrf.mxu0
  %v719 = vadd.f32 %v646, %v718
  %720 = vmatmul.bf16.gmra.mxu0 %v585
  %v721 = vpop.f32.mrf.mxu0
  %v722 = vadd.f32 %v649, %v721
  %v723 = vpop.f32.mrf.mxu0
  %v724 = vadd.f32 %v651, %v723
  %725 = vmatmul.bf16.gmra.mxu0 %v588
  %v726 = vpop.f32.mrf.mxu0
  %v727 = vadd.f32 %v654, %v726
  %v728 = vpop.f32.mrf.mxu0
  %v729 = vadd.f32 %v656, %v728
  %730 = vmatmul.bf16.gmra.mxu0 %v591
  %v731 = vpop.f32.mrf.mxu0
  %v732 = vadd.f32 %v659, %v731
  %v733 = vpop.f32.mrf.mxu0
  %v734 = vadd.f32 %v661, %v733
  %735 = vmatmul.bf16.gmra.mxu0 %v594
  %v736 = vpop.f32.mrf.mxu0
  %v737 = vadd.f32 %v664, %v736
  %v738 = vpop.f32.mrf.mxu0
  %v739 = vadd.f32 %v666, %v738
  %740 = vmatmul.bf16.gmra.mxu0 %v597
  %v741 = vpop.f32.mrf.mxu0
  %v742 = vadd.f32 %v669, %v741
  %v743 = vpop.f32.mrf.mxu0
  %744 = vdwg.mxu0
  %v745 = vmax.f32 %v357, %v682
  %v746 = vmax.f32 %v359, %v684
  %v747 = vmax.f32 %v362, %v687
  %v748 = vmax.f32 %v364, %v689
  %v749 = vmax.f32 %v367, %v692
  %v750 = vmax.f32 %v369, %v694
  %v751 = vmax.f32 %v372, %v697
  %v752 = vmax.f32 %v374, %v699
  %v753 = vmax.f32 %v377, %v702
  %v754 = vmax.f32 %v379, %v704
  %v755 = vmax.f32 %v382, %v707
  %v756 = vmax.f32 %v384, %v709
  %v757 = vmax.f32 %v387, %v712
  %v758 = vmax.f32 %v389, %v714
  %v759 = vmax.f32 %v392, %v717
  %v760 = vmax.f32 %v394, %v719
  %v761 = vmax.f32 %v397, %v722
  %v762 = vmax.f32 %v399, %v724
  %v763 = vmax.f32 %v402, %v727
  %v764 = vmax.f32 %v404, %v729
  %v765 = vmax.f32 %v407, %v732
  %v766 = vmax.f32 %v409, %v734
  %v767 = vmax.f32 %v412, %v737
  %v768 = vmax.f32 %v414, %v739
  %v769 = vmax.f32 %v417, %v742
  %s770 = scalar_lea.vmem %s0, 400
  %v771 = vld [vmem:[%s770] sm:$0xff]
  %v772 = vld [vmem:[%s770 + $0x8] sm:$0xff]
  %v773 = vld [vmem:[%s770 + $0x10] sm:$0xff]
  %v774 = vld [vmem:[%s770 + $0x18] sm:$0xff]
  %v775 = vld [vmem:[%s770 + $0x20] sm:$0xff]
  %v776 = vld [vmem:[%s770 + $0x28] sm:$0xff]
  %v777 = vld [vmem:[%s770 + $0x30] sm:$0xff]
  %v778 = vld [vmem:[%s770 + $0x38] sm:$0xff]
  %v779 = vld [vmem:[%s770 + $0x40] sm:$0xff]
  %v780 = vld [vmem:[%s770 + $0x48] sm:$0xff]
  %v781 = vld [vmem:[%s770 + $0x50] sm:$0xff]
  %v782 = vld [vmem:[%s770 + $0x58] sm:$0xff]
  %v783 = vld [vmem:[%s770 + $0x60] sm:$0xff]
  %v784 = vld [vmem:[%s770 + $0x68] sm:$0xff]
  %v785 = vld [vmem:[%s770 + $0x70] sm:$0xff]
  %v786 = vld [vmem:[%s770 + $0x78] sm:$0xff]
  %v787 = vld [vmem:[%s770 + $0x80] sm:$0xff]
  %v788 = vld [vmem:[%s770 + $0x88] sm:$0xff]
  %v789 = vld [vmem:[%s770 + $0x90] sm:$0xff]
  %v790 = vld [vmem:[%s770 + $0x98] sm:$0xff]
  %v791 = vld [vmem:[%s770 + $0xa0] sm:$0xff]
  %v792 = vld [vmem:[%s770 + $0xa8] sm:$0xff]
  %v793 = vld [vmem:[%s770 + $0xb0] sm:$0xff]
  %v794 = vld [vmem:[%s770 + $0xb8] sm:$0xff]
  %v795 = vld [vmem:[%s770 + $0xc0] sm:$0xff]
  %v821 = vunpack.c.l.b16 %v771
  %v822 = vunpack.c.h.b16 %v771
  %v823 = vunpack.c.l.b16 %v772
  %v824 = vunpack.c.h.b16 %v772
  %v825 = vunpack.c.l.b16 %v773
  %v826 = vunpack.c.h.b16 %v773
  %v827 = vunpack.c.l.b16 %v774
  %v828 = vunpack.c.h.b16 %v774
  %v829 = vunpack.c.l.b16 %v775
  %v830 = vunpack.c.h.b16 %v775
  %v831 = vunpack.c.l.b16 %v776
  %v832 = vunpack.c.h.b16 %v776
  %v833 = vunpack.c.l.b16 %v777
  %v834 = vunpack.c.h.b16 %v777
  %v835 = vunpack.c.l.b16 %v778
  %v836 = vunpack.c.h.b16 %v778
  %v837 = vunpack.c.l.b16 %v779
  %v838 = vunpack.c.h.b16 %v779
  %v839 = vunpack.c.l.b16 %v780
  %v840 = vunpack.c.h.b16 %v780
  %v841 = vunpack.c.l.b16 %v781
  %v842 = vunpack.c.h.b16 %v781
  %v843 = vunpack.c.l.b16 %v782
  %v844 = vunpack.c.h.b16 %v782
  %v845 = vunpack.c.l.b16 %v783
  %v846 = vunpack.c.h.b16 %v783
  %v847 = vunpack.c.l.b16 %v784
  %v848 = vunpack.c.h.b16 %v784
  %v849 = vunpack.c.l.b16 %v785
  %v850 = vunpack.c.h.b16 %v785
  %v851 = vunpack.c.l.b16 %v786
  %v852 = vunpack.c.h.b16 %v786
  %v853 = vunpack.c.l.b16 %v787
  %v854 = vunpack.c.h.b16 %v787
  %v855 = vunpack.c.l.b16 %v788
  %v856 = vunpack.c.h.b16 %v788
  %v857 = vunpack.c.l.b16 %v789
  %v858 = vunpack.c.h.b16 %v789
  %v859 = vunpack.c.l.b16 %v790
  %v860 = vunpack.c.h.b16 %v790
  %v861 = vunpack.c.l.b16 %v791
  %v862 = vunpack.c.h.b16 %v791
  %v863 = vunpack.c.l.b16 %v792
  %v864 = vunpack.c.h.b16 %v792
  %v865 = vunpack.c.l.b16 %v793
  %v866 = vunpack.c.h.b16 %v793
  %v867 = vunpack.c.l.b16 %v794
  %v868 = vunpack.c.h.b16 %v794
  %v869 = vunpack.c.l.b16 %v795
  %v870 = vunpack.c.h.b16 %v795
  %v871 = vpack.c.b16 %v823, %v821
  %v872 = vpack.c.b16 %v824, %v822
  %v873 = vpack.c.b16 %v827, %v825
  %v874 = vpack.c.b16 %v828, %v826
  %v875 = vpack.c.b16 %v831, %v829
  %v876 = vpack.c.b16 %v832, %v830
  %v877 = vpack.c.b16 %v835, %v833
  %v878 = vpack.c.b16 %v836, %v834
  %v879 = vpack.c.b16 %v839, %v837
  %v880 = vpack.c.b16 %v840, %v838
  %v881 = vpack.c.b16 %v843, %v841
  %v882 = vpack.c.b16 %v844, %v842
  %v883 = vpack.c.b16 %v847, %v845
  %v884 = vpack.c.b16 %v848, %v846
  %v885 = vpack.c.b16 %v851, %v849
  %v886 = vpack.c.b16 %v852, %v850
  %v887 = vpack.c.b16 %v855, %v853
  %v888 = vpack.c.b16 %v856, %v854
  %v889 = vpack.c.b16 %v859, %v857
  %v890 = vpack.c.b16 %v860, %v858
  %v891 = vpack.c.b16 %v863, %v861
  %v892 = vpack.c.b16 %v864, %v862
  %v893 = vpack.c.b16 %v867, %v865
  %v894 = vpack.c.b16 %v868, %v866
  %v895 = vpack.c.b16 %v869, %v869
  %v896 = vpack.c.b16 %v870, %v870
  %v911 = vsel %vm230, %v872, 0
  %v914 = vsel %vm230, %v874, 0
  %v917 = vsel %vm230, %v876, 0
  %v920 = vsel %vm230, %v878, 0
  %v923 = vsel %vm230, %v880, 0
  %v926 = vsel %vm230, %v882, 0
  %v929 = vsel %vm230, %v884, 0
  %v932 = vsel %vm230, %v886, 0
  %v935 = vsel %vm230, %v888, 0
  %v938 = vsel %vm230, %v890, 0
  %v941 = vsel %vm230, %v892, 0
  %v944 = vsel %vm230, %v894, 0
  %v947 = vsel %vm230, %v896, 0
  %949 = vmatpush.bf16.msra.mxu0 %v218
  %950 = vmatpush.bf16.msra.mxu0 %v217
  %951 = vmatpush.bf16.msra.mxu0 %v216
  %952 = vmatpush.bf16.msra.mxu0 %v215
  %953 = vmatpush.bf16.msra.mxu0 %v214
  %954 = vmatpush.bf16.msra.mxu0 %v213
  %955 = vmatpush.bf16.msra.mxu0 %v212
  %956 = vmatpush.bf16.msra.mxu0 %v211
  %957 = vmatmul.bf16.gmra.mxu0 %v871
  %v958 = vpop.f32.mrf.mxu0
  %v959 = vadd.f32 0.0, %v958
  %v960 = vpop.f32.mrf.mxu0
  %v961 = vadd.f32 0.0, %v960
  %962 = vmatmul.bf16.gmra.mxu0 %v873
  %v963 = vpop.f32.mrf.mxu0
  %v964 = vadd.f32 0.0, %v963
  %v965 = vpop.f32.mrf.mxu0
  %v966 = vadd.f32 0.0, %v965
  %967 = vmatmul.bf16.gmra.mxu0 %v875
  %v968 = vpop.f32.mrf.mxu0
  %v969 = vadd.f32 0.0, %v968
  %v970 = vpop.f32.mrf.mxu0
  %v971 = vadd.f32 0.0, %v970
  %972 = vmatmul.bf16.gmra.mxu0 %v877
  %v973 = vpop.f32.mrf.mxu0
  %v974 = vadd.f32 0.0, %v973
  %v975 = vpop.f32.mrf.mxu0
  %v976 = vadd.f32 0.0, %v975
  %977 = vmatmul.bf16.gmra.mxu0 %v879
  %v978 = vpop.f32.mrf.mxu0
  %v979 = vadd.f32 0.0, %v978
  %v980 = vpop.f32.mrf.mxu0
  %v981 = vadd.f32 0.0, %v980
  %982 = vmatmul.bf16.gmra.mxu0 %v881
  %v983 = vpop.f32.mrf.mxu0
  %v984 = vadd.f32 0.0, %v983
  %v985 = vpop.f32.mrf.mxu0
  %v986 = vadd.f32 0.0, %v985
  %987 = vmatmul.bf16.gmra.mxu0 %v883
  %v988 = vpop.f32.mrf.mxu0
  %v989 = vadd.f32 0.0, %v988
  %v990 = vpop.f32.mrf.mxu0
  %v991 = vadd.f32 0.0, %v990
  %992 = vmatmul.bf16.gmra.mxu0 %v885
  %v993 = vpop.f32.mrf.mxu0
  %v994 = vadd.f32 0.0, %v993
  %v995 = vpop.f32.mrf.mxu0
  %v996 = vadd.f32 0.0, %v995
  %997 = vmatmul.bf16.gmra.mxu0 %v887
  %v998 = vpop.f32.mrf.mxu0
  %v999 = vadd.f32 0.0, %v998
  %v1000 = vpop.f32.mrf.mxu0
  %v1001 = vadd.f32 0.0, %v1000
  %1002 = vmatmul.bf16.gmra.mxu0 %v889
  %v1003 = vpop.f32.mrf.mxu0
  %v1004 = vadd.f32 0.0, %v1003
  %v1005 = vpop.f32.mrf.mxu0
  %v1006 = vadd.f32 0.0, %v1005
  %1007 = vmatmul.bf16.gmra.mxu0 %v891
  %v1008 = vpop.f32.mrf.mxu0
  %v1009 = vadd.f32 0.0, %v1008
  %v1010 = vpop.f32.mrf.mxu0
  %v1011 = vadd.f32 0.0, %v1010
  %1012 = vmatmul.bf16.gmra.mxu0 %v893
  %v1013 = vpop.f32.mrf.mxu0
  %v1014 = vadd.f32 0.0, %v1013
  %v1015 = vpop.f32.mrf.mxu0
  %v1016 = vadd.f32 0.0, %v1015
  %1017 = vmatmul.bf16.gmra.mxu0 %v895
  %v1018 = vpop.f32.mrf.mxu0
  %v1019 = vadd.f32 0.0, %v1018
  %v1020 = vpop.f32.mrf.mxu0
  %1021 = vdwg.mxu0
  %1022 = vmatpush.bf16.msra.mxu0 0
  %1023 = vmatpush.bf16.msra.mxu0 0
  %1024 = vmatpush.bf16.msra.mxu0 0
  %1025 = vmatpush.bf16.msra.mxu0 0
  %1026 = vmatpush.bf16.msra.mxu0 0
  %1027 = vmatpush.bf16.msra.mxu0 0
  %1028 = vmatpush.bf16.msra.mxu0 %v272
  %1029 = vmatpush.bf16.msra.mxu0 %v219
  %1030 = vmatmul.bf16.gmra.mxu0 %v911
  %v1031 = vpop.f32.mrf.mxu0
  %v1032 = vadd.f32 %v959, %v1031
  %v1033 = vpop.f32.mrf.mxu0
  %v1034 = vadd.f32 %v961, %v1033
  %1035 = vmatmul.bf16.gmra.mxu0 %v914
  %v1036 = vpop.f32.mrf.mxu0
  %v1037 = vadd.f32 %v964, %v1036
  %v1038 = vpop.f32.mrf.mxu0
  %v1039 = vadd.f32 %v966, %v1038
  %1040 = vmatmul.bf16.gmra.mxu0 %v917
  %v1041 = vpop.f32.mrf.mxu0
  %v1042 = vadd.f32 %v969, %v1041
  %v1043 = vpop.f32.mrf.mxu0
  %v1044 = vadd.f32 %v971, %v1043
  %1045 = vmatmul.bf16.gmra.mxu0 %v920
  %v1046 = vpop.f32.mrf.mxu0
  %v1047 = vadd.f32 %v974, %v1046
  %v1048 = vpop.f32.mrf.mxu0
  %v1049 = vadd.f32 %v976, %v1048
  %1050 = vmatmul.bf16.gmra.mxu0 %v923
  %v1051 = vpop.f32.mrf.mxu0
  %v1052 = vadd.f32 %v979, %v1051
  %v1053 = vpop.f32.mrf.mxu0
  %v1054 = vadd.f32 %v981, %v1053
  %1055 = vmatmul.bf16.gmra.mxu0 %v926
  %v1056 = vpop.f32.mrf.mxu0
  %v1057 = vadd.f32 %v984, %v1056
  %v1058 = vpop.f32.mrf.mxu0
  %v1059 = vadd.f32 %v986, %v1058
  %1060 = vmatmul.bf16.gmra.mxu0 %v929
  %v1061 = vpop.f32.mrf.mxu0
  %v1062 = vadd.f32 %v989, %v1061
  %v1063 = vpop.f32.mrf.mxu0
  %v1064 = vadd.f32 %v991, %v1063
  %1065 = vmatmul.bf16.gmra.mxu0 %v932
  %v1066 = vpop.f32.mrf.mxu0
  %v1067 = vadd.f32 %v994, %v1066
  %v1068 = vpop.f32.mrf.mxu0
  %v1069 = vadd.f32 %v996, %v1068
  %1070 = vmatmul.bf16.gmra.mxu0 %v935
  %v1071 = vpop.f32.mrf.mxu0
  %v1072 = vadd.f32 %v999, %v1071
  %v1073 = vpop.f32.mrf.mxu0
  %v1074 = vadd.f32 %v1001, %v1073
  %1075 = vmatmul.bf16.gmra.mxu0 %v938
  %v1076 = vpop.f32.mrf.mxu0
  %v1077 = vadd.f32 %v1004, %v1076
  %v1078 = vpop.f32.mrf.mxu0
  %v1079 = vadd.f32 %v1006, %v1078
  %1080 = vmatmul.bf16.gmra.mxu0 %v941
  %v1081 = vpop.f32.mrf.mxu0
  %v1082 = vadd.f32 %v1009, %v1081
  %v1083 = vpop.f32.mrf.mxu0
  %v1084 = vadd.f32 %v1011, %v1083
  %1085 = vmatmul.bf16.gmra.mxu0 %v944
  %v1086 = vpop.f32.mrf.mxu0
  %v1087 = vadd.f32 %v1014, %v1086
  %v1088 = vpop.f32.mrf.mxu0
  %v1089 = vadd.f32 %v1016, %v1088
  %1090 = vmatmul.bf16.gmra.mxu0 %v947
  %v1091 = vpop.f32.mrf.mxu0
  %v1092 = vadd.f32 %v1019, %v1091
  %v1093 = vpop.f32.mrf.mxu0
  %1094 = vdwg.mxu0
  %v1095 = vmax.f32 %v745, %v1032
  %v1096 = vmax.f32 %v746, %v1034
  %v1097 = vmax.f32 %v747, %v1037
  %v1098 = vmax.f32 %v748, %v1039
  %v1099 = vmax.f32 %v749, %v1042
  %v1100 = vmax.f32 %v750, %v1044
  %v1101 = vmax.f32 %v751, %v1047
  %v1102 = vmax.f32 %v752, %v1049
  %v1103 = vmax.f32 %v753, %v1052
  %v1104 = vmax.f32 %v754, %v1054
  %v1105 = vmax.f32 %v755, %v1057
  %v1106 = vmax.f32 %v756, %v1059
  %v1107 = vmax.f32 %v757, %v1062
  %v1108 = vmax.f32 %v758, %v1064
  %v1109 = vmax.f32 %v759, %v1067
  %v1110 = vmax.f32 %v760, %v1069
  %v1111 = vmax.f32 %v761, %v1072
  %v1112 = vmax.f32 %v762, %v1074
  %v1113 = vmax.f32 %v763, %v1077
  %v1114 = vmax.f32 %v764, %v1079
  %v1115 = vmax.f32 %v765, %v1082
  %v1116 = vmax.f32 %v766, %v1084
  %v1117 = vmax.f32 %v767, %v1087
  %v1118 = vmax.f32 %v768, %v1089
  %v1119 = vmax.f32 %v769, %v1092
  %s1120 = scalar_lea.vmem %s0, 600
  %v1121 = vld [vmem:[%s1120] sm:$0xff]
  %v1122 = vld [vmem:[%s1120 + $0x8] sm:$0xff]
  %v1123 = vld [vmem:[%s1120 + $0x10] sm:$0xff]
  %v1124 = vld [vmem:[%s1120 + $0x18] sm:$0xff]
  %v1125 = vld [vmem:[%s1120 + $0x20] sm:$0xff]
  %v1126 = vld [vmem:[%s1120 + $0x28] sm:$0xff]
  %v1127 = vld [vmem:[%s1120 + $0x30] sm:$0xff]
  %v1128 = vld [vmem:[%s1120 + $0x38] sm:$0xff]
  %v1129 = vld [vmem:[%s1120 + $0x40] sm:$0xff]
  %v1130 = vld [vmem:[%s1120 + $0x48] sm:$0xff]
  %v1131 = vld [vmem:[%s1120 + $0x50] sm:$0xff]
  %v1132 = vld [vmem:[%s1120 + $0x58] sm:$0xff]
  %v1133 = vld [vmem:[%s1120 + $0x60] sm:$0xff]
  %v1134 = vld [vmem:[%s1120 + $0x68] sm:$0xff]
  %v1135 = vld [vmem:[%s1120 + $0x70] sm:$0xff]
  %v1136 = vld [vmem:[%s1120 + $0x78] sm:$0xff]
  %v1137 = vld [vmem:[%s1120 + $0x80] sm:$0xff]
  %v1138 = vld [vmem:[%s1120 + $0x88] sm:$0xff]
  %v1139 = vld [vmem:[%s1120 + $0x90] sm:$0xff]
  %v1140 = vld [vmem:[%s1120 + $0x98] sm:$0xff]
  %v1141 = vld [vmem:[%s1120 + $0xa0] sm:$0xff]
  %v1142 = vld [vmem:[%s1120 + $0xa8] sm:$0xff]
  %v1143 = vld [vmem:[%s1120 + $0xb0] sm:$0xff]
  %v1144 = vld [vmem:[%s1120 + $0xb8] sm:$0xff]
  %v1145 = vld [vmem:[%s1120 + $0xc0] sm:$0xff]
  %v1171 = vunpack.c.l.b16 %v1121
  %v1172 = vunpack.c.h.b16 %v1121
  %v1173 = vunpack.c.l.b16 %v1122
  %v1174 = vunpack.c.h.b16 %v1122
  %v1175 = vunpack.c.l.b16 %v1123
  %v1176 = vunpack.c.h.b16 %v1123
  %v1177 = vunpack.c.l.b16 %v1124
  %v1178 = vunpack.c.h.b16 %v1124
  %v1179 = vunpack.c.l.b16 %v1125
  %v1180 = vunpack.c.h.b16 %v1125
  %v1181 = vunpack.c.l.b16 %v1126
  %v1182 = vunpack.c.h.b16 %v1126
  %v1183 = vunpack.c.l.b16 %v1127
  %v1184 = vunpack.c.h.b16 %v1127
  %v1185 = vunpack.c.l.b16 %v1128
  %v1186 = vunpack.c.h.b16 %v1128
  %v1187 = vunpack.c.l.b16 %v1129
  %v1188 = vunpack.c.h.b16 %v1129
  %v1189 = vunpack.c.l.b16 %v1130
  %v1190 = vunpack.c.h.b16 %v1130
  %v1191 = vunpack.c.l.b16 %v1131
  %v1192 = vunpack.c.h.b16 %v1131
  %v1193 = vunpack.c.l.b16 %v1132
  %v1194 = vunpack.c.h.b16 %v1132
  %v1195 = vunpack.c.l.b16 %v1133
  %v1196 = vunpack.c.h.b16 %v1133
  %v1197 = vunpack.c.l.b16 %v1134
  %v1198 = vunpack.c.h.b16 %v1134
  %v1199 = vunpack.c.l.b16 %v1135
  %v1200 = vunpack.c.h.b16 %v1135
  %v1201 = vunpack.c.l.b16 %v1136
  %v1202 = vunpack.c.h.b16 %v1136
  %v1203 = vunpack.c.l.b16 %v1137
  %v1204 = vunpack.c.h.b16 %v1137
  %v1205 = vunpack.c.l.b16 %v1138
  %v1206 = vunpack.c.h.b16 %v1138
  %v1207 = vunpack.c.l.b16 %v1139
  %v1208 = vunpack.c.h.b16 %v1139
  %v1209 = vunpack.c.l.b16 %v1140
  %v1210 = vunpack.c.h.b16 %v1140
  %v1211 = vunpack.c.l.b16 %v1141
  %v1212 = vunpack.c.h.b16 %v1141
  %v1213 = vunpack.c.l.b16 %v1142
  %v1214 = vunpack.c.h.b16 %v1142
  %v1215 = vunpack.c.l.b16 %v1143
  %v1216 = vunpack.c.h.b16 %v1143
  %v1217 = vunpack.c.l.b16 %v1144
  %v1218 = vunpack.c.h.b16 %v1144
  %v1219 = vunpack.c.l.b16 %v1145
  %v1220 = vunpack.c.h.b16 %v1145
  %v1221 = vpack.c.b16 %v1173, %v1171
  %v1222 = vpack.c.b16 %v1174, %v1172
  %v1223 = vpack.c.b16 %v1177, %v1175
  %v1224 = vpack.c.b16 %v1178, %v1176
  %v1225 = vpack.c.b16 %v1181, %v1179
  %v1226 = vpack.c.b16 %v1182, %v1180
  %v1227 = vpack.c.b16 %v1185, %v1183
  %v1228 = vpack.c.b16 %v1186, %v1184
  %v1229 = vpack.c.b16 %v1189, %v1187
  %v1230 = vpack.c.b16 %v1190, %v1188
  %v1231 = vpack.c.b16 %v1193, %v1191
  %v1232 = vpack.c.b16 %v1194, %v1192
  %v1233 = vpack.c.b16 %v1197, %v1195
  %v1234 = vpack.c.b16 %v1198, %v1196
  %v1235 = vpack.c.b16 %v1201, %v1199
  %v1236 = vpack.c.b16 %v1202, %v1200
  %v1237 = vpack.c.b16 %v1205, %v1203
  %v1238 = vpack.c.b16 %v1206, %v1204
  %v1239 = vpack.c.b16 %v1209, %v1207
  %v1240 = vpack.c.b16 %v1210, %v1208
  %v1241 = vpack.c.b16 %v1213, %v1211
  %v1242 = vpack.c.b16 %v1214, %v1212
  %v1243 = vpack.c.b16 %v1217, %v1215
  %v1244 = vpack.c.b16 %v1218, %v1216
  %v1245 = vpack.c.b16 %v1219, %v1219
  %v1246 = vpack.c.b16 %v1220, %v1220
  %v1261 = vsel %vm230, %v1222, 0
  %v1264 = vsel %vm230, %v1224, 0
  %v1267 = vsel %vm230, %v1226, 0
  %v1270 = vsel %vm230, %v1228, 0
  %v1273 = vsel %vm230, %v1230, 0
  %v1276 = vsel %vm230, %v1232, 0
  %v1279 = vsel %vm230, %v1234, 0
  %v1282 = vsel %vm230, %v1236, 0
  %v1285 = vsel %vm230, %v1238, 0
  %v1288 = vsel %vm230, %v1240, 0
  %v1291 = vsel %vm230, %v1242, 0
  %v1294 = vsel %vm230, %v1244, 0
  %v1297 = vsel %vm230, %v1246, 0
  %1299 = vmatpush.bf16.msra.mxu0 %v218
  %1300 = vmatpush.bf16.msra.mxu0 %v217
  %1301 = vmatpush.bf16.msra.mxu0 %v216
  %1302 = vmatpush.bf16.msra.mxu0 %v215
  %1303 = vmatpush.bf16.msra.mxu0 %v214
  %1304 = vmatpush.bf16.msra.mxu0 %v213
  %1305 = vmatpush.bf16.msra.mxu0 %v212
  %1306 = vmatpush.bf16.msra.mxu0 %v211
  %1307 = vmatmul.bf16.gmra.mxu0 %v1221
  %v1308 = vpop.f32.mrf.mxu0
  %v1309 = vadd.f32 0.0, %v1308
  %v1310 = vpop.f32.mrf.mxu0
  %v1311 = vadd.f32 0.0, %v1310
  %1312 = vmatmul.bf16.gmra.mxu0 %v1223
  %v1313 = vpop.f32.mrf.mxu0
  %v1314 = vadd.f32 0.0, %v1313
  %v1315 = vpop.f32.mrf.mxu0
  %v1316 = vadd.f32 0.0, %v1315
  %1317 = vmatmul.bf16.gmra.mxu0 %v1225
  %v1318 = vpop.f32.mrf.mxu0
  %v1319 = vadd.f32 0.0, %v1318
  %v1320 = vpop.f32.mrf.mxu0
  %v1321 = vadd.f32 0.0, %v1320
  %1322 = vmatmul.bf16.gmra.mxu0 %v1227
  %v1323 = vpop.f32.mrf.mxu0
  %v1324 = vadd.f32 0.0, %v1323
  %v1325 = vpop.f32.mrf.mxu0
  %v1326 = vadd.f32 0.0, %v1325
  %1327 = vmatmul.bf16.gmra.mxu0 %v1229
  %v1328 = vpop.f32.mrf.mxu0
  %v1329 = vadd.f32 0.0, %v1328
  %v1330 = vpop.f32.mrf.mxu0
  %v1331 = vadd.f32 0.0, %v1330
  %1332 = vmatmul.bf16.gmra.mxu0 %v1231
  %v1333 = vpop.f32.mrf.mxu0
  %v1334 = vadd.f32 0.0, %v1333
  %v1335 = vpop.f32.mrf.mxu0
  %v1336 = vadd.f32 0.0, %v1335
  %1337 = vmatmul.bf16.gmra.mxu0 %v1233
  %v1338 = vpop.f32.mrf.mxu0
  %v1339 = vadd.f32 0.0, %v1338
  %v1340 = vpop.f32.mrf.mxu0
  %v1341 = vadd.f32 0.0, %v1340
  %1342 = vmatmul.bf16.gmra.mxu0 %v1235
  %v1343 = vpop.f32.mrf.mxu0
  %v1344 = vadd.f32 0.0, %v1343
  %v1345 = vpop.f32.mrf.mxu0
  %v1346 = vadd.f32 0.0, %v1345
  %1347 = vmatmul.bf16.gmra.mxu0 %v1237
  %v1348 = vpop.f32.mrf.mxu0
  %v1349 = vadd.f32 0.0, %v1348
  %v1350 = vpop.f32.mrf.mxu0
  %v1351 = vadd.f32 0.0, %v1350
  %1352 = vmatmul.bf16.gmra.mxu0 %v1239
  %v1353 = vpop.f32.mrf.mxu0
  %v1354 = vadd.f32 0.0, %v1353
  %v1355 = vpop.f32.mrf.mxu0
  %v1356 = vadd.f32 0.0, %v1355
  %1357 = vmatmul.bf16.gmra.mxu0 %v1241
  %v1358 = vpop.f32.mrf.mxu0
  %v1359 = vadd.f32 0.0, %v1358
  %v1360 = vpop.f32.mrf.mxu0
  %v1361 = vadd.f32 0.0, %v1360
  %1362 = vmatmul.bf16.gmra.mxu0 %v1243
  %v1363 = vpop.f32.mrf.mxu0
  %v1364 = vadd.f32 0.0, %v1363
  %v1365 = vpop.f32.mrf.mxu0
  %v1366 = vadd.f32 0.0, %v1365
  %1367 = vmatmul.bf16.gmra.mxu0 %v1245
  %v1368 = vpop.f32.mrf.mxu0
  %v1369 = vadd.f32 0.0, %v1368
  %v1370 = vpop.f32.mrf.mxu0
  %1371 = vdwg.mxu0
  %1372 = vmatpush.bf16.msra.mxu0 0
  %1373 = vmatpush.bf16.msra.mxu0 0
  %1374 = vmatpush.bf16.msra.mxu0 0
  %1375 = vmatpush.bf16.msra.mxu0 0
  %1376 = vmatpush.bf16.msra.mxu0 0
  %1377 = vmatpush.bf16.msra.mxu0 0
  %1378 = vmatpush.bf16.msra.mxu0 %v272
  %1379 = vmatpush.bf16.msra.mxu0 %v219
  %1380 = vmatmul.bf16.gmra.mxu0 %v1261
  %v1381 = vpop.f32.mrf.mxu0
  %v1382 = vadd.f32 %v1309, %v1381
  %v1383 = vpop.f32.mrf.mxu0
  %v1384 = vadd.f32 %v1311, %v1383
  %1385 = vmatmul.bf16.gmra.mxu0 %v1264
  %v1386 = vpop.f32.mrf.mxu0
  %v1387 = vadd.f32 %v1314, %v1386
  %v1388 = vpop.f32.mrf.mxu0
  %v1389 = vadd.f32 %v1316, %v1388
  %1390 = vmatmul.bf16.gmra.mxu0 %v1267
  %v1391 = vpop.f32.mrf.mxu0
  %v1392 = vadd.f32 %v1319, %v1391
  %v1393 = vpop.f32.mrf.mxu0
  %v1394 = vadd.f32 %v1321, %v1393
  %1395 = vmatmul.bf16.gmra.mxu0 %v1270
  %v1396 = vpop.f32.mrf.mxu0
  %v1397 = vadd.f32 %v1324, %v1396
  %v1398 = vpop.f32.mrf.mxu0
  %v1399 = vadd.f32 %v1326, %v1398
  %1400 = vmatmul.bf16.gmra.mxu0 %v1273
  %v1401 = vpop.f32.mrf.mxu0
  %v1402 = vadd.f32 %v1329, %v1401
  %v1403 = vpop.f32.mrf.mxu0
  %v1404 = vadd.f32 %v1331, %v1403
  %1405 = vmatmul.bf16.gmra.mxu0 %v1276
  %v1406 = vpop.f32.mrf.mxu0
  %v1407 = vadd.f32 %v1334, %v1406
  %v1408 = vpop.f32.mrf.mxu0
  %v1409 = vadd.f32 %v1336, %v1408
  %1410 = vmatmul.bf16.gmra.mxu0 %v1279
  %v1411 = vpop.f32.mrf.mxu0
  %v1412 = vadd.f32 %v1339, %v1411
  %v1413 = vpop.f32.mrf.mxu0
  %v1414 = vadd.f32 %v1341, %v1413
  %1415 = vmatmul.bf16.gmra.mxu0 %v1282
  %v1416 = vpop.f32.mrf.mxu0
  %v1417 = vadd.f32 %v1344, %v1416
  %v1418 = vpop.f32.mrf.mxu0
  %v1419 = vadd.f32 %v1346, %v1418
  %1420 = vmatmul.bf16.gmra.mxu0 %v1285
  %v1421 = vpop.f32.mrf.mxu0
  %v1422 = vadd.f32 %v1349, %v1421
  %v1423 = vpop.f32.mrf.mxu0
  %v1424 = vadd.f32 %v1351, %v1423
  %1425 = vmatmul.bf16.gmra.mxu0 %v1288
  %v1426 = vpop.f32.mrf.mxu0
  %v1427 = vadd.f32 %v1354, %v1426
  %v1428 = vpop.f32.mrf.mxu0
  %v1429 = vadd.f32 %v1356, %v1428
  %1430 = vmatmul.bf16.gmra.mxu0 %v1291
  %v1431 = vpop.f32.mrf.mxu0
  %v1432 = vadd.f32 %v1359, %v1431
  %v1433 = vpop.f32.mrf.mxu0
  %v1434 = vadd.f32 %v1361, %v1433
  %1435 = vmatmul.bf16.gmra.mxu0 %v1294
  %v1436 = vpop.f32.mrf.mxu0
  %v1437 = vadd.f32 %v1364, %v1436
  %v1438 = vpop.f32.mrf.mxu0
  %v1439 = vadd.f32 %v1366, %v1438
  %1440 = vmatmul.bf16.gmra.mxu0 %v1297
  %v1441 = vpop.f32.mrf.mxu0
  %v1442 = vadd.f32 %v1369, %v1441
  %v1443 = vpop.f32.mrf.mxu0
  %1444 = vdwg.mxu0
  %v1445 = vmax.f32 %v1095, %v1382
  %v1446 = vmax.f32 %v1096, %v1384
  %v1447 = vmax.f32 %v1097, %v1387
  %v1448 = vmax.f32 %v1098, %v1389
  %v1449 = vmax.f32 %v1099, %v1392
  %v1450 = vmax.f32 %v1100, %v1394
  %v1451 = vmax.f32 %v1101, %v1397
  %v1452 = vmax.f32 %v1102, %v1399
  %v1453 = vmax.f32 %v1103, %v1402
  %v1454 = vmax.f32 %v1104, %v1404
  %v1455 = vmax.f32 %v1105, %v1407
  %v1456 = vmax.f32 %v1106, %v1409
  %v1457 = vmax.f32 %v1107, %v1412
  %v1458 = vmax.f32 %v1108, %v1414
  %v1459 = vmax.f32 %v1109, %v1417
  %v1460 = vmax.f32 %v1110, %v1419
  %v1461 = vmax.f32 %v1111, %v1422
  %v1462 = vmax.f32 %v1112, %v1424
  %v1463 = vmax.f32 %v1113, %v1427
  %v1464 = vmax.f32 %v1114, %v1429
  %v1465 = vmax.f32 %v1115, %v1432
  %v1466 = vmax.f32 %v1116, %v1434
  %v1467 = vmax.f32 %v1117, %v1437
  %v1468 = vmax.f32 %v1118, %v1439
  %v1469 = vmax.f32 %v1119, %v1442
  %v1470 = vld [vmem:[%s2] sm:$0x1]
  %v1472 = vperm.slane %v1470, 0
  %v1474 = vadd.f32 %v1445, %v1472
  %v1475 = vadd.f32 %v1446, %v1472
  %v1476 = vadd.f32 %v1447, %v1472
  %v1477 = vadd.f32 %v1448, %v1472
  %v1478 = vadd.f32 %v1449, %v1472
  %v1479 = vadd.f32 %v1450, %v1472
  %v1480 = vadd.f32 %v1451, %v1472
  %v1481 = vadd.f32 %v1452, %v1472
  %v1482 = vadd.f32 %v1453, %v1472
  %v1483 = vadd.f32 %v1454, %v1472
  %v1484 = vadd.f32 %v1455, %v1472
  %v1485 = vadd.f32 %v1456, %v1472
  %v1486 = vadd.f32 %v1457, %v1472
  %v1487 = vadd.f32 %v1458, %v1472
  %v1488 = vadd.f32 %v1459, %v1472
  %v1489 = vadd.f32 %v1460, %v1472
  %v1490 = vadd.f32 %v1461, %v1472
  %v1491 = vadd.f32 %v1462, %v1472
  %v1492 = vadd.f32 %v1463, %v1472
  %v1493 = vadd.f32 %v1464, %v1472
  %v1494 = vadd.f32 %v1465, %v1472
  %v1495 = vadd.f32 %v1466, %v1472
  %v1496 = vadd.f32 %v1467, %v1472
  %v1497 = vadd.f32 %v1468, %v1472
  %v1498 = vadd.f32 %v1469, %v1472
  %v1499 = vmax.f32 %v1474, 0.0
  %v1500 = vmax.f32 %v1475, 0.0
  %v1501 = vmax.f32 %v1476, 0.0
  %v1502 = vmax.f32 %v1477, 0.0
  %v1503 = vmax.f32 %v1478, 0.0
  %v1504 = vmax.f32 %v1479, 0.0
  %v1505 = vmax.f32 %v1480, 0.0
  %v1506 = vmax.f32 %v1481, 0.0
  %v1507 = vmax.f32 %v1482, 0.0
  %v1508 = vmax.f32 %v1483, 0.0
  %v1509 = vmax.f32 %v1484, 0.0
  %v1510 = vmax.f32 %v1485, 0.0
  %v1511 = vmax.f32 %v1486, 0.0
  %v1512 = vmax.f32 %v1487, 0.0
  %v1513 = vmax.f32 %v1488, 0.0
  %v1514 = vmax.f32 %v1489, 0.0
  %v1515 = vmax.f32 %v1490, 0.0
  %v1516 = vmax.f32 %v1491, 0.0
  %v1517 = vmax.f32 %v1492, 0.0
  %v1518 = vmax.f32 %v1493, 0.0
  %v1519 = vmax.f32 %v1494, 0.0
  %v1520 = vmax.f32 %v1495, 0.0
  %v1521 = vmax.f32 %v1496, 0.0
  %v1522 = vmax.f32 %v1497, 0.0
  %v1523 = vmax.f32 %v1498, 0.0
  %v1524 = vpack.c.bf16 %v1499, %v1499
  %v1525 = vpack.c.bf16 %v1500, %v1500
  %v1526 = vpack.c.bf16 %v1501, %v1501
  %v1527 = vpack.c.bf16 %v1502, %v1502
  %v1528 = vpack.c.bf16 %v1503, %v1503
  %v1529 = vpack.c.bf16 %v1504, %v1504
  %v1530 = vpack.c.bf16 %v1505, %v1505
  %v1531 = vpack.c.bf16 %v1506, %v1506
  %v1532 = vpack.c.bf16 %v1507, %v1507
  %v1533 = vpack.c.bf16 %v1508, %v1508
  %v1534 = vpack.c.bf16 %v1509, %v1509
  %v1535 = vpack.c.bf16 %v1510, %v1510
  %v1536 = vpack.c.bf16 %v1511, %v1511
  %v1537 = vpack.c.bf16 %v1512, %v1512
  %v1538 = vpack.c.bf16 %v1513, %v1513
  %v1539 = vpack.c.bf16 %v1514, %v1514
  %v1540 = vpack.c.bf16 %v1515, %v1515
  %v1541 = vpack.c.bf16 %v1516, %v1516
  %v1542 = vpack.c.bf16 %v1517, %v1517
  %v1543 = vpack.c.bf16 %v1518, %v1518
  %v1544 = vpack.c.bf16 %v1519, %v1519
  %v1545 = vpack.c.bf16 %v1520, %v1520
  %v1546 = vpack.c.bf16 %v1521, %v1521
  %v1547 = vpack.c.bf16 %v1522, %v1522
  %v1548 = vpack.c.bf16 %v1523, %v1523
  %vm1549 = vcmask 125952
  %1550 = vst.msk [vmem:[%s3] sm:$0xf] %vm1549, %v1524
  %1551 = vst.msk [vmem:[%s3 + $0x4] sm:$0xf] %vm1549, %v1525
  %1552 = vst.msk [vmem:[%s3 + $0x8] sm:$0xf] %vm1549, %v1526
  %1553 = vst.msk [vmem:[%s3 + $0xc] sm:$0xf] %vm1549, %v1527
  %1554 = vst.msk [vmem:[%s3 + $0x10] sm:$0xf] %vm1549, %v1528
  %1555 = vst.msk [vmem:[%s3 + $0x14] sm:$0xf] %vm1549, %v1529
  %1556 = vst.msk [vmem:[%s3 + $0x18] sm:$0xf] %vm1549, %v1530
  %1557 = vst.msk [vmem:[%s3 + $0x1c] sm:$0xf] %vm1549, %v1531
  %1558 = vst.msk [vmem:[%s3 + $0x20] sm:$0xf] %vm1549, %v1532
  %1559 = vst.msk [vmem:[%s3 + $0x24] sm:$0xf] %vm1549, %v1533
  %1560 = vst.msk [vmem:[%s3 + $0x28] sm:$0xf] %vm1549, %v1534
  %1561 = vst.msk [vmem:[%s3 + $0x2c] sm:$0xf] %vm1549, %v1535
  %1562 = vst.msk [vmem:[%s3 + $0x30] sm:$0xf] %vm1549, %v1536
  %1563 = vst.msk [vmem:[%s3 + $0x34] sm:$0xf] %vm1549, %v1537
  %1564 = vst.msk [vmem:[%s3 + $0x38] sm:$0xf] %vm1549, %v1538
  %1565 = vst.msk [vmem:[%s3 + $0x3c] sm:$0xf] %vm1549, %v1539
  %1566 = vst.msk [vmem:[%s3 + $0x40] sm:$0xf] %vm1549, %v1540
  %1567 = vst.msk [vmem:[%s3 + $0x44] sm:$0xf] %vm1549, %v1541
  %1568 = vst.msk [vmem:[%s3 + $0x48] sm:$0xf] %vm1549, %v1542
  %1569 = vst.msk [vmem:[%s3 + $0x4c] sm:$0xf] %vm1549, %v1543
  %1570 = vst.msk [vmem:[%s3 + $0x50] sm:$0xf] %vm1549, %v1544
  %1571 = vst.msk [vmem:[%s3 + $0x54] sm:$0xf] %vm1549, %v1545
  %1572 = vst.msk [vmem:[%s3 + $0x58] sm:$0xf] %vm1549, %v1546
  %1573 = vst.msk [vmem:[%s3 + $0x5c] sm:$0xf] %vm1549, %v1547
  %1574 = vst.msk [vmem:[%s3 + $0x60] sm:$0xf] %vm1549, %v1548
  // Predicated region
  $region14: #{lenet5_cifar_forward.4} parent=0 // pred_check
    _
  $region15: #{lenet5_cifar_forward.4} parent=0 // pred_check_branch
    %1576 = sbr.rel (0) target = $region17
  $region16: #{lenet5_cifar_forward.4} parent=0 // pred_region
    _
  $region17: #{lenet5_cifar_forward.4} parent=0 // pred_fallthru
    _
  // Predicated region
  $region18: #{lenet5_cifar_forward.4} parent=0 // pred_check
    _
  $region19: #{lenet5_cifar_forward.4} parent=0 // pred_check_branch
    %1578 = sbr.rel (0) target = $region21
  $region20: #{lenet5_cifar_forward.4} parent=0 // pred_region
    _
  $region21: #{lenet5_cifar_forward.4} parent=0 // pred_fallthru
    _

// kernel: lenet5_cifar_forward.5
$region0: #{lenet5_cifar_forward.5}
  #allocation0 [shape = 'u32[]', space=smem, size = 0x4, offset = 0x4, fixed_abs, tag = 'smem constant byte address 0x4 - core index']
  #allocation1 [shape = 'u32[72,128]{1,0:T(1,128)}', space=vmem, size = 0x9000, scoped, tag = 'internal scratch']
  %s0 = inlined_call_operand.vmem [shape: bf16[8,400], index: 0, kind: input, shape index: {}]
  %s1 = inlined_call_operand.vmem [shape: bf16[400,128], index: 1, kind: input, shape index: {}]
  %s2 = inlined_call_operand.vmem [shape: f32[1,128], index: 2, kind: input, shape index: {}]
  %s3 = inlined_call_operand.vmem [shape: bf16[128,128], index: 3, kind: input, shape index: {}]
  %s4 = inlined_call_operand.vmem [shape: f32[1,128], index: 4, kind: input, shape index: {}]
  %s5 = inlined_call_operand.vmem [shape: bf16[128,10], index: 5, kind: input, shape index: {}]
  %s6 = inlined_call_operand.vmem [shape: f32[1,10], index: 6, kind: input, shape index: {}]
  %s7 = inlined_call_operand.vmem [shape: f32[8,10], index: 7, kind: output, shape index: {}]
  %s8 = sld [smem:[#allocation0]]
  $region38: #{lenet5_cifar_forward.5} parent=0
    _
  %s10 = ssub.s32 1, %s8
  %s11 = scalar_select 0, %s10, %s8
  // Predicated region
  $region2: #{lenet5_cifar_forward.5} parent=0 // pred_check
    _
  $region3: #{lenet5_cifar_forward.5} parent=0 // pred_check_branch
    %13 = sbr.rel (0) target = $region5
  $region4: #{lenet5_cifar_forward.5} parent=0 // pred_region
    _
  $region5: #{lenet5_cifar_forward.5} parent=0 // pred_fallthru
    _
  // Predicated region
  $region6: #{lenet5_cifar_forward.5} parent=0 // pred_check
    _
  $region7: #{lenet5_cifar_forward.5} parent=0 // pred_check_branch
    %15 = sbr.rel (0) target = $region9
  $region8: #{lenet5_cifar_forward.5} parent=0 // pred_region
    _
  $region9: #{lenet5_cifar_forward.5} parent=0 // pred_fallthru
    _
  // Predicated region
  $region10: #{lenet5_cifar_forward.5} parent=0 // pred_check
    _
  $region11: #{lenet5_cifar_forward.5} parent=0 // pred_check_branch
    %17 = sbr.rel (0) target = $region13
  $region12: #{lenet5_cifar_forward.5} parent=0 // pred_region
    _
  $region13: #{lenet5_cifar_forward.5} parent=0 // pred_fallthru
    _
  // Predicated region
  $region14: #{lenet5_cifar_forward.5} parent=0 // pred_check
    _
  $region15: #{lenet5_cifar_forward.5} parent=0 // pred_check_branch
    %19 = sbr.rel (0) target = $region17
  $region16: #{lenet5_cifar_forward.5} parent=0 // pred_region
    _
  $region17: #{lenet5_cifar_forward.5} parent=0 // pred_fallthru
    _
  // Predicated region
  $region18: #{lenet5_cifar_forward.5} parent=0 // pred_check
    _
  $region19: #{lenet5_cifar_forward.5} parent=0 // pred_check_branch
    %21 = sbr.rel (0) target = $region21
  $region20: #{lenet5_cifar_forward.5} parent=0 // pred_region
    _
  $region21: #{lenet5_cifar_forward.5} parent=0 // pred_fallthru
    _
  // Predicated region
  $region22: #{lenet5_cifar_forward.5} parent=0 // pred_check
    _
  $region23: #{lenet5_cifar_forward.5} parent=0 // pred_check_branch
    %23 = sbr.rel (0) target = $region25
  $region24: #{lenet5_cifar_forward.5} parent=0 // pred_region
    _
  $region25: #{lenet5_cifar_forward.5} parent=0 // pred_fallthru
    _
  // Predicated region
  $region26: #{lenet5_cifar_forward.5} parent=0 // pred_check
    _
  $region27: #{lenet5_cifar_forward.5} parent=0 // pred_check_branch
    %25 = sbr.rel (0) target = $region29
  $region28: #{lenet5_cifar_forward.5} parent=0 // pred_region
    _
  $region29: #{lenet5_cifar_forward.5} parent=0 // pred_fallthru
    _
  %v27 = vld [vmem:[%s0] sm:$0xff]
  %v28 = vld [vmem:[%s0 + $0x8] sm:$0xff]
  %v29 = vld [vmem:[%s1] sm:$0xf]
  %v30 = vld [vmem:[%s1 + $0x4] sm:$0xf]
  %v31 = vld [vmem:[%s1 + $0x8] sm:$0xf]
  %v32 = vld [vmem:[%s1 + $0xc] sm:$0xf]
  %v33 = vld [vmem:[%s1 + $0x10] sm:$0xf]
  %v34 = vld [vmem:[%s1 + $0x14] sm:$0xf]
  %v35 = vld [vmem:[%s1 + $0x18] sm:$0xf]
  %v36 = vld [vmem:[%s1 + $0x1c] sm:$0xf]
  %v37 = vld [vmem:[%s1 + $0x20] sm:$0xf]
  %v38 = vld [vmem:[%s1 + $0x24] sm:$0xf]
  %v39 = vld [vmem:[%s1 + $0x28] sm:$0xf]
  %v40 = vld [vmem:[%s1 + $0x2c] sm:$0xf]
  %v41 = vld [vmem:[%s1 + $0x30] sm:$0xf]
  %v42 = vld [vmem:[%s1 + $0x34] sm:$0xf]
  %v43 = vld [vmem:[%s1 + $0x38] sm:$0xf]
  %v44 = vld [vmem:[%s1 + $0x3c] sm:$0xf]
  %v45 = vld [vmem:[%s1 + $0x40] sm:$0xf]
  %v46 = vld [vmem:[%s1 + $0x44] sm:$0xf]
  %v47 = vld [vmem:[%s1 + $0x48] sm:$0xf]
  %v48 = vld [vmem:[%s1 + $0x4c] sm:$0xf]
  %v49 = vld [vmem:[%s1 + $0x50] sm:$0xf]
  %v50 = vld [vmem:[%s1 + $0x54] sm:$0xf]
  %v51 = vld [vmem:[%s1 + $0x58] sm:$0xf]
  %v52 = vld [vmem:[%s1 + $0x5c] sm:$0xf]
  %v53 = vld [vmem:[%s1 + $0x60] sm:$0xf]
  %v54 = vld [vmem:[%s1 + $0x64] sm:$0xf]
  %v55 = vld [vmem:[%s1 + $0x68] sm:$0xf]
  %v56 = vld [vmem:[%s1 + $0x6c] sm:$0xf]
  %v57 = vld [vmem:[%s1 + $0x70] sm:$0xf]
  %v58 = vld [vmem:[%s1 + $0x74] sm:$0xf]
  %v59 = vld [vmem:[%s1 + $0x78] sm:$0xf]
  %v60 = vld [vmem:[%s1 + $0x7c] sm:$0xf]
  %v61 = vld [vmem:[%s1 + $0x80] sm:$0xf]
  %v62 = vld [vmem:[%s1 + $0x84] sm:$0xf]
  %v63 = vld [vmem:[%s1 + $0x88] sm:$0xf]
  %v64 = vld [vmem:[%s1 + $0x8c] sm:$0xf]
  %v65 = vld [vmem:[%s1 + $0x90] sm:$0xf]
  %v66 = vld [vmem:[%s1 + $0x94] sm:$0xf]
  %v67 = vld [vmem:[%s1 + $0x98] sm:$0xf]
  %v68 = vld [vmem:[%s1 + $0x9c] sm:$0xf]
  %v69 = vld [vmem:[%s1 + $0xa0] sm:$0xf]
  %v70 = vld [vmem:[%s1 + $0xa4] sm:$0xf]
  %v71 = vld [vmem:[%s1 + $0xa8] sm:$0xf]
  %v72 = vld [vmem:[%s1 + $0xac] sm:$0xf]
  %v73 = vld [vmem:[%s1 + $0xb0] sm:$0xf]
  %v74 = vld [vmem:[%s1 + $0xb4] sm:$0xf]
  %v75 = vld [vmem:[%s1 + $0xb8] sm:$0xf]
  %v76 = vld [vmem:[%s1 + $0xbc] sm:$0xf]
  %v77 = vld [vmem:[%s1 + $0xc0] sm:$0xf]
  %v78 = vld [vmem:[%s1 + $0xc4] sm:$0xf]
  %v79 = vld [vmem:[%s2] sm:$0x1]
  %v81 = vperm.slane %v79, 0
  %v85 = vunpack.c.l.b16 %v27
  %v86 = vunpack.c.h.b16 %v27
  %v87 = vunpack.c.l.b16 %v28
  %v88 = vunpack.c.h.b16 %v28
  %v89 = vpack.c.b16 %v85, %v85
  %v90 = vpack.c.b16 %v86, %v86
  %v91 = vpack.c.b16 %v87, %v87
  %v92 = vpack.c.b16 %v88, %v88
  %v146 = vunpack.c.l.b16 %v29
  %v147 = vunpack.c.l.b16 %v30
  %v148 = vunpack.c.l.b16 %v31
  %v149 = vunpack.c.l.b16 %v32
  %v150 = vunpack.c.l.b16 %v33
  %v151 = vunpack.c.l.b16 %v34
  %v152 = vunpack.c.l.b16 %v35
  %v153 = vunpack.c.l.b16 %v36
  %v154 = vunpack.c.l.b16 %v37
  %v155 = vunpack.c.l.b16 %v38
  %v156 = vunpack.c.l.b16 %v39
  %v157 = vunpack.c.l.b16 %v40
  %v158 = vunpack.c.l.b16 %v41
  %v159 = vunpack.c.l.b16 %v42
  %v160 = vunpack.c.l.b16 %v43
  %v161 = vunpack.c.l.b16 %v44
  %v162 = vunpack.c.l.b16 %v45
  %v163 = vunpack.c.l.b16 %v46
  %v164 = vunpack.c.l.b16 %v47
  %v165 = vunpack.c.l.b16 %v48
  %v166 = vunpack.c.l.b16 %v49
  %v167 = vunpack.c.l.b16 %v50
  %v168 = vunpack.c.l.b16 %v51
  %v169 = vunpack.c.l.b16 %v52
  %v170 = vunpack.c.l.b16 %v53
  %v171 = vunpack.c.l.b16 %v54
  %v172 = vunpack.c.l.b16 %v55
  %v173 = vunpack.c.l.b16 %v56
  %v174 = vunpack.c.l.b16 %v57
  %v175 = vunpack.c.l.b16 %v58
  %v176 = vunpack.c.l.b16 %v59
  %v177 = vunpack.c.l.b16 %v60
  %v178 = vunpack.c.l.b16 %v61
  %v179 = vunpack.c.l.b16 %v62
  %v180 = vunpack.c.l.b16 %v63
  %v181 = vunpack.c.l.b16 %v64
  %v182 = vunpack.c.l.b16 %v65
  %v183 = vunpack.c.l.b16 %v66
  %v184 = vunpack.c.l.b16 %v67
  %v185 = vunpack.c.l.b16 %v68
  %v186 = vunpack.c.l.b16 %v69
  %v187 = vunpack.c.l.b16 %v70
  %v188 = vunpack.c.l.b16 %v71
  %v189 = vunpack.c.l.b16 %v72
  %v190 = vunpack.c.l.b16 %v73
  %v191 = vunpack.c.l.b16 %v74
  %v192 = vunpack.c.l.b16 %v75
  %v193 = vunpack.c.l.b16 %v76
  %v194 = vunpack.c.l.b16 %v77
  %v195 = vunpack.c.l.b16 %v78
  %v196 = vpack.c.b16 %v147, %v146
  %v197 = vpack.c.b16 %v149, %v148
  %v198 = vpack.c.b16 %v151, %v150
  %v199 = vpack.c.b16 %v153, %v152
  %v200 = vpack.c.b16 %v155, %v154
  %v201 = vpack.c.b16 %v157, %v156
  %v202 = vpack.c.b16 %v159, %v158
  %v203 = vpack.c.b16 %v161, %v160
  %v204 = vpack.c.b16 %v163, %v162
  %v205 = vpack.c.b16 %v165, %v164
  %v206 = vpack.c.b16 %v167, %v166
  %v207 = vpack.c.b16 %v169, %v168
  %v208 = vpack.c.b16 %v171, %v170
  %v209 = vpack.c.b16 %v173, %v172
  %v210 = vpack.c.b16 %v175, %v174
  %v211 = vpack.c.b16 %v177, %v176
  %v212 = vpack.c.b16 %v179, %v178
  %v213 = vpack.c.b16 %v181, %v180
  %v214 = vpack.c.b16 %v183, %v182
  %v215 = vpack.c.b16 %v185, %v184
  %v216 = vpack.c.b16 %v187, %v186
  %v217 = vpack.c.b16 %v189, %v188
  %v218 = vpack.c.b16 %v191, %v190
  %v219 = vpack.c.b16 %v193, %v192
  %v220 = vpack.c.b16 %v195, %v194
  %vm246 = vcmask 130048
  %v248 = vsel %vm246, %v92, 0
  %250 = vmatpush.bf16.msra.mxu0 %v203
  %251 = vmatpush.bf16.msra.mxu0 %v202
  %252 = vmatpush.bf16.msra.mxu0 %v201
  %253 = vmatpush.bf16.msra.mxu0 %v200
  %254 = vmatpush.bf16.msra.mxu0 %v199
  %255 = vmatpush.bf16.msra.mxu0 %v198
  %256 = vmatpush.bf16.msra.mxu0 %v197
  %257 = vmatpush.bf16.msra.mxu0 %v196
  %258 = vmatmul.bf16.gmra.mxu0 %v89
  %v259 = vpop.f32.mrf.mxu0
  %v260 = vadd.f32 %v81, %v259
  %v261 = vpop.f32.mrf.mxu0
  %262 = vdwg.mxu0
  %263 = vmatpush.bf16.msra.mxu0 %v211
  %264 = vmatpush.bf16.msra.mxu0 %v210
  %265 = vmatpush.bf16.msra.mxu0 %v209
  %266 = vmatpush.bf16.msra.mxu0 %v208
  %267 = vmatpush.bf16.msra.mxu0 %v207
  %268 = vmatpush.bf16.msra.mxu0 %v206
  %269 = vmatpush.bf16.msra.mxu0 %v205
  %270 = vmatpush.bf16.msra.mxu0 %v204
  %271 = vmatmul.bf16.gmra.mxu0 %v90
  %v272 = vpop.f32.mrf.mxu0
  %v273 = vadd.f32 %v260, %v272
  %v274 = vpop.f32.mrf.mxu0
  %275 = vdwg.mxu0
  %276 = vmatpush.bf16.msra.mxu0 %v219
  %277 = vmatpush.bf16.msra.mxu0 %v218
  %278 = vmatpush.bf16.msra.mxu0 %v217
  %279 = vmatpush.bf16.msra.mxu0 %v216
  %280 = vmatpush.bf16.msra.mxu0 %v215
  %281 = vmatpush.bf16.msra.mxu0 %v214
  %282 = vmatpush.bf16.msra.mxu0 %v213
  %283 = vmatpush.bf16.msra.mxu0 %v212
  %284 = vmatmul.bf16.gmra.mxu0 %v91
  %v285 = vpop.f32.mrf.mxu0
  %v286 = vadd.f32 %v273, %v285
  %v287 = vpop.f32.mrf.mxu0
  %288 = vdwg.mxu0
  %289 = vmatpush.bf16.msra.mxu0 0
  %290 = vmatpush.bf16.msra.mxu0 0
  %291 = vmatpush.bf16.msra.mxu0 0
  %292 = vmatpush.bf16.msra.mxu0 0
  %293 = vmatpush.bf16.msra.mxu0 0
  %294 = vmatpush.bf16.msra.mxu0 0
  %295 = vmatpush.bf16.msra.mxu0 0
  %296 = vmatpush.bf16.msra.mxu0 %v220
  %297 = vmatmul.bf16.gmra.mxu0 %v248
  %v298 = vpop.f32.mrf.mxu0
  %v299 = vadd.f32 %v286, %v298
  %v300 = vpop.f32.mrf.mxu0
  %301 = vdwg.mxu0
  %v302 = vmax.f32 %v299, 0.0
  %v303 = vpack.c.bf16 %v302, %v302
  %v304 = vld [vmem:[%s3] sm:$0xf]
  %v305 = vld [vmem:[%s3 + $0x4] sm:$0xf]
  %v306 = vld [vmem:[%s3 + $0x8] sm:$0xf]
  %v307 = vld [vmem:[%s3 + $0xc] sm:$0xf]
  %v308 = vld [vmem:[%s3 + $0x10] sm:$0xf]
  %v309 = vld [vmem:[%s3 + $0x14] sm:$0xf]
  %v310 = vld [vmem:[%s3 + $0x18] sm:$0xf]
  %v311 = vld [vmem:[%s3 + $0x1c] sm:$0xf]
  %v312 = vld [vmem:[%s3 + $0x20] sm:$0xf]
  %v313 = vld [vmem:[%s3 + $0x24] sm:$0xf]
  %v314 = vld [vmem:[%s3 + $0x28] sm:$0xf]
  %v315 = vld [vmem:[%s3 + $0x2c] sm:$0xf]
  %v316 = vld [vmem:[%s3 + $0x30] sm:$0xf]
  %v317 = vld [vmem:[%s3 + $0x34] sm:$0xf]
  %v318 = vld [vmem:[%s3 + $0x38] sm:$0xf]
  %v319 = vld [vmem:[%s3 + $0x3c] sm:$0xf]
  %v320 = vld [vmem:[%s4] sm:$0x1]
  %v322 = vperm.slane %v320, 0
  %v340 = vunpack.c.l.b16 %v304
  %v341 = vunpack.c.l.b16 %v305
  %v342 = vunpack.c.l.b16 %v306
  %v343 = vunpack.c.l.b16 %v307
  %v344 = vunpack.c.l.b16 %v308
  %v345 = vunpack.c.l.b16 %v309
  %v346 = vunpack.c.l.b16 %v310
  %v347 = vunpack.c.l.b16 %v311
  %v348 = vunpack.c.l.b16 %v312
  %v349 = vunpack.c.l.b16 %v313
  %v350 = vunpack.c.l.b16 %v314
  %v351 = vunpack.c.l.b16 %v315
  %v352 = vunpack.c.l.b16 %v316
  %v353 = vunpack.c.l.b16 %v317
  %v354 = vunpack.c.l.b16 %v318
  %v355 = vunpack.c.l.b16 %v319
  %v356 = vpack.c.b16 %v341, %v340
  %v357 = vpack.c.b16 %v343, %v342
  %v358 = vpack.c.b16 %v345, %v344
  %v359 = vpack.c.b16 %v347, %v346
  %v360 = vpack.c.b16 %v349, %v348
  %v361 = vpack.c.b16 %v351, %v350
  %v362 = vpack.c.b16 %v353, %v352
  %v363 = vpack.c.b16 %v355, %v354
  %372 = vmatpush.bf16.msra.mxu0 %v363
  %373 = vmatpush.bf16.msra.mxu0 %v362
  %374 = vmatpush.bf16.msra.mxu0 %v361
  %375 = vmatpush.bf16.msra.mxu0 %v360
  %376 = vmatpush.bf16.msra.mxu0 %v359
  %377 = vmatpush.bf16.msra.mxu0 %v358
  %378 = vmatpush.bf16.msra.mxu0 %v357
  %379 = vmatpush.bf16.msra.mxu0 %v356
  %380 = vmatmul.bf16.gmra.mxu0 %v303
  %v381 = vpop.f32.mrf.mxu0
  %v382 = vadd.f32 %v322, %v381
  %v383 = vpop.f32.mrf.mxu0
  %384 = vdwg.mxu0
  %v385 = vmax.f32 %v382, 0.0
  %v386 = vpack.c.bf16 %v385, %v385
  %v387 = vld [vmem:[%s5] sm:$0xf]
  %v388 = vld [vmem:[%s5 + $0x4] sm:$0xf]
  %v389 = vld [vmem:[%s5 + $0x8] sm:$0xf]
  %v390 = vld [vmem:[%s5 + $0xc] sm:$0xf]
  %v391 = vld [vmem:[%s5 + $0x10] sm:$0xf]
  %v392 = vld [vmem:[%s5 + $0x14] sm:$0xf]
  %v393 = vld [vmem:[%s5 + $0x18] sm:$0xf]
  %v394 = vld [vmem:[%s5 + $0x1c] sm:$0xf]
  %v395 = vld [vmem:[%s5 + $0x20] sm:$0xf]
  %v396 = vld [vmem:[%s5 + $0x24] sm:$0xf]
  %v397 = vld [vmem:[%s5 + $0x28] sm:$0xf]
  %v398 = vld [vmem:[%s5 + $0x2c] sm:$0xf]
  %v399 = vld [vmem:[%s5 + $0x30] sm:$0xf]
  %v400 = vld [vmem:[%s5 + $0x34] sm:$0xf]
  %v401 = vld [vmem:[%s5 + $0x38] sm:$0xf]
  %v402 = vld [vmem:[%s5 + $0x3c] sm:$0xf]
  %v403 = vld [vmem:[%s6] sm:$0x1]
  %v405 = vperm.slane %v403, 0
  %v423 = vunpack.c.l.b16 %v387
  %v424 = vunpack.c.l.b16 %v388
  %v425 = vunpack.c.l.b16 %v389
  %v426 = vunpack.c.l.b16 %v390
  %v427 = vunpack.c.l.b16 %v391
  %v428 = vunpack.c.l.b16 %v392
  %v429 = vunpack.c.l.b16 %v393
  %v430 = vunpack.c.l.b16 %v394
  %v431 = vunpack.c.l.b16 %v395
  %v432 = vunpack.c.l.b16 %v396
  %v433 = vunpack.c.l.b16 %v397
  %v434 = vunpack.c.l.b16 %v398
  %v435 = vunpack.c.l.b16 %v399
  %v436 = vunpack.c.l.b16 %v400
  %v437 = vunpack.c.l.b16 %v401
  %v438 = vunpack.c.l.b16 %v402
  %v439 = vpack.c.b16 %v424, %v423
  %v440 = vpack.c.b16 %v426, %v425
  %v441 = vpack.c.b16 %v428, %v427
  %v442 = vpack.c.b16 %v430, %v429
  %v443 = vpack.c.b16 %v432, %v431
  %v444 = vpack.c.b16 %v434, %v433
  %v445 = vpack.c.b16 %v436, %v435
  %v446 = vpack.c.b16 %v438, %v437
  %455 = vmatpush.bf16.msra.mxu0 %v446
  %456 = vmatpush.bf16.msra.mxu0 %v445
  %457 = vmatpush.bf16.msra.mxu0 %v444
  %458 = vmatpush.bf16.msra.mxu0 %v443
  %459 = vmatpush.bf16.msra.mxu0 %v442
  %460 = vmatpush.bf16.msra.mxu0 %v441
  %461 = vmatpush.bf16.msra.mxu0 %v440
  %462 = vmatpush.bf16.msra.mxu0 %v439
  %463 = vmatmul.bf16.gmra.mxu0 %v386
  %v464 = vpop.f32.mrf.mxu0
  %v465 = vadd.f32 %v405, %v464
  %v466 = vpop.f32.mrf.mxu0
  %467 = vdwg.mxu0
  %vm468 = vcmask 80896
  %v469 = vsel %vm468, %v465, -inf
  %470 = vmax.xlane.f32.xlu0 %v469
  %v471 = vpop.xlane.xlu0 %470
  %v472 = vsub.f32 %v465, %v471
  %v473 = vmul.f32 %v472, 1.442695
  %v474 = vpow.pop %v473
  %v475 = vsel %vm468, %v474, 0.0
  %476 = vadd.xlane.f32.xlu0 %v475
  %v477 = vpop.xlane.xlu0 %476
  %v478 = vlog2.pop %v477
  %v479 = vmul.f32 %v478, 0.6931472
  %v480 = vsub.f32 %v472, %v479
  %481 = vst.msk [vmem:[%s7] sm:$0xff] %vm468, %v480
  // Predicated region
  $region30: #{lenet5_cifar_forward.5} parent=0 // pred_check
    _
  $region31: #{lenet5_cifar_forward.5} parent=0 // pred_check_branch
    %483 = sbr.rel (0) target = $region33
  $region32: #{lenet5_cifar_forward.5} parent=0 // pred_region
    _
  $region33: #{lenet5_cifar_forward.5} parent=0 // pred_fallthru
    _
  // Predicated region
  $region34: #{lenet5_cifar_forward.5} parent=0 // pred_check
    _
  $region35: #{lenet5_cifar_forward.5} parent=0 // pred_check_branch
    %485 = sbr.rel (0) target = $region37
  $region36: #{lenet5_cifar_forward.5} parent=0 // pred_region
    _
  $region37: #{lenet5_cifar_forward.5} parent=0 // pred_fallthru
    _

</llo_original>
